<compile_context>
chip_gen: v5e
topology: v5e:2x2
jax: 0.10.0
libtpu: 0.0.40
codegen_flags: <defaults>
</compile_context>

<pallas_src>
import numpy as np

import jax
import jax.numpy as jnp
from jax.experimental import pallas as pl
from jax.experimental.pallas import tpu as pltpu


# --------------------------------------------------------------------------
# Constant conv2 tap-selection matrices (built once at import time).
#
# pooled1 rows are in (h, w) raster order over 12x12 (r = h*12 + w).
# conv2 output rows are ordered as 4 pool-tap blocks of 16:
#   p = k*16 + qh*4 + qw  with (oh, ow) = (2*qh + k//2, 2*qw + k%2)
# so the following 2x2 maxpool is a max over contiguous 16-row slices, and the
# pooled rows come out in (qh, qw) raster order over 4x4.
# --------------------------------------------------------------------------
def _build_conv2_selectors():
    s = np.zeros((25, 64, 144), np.float32)
    for ki in range(5):
        for kj in range(5):
            t = ki * 5 + kj
            for k in range(4):
                di, dj = divmod(k, 2)
                for qh in range(4):
                    for qw in range(4):
                        oh, ow = 2 * qh + di, 2 * qw + dj
                        p = k * 16 + qh * 4 + qw
                        r = (oh + ki) * 12 + (ow + kj)
                        s[t, p, r] = 1.0
    return s


_CONV2_SEL = _build_conv2_selectors()


# ------------------------------- Pallas kernel -----------------------------
def _lenet_kernel(p1_ref, w1_ref, b1_ref, s2_ref, w2_ref, b2_ref,
                  wf1_ref, bf1_ref, wf2_ref, bf2_ref, wf3_ref, bf3_ref,
                  out_ref, protos_ref):
    f32 = jnp.float32
    bf16 = jnp.bfloat16

    # ---- conv1 (im2col GEMM) with the 2x2 maxpool fused in ----
    # Patch rows come pre-ordered in 4 pool-tap blocks of 144, so pooling is a
    # running max over contiguous sublane-aligned slices of the GEMM output.
    w1 = w1_ref[...]
    m = None
    for k in range(4):
        blk = jnp.dot(p1_ref[k * 144:(k + 1) * 144, :], w1,
                      preferred_element_type=f32)              # (144, 64)
        m = blk if m is None else jnp.maximum(m, blk)
    pooled1 = jnp.maximum(m + b1_ref[...], 0.0)                # (144, 64) f32, 12x12 raster
    pooled1_b = pooled1.astype(bf16)

    # ---- conv2: 25-tap accumulation, im2col done in-kernel ----
    # Tap inputs are gathered with constant 0/1 selection matmuls (exact for the
    # bf16 values), then contracted against the tap's (ic, oc) weight slice.
    acc2 = jnp.zeros((64, 64), f32)
    for t in range(25):
        tap = jnp.dot(s2_ref[t], pooled1_b, preferred_element_type=f32)     # (64, 64)
        acc2 = acc2 + jnp.dot(tap.astype(bf16), w2_ref[t],
                              preferred_element_type=f32)
    conv2 = jnp.maximum(acc2 + b2_ref[...], 0.0)               # (64, 64) rows = 4 blocks of 16

    # ---- pool2: contiguous-block max (rows ordered for this by construction) ----
    pooled2 = jnp.maximum(jnp.maximum(conv2[0:16], conv2[16:32]),
                          jnp.maximum(conv2[32:48], conv2[48:64]))          # (16, 64)

    # ---- fc1: PyTorch NCHW flatten folded into the constant weight layout ----
    # wf1_ref[r] holds fc1_w columns for pooled2 row r, so the flatten is just a
    # sum of 16 small row GEMMs (no activation transpose / reshape needed).
    x = bf1_ref[...]                                           # (1, 384) f32
    for r in range(16):
        row = pooled2[r:r + 1, :].astype(bf16)                 # (1, 64)
        x = x + jnp.dot(row, wf1_ref[r], preferred_element_type=f32)
    x1 = jnp.maximum(x, 0.0)                                   # (1, 384)

    # ---- fc2 / fc3 ----
    x2 = jnp.maximum(jnp.dot(x1.astype(bf16), wf2_ref[...],
                             preferred_element_type=f32) + bf2_ref[...], 0.0)   # (1, 192)
    protos = jnp.dot(x2.astype(bf16), wf3_ref[...],
                     preferred_element_type=f32) + bf3_ref[...]                 # (1, 10)

    # ---- log_softmax (f32) ----
    mx = jnp.max(protos, axis=1, keepdims=True)
    s = protos - mx
    lse = jnp.log(jnp.sum(jnp.exp(s), axis=1, keepdims=True))

    out_ref[...] = s - lse
    protos_ref[...] = protos


# ------------------------------- JAX wrapper -------------------------------
def _conv1_patches(x_b28x28):
    """im2col for conv1 with rows ordered as 4 pool-tap blocks of 144 (each block
    in 12x12 raster order) so the maxpool becomes a contiguous-slice max in-kernel."""
    B = x_b28x28.shape[0]
    taps = [x_b28x28[:, ki:ki + 24, kj:kj + 24]
            for ki in range(5) for kj in range(5)]
    p = jnp.stack(taps, axis=-1)                               # (B, 24, 24, 25)
    blocks = [p[:, di::2, dj::2, :].reshape(B, 144, 25)
              for di in (0, 1) for dj in (0, 1)]
    return jnp.concatenate(blocks, axis=1)                     # (B, 576, 25)


def lenet_forward(params, x_nchw):
    B, C, H, W = x_nchw.shape
    assert C == 1 and H == 28 and W == 28, "fc1 expects 64*4*4 -> 1x28x28 input"
    f32, bf16 = jnp.float32, jnp.bfloat16

    x = x_nchw.astype(f32).reshape(B, 28, 28)
    patches1 = _conv1_patches(x).astype(bf16)                  # (B, 576, 25)

    # One-time weight re-layouts (constant permutations, kept off the activation path).
    w1 = params["conv1_w"].reshape(64, 25).T.astype(bf16)                      # (25, 64)
    b1 = params["conv1_b"].reshape(1, 64).astype(f32)
    w2 = jnp.transpose(params["conv2_w"], (2, 3, 1, 0)).reshape(25, 64, 64).astype(bf16)
    b2 = params["conv2_b"].reshape(1, 64).astype(f32)
    # fc1 weight reorganized so pooled2[(qh*4+qw), c] contracts against
    # fc1_w[n, c*16 + qh*4 + qw]  (== PyTorch's x.view(-1, 64*4*4) order).
    wf1 = params["fc1_w"].reshape(384, 64, 16).transpose(2, 1, 0).astype(bf16)  # (16, 64, 384)
    bf1 = params["fc1_b"].reshape(1, 384).astype(f32)
    wf2 = params["fc2_w"].T.astype(bf16)                                        # (384, 192)
    bf2 = params["fc2_b"].reshape(1, 192).astype(f32)
    wf3 = params["fc3_w"].T.astype(bf16)                                        # (192, 10)
    bf3 = params["fc3_b"].reshape(1, 10).astype(f32)
    s2 = jnp.asarray(_CONV2_SEL, dtype=bf16)                                    # (25, 64, 144)

    const2 = lambda b: (0, 0)
    const3 = lambda b: (0, 0, 0)

    output, protos = pl.pallas_call(
        _lenet_kernel,
        grid=(B,),
        out_shape=(jax.ShapeDtypeStruct((B, 1, 10), f32),
                   jax.ShapeDtypeStruct((B, 1, 10), f32)),
        in_specs=[
            pl.BlockSpec((None, 576, 25), lambda b: (b, 0, 0)),   # conv1 patches (per batch)
            pl.BlockSpec((25, 64), const2),                       # w1
            pl.BlockSpec((1, 64), const2),                        # b1
            pl.BlockSpec((25, 64, 144), const3),                  # conv2 tap selectors
            pl.BlockSpec((25, 64, 64), const3),                   # w2 (tap, ic, oc)
            pl.BlockSpec((1, 64), const2),                        # b2
            pl.BlockSpec((16, 64, 384), const3),                  # fc1 w (row, ic, oc)
            pl.BlockSpec((1, 384), const2),                       # fc1 b
            pl.BlockSpec((384, 192), const2),                     # fc2 w
            pl.BlockSpec((1, 192), const2),                       # fc2 b
            pl.BlockSpec((192, 10), const2),                      # fc3 w
            pl.BlockSpec((1, 10), const2),                        # fc3 b
        ],
        out_specs=(pl.BlockSpec((None, 1, 10), lambda b: (b, 0, 0)),
                   pl.BlockSpec((None, 1, 10), lambda b: (b, 0, 0))),
        compiler_params=pltpu.CompilerParams(
            dimension_semantics=("parallel",),          # v7x: shard batch over 2 TCs
            vmem_limit_bytes=32 * 1024 * 1024),
    )(patches1, w1, b1, s2, w2, b2, wf1, bf1, wf2, bf2, wf3, bf3)

    return output.reshape(B, 10), protos.reshape(B, 10)


def init_params(key):
    """PyTorch-default-style init: U(-1/sqrt(fan_in), +1/sqrt(fan_in))."""
    def uni(k, shape, fan_in):
        bound = 1.0 / jnp.sqrt(fan_in)
        return jax.random.uniform(k, shape, jnp.float32, -bound, bound)

    ks = jax.random.split(key, 10)
    return {
        "conv1_w": uni(ks[0], (64, 1, 5, 5), 1 * 5 * 5),
        "conv1_b": uni(ks[1], (64,), 1 * 5 * 5),
        "conv2_w": uni(ks[2], (64, 64, 5, 5), 64 * 5 * 5),
        "conv2_b": uni(ks[3], (64,), 64 * 5 * 5),
        "fc1_w": uni(ks[4], (384, 64 * 4 * 4), 64 * 4 * 4),
        "fc1_b": uni(ks[5], (384,), 64 * 4 * 4),
        "fc2_w": uni(ks[6], (192, 384), 384),
        "fc2_b": uni(ks[7], (192,), 384),
        "fc3_w": uni(ks[8], (10, 192), 192),
        "fc3_b": uni(ks[9], (10,), 192),
    }


if __name__ == "__main__":
    key = jax.random.PRNGKey(0)
    k_param, k_x = jax.random.split(key)
    params = init_params(k_param)
    # MNIST-like input: fc1 expects 64*4*4, which forces 1x28x28 spatial input.
    x = jax.random.normal(k_x, (2, 1, 28, 28), dtype=jnp.float32)

    output, protos = jax.jit(lenet_forward)(params, x)
    jax.block_until_ready((output, protos))

    assert output.shape == (2, 10) and protos.shape == (2, 10)
    assert bool(jnp.all(jnp.isfinite(output))) and bool(jnp.all(jnp.isfinite(protos)))
    # log_softmax rows must sum to 1 in prob space
    assert bool(jnp.allclose(jnp.sum(jnp.exp(output), axis=1), 1.0, atol=1e-4))
    print("KERNEL_OK")
</pallas_src>

<mosaic_0001>
module attributes {stable_mosaic.version = 11 : i64} {
  func.func @_lenet_kernel(%arg0: i32, %arg1: memref<1x576x25xbf16, #tpu.memory_space<vmem>>, %arg2: memref<25x64xbf16, #tpu.memory_space<vmem>>, %arg3: memref<1x64xf32, #tpu.memory_space<vmem>>, %arg4: memref<25x64x144xbf16, #tpu.memory_space<vmem>>, %arg5: memref<25x64x64xbf16, #tpu.memory_space<vmem>>, %arg6: memref<1x64xf32, #tpu.memory_space<vmem>>, %arg7: memref<16x64x384xbf16, #tpu.memory_space<vmem>>, %arg8: memref<1x384xf32, #tpu.memory_space<vmem>>, %arg9: memref<384x192xbf16, #tpu.memory_space<vmem>>, %arg10: memref<1x192xf32, #tpu.memory_space<vmem>>, %arg11: memref<192x10xbf16, #tpu.memory_space<vmem>>, %arg12: memref<1x10xf32, #tpu.memory_space<vmem>>, %arg13: memref<1x1x10xf32, #tpu.memory_space<vmem>>, %arg14: memref<1x1x10xf32, #tpu.memory_space<vmem>>) attributes {dimension_semantics = [#tpu.dimension_semantics<parallel>], iteration_bounds = array<i64: 2>, scalar_prefetch = 0 : i64, scratch_operands = 0 : i64, tpu.core_type = #tpu.core_type<tc>, window_params = [{transform_indices = @transform_0, window_bounds = array<i64: 1, 576, 25>}, {pipeline_mode = #tpu.pipeline_mode<synchronous>, transform_indices = @transform_1, window_bounds = array<i64: 25, 64>}, {pipeline_mode = #tpu.pipeline_mode<synchronous>, transform_indices = @transform_2, window_bounds = array<i64: 1, 64>}, {pipeline_mode = #tpu.pipeline_mode<synchronous>, transform_indices = @transform_3, window_bounds = array<i64: 25, 64, 144>}, {pipeline_mode = #tpu.pipeline_mode<synchronous>, transform_indices = @transform_4, window_bounds = array<i64: 25, 64, 64>}, {pipeline_mode = #tpu.pipeline_mode<synchronous>, transform_indices = @transform_5, window_bounds = array<i64: 1, 64>}, {pipeline_mode = #tpu.pipeline_mode<synchronous>, transform_indices = @transform_6, window_bounds = array<i64: 16, 64, 384>}, {pipeline_mode = #tpu.pipeline_mode<synchronous>, transform_indices = @transform_7, window_bounds = array<i64: 1, 384>}, {pipeline_mode = #tpu.pipeline_mode<synchronous>, transform_indices = @transform_8, window_bounds = array<i64: 384, 192>}, {pipeline_mode = #tpu.pipeline_mode<synchronous>, transform_indices = @transform_9, window_bounds = array<i64: 1, 192>}, {pipeline_mode = #tpu.pipeline_mode<synchronous>, transform_indices = @transform_10, window_bounds = array<i64: 192, 10>}, {pipeline_mode = #tpu.pipeline_mode<synchronous>, transform_indices = @transform_11, window_bounds = array<i64: 1, 10>}, {transform_indices = @transform_12, window_bounds = array<i64: 1, 1, 10>}, {transform_indices = @transform_13, window_bounds = array<i64: 1, 1, 10>}]} {
    %c0 = arith.constant 0 : index
    %c0_0 = arith.constant 0 : index
    %0 = vector.load %arg2[%c0, %c0_0] : memref<25x64xbf16, #tpu.memory_space<vmem>>, vector<25x64xbf16>
    %c0_1 = arith.constant 0 : index
    %c0_2 = arith.constant 0 : index
    %c0_3 = arith.constant 0 : index
    %1 = vector.load %arg1[%c0_1, %c0_2, %c0_3] : memref<1x576x25xbf16, #tpu.memory_space<vmem>>, vector<1x144x25xbf16>
    %2 = vector.shape_cast %1 : vector<1x144x25xbf16> to vector<144x25xbf16>
    %cst = arith.constant dense<0.000000e+00> : vector<144x64xf32>
    %3 = tpu.matmul %2, %0, %cst {dimension_numbers = #tpu.dot_dimension_numbers<[1], [0], [0], [1], [0, 0, 1, 1], [], []>} : vector<144x25xbf16>, vector<25x64xbf16>, vector<144x64xf32> -> vector<144x64xf32>
    %c0_4 = arith.constant 0 : index
    %c144 = arith.constant 144 : index
    %c0_5 = arith.constant 0 : index
    %4 = vector.load %arg1[%c0_4, %c144, %c0_5] : memref<1x576x25xbf16, #tpu.memory_space<vmem>>, vector<1x144x25xbf16>
    %5 = vector.shape_cast %4 : vector<1x144x25xbf16> to vector<144x25xbf16>
    %cst_6 = arith.constant dense<0.000000e+00> : vector<144x64xf32>
    %6 = tpu.matmul %5, %0, %cst_6 {dimension_numbers = #tpu.dot_dimension_numbers<[1], [0], [0], [1], [0, 0, 1, 1], [], []>} : vector<144x25xbf16>, vector<25x64xbf16>, vector<144x64xf32> -> vector<144x64xf32>
    %7 = arith.maximumf %3, %6 : vector<144x64xf32>
    %c0_7 = arith.constant 0 : index
    %c288 = arith.constant 288 : index
    %c0_8 = arith.constant 0 : index
    %8 = vector.load %arg1[%c0_7, %c288, %c0_8] : memref<1x576x25xbf16, #tpu.memory_space<vmem>>, vector<1x144x25xbf16>
    %9 = vector.shape_cast %8 : vector<1x144x25xbf16> to vector<144x25xbf16>
    %cst_9 = arith.constant dense<0.000000e+00> : vector<144x64xf32>
    %10 = tpu.matmul %9, %0, %cst_9 {dimension_numbers = #tpu.dot_dimension_numbers<[1], [0], [0], [1], [0, 0, 1, 1], [], []>} : vector<144x25xbf16>, vector<25x64xbf16>, vector<144x64xf32> -> vector<144x64xf32>
    %11 = arith.maximumf %7, %10 : vector<144x64xf32>
    %c0_10 = arith.constant 0 : index
    %c432 = arith.constant 432 : index
    %c0_11 = arith.constant 0 : index
    %12 = vector.load %arg1[%c0_10, %c432, %c0_11] : memref<1x576x25xbf16, #tpu.memory_space<vmem>>, vector<1x144x25xbf16>
    %13 = vector.shape_cast %12 : vector<1x144x25xbf16> to vector<144x25xbf16>
    %cst_12 = arith.constant dense<0.000000e+00> : vector<144x64xf32>
    %14 = tpu.matmul %13, %0, %cst_12 {dimension_numbers = #tpu.dot_dimension_numbers<[1], [0], [0], [1], [0, 0, 1, 1], [], []>} : vector<144x25xbf16>, vector<25x64xbf16>, vector<144x64xf32> -> vector<144x64xf32>
    %15 = arith.maximumf %11, %14 : vector<144x64xf32>
    %c0_13 = arith.constant 0 : index
    %c0_14 = arith.constant 0 : index
    %16 = vector.load %arg3[%c0_13, %c0_14] : memref<1x64xf32, #tpu.memory_space<vmem>>, vector<1x64xf32>
    %17 = vector.broadcast %16 : vector<1x64xf32> to vector<144x64xf32>
    %18 = arith.addf %15, %17 : vector<144x64xf32>
    %cst_15 = arith.constant 0.000000e+00 : f32
    %19 = vector.broadcast %cst_15 : f32 to vector<144x64xf32>
    %20 = arith.maximumf %18, %19 : vector<144x64xf32>
    %21 = arith.truncf %20 : vector<144x64xf32> to vector<144x64xbf16>
    %cst_16 = arith.constant 0.000000e+00 : f32
    %22 = vector.broadcast %cst_16 : f32 to vector<64x64xf32>
    %c0_17 = arith.constant 0 : index
    %c0_18 = arith.constant 0 : index
    %c0_19 = arith.constant 0 : index
    %23 = vector.load %arg4[%c0_17, %c0_18, %c0_19] : memref<25x64x144xbf16, #tpu.memory_space<vmem>>, vector<1x64x144xbf16>
    %24 = vector.shape_cast %23 : vector<1x64x144xbf16> to vector<64x144xbf16>
    %cst_20 = arith.constant dense<0.000000e+00> : vector<64x64xf32>
    %25 = tpu.matmul %24, %21, %cst_20 {dimension_numbers = #tpu.dot_dimension_numbers<[1], [0], [0], [1], [0, 0, 1, 1], [], []>} : vector<64x144xbf16>, vector<144x64xbf16>, vector<64x64xf32> -> vector<64x64xf32>
    %26 = arith.truncf %25 : vector<64x64xf32> to vector<64x64xbf16>
    %c0_21 = arith.constant 0 : index
    %c0_22 = arith.constant 0 : index
    %c0_23 = arith.constant 0 : index
    %27 = vector.load %arg5[%c0_21, %c0_22, %c0_23] : memref<25x64x64xbf16, #tpu.memory_space<vmem>>, vector<1x64x64xbf16>
    %28 = vector.shape_cast %27 : vector<1x64x64xbf16> to vector<64x64xbf16>
    %cst_24 = arith.constant dense<0.000000e+00> : vector<64x64xf32>
    %29 = tpu.matmul %26, %28, %cst_24 {dimension_numbers = #tpu.dot_dimension_numbers<[1], [0], [0], [1], [0, 0, 1, 1], [], []>} : vector<64x64xbf16>, vector<64x64xbf16>, vector<64x64xf32> -> vector<64x64xf32>
    %30 = arith.addf %22, %29 : vector<64x64xf32>
    %c1 = arith.constant 1 : index
    %c0_25 = arith.constant 0 : index
    %c0_26 = arith.constant 0 : index
    %31 = vector.load %arg4[%c1, %c0_25, %c0_26] : memref<25x64x144xbf16, #tpu.memory_space<vmem>>, vector<1x64x144xbf16>
    %32 = vector.shape_cast %31 : vector<1x64x144xbf16> to vector<64x144xbf16>
    %cst_27 = arith.constant dense<0.000000e+00> : vector<64x64xf32>
    %33 = tpu.matmul %32, %21, %cst_27 {dimension_numbers = #tpu.dot_dimension_numbers<[1], [0], [0], [1], [0, 0, 1, 1], [], []>} : vector<64x144xbf16>, vector<144x64xbf16>, vector<64x64xf32> -> vector<64x64xf32>
    %34 = arith.truncf %33 : vector<64x64xf32> to vector<64x64xbf16>
    %c1_28 = arith.constant 1 : index
    %c0_29 = arith.constant 0 : index
    %c0_30 = arith.constant 0 : index
    %35 = vector.load %arg5[%c1_28, %c0_29, %c0_30] : memref<25x64x64xbf16, #tpu.memory_space<vmem>>, vector<1x64x64xbf16>
    %36 = vector.shape_cast %35 : vector<1x64x64xbf16> to vector<64x64xbf16>
    %cst_31 = arith.constant dense<0.000000e+00> : vector<64x64xf32>
    %37 = tpu.matmul %34, %36, %cst_31 {dimension_numbers = #tpu.dot_dimension_numbers<[1], [0], [0], [1], [0, 0, 1, 1], [], []>} : vector<64x64xbf16>, vector<64x64xbf16>, vector<64x64xf32> -> vector<64x64xf32>
    %38 = arith.addf %30, %37 : vector<64x64xf32>
    %c2 = arith.constant 2 : index
    %c0_32 = arith.constant 0 : index
    %c0_33 = arith.constant 0 : index
    %39 = vector.load %arg4[%c2, %c0_32, %c0_33] : memref<25x64x144xbf16, #tpu.memory_space<vmem>>, vector<1x64x144xbf16>
    %40 = vector.shape_cast %39 : vector<1x64x144xbf16> to vector<64x144xbf16>
    %cst_34 = arith.constant dense<0.000000e+00> : vector<64x64xf32>
    %41 = tpu.matmul %40, %21, %cst_34 {dimension_numbers = #tpu.dot_dimension_numbers<[1], [0], [0], [1], [0, 0, 1, 1], [], []>} : vector<64x144xbf16>, vector<144x64xbf16>, vector<64x64xf32> -> vector<64x64xf32>
    %42 = arith.truncf %41 : vector<64x64xf32> to vector<64x64xbf16>
    %c2_35 = arith.constant 2 : index
    %c0_36 = arith.constant 0 : index
    %c0_37 = arith.constant 0 : index
    %43 = vector.load %arg5[%c2_35, %c0_36, %c0_37] : memref<25x64x64xbf16, #tpu.memory_space<vmem>>, vector<1x64x64xbf16>
    %44 = vector.shape_cast %43 : vector<1x64x64xbf16> to vector<64x64xbf16>
    %cst_38 = arith.constant dense<0.000000e+00> : vector<64x64xf32>
    %45 = tpu.matmul %42, %44, %cst_38 {dimension_numbers = #tpu.dot_dimension_numbers<[1], [0], [0], [1], [0, 0, 1, 1], [], []>} : vector<64x64xbf16>, vector<64x64xbf16>, vector<64x64xf32> -> vector<64x64xf32>
    %46 = arith.addf %38, %45 : vector<64x64xf32>
    %c3 = arith.constant 3 : index
    %c0_39 = arith.constant 0 : index
    %c0_40 = arith.constant 0 : index
    %47 = vector.load %arg4[%c3, %c0_39, %c0_40] : memref<25x64x144xbf16, #tpu.memory_space<vmem>>, vector<1x64x144xbf16>
    %48 = vector.shape_cast %47 : vector<1x64x144xbf16> to vector<64x144xbf16>
    %cst_41 = arith.constant dense<0.000000e+00> : vector<64x64xf32>
    %49 = tpu.matmul %48, %21, %cst_41 {dimension_numbers = #tpu.dot_dimension_numbers<[1], [0], [0], [1], [0, 0, 1, 1], [], []>} : vector<64x144xbf16>, vector<144x64xbf16>, vector<64x64xf32> -> vector<64x64xf32>
    %50 = arith.truncf %49 : vector<64x64xf32> to vector<64x64xbf16>
    %c3_42 = arith.constant 3 : index
    %c0_43 = arith.constant 0 : index
    %c0_44 = arith.constant 0 : index
    %51 = vector.load %arg5[%c3_42, %c0_43, %c0_44] : memref<25x64x64xbf16, #tpu.memory_space<vmem>>, vector<1x64x64xbf16>
    %52 = vector.shape_cast %51 : vector<1x64x64xbf16> to vector<64x64xbf16>
    %cst_45 = arith.constant dense<0.000000e+00> : vector<64x64xf32>
    %53 = tpu.matmul %50, %52, %cst_45 {dimension_numbers = #tpu.dot_dimension_numbers<[1], [0], [0], [1], [0, 0, 1, 1], [], []>} : vector<64x64xbf16>, vector<64x64xbf16>, vector<64x64xf32> -> vector<64x64xf32>
    %54 = arith.addf %46, %53 : vector<64x64xf32>
    %c4 = arith.constant 4 : index
    %c0_46 = arith.constant 0 : index
    %c0_47 = arith.constant 0 : index
    %55 = vector.load %arg4[%c4, %c0_46, %c0_47] : memref<25x64x144xbf16, #tpu.memory_space<vmem>>, vector<1x64x144xbf16>
    %56 = vector.shape_cast %55 : vector<1x64x144xbf16> to vector<64x144xbf16>
    %cst_48 = arith.constant dense<0.000000e+00> : vector<64x64xf32>
    %57 = tpu.matmul %56, %21, %cst_48 {dimension_numbers = #tpu.dot_dimension_numbers<[1], [0], [0], [1], [0, 0, 1, 1], [], []>} : vector<64x144xbf16>, vector<144x64xbf16>, vector<64x64xf32> -> vector<64x64xf32>
    %58 = arith.truncf %57 : vector<64x64xf32> to vector<64x64xbf16>
    %c4_49 = arith.constant 4 : index
    %c0_50 = arith.constant 0 : index
    %c0_51 = arith.constant 0 : index
    %59 = vector.load %arg5[%c4_49, %c0_50, %c0_51] : memref<25x64x64xbf16, #tpu.memory_space<vmem>>, vector<1x64x64xbf16>
    %60 = vector.shape_cast %59 : vector<1x64x64xbf16> to vector<64x64xbf16>
    %cst_52 = arith.constant dense<0.000000e+00> : vector<64x64xf32>
    %61 = tpu.matmul %58, %60, %cst_52 {dimension_numbers = #tpu.dot_dimension_numbers<[1], [0], [0], [1], [0, 0, 1, 1], [], []>} : vector<64x64xbf16>, vector<64x64xbf16>, vector<64x64xf32> -> vector<64x64xf32>
    %62 = arith.addf %54, %61 : vector<64x64xf32>
    %c5 = arith.constant 5 : index
    %c0_53 = arith.constant 0 : index
    %c0_54 = arith.constant 0 : index
    %63 = vector.load %arg4[%c5, %c0_53, %c0_54] : memref<25x64x144xbf16, #tpu.memory_space<vmem>>, vector<1x64x144xbf16>
    %64 = vector.shape_cast %63 : vector<1x64x144xbf16> to vector<64x144xbf16>
    %cst_55 = arith.constant dense<0.000000e+00> : vector<64x64xf32>
    %65 = tpu.matmul %64, %21, %cst_55 {dimension_numbers = #tpu.dot_dimension_numbers<[1], [0], [0], [1], [0, 0, 1, 1], [], []>} : vector<64x144xbf16>, vector<144x64xbf16>, vector<64x64xf32> -> vector<64x64xf32>
    %66 = arith.truncf %65 : vector<64x64xf32> to vector<64x64xbf16>
    %c5_56 = arith.constant 5 : index
    %c0_57 = arith.constant 0 : index
    %c0_58 = arith.constant 0 : index
    %67 = vector.load %arg5[%c5_56, %c0_57, %c0_58] : memref<25x64x64xbf16, #tpu.memory_space<vmem>>, vector<1x64x64xbf16>
    %68 = vector.shape_cast %67 : vector<1x64x64xbf16> to vector<64x64xbf16>
    %cst_59 = arith.constant dense<0.000000e+00> : vector<64x64xf32>
    %69 = tpu.matmul %66, %68, %cst_59 {dimension_numbers = #tpu.dot_dimension_numbers<[1], [0], [0], [1], [0, 0, 1, 1], [], []>} : vector<64x64xbf16>, vector<64x64xbf16>, vector<64x64xf32> -> vector<64x64xf32>
    %70 = arith.addf %62, %69 : vector<64x64xf32>
    %c6 = arith.constant 6 : index
    %c0_60 = arith.constant 0 : index
    %c0_61 = arith.constant 0 : index
    %71 = vector.load %arg4[%c6, %c0_60, %c0_61] : memref<25x64x144xbf16, #tpu.memory_space<vmem>>, vector<1x64x144xbf16>
    %72 = vector.shape_cast %71 : vector<1x64x144xbf16> to vector<64x144xbf16>
    %cst_62 = arith.constant dense<0.000000e+00> : vector<64x64xf32>
    %73 = tpu.matmul %72, %21, %cst_62 {dimension_numbers = #tpu.dot_dimension_numbers<[1], [0], [0], [1], [0, 0, 1, 1], [], []>} : vector<64x144xbf16>, vector<144x64xbf16>, vector<64x64xf32> -> vector<64x64xf32>
    %74 = arith.truncf %73 : vector<64x64xf32> to vector<64x64xbf16>
    %c6_63 = arith.constant 6 : index
    %c0_64 = arith.constant 0 : index
    %c0_65 = arith.constant 0 : index
    %75 = vector.load %arg5[%c6_63, %c0_64, %c0_65] : memref<25x64x64xbf16, #tpu.memory_space<vmem>>, vector<1x64x64xbf16>
    %76 = vector.shape_cast %75 : vector<1x64x64xbf16> to vector<64x64xbf16>
    %cst_66 = arith.constant dense<0.000000e+00> : vector<64x64xf32>
    %77 = tpu.matmul %74, %76, %cst_66 {dimension_numbers = #tpu.dot_dimension_numbers<[1], [0], [0], [1], [0, 0, 1, 1], [], []>} : vector<64x64xbf16>, vector<64x64xbf16>, vector<64x64xf32> -> vector<64x64xf32>
    %78 = arith.addf %70, %77 : vector<64x64xf32>
    %c7 = arith.constant 7 : index
    %c0_67 = arith.constant 0 : index
    %c0_68 = arith.constant 0 : index
    %79 = vector.load %arg4[%c7, %c0_67, %c0_68] : memref<25x64x144xbf16, #tpu.memory_space<vmem>>, vector<1x64x144xbf16>
    %80 = vector.shape_cast %79 : vector<1x64x144xbf16> to vector<64x144xbf16>
    %cst_69 = arith.constant dense<0.000000e+00> : vector<64x64xf32>
    %81 = tpu.matmul %80, %21, %cst_69 {dimension_numbers = #tpu.dot_dimension_numbers<[1], [0], [0], [1], [0, 0, 1, 1], [], []>} : vector<64x144xbf16>, vector<144x64xbf16>, vector<64x64xf32> -> vector<64x64xf32>
    %82 = arith.truncf %81 : vector<64x64xf32> to vector<64x64xbf16>
    %c7_70 = arith.constant 7 : index
    %c0_71 = arith.constant 0 : index
    %c0_72 = arith.constant 0 : index
    %83 = vector.load %arg5[%c7_70, %c0_71, %c0_72] : memref<25x64x64xbf16, #tpu.memory_space<vmem>>, vector<1x64x64xbf16>
    %84 = vector.shape_cast %83 : vector<1x64x64xbf16> to vector<64x64xbf16>
    %cst_73 = arith.constant dense<0.000000e+00> : vector<64x64xf32>
    %85 = tpu.matmul %82, %84, %cst_73 {dimension_numbers = #tpu.dot_dimension_numbers<[1], [0], [0], [1], [0, 0, 1, 1], [], []>} : vector<64x64xbf16>, vector<64x64xbf16>, vector<64x64xf32> -> vector<64x64xf32>
    %86 = arith.addf %78, %85 : vector<64x64xf32>
    %c8 = arith.constant 8 : index
    %c0_74 = arith.constant 0 : index
    %c0_75 = arith.constant 0 : index
    %87 = vector.load %arg4[%c8, %c0_74, %c0_75] : memref<25x64x144xbf16, #tpu.memory_space<vmem>>, vector<1x64x144xbf16>
    %88 = vector.shape_cast %87 : vector<1x64x144xbf16> to vector<64x144xbf16>
    %cst_76 = arith.constant dense<0.000000e+00> : vector<64x64xf32>
    %89 = tpu.matmul %88, %21, %cst_76 {dimension_numbers = #tpu.dot_dimension_numbers<[1], [0], [0], [1], [0, 0, 1, 1], [], []>} : vector<64x144xbf16>, vector<144x64xbf16>, vector<64x64xf32> -> vector<64x64xf32>
    %90 = arith.truncf %89 : vector<64x64xf32> to vector<64x64xbf16>
    %c8_77 = arith.constant 8 : index
    %c0_78 = arith.constant 0 : index
    %c0_79 = arith.constant 0 : index
    %91 = vector.load %arg5[%c8_77, %c0_78, %c0_79] : memref<25x64x64xbf16, #tpu.memory_space<vmem>>, vector<1x64x64xbf16>
    %92 = vector.shape_cast %91 : vector<1x64x64xbf16> to vector<64x64xbf16>
    %cst_80 = arith.constant dense<0.000000e+00> : vector<64x64xf32>
    %93 = tpu.matmul %90, %92, %cst_80 {dimension_numbers = #tpu.dot_dimension_numbers<[1], [0], [0], [1], [0, 0, 1, 1], [], []>} : vector<64x64xbf16>, vector<64x64xbf16>, vector<64x64xf32> -> vector<64x64xf32>
    %94 = arith.addf %86, %93 : vector<64x64xf32>
    %c9 = arith.constant 9 : index
    %c0_81 = arith.constant 0 : index
    %c0_82 = arith.constant 0 : index
    %95 = vector.load %arg4[%c9, %c0_81, %c0_82] : memref<25x64x144xbf16, #tpu.memory_space<vmem>>, vector<1x64x144xbf16>
    %96 = vector.shape_cast %95 : vector<1x64x144xbf16> to vector<64x144xbf16>
    %cst_83 = arith.constant dense<0.000000e+00> : vector<64x64xf32>
    %97 = tpu.matmul %96, %21, %cst_83 {dimension_numbers = #tpu.dot_dimension_numbers<[1], [0], [0], [1], [0, 0, 1, 1], [], []>} : vector<64x144xbf16>, vector<144x64xbf16>, vector<64x64xf32> -> vector<64x64xf32>
    %98 = arith.truncf %97 : vector<64x64xf32> to vector<64x64xbf16>
    %c9_84 = arith.constant 9 : index
    %c0_85 = arith.constant 0 : index
    %c0_86 = arith.constant 0 : index
    %99 = vector.load %arg5[%c9_84, %c0_85, %c0_86] : memref<25x64x64xbf16, #tpu.memory_space<vmem>>, vector<1x64x64xbf16>
    %100 = vector.shape_cast %99 : vector<1x64x64xbf16> to vector<64x64xbf16>
    %cst_87 = arith.constant dense<0.000000e+00> : vector<64x64xf32>
    %101 = tpu.matmul %98, %100, %cst_87 {dimension_numbers = #tpu.dot_dimension_numbers<[1], [0], [0], [1], [0, 0, 1, 1], [], []>} : vector<64x64xbf16>, vector<64x64xbf16>, vector<64x64xf32> -> vector<64x64xf32>
    %102 = arith.addf %94, %101 : vector<64x64xf32>
    %c10 = arith.constant 10 : index
    %c0_88 = arith.constant 0 : index
    %c0_89 = arith.constant 0 : index
    %103 = vector.load %arg4[%c10, %c0_88, %c0_89] : memref<25x64x144xbf16, #tpu.memory_space<vmem>>, vector<1x64x144xbf16>
    %104 = vector.shape_cast %103 : vector<1x64x144xbf16> to vector<64x144xbf16>
    %cst_90 = arith.constant dense<0.000000e+00> : vector<64x64xf32>
    %105 = tpu.matmul %104, %21, %cst_90 {dimension_numbers = #tpu.dot_dimension_numbers<[1], [0], [0], [1], [0, 0, 1, 1], [], []>} : vector<64x144xbf16>, vector<144x64xbf16>, vector<64x64xf32> -> vector<64x64xf32>
    %106 = arith.truncf %105 : vector<64x64xf32> to vector<64x64xbf16>
    %c10_91 = arith.constant 10 : index
    %c0_92 = arith.constant 0 : index
    %c0_93 = arith.constant 0 : index
    %107 = vector.load %arg5[%c10_91, %c0_92, %c0_93] : memref<25x64x64xbf16, #tpu.memory_space<vmem>>, vector<1x64x64xbf16>
    %108 = vector.shape_cast %107 : vector<1x64x64xbf16> to vector<64x64xbf16>
    %cst_94 = arith.constant dense<0.000000e+00> : vector<64x64xf32>
    %109 = tpu.matmul %106, %108, %cst_94 {dimension_numbers = #tpu.dot_dimension_numbers<[1], [0], [0], [1], [0, 0, 1, 1], [], []>} : vector<64x64xbf16>, vector<64x64xbf16>, vector<64x64xf32> -> vector<64x64xf32>
    %110 = arith.addf %102, %109 : vector<64x64xf32>
    %c11 = arith.constant 11 : index
    %c0_95 = arith.constant 0 : index
    %c0_96 = arith.constant 0 : index
    %111 = vector.load %arg4[%c11, %c0_95, %c0_96] : memref<25x64x144xbf16, #tpu.memory_space<vmem>>, vector<1x64x144xbf16>
    %112 = vector.shape_cast %111 : vector<1x64x144xbf16> to vector<64x144xbf16>
    %cst_97 = arith.constant dense<0.000000e+00> : vector<64x64xf32>
    %113 = tpu.matmul %112, %21, %cst_97 {dimension_numbers = #tpu.dot_dimension_numbers<[1], [0], [0], [1], [0, 0, 1, 1], [], []>} : vector<64x144xbf16>, vector<144x64xbf16>, vector<64x64xf32> -> vector<64x64xf32>
    %114 = arith.truncf %113 : vector<64x64xf32> to vector<64x64xbf16>
    %c11_98 = arith.constant 11 : index
    %c0_99 = arith.constant 0 : index
    %c0_100 = arith.constant 0 : index
    %115 = vector.load %arg5[%c11_98, %c0_99, %c0_100] : memref<25x64x64xbf16, #tpu.memory_space<vmem>>, vector<1x64x64xbf16>
    %116 = vector.shape_cast %115 : vector<1x64x64xbf16> to vector<64x64xbf16>
    %cst_101 = arith.constant dense<0.000000e+00> : vector<64x64xf32>
    %117 = tpu.matmul %114, %116, %cst_101 {dimension_numbers = #tpu.dot_dimension_numbers<[1], [0], [0], [1], [0, 0, 1, 1], [], []>} : vector<64x64xbf16>, vector<64x64xbf16>, vector<64x64xf32> -> vector<64x64xf32>
    %118 = arith.addf %110, %117 : vector<64x64xf32>
    %c12 = arith.constant 12 : index
    %c0_102 = arith.constant 0 : index
    %c0_103 = arith.constant 0 : index
    %119 = vector.load %arg4[%c12, %c0_102, %c0_103] : memref<25x64x144xbf16, #tpu.memory_space<vmem>>, vector<1x64x144xbf16>
    %120 = vector.shape_cast %119 : vector<1x64x144xbf16> to vector<64x144xbf16>
    %cst_104 = arith.constant dense<0.000000e+00> : vector<64x64xf32>
    %121 = tpu.matmul %120, %21, %cst_104 {dimension_numbers = #tpu.dot_dimension_numbers<[1], [0], [0], [1], [0, 0, 1, 1], [], []>} : vector<64x144xbf16>, vector<144x64xbf16>, vector<64x64xf32> -> vector<64x64xf32>
    %122 = arith.truncf %121 : vector<64x64xf32> to vector<64x64xbf16>
    %c12_105 = arith.constant 12 : index
    %c0_106 = arith.constant 0 : index
    %c0_107 = arith.constant 0 : index
    %123 = vector.load %arg5[%c12_105, %c0_106, %c0_107] : memref<25x64x64xbf16, #tpu.memory_space<vmem>>, vector<1x64x64xbf16>
    %124 = vector.shape_cast %123 : vector<1x64x64xbf16> to vector<64x64xbf16>
    %cst_108 = arith.constant dense<0.000000e+00> : vector<64x64xf32>
    %125 = tpu.matmul %122, %124, %cst_108 {dimension_numbers = #tpu.dot_dimension_numbers<[1], [0], [0], [1], [0, 0, 1, 1], [], []>} : vector<64x64xbf16>, vector<64x64xbf16>, vector<64x64xf32> -> vector<64x64xf32>
    %126 = arith.addf %118, %125 : vector<64x64xf32>
    %c13 = arith.constant 13 : index
    %c0_109 = arith.constant 0 : index
    %c0_110 = arith.constant 0 : index
    %127 = vector.load %arg4[%c13, %c0_109, %c0_110] : memref<25x64x144xbf16, #tpu.memory_space<vmem>>, vector<1x64x144xbf16>
    %128 = vector.shape_cast %127 : vector<1x64x144xbf16> to vector<64x144xbf16>
    %cst_111 = arith.constant dense<0.000000e+00> : vector<64x64xf32>
    %129 = tpu.matmul %128, %21, %cst_111 {dimension_numbers = #tpu.dot_dimension_numbers<[1], [0], [0], [1], [0, 0, 1, 1], [], []>} : vector<64x144xbf16>, vector<144x64xbf16>, vector<64x64xf32> -> vector<64x64xf32>
    %130 = arith.truncf %129 : vector<64x64xf32> to vector<64x64xbf16>
    %c13_112 = arith.constant 13 : index
    %c0_113 = arith.constant 0 : index
    %c0_114 = arith.constant 0 : index
    %131 = vector.load %arg5[%c13_112, %c0_113, %c0_114] : memref<25x64x64xbf16, #tpu.memory_space<vmem>>, vector<1x64x64xbf16>
    %132 = vector.shape_cast %131 : vector<1x64x64xbf16> to vector<64x64xbf16>
    %cst_115 = arith.constant dense<0.000000e+00> : vector<64x64xf32>
    %133 = tpu.matmul %130, %132, %cst_115 {dimension_numbers = #tpu.dot_dimension_numbers<[1], [0], [0], [1], [0, 0, 1, 1], [], []>} : vector<64x64xbf16>, vector<64x64xbf16>, vector<64x64xf32> -> vector<64x64xf32>
    %134 = arith.addf %126, %133 : vector<64x64xf32>
    %c14 = arith.constant 14 : index
    %c0_116 = arith.constant 0 : index
    %c0_117 = arith.constant 0 : index
    %135 = vector.load %arg4[%c14, %c0_116, %c0_117] : memref<25x64x144xbf16, #tpu.memory_space<vmem>>, vector<1x64x144xbf16>
    %136 = vector.shape_cast %135 : vector<1x64x144xbf16> to vector<64x144xbf16>
    %cst_118 = arith.constant dense<0.000000e+00> : vector<64x64xf32>
    %137 = tpu.matmul %136, %21, %cst_118 {dimension_numbers = #tpu.dot_dimension_numbers<[1], [0], [0], [1], [0, 0, 1, 1], [], []>} : vector<64x144xbf16>, vector<144x64xbf16>, vector<64x64xf32> -> vector<64x64xf32>
    %138 = arith.truncf %137 : vector<64x64xf32> to vector<64x64xbf16>
    %c14_119 = arith.constant 14 : index
    %c0_120 = arith.constant 0 : index
    %c0_121 = arith.constant 0 : index
    %139 = vector.load %arg5[%c14_119, %c0_120, %c0_121] : memref<25x64x64xbf16, #tpu.memory_space<vmem>>, vector<1x64x64xbf16>
    %140 = vector.shape_cast %139 : vector<1x64x64xbf16> to vector<64x64xbf16>
    %cst_122 = arith.constant dense<0.000000e+00> : vector<64x64xf32>
    %141 = tpu.matmul %138, %140, %cst_122 {dimension_numbers = #tpu.dot_dimension_numbers<[1], [0], [0], [1], [0, 0, 1, 1], [], []>} : vector<64x64xbf16>, vector<64x64xbf16>, vector<64x64xf32> -> vector<64x64xf32>
    %142 = arith.addf %134, %141 : vector<64x64xf32>
    %c15 = arith.constant 15 : index
    %c0_123 = arith.constant 0 : index
    %c0_124 = arith.constant 0 : index
    %143 = vector.load %arg4[%c15, %c0_123, %c0_124] : memref<25x64x144xbf16, #tpu.memory_space<vmem>>, vector<1x64x144xbf16>
    %144 = vector.shape_cast %143 : vector<1x64x144xbf16> to vector<64x144xbf16>
    %cst_125 = arith.constant dense<0.000000e+00> : vector<64x64xf32>
    %145 = tpu.matmul %144, %21, %cst_125 {dimension_numbers = #tpu.dot_dimension_numbers<[1], [0], [0], [1], [0, 0, 1, 1], [], []>} : vector<64x144xbf16>, vector<144x64xbf16>, vector<64x64xf32> -> vector<64x64xf32>
    %146 = arith.truncf %145 : vector<64x64xf32> to vector<64x64xbf16>
    %c15_126 = arith.constant 15 : index
    %c0_127 = arith.constant 0 : index
    %c0_128 = arith.constant 0 : index
    %147 = vector.load %arg5[%c15_126, %c0_127, %c0_128] : memref<25x64x64xbf16, #tpu.memory_space<vmem>>, vector<1x64x64xbf16>
    %148 = vector.shape_cast %147 : vector<1x64x64xbf16> to vector<64x64xbf16>
    %cst_129 = arith.constant dense<0.000000e+00> : vector<64x64xf32>
    %149 = tpu.matmul %146, %148, %cst_129 {dimension_numbers = #tpu.dot_dimension_numbers<[1], [0], [0], [1], [0, 0, 1, 1], [], []>} : vector<64x64xbf16>, vector<64x64xbf16>, vector<64x64xf32> -> vector<64x64xf32>
    %150 = arith.addf %142, %149 : vector<64x64xf32>
    %c16 = arith.constant 16 : index
    %c0_130 = arith.constant 0 : index
    %c0_131 = arith.constant 0 : index
    %151 = vector.load %arg4[%c16, %c0_130, %c0_131] : memref<25x64x144xbf16, #tpu.memory_space<vmem>>, vector<1x64x144xbf16>
    %152 = vector.shape_cast %151 : vector<1x64x144xbf16> to vector<64x144xbf16>
    %cst_132 = arith.constant dense<0.000000e+00> : vector<64x64xf32>
    %153 = tpu.matmul %152, %21, %cst_132 {dimension_numbers = #tpu.dot_dimension_numbers<[1], [0], [0], [1], [0, 0, 1, 1], [], []>} : vector<64x144xbf16>, vector<144x64xbf16>, vector<64x64xf32> -> vector<64x64xf32>
    %154 = arith.truncf %153 : vector<64x64xf32> to vector<64x64xbf16>
    %c16_133 = arith.constant 16 : index
    %c0_134 = arith.constant 0 : index
    %c0_135 = arith.constant 0 : index
    %155 = vector.load %arg5[%c16_133, %c0_134, %c0_135] : memref<25x64x64xbf16, #tpu.memory_space<vmem>>, vector<1x64x64xbf16>
    %156 = vector.shape_cast %155 : vector<1x64x64xbf16> to vector<64x64xbf16>
    %cst_136 = arith.constant dense<0.000000e+00> : vector<64x64xf32>
    %157 = tpu.matmul %154, %156, %cst_136 {dimension_numbers = #tpu.dot_dimension_numbers<[1], [0], [0], [1], [0, 0, 1, 1], [], []>} : vector<64x64xbf16>, vector<64x64xbf16>, vector<64x64xf32> -> vector<64x64xf32>
    %158 = arith.addf %150, %157 : vector<64x64xf32>
    %c17 = arith.constant 17 : index
    %c0_137 = arith.constant 0 : index
    %c0_138 = arith.constant 0 : index
    %159 = vector.load %arg4[%c17, %c0_137, %c0_138] : memref<25x64x144xbf16, #tpu.memory_space<vmem>>, vector<1x64x144xbf16>
    %160 = vector.shape_cast %159 : vector<1x64x144xbf16> to vector<64x144xbf16>
    %cst_139 = arith.constant dense<0.000000e+00> : vector<64x64xf32>
    %161 = tpu.matmul %160, %21, %cst_139 {dimension_numbers = #tpu.dot_dimension_numbers<[1], [0], [0], [1], [0, 0, 1, 1], [], []>} : vector<64x144xbf16>, vector<144x64xbf16>, vector<64x64xf32> -> vector<64x64xf32>
    %162 = arith.truncf %161 : vector<64x64xf32> to vector<64x64xbf16>
    %c17_140 = arith.constant 17 : index
    %c0_141 = arith.constant 0 : index
    %c0_142 = arith.constant 0 : index
    %163 = vector.load %arg5[%c17_140, %c0_141, %c0_142] : memref<25x64x64xbf16, #tpu.memory_space<vmem>>, vector<1x64x64xbf16>
    %164 = vector.shape_cast %163 : vector<1x64x64xbf16> to vector<64x64xbf16>
    %cst_143 = arith.constant dense<0.000000e+00> : vector<64x64xf32>
    %165 = tpu.matmul %162, %164, %cst_143 {dimension_numbers = #tpu.dot_dimension_numbers<[1], [0], [0], [1], [0, 0, 1, 1], [], []>} : vector<64x64xbf16>, vector<64x64xbf16>, vector<64x64xf32> -> vector<64x64xf32>
    %166 = arith.addf %158, %165 : vector<64x64xf32>
    %c18 = arith.constant 18 : index
    %c0_144 = arith.constant 0 : index
    %c0_145 = arith.constant 0 : index
    %167 = vector.load %arg4[%c18, %c0_144, %c0_145] : memref<25x64x144xbf16, #tpu.memory_space<vmem>>, vector<1x64x144xbf16>
    %168 = vector.shape_cast %167 : vector<1x64x144xbf16> to vector<64x144xbf16>
    %cst_146 = arith.constant dense<0.000000e+00> : vector<64x64xf32>
    %169 = tpu.matmul %168, %21, %cst_146 {dimension_numbers = #tpu.dot_dimension_numbers<[1], [0], [0], [1], [0, 0, 1, 1], [], []>} : vector<64x144xbf16>, vector<144x64xbf16>, vector<64x64xf32> -> vector<64x64xf32>
    %170 = arith.truncf %169 : vector<64x64xf32> to vector<64x64xbf16>
    %c18_147 = arith.constant 18 : index
    %c0_148 = arith.constant 0 : index
    %c0_149 = arith.constant 0 : index
    %171 = vector.load %arg5[%c18_147, %c0_148, %c0_149] : memref<25x64x64xbf16, #tpu.memory_space<vmem>>, vector<1x64x64xbf16>
    %172 = vector.shape_cast %171 : vector<1x64x64xbf16> to vector<64x64xbf16>
    %cst_150 = arith.constant dense<0.000000e+00> : vector<64x64xf32>
    %173 = tpu.matmul %170, %172, %cst_150 {dimension_numbers = #tpu.dot_dimension_numbers<[1], [0], [0], [1], [0, 0, 1, 1], [], []>} : vector<64x64xbf16>, vector<64x64xbf16>, vector<64x64xf32> -> vector<64x64xf32>
    %174 = arith.addf %166, %173 : vector<64x64xf32>
    %c19 = arith.constant 19 : index
    %c0_151 = arith.constant 0 : index
    %c0_152 = arith.constant 0 : index
    %175 = vector.load %arg4[%c19, %c0_151, %c0_152] : memref<25x64x144xbf16, #tpu.memory_space<vmem>>, vector<1x64x144xbf16>
    %176 = vector.shape_cast %175 : vector<1x64x144xbf16> to vector<64x144xbf16>
    %cst_153 = arith.constant dense<0.000000e+00> : vector<64x64xf32>
    %177 = tpu.matmul %176, %21, %cst_153 {dimension_numbers = #tpu.dot_dimension_numbers<[1], [0], [0], [1], [0, 0, 1, 1], [], []>} : vector<64x144xbf16>, vector<144x64xbf16>, vector<64x64xf32> -> vector<64x64xf32>
    %178 = arith.truncf %177 : vector<64x64xf32> to vector<64x64xbf16>
    %c19_154 = arith.constant 19 : index
    %c0_155 = arith.constant 0 : index
    %c0_156 = arith.constant 0 : index
    %179 = vector.load %arg5[%c19_154, %c0_155, %c0_156] : memref<25x64x64xbf16, #tpu.memory_space<vmem>>, vector<1x64x64xbf16>
    %180 = vector.shape_cast %179 : vector<1x64x64xbf16> to vector<64x64xbf16>
    %cst_157 = arith.constant dense<0.000000e+00> : vector<64x64xf32>
    %181 = tpu.matmul %178, %180, %cst_157 {dimension_numbers = #tpu.dot_dimension_numbers<[1], [0], [0], [1], [0, 0, 1, 1], [], []>} : vector<64x64xbf16>, vector<64x64xbf16>, vector<64x64xf32> -> vector<64x64xf32>
    %182 = arith.addf %174, %181 : vector<64x64xf32>
    %c20 = arith.constant 20 : index
    %c0_158 = arith.constant 0 : index
    %c0_159 = arith.constant 0 : index
    %183 = vector.load %arg4[%c20, %c0_158, %c0_159] : memref<25x64x144xbf16, #tpu.memory_space<vmem>>, vector<1x64x144xbf16>
    %184 = vector.shape_cast %183 : vector<1x64x144xbf16> to vector<64x144xbf16>
    %cst_160 = arith.constant dense<0.000000e+00> : vector<64x64xf32>
    %185 = tpu.matmul %184, %21, %cst_160 {dimension_numbers = #tpu.dot_dimension_numbers<[1], [0], [0], [1], [0, 0, 1, 1], [], []>} : vector<64x144xbf16>, vector<144x64xbf16>, vector<64x64xf32> -> vector<64x64xf32>
    %186 = arith.truncf %185 : vector<64x64xf32> to vector<64x64xbf16>
    %c20_161 = arith.constant 20 : index
    %c0_162 = arith.constant 0 : index
    %c0_163 = arith.constant 0 : index
    %187 = vector.load %arg5[%c20_161, %c0_162, %c0_163] : memref<25x64x64xbf16, #tpu.memory_space<vmem>>, vector<1x64x64xbf16>
    %188 = vector.shape_cast %187 : vector<1x64x64xbf16> to vector<64x64xbf16>
    %cst_164 = arith.constant dense<0.000000e+00> : vector<64x64xf32>
    %189 = tpu.matmul %186, %188, %cst_164 {dimension_numbers = #tpu.dot_dimension_numbers<[1], [0], [0], [1], [0, 0, 1, 1], [], []>} : vector<64x64xbf16>, vector<64x64xbf16>, vector<64x64xf32> -> vector<64x64xf32>
    %190 = arith.addf %182, %189 : vector<64x64xf32>
    %c21 = arith.constant 21 : index
    %c0_165 = arith.constant 0 : index
    %c0_166 = arith.constant 0 : index
    %191 = vector.load %arg4[%c21, %c0_165, %c0_166] : memref<25x64x144xbf16, #tpu.memory_space<vmem>>, vector<1x64x144xbf16>
    %192 = vector.shape_cast %191 : vector<1x64x144xbf16> to vector<64x144xbf16>
    %cst_167 = arith.constant dense<0.000000e+00> : vector<64x64xf32>
    %193 = tpu.matmul %192, %21, %cst_167 {dimension_numbers = #tpu.dot_dimension_numbers<[1], [0], [0], [1], [0, 0, 1, 1], [], []>} : vector<64x144xbf16>, vector<144x64xbf16>, vector<64x64xf32> -> vector<64x64xf32>
    %194 = arith.truncf %193 : vector<64x64xf32> to vector<64x64xbf16>
    %c21_168 = arith.constant 21 : index
    %c0_169 = arith.constant 0 : index
    %c0_170 = arith.constant 0 : index
    %195 = vector.load %arg5[%c21_168, %c0_169, %c0_170] : memref<25x64x64xbf16, #tpu.memory_space<vmem>>, vector<1x64x64xbf16>
    %196 = vector.shape_cast %195 : vector<1x64x64xbf16> to vector<64x64xbf16>
    %cst_171 = arith.constant dense<0.000000e+00> : vector<64x64xf32>
    %197 = tpu.matmul %194, %196, %cst_171 {dimension_numbers = #tpu.dot_dimension_numbers<[1], [0], [0], [1], [0, 0, 1, 1], [], []>} : vector<64x64xbf16>, vector<64x64xbf16>, vector<64x64xf32> -> vector<64x64xf32>
    %198 = arith.addf %190, %197 : vector<64x64xf32>
    %c22 = arith.constant 22 : index
    %c0_172 = arith.constant 0 : index
    %c0_173 = arith.constant 0 : index
    %199 = vector.load %arg4[%c22, %c0_172, %c0_173] : memref<25x64x144xbf16, #tpu.memory_space<vmem>>, vector<1x64x144xbf16>
    %200 = vector.shape_cast %199 : vector<1x64x144xbf16> to vector<64x144xbf16>
    %cst_174 = arith.constant dense<0.000000e+00> : vector<64x64xf32>
    %201 = tpu.matmul %200, %21, %cst_174 {dimension_numbers = #tpu.dot_dimension_numbers<[1], [0], [0], [1], [0, 0, 1, 1], [], []>} : vector<64x144xbf16>, vector<144x64xbf16>, vector<64x64xf32> -> vector<64x64xf32>
    %202 = arith.truncf %201 : vector<64x64xf32> to vector<64x64xbf16>
    %c22_175 = arith.constant 22 : index
    %c0_176 = arith.constant 0 : index
    %c0_177 = arith.constant 0 : index
    %203 = vector.load %arg5[%c22_175, %c0_176, %c0_177] : memref<25x64x64xbf16, #tpu.memory_space<vmem>>, vector<1x64x64xbf16>
    %204 = vector.shape_cast %203 : vector<1x64x64xbf16> to vector<64x64xbf16>
    %cst_178 = arith.constant dense<0.000000e+00> : vector<64x64xf32>
    %205 = tpu.matmul %202, %204, %cst_178 {dimension_numbers = #tpu.dot_dimension_numbers<[1], [0], [0], [1], [0, 0, 1, 1], [], []>} : vector<64x64xbf16>, vector<64x64xbf16>, vector<64x64xf32> -> vector<64x64xf32>
    %206 = arith.addf %198, %205 : vector<64x64xf32>
    %c23 = arith.constant 23 : index
    %c0_179 = arith.constant 0 : index
    %c0_180 = arith.constant 0 : index
    %207 = vector.load %arg4[%c23, %c0_179, %c0_180] : memref<25x64x144xbf16, #tpu.memory_space<vmem>>, vector<1x64x144xbf16>
    %208 = vector.shape_cast %207 : vector<1x64x144xbf16> to vector<64x144xbf16>
    %cst_181 = arith.constant dense<0.000000e+00> : vector<64x64xf32>
    %209 = tpu.matmul %208, %21, %cst_181 {dimension_numbers = #tpu.dot_dimension_numbers<[1], [0], [0], [1], [0, 0, 1, 1], [], []>} : vector<64x144xbf16>, vector<144x64xbf16>, vector<64x64xf32> -> vector<64x64xf32>
    %210 = arith.truncf %209 : vector<64x64xf32> to vector<64x64xbf16>
    %c23_182 = arith.constant 23 : index
    %c0_183 = arith.constant 0 : index
    %c0_184 = arith.constant 0 : index
    %211 = vector.load %arg5[%c23_182, %c0_183, %c0_184] : memref<25x64x64xbf16, #tpu.memory_space<vmem>>, vector<1x64x64xbf16>
    %212 = vector.shape_cast %211 : vector<1x64x64xbf16> to vector<64x64xbf16>
    %cst_185 = arith.constant dense<0.000000e+00> : vector<64x64xf32>
    %213 = tpu.matmul %210, %212, %cst_185 {dimension_numbers = #tpu.dot_dimension_numbers<[1], [0], [0], [1], [0, 0, 1, 1], [], []>} : vector<64x64xbf16>, vector<64x64xbf16>, vector<64x64xf32> -> vector<64x64xf32>
    %214 = arith.addf %206, %213 : vector<64x64xf32>
    %c24 = arith.constant 24 : index
    %c0_186 = arith.constant 0 : index
    %c0_187 = arith.constant 0 : index
    %215 = vector.load %arg4[%c24, %c0_186, %c0_187] : memref<25x64x144xbf16, #tpu.memory_space<vmem>>, vector<1x64x144xbf16>
    %216 = vector.shape_cast %215 : vector<1x64x144xbf16> to vector<64x144xbf16>
    %cst_188 = arith.constant dense<0.000000e+00> : vector<64x64xf32>
    %217 = tpu.matmul %216, %21, %cst_188 {dimension_numbers = #tpu.dot_dimension_numbers<[1], [0], [0], [1], [0, 0, 1, 1], [], []>} : vector<64x144xbf16>, vector<144x64xbf16>, vector<64x64xf32> -> vector<64x64xf32>
    %218 = arith.truncf %217 : vector<64x64xf32> to vector<64x64xbf16>
    %c24_189 = arith.constant 24 : index
    %c0_190 = arith.constant 0 : index
    %c0_191 = arith.constant 0 : index
    %219 = vector.load %arg5[%c24_189, %c0_190, %c0_191] : memref<25x64x64xbf16, #tpu.memory_space<vmem>>, vector<1x64x64xbf16>
    %220 = vector.shape_cast %219 : vector<1x64x64xbf16> to vector<64x64xbf16>
    %cst_192 = arith.constant dense<0.000000e+00> : vector<64x64xf32>
    %221 = tpu.matmul %218, %220, %cst_192 {dimension_numbers = #tpu.dot_dimension_numbers<[1], [0], [0], [1], [0, 0, 1, 1], [], []>} : vector<64x64xbf16>, vector<64x64xbf16>, vector<64x64xf32> -> vector<64x64xf32>
    %222 = arith.addf %214, %221 : vector<64x64xf32>
    %c0_193 = arith.constant 0 : index
    %c0_194 = arith.constant 0 : index
    %223 = vector.load %arg6[%c0_193, %c0_194] : memref<1x64xf32, #tpu.memory_space<vmem>>, vector<1x64xf32>
    %224 = vector.broadcast %223 : vector<1x64xf32> to vector<64x64xf32>
    %225 = arith.addf %222, %224 : vector<64x64xf32>
    %cst_195 = arith.constant 0.000000e+00 : f32
    %226 = vector.broadcast %cst_195 : f32 to vector<64x64xf32>
    %227 = arith.maximumf %225, %226 : vector<64x64xf32>
    %228 = vector.extract_strided_slice %227 {offsets = [0, 0], sizes = [16, 64], strides = [1, 1]} : vector<64x64xf32> to vector<16x64xf32>
    %229 = vector.extract_strided_slice %227 {offsets = [16, 0], sizes = [16, 64], strides = [1, 1]} : vector<64x64xf32> to vector<16x64xf32>
    %230 = arith.maximumf %228, %229 : vector<16x64xf32>
    %231 = vector.extract_strided_slice %227 {offsets = [32, 0], sizes = [16, 64], strides = [1, 1]} : vector<64x64xf32> to vector<16x64xf32>
    %232 = vector.extract_strided_slice %227 {offsets = [48, 0], sizes = [16, 64], strides = [1, 1]} : vector<64x64xf32> to vector<16x64xf32>
    %233 = arith.maximumf %231, %232 : vector<16x64xf32>
    %234 = arith.maximumf %230, %233 : vector<16x64xf32>
    %c0_196 = arith.constant 0 : index
    %c0_197 = arith.constant 0 : index
    %235 = vector.load %arg8[%c0_196, %c0_197] : memref<1x384xf32, #tpu.memory_space<vmem>>, vector<1x384xf32>
    %236 = vector.extract_strided_slice %234 {offsets = [0, 0], sizes = [1, 64], strides = [1, 1]} : vector<16x64xf32> to vector<1x64xf32>
    %237 = arith.truncf %236 : vector<1x64xf32> to vector<1x64xbf16>
    %c0_198 = arith.constant 0 : index
    %c0_199 = arith.constant 0 : index
    %c0_200 = arith.constant 0 : index
    %238 = vector.load %arg7[%c0_198, %c0_199, %c0_200] : memref<16x64x384xbf16, #tpu.memory_space<vmem>>, vector<1x64x384xbf16>
    %239 = vector.shape_cast %238 : vector<1x64x384xbf16> to vector<64x384xbf16>
    %cst_201 = arith.constant dense<0.000000e+00> : vector<1x384xf32>
    %240 = tpu.matmul %237, %239, %cst_201 {dimension_numbers = #tpu.dot_dimension_numbers<[1], [0], [0], [1], [0, 0, 1, 1], [], []>} : vector<1x64xbf16>, vector<64x384xbf16>, vector<1x384xf32> -> vector<1x384xf32>
    %241 = arith.addf %235, %240 : vector<1x384xf32>
    %242 = vector.extract_strided_slice %234 {offsets = [1, 0], sizes = [1, 64], strides = [1, 1]} : vector<16x64xf32> to vector<1x64xf32>
    %243 = arith.truncf %242 : vector<1x64xf32> to vector<1x64xbf16>
    %c1_202 = arith.constant 1 : index
    %c0_203 = arith.constant 0 : index
    %c0_204 = arith.constant 0 : index
    %244 = vector.load %arg7[%c1_202, %c0_203, %c0_204] : memref<16x64x384xbf16, #tpu.memory_space<vmem>>, vector<1x64x384xbf16>
    %245 = vector.shape_cast %244 : vector<1x64x384xbf16> to vector<64x384xbf16>
    %cst_205 = arith.constant dense<0.000000e+00> : vector<1x384xf32>
    %246 = tpu.matmul %243, %245, %cst_205 {dimension_numbers = #tpu.dot_dimension_numbers<[1], [0], [0], [1], [0, 0, 1, 1], [], []>} : vector<1x64xbf16>, vector<64x384xbf16>, vector<1x384xf32> -> vector<1x384xf32>
    %247 = arith.addf %241, %246 : vector<1x384xf32>
    %248 = vector.extract_strided_slice %234 {offsets = [2, 0], sizes = [1, 64], strides = [1, 1]} : vector<16x64xf32> to vector<1x64xf32>
    %249 = arith.truncf %248 : vector<1x64xf32> to vector<1x64xbf16>
    %c2_206 = arith.constant 2 : index
    %c0_207 = arith.constant 0 : index
    %c0_208 = arith.constant 0 : index
    %250 = vector.load %arg7[%c2_206, %c0_207, %c0_208] : memref<16x64x384xbf16, #tpu.memory_space<vmem>>, vector<1x64x384xbf16>
    %251 = vector.shape_cast %250 : vector<1x64x384xbf16> to vector<64x384xbf16>
    %cst_209 = arith.constant dense<0.000000e+00> : vector<1x384xf32>
    %252 = tpu.matmul %249, %251, %cst_209 {dimension_numbers = #tpu.dot_dimension_numbers<[1], [0], [0], [1], [0, 0, 1, 1], [], []>} : vector<1x64xbf16>, vector<64x384xbf16>, vector<1x384xf32> -> vector<1x384xf32>
    %253 = arith.addf %247, %252 : vector<1x384xf32>
    %254 = vector.extract_strided_slice %234 {offsets = [3, 0], sizes = [1, 64], strides = [1, 1]} : vector<16x64xf32> to vector<1x64xf32>
    %255 = arith.truncf %254 : vector<1x64xf32> to vector<1x64xbf16>
    %c3_210 = arith.constant 3 : index
    %c0_211 = arith.constant 0 : index
    %c0_212 = arith.constant 0 : index
    %256 = vector.load %arg7[%c3_210, %c0_211, %c0_212] : memref<16x64x384xbf16, #tpu.memory_space<vmem>>, vector<1x64x384xbf16>
    %257 = vector.shape_cast %256 : vector<1x64x384xbf16> to vector<64x384xbf16>
    %cst_213 = arith.constant dense<0.000000e+00> : vector<1x384xf32>
    %258 = tpu.matmul %255, %257, %cst_213 {dimension_numbers = #tpu.dot_dimension_numbers<[1], [0], [0], [1], [0, 0, 1, 1], [], []>} : vector<1x64xbf16>, vector<64x384xbf16>, vector<1x384xf32> -> vector<1x384xf32>
    %259 = arith.addf %253, %258 : vector<1x384xf32>
    %260 = vector.extract_strided_slice %234 {offsets = [4, 0], sizes = [1, 64], strides = [1, 1]} : vector<16x64xf32> to vector<1x64xf32>
    %261 = arith.truncf %260 : vector<1x64xf32> to vector<1x64xbf16>
    %c4_214 = arith.constant 4 : index
    %c0_215 = arith.constant 0 : index
    %c0_216 = arith.constant 0 : index
    %262 = vector.load %arg7[%c4_214, %c0_215, %c0_216] : memref<16x64x384xbf16, #tpu.memory_space<vmem>>, vector<1x64x384xbf16>
    %263 = vector.shape_cast %262 : vector<1x64x384xbf16> to vector<64x384xbf16>
    %cst_217 = arith.constant dense<0.000000e+00> : vector<1x384xf32>
    %264 = tpu.matmul %261, %263, %cst_217 {dimension_numbers = #tpu.dot_dimension_numbers<[1], [0], [0], [1], [0, 0, 1, 1], [], []>} : vector<1x64xbf16>, vector<64x384xbf16>, vector<1x384xf32> -> vector<1x384xf32>
    %265 = arith.addf %259, %264 : vector<1x384xf32>
    %266 = vector.extract_strided_slice %234 {offsets = [5, 0], sizes = [1, 64], strides = [1, 1]} : vector<16x64xf32> to vector<1x64xf32>
    %267 = arith.truncf %266 : vector<1x64xf32> to vector<1x64xbf16>
    %c5_218 = arith.constant 5 : index
    %c0_219 = arith.constant 0 : index
    %c0_220 = arith.constant 0 : index
    %268 = vector.load %arg7[%c5_218, %c0_219, %c0_220] : memref<16x64x384xbf16, #tpu.memory_space<vmem>>, vector<1x64x384xbf16>
    %269 = vector.shape_cast %268 : vector<1x64x384xbf16> to vector<64x384xbf16>
    %cst_221 = arith.constant dense<0.000000e+00> : vector<1x384xf32>
    %270 = tpu.matmul %267, %269, %cst_221 {dimension_numbers = #tpu.dot_dimension_numbers<[1], [0], [0], [1], [0, 0, 1, 1], [], []>} : vector<1x64xbf16>, vector<64x384xbf16>, vector<1x384xf32> -> vector<1x384xf32>
    %271 = arith.addf %265, %270 : vector<1x384xf32>
    %272 = vector.extract_strided_slice %234 {offsets = [6, 0], sizes = [1, 64], strides = [1, 1]} : vector<16x64xf32> to vector<1x64xf32>
    %273 = arith.truncf %272 : vector<1x64xf32> to vector<1x64xbf16>
    %c6_222 = arith.constant 6 : index
    %c0_223 = arith.constant 0 : index
    %c0_224 = arith.constant 0 : index
    %274 = vector.load %arg7[%c6_222, %c0_223, %c0_224] : memref<16x64x384xbf16, #tpu.memory_space<vmem>>, vector<1x64x384xbf16>
    %275 = vector.shape_cast %274 : vector<1x64x384xbf16> to vector<64x384xbf16>
    %cst_225 = arith.constant dense<0.000000e+00> : vector<1x384xf32>
    %276 = tpu.matmul %273, %275, %cst_225 {dimension_numbers = #tpu.dot_dimension_numbers<[1], [0], [0], [1], [0, 0, 1, 1], [], []>} : vector<1x64xbf16>, vector<64x384xbf16>, vector<1x384xf32> -> vector<1x384xf32>
    %277 = arith.addf %271, %276 : vector<1x384xf32>
    %278 = vector.extract_strided_slice %234 {offsets = [7, 0], sizes = [1, 64], strides = [1, 1]} : vector<16x64xf32> to vector<1x64xf32>
    %279 = arith.truncf %278 : vector<1x64xf32> to vector<1x64xbf16>
    %c7_226 = arith.constant 7 : index
    %c0_227 = arith.constant 0 : index
    %c0_228 = arith.constant 0 : index
    %280 = vector.load %arg7[%c7_226, %c0_227, %c0_228] : memref<16x64x384xbf16, #tpu.memory_space<vmem>>, vector<1x64x384xbf16>
    %281 = vector.shape_cast %280 : vector<1x64x384xbf16> to vector<64x384xbf16>
    %cst_229 = arith.constant dense<0.000000e+00> : vector<1x384xf32>
    %282 = tpu.matmul %279, %281, %cst_229 {dimension_numbers = #tpu.dot_dimension_numbers<[1], [0], [0], [1], [0, 0, 1, 1], [], []>} : vector<1x64xbf16>, vector<64x384xbf16>, vector<1x384xf32> -> vector<1x384xf32>
    %283 = arith.addf %277, %282 : vector<1x384xf32>
    %284 = vector.extract_strided_slice %234 {offsets = [8, 0], sizes = [1, 64], strides = [1, 1]} : vector<16x64xf32> to vector<1x64xf32>
    %285 = arith.truncf %284 : vector<1x64xf32> to vector<1x64xbf16>
    %c8_230 = arith.constant 8 : index
    %c0_231 = arith.constant 0 : index
    %c0_232 = arith.constant 0 : index
    %286 = vector.load %arg7[%c8_230, %c0_231, %c0_232] : memref<16x64x384xbf16, #tpu.memory_space<vmem>>, vector<1x64x384xbf16>
    %287 = vector.shape_cast %286 : vector<1x64x384xbf16> to vector<64x384xbf16>
    %cst_233 = arith.constant dense<0.000000e+00> : vector<1x384xf32>
    %288 = tpu.matmul %285, %287, %cst_233 {dimension_numbers = #tpu.dot_dimension_numbers<[1], [0], [0], [1], [0, 0, 1, 1], [], []>} : vector<1x64xbf16>, vector<64x384xbf16>, vector<1x384xf32> -> vector<1x384xf32>
    %289 = arith.addf %283, %288 : vector<1x384xf32>
    %290 = vector.extract_strided_slice %234 {offsets = [9, 0], sizes = [1, 64], strides = [1, 1]} : vector<16x64xf32> to vector<1x64xf32>
    %291 = arith.truncf %290 : vector<1x64xf32> to vector<1x64xbf16>
    %c9_234 = arith.constant 9 : index
    %c0_235 = arith.constant 0 : index
    %c0_236 = arith.constant 0 : index
    %292 = vector.load %arg7[%c9_234, %c0_235, %c0_236] : memref<16x64x384xbf16, #tpu.memory_space<vmem>>, vector<1x64x384xbf16>
    %293 = vector.shape_cast %292 : vector<1x64x384xbf16> to vector<64x384xbf16>
    %cst_237 = arith.constant dense<0.000000e+00> : vector<1x384xf32>
    %294 = tpu.matmul %291, %293, %cst_237 {dimension_numbers = #tpu.dot_dimension_numbers<[1], [0], [0], [1], [0, 0, 1, 1], [], []>} : vector<1x64xbf16>, vector<64x384xbf16>, vector<1x384xf32> -> vector<1x384xf32>
    %295 = arith.addf %289, %294 : vector<1x384xf32>
    %296 = vector.extract_strided_slice %234 {offsets = [10, 0], sizes = [1, 64], strides = [1, 1]} : vector<16x64xf32> to vector<1x64xf32>
    %297 = arith.truncf %296 : vector<1x64xf32> to vector<1x64xbf16>
    %c10_238 = arith.constant 10 : index
    %c0_239 = arith.constant 0 : index
    %c0_240 = arith.constant 0 : index
    %298 = vector.load %arg7[%c10_238, %c0_239, %c0_240] : memref<16x64x384xbf16, #tpu.memory_space<vmem>>, vector<1x64x384xbf16>
    %299 = vector.shape_cast %298 : vector<1x64x384xbf16> to vector<64x384xbf16>
    %cst_241 = arith.constant dense<0.000000e+00> : vector<1x384xf32>
    %300 = tpu.matmul %297, %299, %cst_241 {dimension_numbers = #tpu.dot_dimension_numbers<[1], [0], [0], [1], [0, 0, 1, 1], [], []>} : vector<1x64xbf16>, vector<64x384xbf16>, vector<1x384xf32> -> vector<1x384xf32>
    %301 = arith.addf %295, %300 : vector<1x384xf32>
    %302 = vector.extract_strided_slice %234 {offsets = [11, 0], sizes = [1, 64], strides = [1, 1]} : vector<16x64xf32> to vector<1x64xf32>
    %303 = arith.truncf %302 : vector<1x64xf32> to vector<1x64xbf16>
    %c11_242 = arith.constant 11 : index
    %c0_243 = arith.constant 0 : index
    %c0_244 = arith.constant 0 : index
    %304 = vector.load %arg7[%c11_242, %c0_243, %c0_244] : memref<16x64x384xbf16, #tpu.memory_space<vmem>>, vector<1x64x384xbf16>
    %305 = vector.shape_cast %304 : vector<1x64x384xbf16> to vector<64x384xbf16>
    %cst_245 = arith.constant dense<0.000000e+00> : vector<1x384xf32>
    %306 = tpu.matmul %303, %305, %cst_245 {dimension_numbers = #tpu.dot_dimension_numbers<[1], [0], [0], [1], [0, 0, 1, 1], [], []>} : vector<1x64xbf16>, vector<64x384xbf16>, vector<1x384xf32> -> vector<1x384xf32>
    %307 = arith.addf %301, %306 : vector<1x384xf32>
    %308 = vector.extract_strided_slice %234 {offsets = [12, 0], sizes = [1, 64], strides = [1, 1]} : vector<16x64xf32> to vector<1x64xf32>
    %309 = arith.truncf %308 : vector<1x64xf32> to vector<1x64xbf16>
    %c12_246 = arith.constant 12 : index
    %c0_247 = arith.constant 0 : index
    %c0_248 = arith.constant 0 : index
    %310 = vector.load %arg7[%c12_246, %c0_247, %c0_248] : memref<16x64x384xbf16, #tpu.memory_space<vmem>>, vector<1x64x384xbf16>
    %311 = vector.shape_cast %310 : vector<1x64x384xbf16> to vector<64x384xbf16>
    %cst_249 = arith.constant dense<0.000000e+00> : vector<1x384xf32>
    %312 = tpu.matmul %309, %311, %cst_249 {dimension_numbers = #tpu.dot_dimension_numbers<[1], [0], [0], [1], [0, 0, 1, 1], [], []>} : vector<1x64xbf16>, vector<64x384xbf16>, vector<1x384xf32> -> vector<1x384xf32>
    %313 = arith.addf %307, %312 : vector<1x384xf32>
    %314 = vector.extract_strided_slice %234 {offsets = [13, 0], sizes = [1, 64], strides = [1, 1]} : vector<16x64xf32> to vector<1x64xf32>
    %315 = arith.truncf %314 : vector<1x64xf32> to vector<1x64xbf16>
    %c13_250 = arith.constant 13 : index
    %c0_251 = arith.constant 0 : index
    %c0_252 = arith.constant 0 : index
    %316 = vector.load %arg7[%c13_250, %c0_251, %c0_252] : memref<16x64x384xbf16, #tpu.memory_space<vmem>>, vector<1x64x384xbf16>
    %317 = vector.shape_cast %316 : vector<1x64x384xbf16> to vector<64x384xbf16>
    %cst_253 = arith.constant dense<0.000000e+00> : vector<1x384xf32>
    %318 = tpu.matmul %315, %317, %cst_253 {dimension_numbers = #tpu.dot_dimension_numbers<[1], [0], [0], [1], [0, 0, 1, 1], [], []>} : vector<1x64xbf16>, vector<64x384xbf16>, vector<1x384xf32> -> vector<1x384xf32>
    %319 = arith.addf %313, %318 : vector<1x384xf32>
    %320 = vector.extract_strided_slice %234 {offsets = [14, 0], sizes = [1, 64], strides = [1, 1]} : vector<16x64xf32> to vector<1x64xf32>
    %321 = arith.truncf %320 : vector<1x64xf32> to vector<1x64xbf16>
    %c14_254 = arith.constant 14 : index
    %c0_255 = arith.constant 0 : index
    %c0_256 = arith.constant 0 : index
    %322 = vector.load %arg7[%c14_254, %c0_255, %c0_256] : memref<16x64x384xbf16, #tpu.memory_space<vmem>>, vector<1x64x384xbf16>
    %323 = vector.shape_cast %322 : vector<1x64x384xbf16> to vector<64x384xbf16>
    %cst_257 = arith.constant dense<0.000000e+00> : vector<1x384xf32>
    %324 = tpu.matmul %321, %323, %cst_257 {dimension_numbers = #tpu.dot_dimension_numbers<[1], [0], [0], [1], [0, 0, 1, 1], [], []>} : vector<1x64xbf16>, vector<64x384xbf16>, vector<1x384xf32> -> vector<1x384xf32>
    %325 = arith.addf %319, %324 : vector<1x384xf32>
    %326 = vector.extract_strided_slice %234 {offsets = [15, 0], sizes = [1, 64], strides = [1, 1]} : vector<16x64xf32> to vector<1x64xf32>
    %327 = arith.truncf %326 : vector<1x64xf32> to vector<1x64xbf16>
    %c15_258 = arith.constant 15 : index
    %c0_259 = arith.constant 0 : index
    %c0_260 = arith.constant 0 : index
    %328 = vector.load %arg7[%c15_258, %c0_259, %c0_260] : memref<16x64x384xbf16, #tpu.memory_space<vmem>>, vector<1x64x384xbf16>
    %329 = vector.shape_cast %328 : vector<1x64x384xbf16> to vector<64x384xbf16>
    %cst_261 = arith.constant dense<0.000000e+00> : vector<1x384xf32>
    %330 = tpu.matmul %327, %329, %cst_261 {dimension_numbers = #tpu.dot_dimension_numbers<[1], [0], [0], [1], [0, 0, 1, 1], [], []>} : vector<1x64xbf16>, vector<64x384xbf16>, vector<1x384xf32> -> vector<1x384xf32>
    %331 = arith.addf %325, %330 : vector<1x384xf32>
    %cst_262 = arith.constant 0.000000e+00 : f32
    %332 = vector.broadcast %cst_262 : f32 to vector<1x384xf32>
    %333 = arith.maximumf %331, %332 : vector<1x384xf32>
    %334 = arith.truncf %333 : vector<1x384xf32> to vector<1x384xbf16>
    %c0_263 = arith.constant 0 : index
    %c0_264 = arith.constant 0 : index
    %335 = vector.load %arg9[%c0_263, %c0_264] : memref<384x192xbf16, #tpu.memory_space<vmem>>, vector<384x192xbf16>
    %cst_265 = arith.constant dense<0.000000e+00> : vector<1x192xf32>
    %336 = tpu.matmul %334, %335, %cst_265 {dimension_numbers = #tpu.dot_dimension_numbers<[1], [0], [0], [1], [0, 0, 1, 1], [], []>} : vector<1x384xbf16>, vector<384x192xbf16>, vector<1x192xf32> -> vector<1x192xf32>
    %c0_266 = arith.constant 0 : index
    %c0_267 = arith.constant 0 : index
    %337 = vector.load %arg10[%c0_266, %c0_267] : memref<1x192xf32, #tpu.memory_space<vmem>>, vector<1x192xf32>
    %338 = arith.addf %336, %337 : vector<1x192xf32>
    %cst_268 = arith.constant 0.000000e+00 : f32
    %339 = vector.broadcast %cst_268 : f32 to vector<1x192xf32>
    %340 = arith.maximumf %338, %339 : vector<1x192xf32>
    %341 = arith.truncf %340 : vector<1x192xf32> to vector<1x192xbf16>
    %c0_269 = arith.constant 0 : index
    %c0_270 = arith.constant 0 : index
    %342 = vector.load %arg11[%c0_269, %c0_270] : memref<192x10xbf16, #tpu.memory_space<vmem>>, vector<192x10xbf16>
    %cst_271 = arith.constant dense<0.000000e+00> : vector<1x10xf32>
    %343 = tpu.matmul %341, %342, %cst_271 {dimension_numbers = #tpu.dot_dimension_numbers<[1], [0], [0], [1], [0, 0, 1, 1], [], []>} : vector<1x192xbf16>, vector<192x10xbf16>, vector<1x10xf32> -> vector<1x10xf32>
    %c0_272 = arith.constant 0 : index
    %c0_273 = arith.constant 0 : index
    %344 = vector.load %arg12[%c0_272, %c0_273] : memref<1x10xf32, #tpu.memory_space<vmem>>, vector<1x10xf32>
    %345 = arith.addf %343, %344 : vector<1x10xf32>
    %cst_274 = arith.constant dense<0xFF800000> : vector<1xf32>
    %346 = vector.multi_reduction <maximumf>, %345, %cst_274 [1] : vector<1x10xf32> to vector<1xf32>
    %347 = vector.shape_cast %346 : vector<1xf32> to vector<1x1xf32>
    %348 = vector.broadcast %347 : vector<1x1xf32> to vector<1x10xf32>
    %349 = arith.subf %345, %348 : vector<1x10xf32>
    %350 = math.exp %349 : vector<1x10xf32>
    %cst_275 = arith.constant dense<0.000000e+00> : vector<1xf32>
    %351 = vector.multi_reduction <add>, %350, %cst_275 [1] : vector<1x10xf32> to vector<1xf32>
    %352 = vector.shape_cast %351 : vector<1xf32> to vector<1x1xf32>
    %353 = math.log %352 : vector<1x1xf32>
    %354 = vector.broadcast %353 : vector<1x1xf32> to vector<1x10xf32>
    %355 = arith.subf %349, %354 : vector<1x10xf32>
    %c0_276 = arith.constant 0 : index
    %c0_277 = arith.constant 0 : index
    %c0_278 = arith.constant 0 : index
    %356 = vector.load %arg13[%c0_276, %c0_277, %c0_278] : memref<1x1x10xf32, #tpu.memory_space<vmem>>, vector<1x1x10xf32>
    %357 = vector.shape_cast %356 : vector<1x1x10xf32> to vector<1x10xf32>
    %358 = vector.shape_cast %355 : vector<1x10xf32> to vector<1x1x10xf32>
    tpu.vector_store %arg13[%c0_276, %c0_277, %c0_278], %358 {strides = array<i32>} : memref<1x1x10xf32, #tpu.memory_space<vmem>>, vector<1x1x10xf32>,
    %c0_279 = arith.constant 0 : index
    %c0_280 = arith.constant 0 : index
    %c0_281 = arith.constant 0 : index
    %359 = vector.load %arg14[%c0_279, %c0_280, %c0_281] : memref<1x1x10xf32, #tpu.memory_space<vmem>>, vector<1x1x10xf32>
    %360 = vector.shape_cast %359 : vector<1x1x10xf32> to vector<1x10xf32>
    %361 = vector.shape_cast %345 : vector<1x10xf32> to vector<1x1x10xf32>
    tpu.vector_store %arg14[%c0_279, %c0_280, %c0_281], %361 {strides = array<i32>} : memref<1x1x10xf32, #tpu.memory_space<vmem>>, vector<1x1x10xf32>,
    return
  }
  func.func @transform_0(%arg0: i32) -> (i32, i32, i32) {
    %c0_i32 = arith.constant 0 : i32
    %c0_i32_0 = arith.constant 0 : i32
    %c0_i32_1 = arith.constant 0 : i32
    return %arg0, %c0_i32, %c0_i32_0 : i32, i32, i32
  }
  func.func @transform_1(%arg0: i32) -> (i32, i32) {
    %c0_i32 = arith.constant 0 : i32
    %c0_i32_0 = arith.constant 0 : i32
    %c0_i32_1 = arith.constant 0 : i32
    return %c0_i32, %c0_i32_0 : i32, i32
  }
  func.func @transform_2(%arg0: i32) -> (i32, i32) {
    %c0_i32 = arith.constant 0 : i32
    %c0_i32_0 = arith.constant 0 : i32
    %c0_i32_1 = arith.constant 0 : i32
    return %c0_i32, %c0_i32_0 : i32, i32
  }
  func.func @transform_3(%arg0: i32) -> (i32, i32, i32) {
    %c0_i32 = arith.constant 0 : i32
    %c0_i32_0 = arith.constant 0 : i32
    %c0_i32_1 = arith.constant 0 : i32
    %c0_i32_2 = arith.constant 0 : i32
    return %c0_i32, %c0_i32_0, %c0_i32_1 : i32, i32, i32
  }
  func.func @transform_4(%arg0: i32) -> (i32, i32, i32) {
    %c0_i32 = arith.constant 0 : i32
    %c0_i32_0 = arith.constant 0 : i32
    %c0_i32_1 = arith.constant 0 : i32
    %c0_i32_2 = arith.constant 0 : i32
    return %c0_i32, %c0_i32_0, %c0_i32_1 : i32, i32, i32
  }
  func.func @transform_5(%arg0: i32) -> (i32, i32) {
    %c0_i32 = arith.constant 0 : i32
    %c0_i32_0 = arith.constant 0 : i32
    %c0_i32_1 = arith.constant 0 : i32
    return %c0_i32, %c0_i32_0 : i32, i32
  }
  func.func @transform_6(%arg0: i32) -> (i32, i32, i32) {
    %c0_i32 = arith.constant 0 : i32
    %c0_i32_0 = arith.constant 0 : i32
    %c0_i32_1 = arith.constant 0 : i32
    %c0_i32_2 = arith.constant 0 : i32
    return %c0_i32, %c0_i32_0, %c0_i32_1 : i32, i32, i32
  }
  func.func @transform_7(%arg0: i32) -> (i32, i32) {
    %c0_i32 = arith.constant 0 : i32
    %c0_i32_0 = arith.constant 0 : i32
    %c0_i32_1 = arith.constant 0 : i32
    return %c0_i32, %c0_i32_0 : i32, i32
  }
  func.func @transform_8(%arg0: i32) -> (i32, i32) {
    %c0_i32 = arith.constant 0 : i32
    %c0_i32_0 = arith.constant 0 : i32
    %c0_i32_1 = arith.constant 0 : i32
    return %c0_i32, %c0_i32_0 : i32, i32
  }
  func.func @transform_9(%arg0: i32) -> (i32, i32) {
    %c0_i32 = arith.constant 0 : i32
    %c0_i32_0 = arith.constant 0 : i32
    %c0_i32_1 = arith.constant 0 : i32
    return %c0_i32, %c0_i32_0 : i32, i32
  }
  func.func @transform_10(%arg0: i32) -> (i32, i32) {
    %c0_i32 = arith.constant 0 : i32
    %c0_i32_0 = arith.constant 0 : i32
    %c0_i32_1 = arith.constant 0 : i32
    return %c0_i32, %c0_i32_0 : i32, i32
  }
  func.func @transform_11(%arg0: i32) -> (i32, i32) {
    %c0_i32 = arith.constant 0 : i32
    %c0_i32_0 = arith.constant 0 : i32
    %c0_i32_1 = arith.constant 0 : i32
    return %c0_i32, %c0_i32_0 : i32, i32
  }
  func.func @transform_12(%arg0: i32) -> (i32, i32, i32) {
    %c0_i32 = arith.constant 0 : i32
    %c0_i32_0 = arith.constant 0 : i32
    %c0_i32_1 = arith.constant 0 : i32
    return %arg0, %c0_i32, %c0_i32_0 : i32, i32, i32
  }
  func.func @transform_13(%arg0: i32) -> (i32, i32, i32) {
    %c0_i32 = arith.constant 0 : i32
    %c0_i32_0 = arith.constant 0 : i32
    %c0_i32_1 = arith.constant 0 : i32
    return %arg0, %c0_i32, %c0_i32_0 : i32, i32, i32
  }
}

</mosaic_0001>

<llo_original>
// kernel: lenet_forward.1
$region0: #{lenet_forward.1}
  #allocation0 [shape = 'u32[]', space=smem, size = 0x4, offset = 0x4, fixed_abs, tag = 'smem constant byte address 0x4 - core index']
  #allocation1 [shape = 'u32[72,128]{1,0:T(1,128)}', space=vmem, size = 0x9000, scoped, tag = 'internal scratch']
  %s0 = inlined_call_operand.vmem [shape: bf16[2,576,25], index: 0, kind: input, shape index: {}]
  %s1 = inlined_call_operand.vmem [shape: bf16[25,64], index: 1, kind: input, shape index: {}]
  %s2 = inlined_call_operand.vmem [shape: f32[1,64], index: 2, kind: input, shape index: {}]
  %s3 = inlined_call_operand.vmem [shape: bf16[25,64,144], index: 3, kind: input, shape index: {}]
  %s4 = inlined_call_operand.vmem [shape: bf16[25,64,64], index: 4, kind: input, shape index: {}]
  %s5 = inlined_call_operand.vmem [shape: f32[1,64], index: 5, kind: input, shape index: {}]
  %s6 = inlined_call_operand.vmem [shape: bf16[16,64,384], index: 6, kind: input, shape index: {}]
  %s7 = inlined_call_operand.vmem [shape: f32[1,384], index: 7, kind: input, shape index: {}]
  %s8 = inlined_call_operand.vmem [shape: bf16[384,192], index: 8, kind: input, shape index: {}]
  %s9 = inlined_call_operand.vmem [shape: f32[1,192], index: 9, kind: input, shape index: {}]
  %s10 = inlined_call_operand.vmem [shape: bf16[192,10], index: 10, kind: input, shape index: {}]
  %s11 = inlined_call_operand.vmem [shape: f32[1,10], index: 11, kind: input, shape index: {}]
  %s12 = inlined_call_operand.hbm [shape: f32[2,1,10], index: 12, kind: output, shape index: {0}]
  %s13 = inlined_call_operand.hbm [shape: f32[2,1,10], index: 13, kind: output, shape index: {1}]
  %14 = xla_tuple %s12, %s13
  %s15 = sld [smem:[#allocation0]]
  $region89: #{lenet_forward.1} parent=0
    _
  %s17 = ssub.s32 1, %s15
  %s18 = scalar_select 0, %s17, %s15
  $region1: #{lenet_forward.1} parent=0
    #allocation2 [shape = 'u8[1024]{0}', space=vmem, size = 0x400, scoped, tag = 'output window, operand 0']
    #allocation3 [shape = 's32[2]{0}', space=sflag, size = 0x8, scoped, tag = 'scoped memory for lenet_forward.1']
    #allocation4 [shape = 'u8[1024]{0}', space=vmem, size = 0x400, scoped, tag = 'output window, operand 1']
    #allocation5 [shape = 's32[2]{0}', space=sflag, size = 0x8, scoped, tag = 'scoped memory for lenet_forward.1']
    %19 = vsyncpa [#allocation3], 0
    %s20 = scalar_lea.sflag [#allocation3], 1
    %21 = vsyncpa %s20, 0
    %22 = vsyncpa [#allocation5], 0
    %s23 = scalar_lea.sflag [#allocation5], 1
    %24 = vsyncpa %s23, 0
    loop: start=0, step=1, limit=4
    $region2: #{lenet_forward.1} parent=1 // loop_pre_header
      _
    $region3: #{lenet_forward.1} parent=1 // loop_header
      %s26 = sphi 0, %s30
      %p27 = scmp.ge.s32.totalorder %s26, 4
      %s36 = sphi 0, %s38
      %s39 = sphi 0, %s36
      %s40 = sphi 0, %s39
      %s56 = sphi 0, %s40
      %s60 = sphi 0, %s60
      %s62 = sphi 0, %s60
      %s63 = sphi 0, %s62
      %s77 = sphi 0, %s63
      %s81 = sphi 0, %s81
      %s83 = sphi 0, %s81
      %s84 = sphi 0, %s83
      %s98 = sphi 0, %s84
      %s102 = sphi 0, %s102
      %s104 = sphi 0, %s102
      %s105 = sphi 0, %s104
      %s119 = sphi 0, %s105
      %s123 = sphi 0, %s123
      %s125 = sphi 0, %s123
      %s126 = sphi 0, %s125
      %s140 = sphi 0, %s126
      %s144 = sphi 0, %s144
      %s146 = sphi 0, %s144
      %s147 = sphi 0, %s146
      %s161 = sphi 0, %s147
      %s165 = sphi 0, %s165
      %s167 = sphi 0, %s165
      %s168 = sphi 0, %s167
      %s182 = sphi 0, %s168
      %s186 = sphi 0, %s186
      %s188 = sphi 0, %s186
      %s189 = sphi 0, %s188
      %s203 = sphi 0, %s189
      %s207 = sphi 0, %s207
      %s209 = sphi 0, %s207
      %s210 = sphi 0, %s209
      %s224 = sphi 0, %s210
      %s228 = sphi 0, %s228
      %s230 = sphi 0, %s228
      %s231 = sphi 0, %s230
      %s245 = sphi 0, %s231
      %s249 = sphi 0, %s249
      %s251 = sphi 0, %s249
      %s252 = sphi 0, %s251
      %s266 = sphi 0, %s252
      %s270 = sphi 0, %s270
      %s272 = sphi 0, %s270
      %s273 = sphi 0, %s272
      %s287 = sphi 0, %s273
      %s293 = sphi 0, %s295
      %s296 = sphi 0, %s293
      %s297 = sphi 0, %s296
      %s313 = sphi 0, %s297
      %s319 = sphi 0, %s321
      %s322 = sphi 0, %s319
      %s323 = sphi 0, %s322
      %s339 = sphi 0, %s323
    $region4: #{lenet_forward.1} parent=1 // loop_header_branch
      %29 = sbr.rel (%p27) target = $region8
    $region5: #{lenet_forward.1} parent=1 // loop_body
      %s31 = ssub.s32 %s26, 1
      %s32 = ssub.s32 %s26, 2
      %s33 = sadd.s32 %s26, 1
      %s34 = ssub.s32 %s26, %s33
      %p35 = scmp.eq.s32.totalorder %s34, 0
      %s37 = sadd.s32 %s36, 1
      %s38 = scalar_select %p35, %s36, %s37
      %p41 = pneg %p35
      %p42 = scmp.eq.s32.totalorder %s26, 1
      %p43 = por %p41, %p42
      %p44 = scmp.ne.s32.totalorder %s36, %s39
      %p45 = scmp.eq.s32.totalorder %s26, 0
      %p46 = por %p44, %p45
      %p47 = scmp.ne.s32.totalorder %s36, %s39
      %p48 = scmp.eq.s32.totalorder %s31, 1
      %p49 = por %p47, %p48
      %p50 = scmp.ne.s32.totalorder %s39, %s40
      %p51 = scmp.eq.s32.totalorder %s31, 0
      %p52 = por %p50, %p51
      %p53 = scmp.ne.s32.totalorder %s39, %s40
      %p54 = scmp.eq.s32.totalorder %s32, 1
      %p55 = por %p53, %p54
      %p57 = scmp.ne.s32.totalorder %s40, %s56
      %p58 = scmp.eq.s32.totalorder %s32, 0
      %p59 = por %p57, %p58
      %s61 = sadd.s32 %s60, 1
      %p64 = scmp.eq.s32.totalorder %s26, 1
      %p65 = scmp.ne.s32.totalorder %s60, %s62
      %p66 = scmp.eq.s32.totalorder %s26, 0
      %p67 = por %p65, %p66
      %p68 = scmp.ne.s32.totalorder %s60, %s62
      %p69 = scmp.eq.s32.totalorder %s31, 1
      %p70 = por %p68, %p69
      %p71 = scmp.ne.s32.totalorder %s62, %s63
      %p72 = scmp.eq.s32.totalorder %s31, 0
      %p73 = por %p71, %p72
      %p74 = scmp.ne.s32.totalorder %s62, %s63
      %p75 = scmp.eq.s32.totalorder %s32, 1
      %p76 = por %p74, %p75
      %p78 = scmp.ne.s32.totalorder %s63, %s77
      %p79 = scmp.eq.s32.totalorder %s32, 0
      %p80 = por %p78, %p79
      %s82 = sadd.s32 %s81, 1
      %p85 = scmp.eq.s32.totalorder %s26, 1
      %p86 = scmp.ne.s32.totalorder %s81, %s83
      %p87 = scmp.eq.s32.totalorder %s26, 0
      %p88 = por %p86, %p87
      %p89 = scmp.ne.s32.totalorder %s81, %s83
      %p90 = scmp.eq.s32.totalorder %s31, 1
      %p91 = por %p89, %p90
      %p92 = scmp.ne.s32.totalorder %s83, %s84
      %p93 = scmp.eq.s32.totalorder %s31, 0
      %p94 = por %p92, %p93
      %p95 = scmp.ne.s32.totalorder %s83, %s84
      %p96 = scmp.eq.s32.totalorder %s32, 1
      %p97 = por %p95, %p96
      %p99 = scmp.ne.s32.totalorder %s84, %s98
      %p100 = scmp.eq.s32.totalorder %s32, 0
      %p101 = por %p99, %p100
      %s103 = sadd.s32 %s102, 1
      %p106 = scmp.eq.s32.totalorder %s26, 1
      %p107 = scmp.ne.s32.totalorder %s102, %s104
      %p108 = scmp.eq.s32.totalorder %s26, 0
      %p109 = por %p107, %p108
      %p110 = scmp.ne.s32.totalorder %s102, %s104
      %p111 = scmp.eq.s32.totalorder %s31, 1
      %p112 = por %p110, %p111
      %p113 = scmp.ne.s32.totalorder %s104, %s105
      %p114 = scmp.eq.s32.totalorder %s31, 0
      %p115 = por %p113, %p114
      %p116 = scmp.ne.s32.totalorder %s104, %s105
      %p117 = scmp.eq.s32.totalorder %s32, 1
      %p118 = por %p116, %p117
      %p120 = scmp.ne.s32.totalorder %s105, %s119
      %p121 = scmp.eq.s32.totalorder %s32, 0
      %p122 = por %p120, %p121
      %s124 = sadd.s32 %s123, 1
      %p127 = scmp.eq.s32.totalorder %s26, 1
      %p128 = scmp.ne.s32.totalorder %s123, %s125
      %p129 = scmp.eq.s32.totalorder %s26, 0
      %p130 = por %p128, %p129
      %p131 = scmp.ne.s32.totalorder %s123, %s125
      %p132 = scmp.eq.s32.totalorder %s31, 1
      %p133 = por %p131, %p132
      %p134 = scmp.ne.s32.totalorder %s125, %s126
      %p135 = scmp.eq.s32.totalorder %s31, 0
      %p136 = por %p134, %p135
      %p137 = scmp.ne.s32.totalorder %s125, %s126
      %p138 = scmp.eq.s32.totalorder %s32, 1
      %p139 = por %p137, %p138
      %p141 = scmp.ne.s32.totalorder %s126, %s140
      %p142 = scmp.eq.s32.totalorder %s32, 0
      %p143 = por %p141, %p142
      %s145 = sadd.s32 %s144, 1
      %p148 = scmp.eq.s32.totalorder %s26, 1
      %p149 = scmp.ne.s32.totalorder %s144, %s146
      %p150 = scmp.eq.s32.totalorder %s26, 0
      %p151 = por %p149, %p150
      %p152 = scmp.ne.s32.totalorder %s144, %s146
      %p153 = scmp.eq.s32.totalorder %s31, 1
      %p154 = por %p152, %p153
      %p155 = scmp.ne.s32.totalorder %s146, %s147
      %p156 = scmp.eq.s32.totalorder %s31, 0
      %p157 = por %p155, %p156
      %p158 = scmp.ne.s32.totalorder %s146, %s147
      %p159 = scmp.eq.s32.totalorder %s32, 1
      %p160 = por %p158, %p159
      %p162 = scmp.ne.s32.totalorder %s147, %s161
      %p163 = scmp.eq.s32.totalorder %s32, 0
      %p164 = por %p162, %p163
      %s166 = sadd.s32 %s165, 1
      %p169 = scmp.eq.s32.totalorder %s26, 1
      %p170 = scmp.ne.s32.totalorder %s165, %s167
      %p171 = scmp.eq.s32.totalorder %s26, 0
      %p172 = por %p170, %p171
      %p173 = scmp.ne.s32.totalorder %s165, %s167
      %p174 = scmp.eq.s32.totalorder %s31, 1
      %p175 = por %p173, %p174
      %p176 = scmp.ne.s32.totalorder %s167, %s168
      %p177 = scmp.eq.s32.totalorder %s31, 0
      %p178 = por %p176, %p177
      %p179 = scmp.ne.s32.totalorder %s167, %s168
      %p180 = scmp.eq.s32.totalorder %s32, 1
      %p181 = por %p179, %p180
      %p183 = scmp.ne.s32.totalorder %s168, %s182
      %p184 = scmp.eq.s32.totalorder %s32, 0
      %p185 = por %p183, %p184
      %s187 = sadd.s32 %s186, 1
      %p190 = scmp.eq.s32.totalorder %s26, 1
      %p191 = scmp.ne.s32.totalorder %s186, %s188
      %p192 = scmp.eq.s32.totalorder %s26, 0
      %p193 = por %p191, %p192
      %p194 = scmp.ne.s32.totalorder %s186, %s188
      %p195 = scmp.eq.s32.totalorder %s31, 1
      %p196 = por %p194, %p195
      %p197 = scmp.ne.s32.totalorder %s188, %s189
      %p198 = scmp.eq.s32.totalorder %s31, 0
      %p199 = por %p197, %p198
      %p200 = scmp.ne.s32.totalorder %s188, %s189
      %p201 = scmp.eq.s32.totalorder %s32, 1
      %p202 = por %p200, %p201
      %p204 = scmp.ne.s32.totalorder %s189, %s203
      %p205 = scmp.eq.s32.totalorder %s32, 0
      %p206 = por %p204, %p205
      %s208 = sadd.s32 %s207, 1
      %p211 = scmp.eq.s32.totalorder %s26, 1
      %p212 = scmp.ne.s32.totalorder %s207, %s209
      %p213 = scmp.eq.s32.totalorder %s26, 0
      %p214 = por %p212, %p213
      %p215 = scmp.ne.s32.totalorder %s207, %s209
      %p216 = scmp.eq.s32.totalorder %s31, 1
      %p217 = por %p215, %p216
      %p218 = scmp.ne.s32.totalorder %s209, %s210
      %p219 = scmp.eq.s32.totalorder %s31, 0
      %p220 = por %p218, %p219
      %p221 = scmp.ne.s32.totalorder %s209, %s210
      %p222 = scmp.eq.s32.totalorder %s32, 1
      %p223 = por %p221, %p222
      %p225 = scmp.ne.s32.totalorder %s210, %s224
      %p226 = scmp.eq.s32.totalorder %s32, 0
      %p227 = por %p225, %p226
      %s229 = sadd.s32 %s228, 1
      %p232 = scmp.eq.s32.totalorder %s26, 1
      %p233 = scmp.ne.s32.totalorder %s228, %s230
      %p234 = scmp.eq.s32.totalorder %s26, 0
      %p235 = por %p233, %p234
      %p236 = scmp.ne.s32.totalorder %s228, %s230
      %p237 = scmp.eq.s32.totalorder %s31, 1
      %p238 = por %p236, %p237
      %p239 = scmp.ne.s32.totalorder %s230, %s231
      %p240 = scmp.eq.s32.totalorder %s31, 0
      %p241 = por %p239, %p240
      %p242 = scmp.ne.s32.totalorder %s230, %s231
      %p243 = scmp.eq.s32.totalorder %s32, 1
      %p244 = por %p242, %p243
      %p246 = scmp.ne.s32.totalorder %s231, %s245
      %p247 = scmp.eq.s32.totalorder %s32, 0
      %p248 = por %p246, %p247
      %s250 = sadd.s32 %s249, 1
      %p253 = scmp.eq.s32.totalorder %s26, 1
      %p254 = scmp.ne.s32.totalorder %s249, %s251
      %p255 = scmp.eq.s32.totalorder %s26, 0
      %p256 = por %p254, %p255
      %p257 = scmp.ne.s32.totalorder %s249, %s251
      %p258 = scmp.eq.s32.totalorder %s31, 1
      %p259 = por %p257, %p258
      %p260 = scmp.ne.s32.totalorder %s251, %s252
      %p261 = scmp.eq.s32.totalorder %s31, 0
      %p262 = por %p260, %p261
      %p263 = scmp.ne.s32.totalorder %s251, %s252
      %p264 = scmp.eq.s32.totalorder %s32, 1
      %p265 = por %p263, %p264
      %p267 = scmp.ne.s32.totalorder %s252, %s266
      %p268 = scmp.eq.s32.totalorder %s32, 0
      %p269 = por %p267, %p268
      %s271 = sadd.s32 %s270, 1
      %p274 = scmp.eq.s32.totalorder %s26, 1
      %p275 = scmp.ne.s32.totalorder %s270, %s272
      %p276 = scmp.eq.s32.totalorder %s26, 0
      %p277 = por %p275, %p276
      %p278 = scmp.ne.s32.totalorder %s270, %s272
      %p279 = scmp.eq.s32.totalorder %s31, 1
      %p280 = por %p278, %p279
      %p281 = scmp.ne.s32.totalorder %s272, %s273
      %p282 = scmp.eq.s32.totalorder %s31, 0
      %p283 = por %p281, %p282
      %p284 = scmp.ne.s32.totalorder %s272, %s273
      %p285 = scmp.eq.s32.totalorder %s32, 1
      %p286 = por %p284, %p285
      %p288 = scmp.ne.s32.totalorder %s273, %s287
      %p289 = scmp.eq.s32.totalorder %s32, 0
      %p290 = por %p288, %p289
      %s291 = ssub.s32 %s26, %s33
      %p292 = scmp.eq.s32.totalorder %s291, 0
      %s294 = sadd.s32 %s293, 1
      %s295 = scalar_select %p292, %s293, %s294
      %p298 = pneg %p292
      %p299 = scmp.eq.s32.totalorder %s26, 1
      %p300 = por %p298, %p299
      %p301 = scmp.ne.s32.totalorder %s293, %s296
      %p302 = scmp.eq.s32.totalorder %s26, 0
      %p303 = por %p301, %p302
      %p304 = scmp.ne.s32.totalorder %s293, %s296
      %p305 = scmp.eq.s32.totalorder %s31, 1
      %p306 = por %p304, %p305
      %p307 = scmp.ne.s32.totalorder %s296, %s297
      %p308 = scmp.eq.s32.totalorder %s31, 0
      %p309 = por %p307, %p308
      %p310 = scmp.ne.s32.totalorder %s296, %s297
      %p311 = scmp.eq.s32.totalorder %s32, 1
      %p312 = por %p310, %p311
      %p314 = scmp.ne.s32.totalorder %s297, %s313
      %p315 = scmp.eq.s32.totalorder %s32, 0
      %p316 = por %p314, %p315
      %s317 = ssub.s32 %s26, %s33
      %p318 = scmp.eq.s32.totalorder %s317, 0
      %s320 = sadd.s32 %s319, 1
      %s321 = scalar_select %p318, %s319, %s320
      %p324 = pneg %p318
      %p325 = scmp.eq.s32.totalorder %s26, 1
      %p326 = por %p324, %p325
      %p327 = scmp.ne.s32.totalorder %s319, %s322
      %p328 = scmp.eq.s32.totalorder %s26, 0
      %p329 = por %p327, %p328
      %p330 = scmp.ne.s32.totalorder %s319, %s322
      %p331 = scmp.eq.s32.totalorder %s31, 1
      %p332 = por %p330, %p331
      %p333 = scmp.ne.s32.totalorder %s322, %s323
      %p334 = scmp.eq.s32.totalorder %s31, 0
      %p335 = por %p333, %p334
      %p336 = scmp.ne.s32.totalorder %s322, %s323
      %p337 = scmp.eq.s32.totalorder %s32, 1
      %p338 = por %p336, %p337
      %p340 = scmp.ne.s32.totalorder %s323, %s339
      %p341 = scmp.eq.s32.totalorder %s32, 0
      %p342 = por %p340, %p341
      %p343 = scmp.le.s32.totalorder 1, %s26
      %p344 = scmp.lt.s32.totalorder %s26, 3
      %p345 = pnand %p343, %p344
      %p346 = pneg %p345
      // Predicated region
      $region9: #{lenet_forward.1} parent=5 // pred_check
        _
      $region10: #{lenet_forward.1} parent=5 // pred_check_branch
        %348 = sbr.rel (%p345) target = $region12
      $region11: #{lenet_forward.1} parent=5 // pred_region
        %s349 = ssub.s32 %s26, 1
        // Predicated region
        $region13: #{lenet_forward.1} parent=11 // pred_check
          %p350 = pneg %p73
        $region14: #{lenet_forward.1} parent=11 // pred_check_branch
          %352 = sbr.rel (%p350) target = $region16
        $region15: #{lenet_forward.1} parent=11 // pred_region
          _
        $region16: #{lenet_forward.1} parent=11 // pred_fallthru
          _
        // Predicated region
        $region17: #{lenet_forward.1} parent=11 // pred_check
          %p353 = pneg %p94
        $region18: #{lenet_forward.1} parent=11 // pred_check_branch
          %355 = sbr.rel (%p353) target = $region20
        $region19: #{lenet_forward.1} parent=11 // pred_region
          _
        $region20: #{lenet_forward.1} parent=11 // pred_fallthru
          _
        // Predicated region
        $region21: #{lenet_forward.1} parent=11 // pred_check
          %p356 = pneg %p115
        $region22: #{lenet_forward.1} parent=11 // pred_check_branch
          %358 = sbr.rel (%p356) target = $region24
        $region23: #{lenet_forward.1} parent=11 // pred_region
          _
        $region24: #{lenet_forward.1} parent=11 // pred_fallthru
          _
        // Predicated region
        $region25: #{lenet_forward.1} parent=11 // pred_check
          %p359 = pneg %p136
        $region26: #{lenet_forward.1} parent=11 // pred_check_branch
          %361 = sbr.rel (%p359) target = $region28
        $region27: #{lenet_forward.1} parent=11 // pred_region
          _
        $region28: #{lenet_forward.1} parent=11 // pred_fallthru
          _
        // Predicated region
        $region29: #{lenet_forward.1} parent=11 // pred_check
          %p362 = pneg %p157
        $region30: #{lenet_forward.1} parent=11 // pred_check_branch
          %364 = sbr.rel (%p362) target = $region32
        $region31: #{lenet_forward.1} parent=11 // pred_region
          _
        $region32: #{lenet_forward.1} parent=11 // pred_fallthru
          _
        // Predicated region
        $region33: #{lenet_forward.1} parent=11 // pred_check
          %p365 = pneg %p178
        $region34: #{lenet_forward.1} parent=11 // pred_check_branch
          %367 = sbr.rel (%p365) target = $region36
        $region35: #{lenet_forward.1} parent=11 // pred_region
          _
        $region36: #{lenet_forward.1} parent=11 // pred_fallthru
          _
        // Predicated region
        $region37: #{lenet_forward.1} parent=11 // pred_check
          %p368 = pneg %p199
        $region38: #{lenet_forward.1} parent=11 // pred_check_branch
          %370 = sbr.rel (%p368) target = $region40
        $region39: #{lenet_forward.1} parent=11 // pred_region
          _
        $region40: #{lenet_forward.1} parent=11 // pred_fallthru
          _
        // Predicated region
        $region41: #{lenet_forward.1} parent=11 // pred_check
          %p371 = pneg %p220
        $region42: #{lenet_forward.1} parent=11 // pred_check_branch
          %373 = sbr.rel (%p371) target = $region44
        $region43: #{lenet_forward.1} parent=11 // pred_region
          _
        $region44: #{lenet_forward.1} parent=11 // pred_fallthru
          _
        // Predicated region
        $region45: #{lenet_forward.1} parent=11 // pred_check
          %p374 = pneg %p241
        $region46: #{lenet_forward.1} parent=11 // pred_check_branch
          %376 = sbr.rel (%p374) target = $region48
        $region47: #{lenet_forward.1} parent=11 // pred_region
          _
        $region48: #{lenet_forward.1} parent=11 // pred_fallthru
          _
        // Predicated region
        $region49: #{lenet_forward.1} parent=11 // pred_check
          %p377 = pneg %p262
        $region50: #{lenet_forward.1} parent=11 // pred_check_branch
          %379 = sbr.rel (%p377) target = $region52
        $region51: #{lenet_forward.1} parent=11 // pred_region
          _
        $region52: #{lenet_forward.1} parent=11 // pred_fallthru
          _
        // Predicated region
        $region53: #{lenet_forward.1} parent=11 // pred_check
          %p380 = pneg %p283
        $region54: #{lenet_forward.1} parent=11 // pred_check_branch
          %382 = sbr.rel (%p380) target = $region56
        $region55: #{lenet_forward.1} parent=11 // pred_region
          _
        $region56: #{lenet_forward.1} parent=11 // pred_fallthru
          _
      $region12: #{lenet_forward.1} parent=5 // pred_fallthru
        _
      %p383 = scmp.lt.s32.totalorder %s26, 2
      // Predicated region
      $region57: #{lenet_forward.1} parent=5 // pred_check
        %p384 = pneg %p383
      $region58: #{lenet_forward.1} parent=5 // pred_check_branch
        %386 = sbr.rel (%p384) target = $region60
      $region59: #{lenet_forward.1} parent=5 // pred_region
        // Predicated region
        $region61: #{lenet_forward.1} parent=59 // pred_check
          %p387 = pneg %p46
        $region62: #{lenet_forward.1} parent=59 // pred_check_branch
          %389 = sbr.rel (%p387) target = $region64
        $region63: #{lenet_forward.1} parent=59 // pred_region
          %p390 = scmp.lt.s32.totalorder %s26, 1
          %s391 = scalar_select %p390, %s26, 1
          %s392 = smul.addr %s391, 72
          %s393 = smul.addr %s392, 4
          %s394 = scalar_lea.vmem %s0, %s393
        $region64: #{lenet_forward.1} parent=59 // pred_fallthru
          _
      $region60: #{lenet_forward.1} parent=5 // pred_fallthru
        _
      %p395 = scmp.le.s32.totalorder 1, %s26
      %p396 = scmp.lt.s32.totalorder %s26, 3
      %p397 = pnand %p395, %p396
      %p398 = pneg %p397
      // Predicated region
      $region65: #{lenet_forward.1} parent=5 // pred_check
        _
      $region66: #{lenet_forward.1} parent=5 // pred_check_branch
        %400 = sbr.rel (%p397) target = $region68
      $region67: #{lenet_forward.1} parent=5 // pred_region
        %s401 = ssub.s32 %s26, 1
        %p402 = scmp.lt.s32.totalorder %s31, 1
        %s403 = scalar_select %p402, %s31, 1
        %s404 = smul.addr %s403, 72
        %s405 = smul.addr %s404, 4
        %s406 = scalar_lea.vmem %s0, %s405
        %p407 = pneg %p52
        %p408 = pneg %p49
        %p409 = pneg %p73
        %p410 = pneg %p70
        %p411 = pneg %p94
        %p412 = pneg %p91
        %p413 = pneg %p115
        %p414 = pneg %p112
        %p415 = pneg %p136
        %p416 = pneg %p133
        %p417 = pneg %p157
        %p418 = pneg %p154
        %p419 = pneg %p178
        %p420 = pneg %p175
        %p421 = pneg %p199
        %p422 = pneg %p196
        %p423 = pneg %p220
        %p424 = pneg %p217
        %p425 = pneg %p241
        %p426 = pneg %p238
        %p427 = pneg %p262
        %p428 = pneg %p259
        %p429 = pneg %p283
        %p430 = pneg %p280
        %p431 = pneg %p309
        %p432 = pneg %p306
        %s433 = sand.u32 %s296, 1
        %s434 = scalar_lea.sflag [#allocation3], %s433
        %s435 = sand.u32 %s296, 1
        %s436 = scalar_lea.vmem [#allocation2], %s435
        %p437 = pneg %p335
        %p438 = pneg %p332
        %s439 = sand.u32 %s322, 1
        %s440 = scalar_lea.sflag [#allocation5], %s439
        %s441 = sand.u32 %s322, 1
        %s442 = scalar_lea.vmem [#allocation4], %s441
        %p443 = scmp.lt.s32.totalorder %s31, 1
        %s444 = scalar_select %p443, %s31, 1
        %s445 = smul.addr %s444, 72
        %s446 = smul.addr %s445, 4
        %s447 = scalar_lea.vmem %s0, %s446
        %v449 = vld [vmem:[%s1] sm:$0xf]
        %v450 = vld [vmem:[%s1 + $0x4] sm:$0xf]
        %v451 = vld [vmem:[%s1 + $0x8] sm:$0xf]
        %v452 = vld [vmem:[%s1 + $0xc] sm:$0x1]
        %v453 = vld [vmem:[%s447] sm:$0xf]
        %v454 = vld [vmem:[%s447 + $0x4] sm:$0xf]
        %v455 = vld [vmem:[%s447 + $0x8] sm:$0xf]
        %v456 = vld [vmem:[%s447 + $0xc] sm:$0xf]
        %v457 = vld [vmem:[%s447 + $0x10] sm:$0xf]
        %v458 = vld [vmem:[%s447 + $0x14] sm:$0xf]
        %v459 = vld [vmem:[%s447 + $0x18] sm:$0xf]
        %v460 = vld [vmem:[%s447 + $0x1c] sm:$0xf]
        %v461 = vld [vmem:[%s447 + $0x20] sm:$0xf]
        %v462 = vld [vmem:[%s447 + $0x24] sm:$0xf]
        %v463 = vld [vmem:[%s447 + $0x28] sm:$0xf]
        %v464 = vld [vmem:[%s447 + $0x2c] sm:$0xf]
        %v465 = vld [vmem:[%s447 + $0x30] sm:$0xf]
        %v466 = vld [vmem:[%s447 + $0x34] sm:$0xf]
        %v467 = vld [vmem:[%s447 + $0x38] sm:$0xf]
        %v468 = vld [vmem:[%s447 + $0x3c] sm:$0xf]
        %v469 = vld [vmem:[%s447 + $0x40] sm:$0xf]
        %v470 = vld [vmem:[%s447 + $0x44] sm:$0xf]
        %v489 = vunpack.c.l.b16 %v453
        %v490 = vunpack.c.l.b16 %v454
        %v491 = vunpack.c.l.b16 %v455
        %v492 = vunpack.c.l.b16 %v456
        %v493 = vunpack.c.l.b16 %v457
        %v494 = vunpack.c.l.b16 %v458
        %v495 = vunpack.c.l.b16 %v459
        %v496 = vunpack.c.l.b16 %v460
        %v497 = vunpack.c.l.b16 %v461
        %v498 = vunpack.c.l.b16 %v462
        %v499 = vunpack.c.l.b16 %v463
        %v500 = vunpack.c.l.b16 %v464
        %v501 = vunpack.c.l.b16 %v465
        %v502 = vunpack.c.l.b16 %v466
        %v503 = vunpack.c.l.b16 %v467
        %v504 = vunpack.c.l.b16 %v468
        %v505 = vunpack.c.l.b16 %v469
        %v506 = vunpack.c.l.b16 %v470
        %v507 = vpack.c.b16 %v490, %v489
        %v508 = vpack.c.b16 %v492, %v491
        %v509 = vpack.c.b16 %v494, %v493
        %v510 = vpack.c.b16 %v496, %v495
        %v511 = vpack.c.b16 %v498, %v497
        %v512 = vpack.c.b16 %v500, %v499
        %v513 = vpack.c.b16 %v502, %v501
        %v514 = vpack.c.b16 %v504, %v503
        %v515 = vpack.c.b16 %v506, %v505
        %v520 = vunpack.c.l.b16 %v449
        %v521 = vunpack.c.l.b16 %v450
        %v522 = vunpack.c.l.b16 %v451
        %v523 = vunpack.c.l.b16 %v452
        %v524 = vpack.c.b16 %v521, %v520
        %v525 = vpack.c.b16 %v523, %v522
        %vm527 = vcmask 203776
        %v529 = vsel %vm527, %v507, 0
        %v532 = vsel %vm527, %v508, 0
        %v535 = vsel %vm527, %v509, 0
        %v538 = vsel %vm527, %v510, 0
        %v541 = vsel %vm527, %v511, 0
        %v544 = vsel %vm527, %v512, 0
        %v547 = vsel %vm527, %v513, 0
        %v550 = vsel %vm527, %v514, 0
        %v553 = vsel %vm527, %v515, 0
        %vm555 = vcmask 1043456
        %vm556 = vcmask 1044480
        %v557 = vsel %vm555, 4294967295, 65535
        %v558 = vsel %vm556, %v557, 0
        %v560 = vand.u32 %v525, %v558
        %562 = vmatpush.bf16.msra.mxu0 0
        %563 = vmatpush.bf16.msra.mxu0 0
        %564 = vmatpush.bf16.msra.mxu0 0
        %565 = vmatpush.bf16.msra.mxu0 0
        %566 = vmatpush.bf16.msra.mxu0 0
        %567 = vmatpush.bf16.msra.mxu0 0
        %568 = vmatpush.bf16.msra.mxu0 %v560
        %569 = vmatpush.bf16.msra.mxu0 %v524
        %570 = vmatmul.bf16.gmra.mxu0 %v529
        %v571 = vpop.f32.mrf.mxu0
        %v572 = vadd.f32 0.0, %v571
        %v573 = vpop.f32.mrf.mxu0
        %v574 = vadd.f32 0.0, %v573
        %575 = vmatmul.bf16.gmra.mxu0 %v532
        %v576 = vpop.f32.mrf.mxu0
        %v577 = vadd.f32 0.0, %v576
        %v578 = vpop.f32.mrf.mxu0
        %v579 = vadd.f32 0.0, %v578
        %580 = vmatmul.bf16.gmra.mxu0 %v535
        %v581 = vpop.f32.mrf.mxu0
        %v582 = vadd.f32 0.0, %v581
        %v583 = vpop.f32.mrf.mxu0
        %v584 = vadd.f32 0.0, %v583
        %585 = vmatmul.bf16.gmra.mxu0 %v538
        %v586 = vpop.f32.mrf.mxu0
        %v587 = vadd.f32 0.0, %v586
        %v588 = vpop.f32.mrf.mxu0
        %v589 = vadd.f32 0.0, %v588
        %590 = vmatmul.bf16.gmra.mxu0 %v541
        %v591 = vpop.f32.mrf.mxu0
        %v592 = vadd.f32 0.0, %v591
        %v593 = vpop.f32.mrf.mxu0
        %v594 = vadd.f32 0.0, %v593
        %595 = vmatmul.bf16.gmra.mxu0 %v544
        %v596 = vpop.f32.mrf.mxu0
        %v597 = vadd.f32 0.0, %v596
        %v598 = vpop.f32.mrf.mxu0
        %v599 = vadd.f32 0.0, %v598
        %600 = vmatmul.bf16.gmra.mxu0 %v547
        %v601 = vpop.f32.mrf.mxu0
        %v602 = vadd.f32 0.0, %v601
        %v603 = vpop.f32.mrf.mxu0
        %v604 = vadd.f32 0.0, %v603
        %605 = vmatmul.bf16.gmra.mxu0 %v550
        %v606 = vpop.f32.mrf.mxu0
        %v607 = vadd.f32 0.0, %v606
        %v608 = vpop.f32.mrf.mxu0
        %v609 = vadd.f32 0.0, %v608
        %610 = vmatmul.bf16.gmra.mxu0 %v553
        %v611 = vpop.f32.mrf.mxu0
        %v612 = vadd.f32 0.0, %v611
        %v613 = vpop.f32.mrf.mxu0
        %v614 = vadd.f32 0.0, %v613
        %615 = vdwg.mxu0
        %v616 = vld [vmem:[%s447 + $0x48] sm:$0xf]
        %v617 = vld [vmem:[%s447 + $0x4c] sm:$0xf]
        %v618 = vld [vmem:[%s447 + $0x50] sm:$0xf]
        %v619 = vld [vmem:[%s447 + $0x54] sm:$0xf]
        %v620 = vld [vmem:[%s447 + $0x58] sm:$0xf]
        %v621 = vld [vmem:[%s447 + $0x5c] sm:$0xf]
        %v622 = vld [vmem:[%s447 + $0x60] sm:$0xf]
        %v623 = vld [vmem:[%s447 + $0x64] sm:$0xf]
        %v624 = vld [vmem:[%s447 + $0x68] sm:$0xf]
        %v625 = vld [vmem:[%s447 + $0x6c] sm:$0xf]
        %v626 = vld [vmem:[%s447 + $0x70] sm:$0xf]
        %v627 = vld [vmem:[%s447 + $0x74] sm:$0xf]
        %v628 = vld [vmem:[%s447 + $0x78] sm:$0xf]
        %v629 = vld [vmem:[%s447 + $0x7c] sm:$0xf]
        %v630 = vld [vmem:[%s447 + $0x80] sm:$0xf]
        %v631 = vld [vmem:[%s447 + $0x84] sm:$0xf]
        %v632 = vld [vmem:[%s447 + $0x88] sm:$0xf]
        %v633 = vld [vmem:[%s447 + $0x8c] sm:$0xf]
        %v652 = vunpack.c.l.b16 %v616
        %v653 = vunpack.c.l.b16 %v617
        %v654 = vunpack.c.l.b16 %v618
        %v655 = vunpack.c.l.b16 %v619
        %v656 = vunpack.c.l.b16 %v620
        %v657 = vunpack.c.l.b16 %v621
        %v658 = vunpack.c.l.b16 %v622
        %v659 = vunpack.c.l.b16 %v623
        %v660 = vunpack.c.l.b16 %v624
        %v661 = vunpack.c.l.b16 %v625
        %v662 = vunpack.c.l.b16 %v626
        %v663 = vunpack.c.l.b16 %v627
        %v664 = vunpack.c.l.b16 %v628
        %v665 = vunpack.c.l.b16 %v629
        %v666 = vunpack.c.l.b16 %v630
        %v667 = vunpack.c.l.b16 %v631
        %v668 = vunpack.c.l.b16 %v632
        %v669 = vunpack.c.l.b16 %v633
        %v670 = vpack.c.b16 %v653, %v652
        %v671 = vpack.c.b16 %v655, %v654
        %v672 = vpack.c.b16 %v657, %v656
        %v673 = vpack.c.b16 %v659, %v658
        %v674 = vpack.c.b16 %v661, %v660
        %v675 = vpack.c.b16 %v663, %v662
        %v676 = vpack.c.b16 %v665, %v664
        %v677 = vpack.c.b16 %v667, %v666
        %v678 = vpack.c.b16 %v669, %v668
        %v680 = vsel %vm527, %v670, 0
        %v683 = vsel %vm527, %v671, 0
        %v686 = vsel %vm527, %v672, 0
        %v689 = vsel %vm527, %v673, 0
        %v692 = vsel %vm527, %v674, 0
        %v695 = vsel %vm527, %v675, 0
        %v698 = vsel %vm527, %v676, 0
        %v701 = vsel %vm527, %v677, 0
        %v704 = vsel %vm527, %v678, 0
        %706 = vmatpush.bf16.msra.mxu0 0
        %707 = vmatpush.bf16.msra.mxu0 0
        %708 = vmatpush.bf16.msra.mxu0 0
        %709 = vmatpush.bf16.msra.mxu0 0
        %710 = vmatpush.bf16.msra.mxu0 0
        %711 = vmatpush.bf16.msra.mxu0 0
        %712 = vmatpush.bf16.msra.mxu0 %v560
        %713 = vmatpush.bf16.msra.mxu0 %v524
        %714 = vmatmul.bf16.gmra.mxu0 %v680
        %v715 = vpop.f32.mrf.mxu0
        %v716 = vadd.f32 0.0, %v715
        %v717 = vpop.f32.mrf.mxu0
        %v718 = vadd.f32 0.0, %v717
        %719 = vmatmul.bf16.gmra.mxu0 %v683
        %v720 = vpop.f32.mrf.mxu0
        %v721 = vadd.f32 0.0, %v720
        %v722 = vpop.f32.mrf.mxu0
        %v723 = vadd.f32 0.0, %v722
        %724 = vmatmul.bf16.gmra.mxu0 %v686
        %v725 = vpop.f32.mrf.mxu0
        %v726 = vadd.f32 0.0, %v725
        %v727 = vpop.f32.mrf.mxu0
        %v728 = vadd.f32 0.0, %v727
        %729 = vmatmul.bf16.gmra.mxu0 %v689
        %v730 = vpop.f32.mrf.mxu0
        %v731 = vadd.f32 0.0, %v730
        %v732 = vpop.f32.mrf.mxu0
        %v733 = vadd.f32 0.0, %v732
        %734 = vmatmul.bf16.gmra.mxu0 %v692
        %v735 = vpop.f32.mrf.mxu0
        %v736 = vadd.f32 0.0, %v735
        %v737 = vpop.f32.mrf.mxu0
        %v738 = vadd.f32 0.0, %v737
        %739 = vmatmul.bf16.gmra.mxu0 %v695
        %v740 = vpop.f32.mrf.mxu0
        %v741 = vadd.f32 0.0, %v740
        %v742 = vpop.f32.mrf.mxu0
        %v743 = vadd.f32 0.0, %v742
        %744 = vmatmul.bf16.gmra.mxu0 %v698
        %v745 = vpop.f32.mrf.mxu0
        %v746 = vadd.f32 0.0, %v745
        %v747 = vpop.f32.mrf.mxu0
        %v748 = vadd.f32 0.0, %v747
        %749 = vmatmul.bf16.gmra.mxu0 %v701
        %v750 = vpop.f32.mrf.mxu0
        %v751 = vadd.f32 0.0, %v750
        %v752 = vpop.f32.mrf.mxu0
        %v753 = vadd.f32 0.0, %v752
        %754 = vmatmul.bf16.gmra.mxu0 %v704
        %v755 = vpop.f32.mrf.mxu0
        %v756 = vadd.f32 0.0, %v755
        %v757 = vpop.f32.mrf.mxu0
        %v758 = vadd.f32 0.0, %v757
        %759 = vdwg.mxu0
        %v760 = vmax.f32 %v572, %v716
        %v761 = vmax.f32 %v574, %v718
        %v762 = vmax.f32 %v577, %v721
        %v763 = vmax.f32 %v579, %v723
        %v764 = vmax.f32 %v582, %v726
        %v765 = vmax.f32 %v584, %v728
        %v766 = vmax.f32 %v587, %v731
        %v767 = vmax.f32 %v589, %v733
        %v768 = vmax.f32 %v592, %v736
        %v769 = vmax.f32 %v594, %v738
        %v770 = vmax.f32 %v597, %v741
        %v771 = vmax.f32 %v599, %v743
        %v772 = vmax.f32 %v602, %v746
        %v773 = vmax.f32 %v604, %v748
        %v774 = vmax.f32 %v607, %v751
        %v775 = vmax.f32 %v609, %v753
        %v776 = vmax.f32 %v612, %v756
        %v777 = vmax.f32 %v614, %v758
        %v778 = vld [vmem:[%s447 + $0x90] sm:$0xf]
        %v779 = vld [vmem:[%s447 + $0x94] sm:$0xf]
        %v780 = vld [vmem:[%s447 + $0x98] sm:$0xf]
        %v781 = vld [vmem:[%s447 + $0x9c] sm:$0xf]
        %v782 = vld [vmem:[%s447 + $0xa0] sm:$0xf]
        %v783 = vld [vmem:[%s447 + $0xa4] sm:$0xf]
        %v784 = vld [vmem:[%s447 + $0xa8] sm:$0xf]
        %v785 = vld [vmem:[%s447 + $0xac] sm:$0xf]
        %v786 = vld [vmem:[%s447 + $0xb0] sm:$0xf]
        %v787 = vld [vmem:[%s447 + $0xb4] sm:$0xf]
        %v788 = vld [vmem:[%s447 + $0xb8] sm:$0xf]
        %v789 = vld [vmem:[%s447 + $0xbc] sm:$0xf]
        %v790 = vld [vmem:[%s447 + $0xc0] sm:$0xf]
        %v791 = vld [vmem:[%s447 + $0xc4] sm:$0xf]
        %v792 = vld [vmem:[%s447 + $0xc8] sm:$0xf]
        %v793 = vld [vmem:[%s447 + $0xcc] sm:$0xf]
        %v794 = vld [vmem:[%s447 + $0xd0] sm:$0xf]
        %v795 = vld [vmem:[%s447 + $0xd4] sm:$0xf]
        %v814 = vunpack.c.l.b16 %v778
        %v815 = vunpack.c.l.b16 %v779
        %v816 = vunpack.c.l.b16 %v780
        %v817 = vunpack.c.l.b16 %v781
        %v818 = vunpack.c.l.b16 %v782
        %v819 = vunpack.c.l.b16 %v783
        %v820 = vunpack.c.l.b16 %v784
        %v821 = vunpack.c.l.b16 %v785
        %v822 = vunpack.c.l.b16 %v786
        %v823 = vunpack.c.l.b16 %v787
        %v824 = vunpack.c.l.b16 %v788
        %v825 = vunpack.c.l.b16 %v789
        %v826 = vunpack.c.l.b16 %v790
        %v827 = vunpack.c.l.b16 %v791
        %v828 = vunpack.c.l.b16 %v792
        %v829 = vunpack.c.l.b16 %v793
        %v830 = vunpack.c.l.b16 %v794
        %v831 = vunpack.c.l.b16 %v795
        %v832 = vpack.c.b16 %v815, %v814
        %v833 = vpack.c.b16 %v817, %v816
        %v834 = vpack.c.b16 %v819, %v818
        %v835 = vpack.c.b16 %v821, %v820
        %v836 = vpack.c.b16 %v823, %v822
        %v837 = vpack.c.b16 %v825, %v824
        %v838 = vpack.c.b16 %v827, %v826
        %v839 = vpack.c.b16 %v829, %v828
        %v840 = vpack.c.b16 %v831, %v830
        %v842 = vsel %vm527, %v832, 0
        %v845 = vsel %vm527, %v833, 0
        %v848 = vsel %vm527, %v834, 0
        %v851 = vsel %vm527, %v835, 0
        %v854 = vsel %vm527, %v836, 0
        %v857 = vsel %vm527, %v837, 0
        %v860 = vsel %vm527, %v838, 0
        %v863 = vsel %vm527, %v839, 0
        %v866 = vsel %vm527, %v840, 0
        %868 = vmatpush.bf16.msra.mxu0 0
        %869 = vmatpush.bf16.msra.mxu0 0
        %870 = vmatpush.bf16.msra.mxu0 0
        %871 = vmatpush.bf16.msra.mxu0 0
        %872 = vmatpush.bf16.msra.mxu0 0
        %873 = vmatpush.bf16.msra.mxu0 0
        %874 = vmatpush.bf16.msra.mxu0 %v560
        %875 = vmatpush.bf16.msra.mxu0 %v524
        %876 = vmatmul.bf16.gmra.mxu0 %v842
        %v877 = vpop.f32.mrf.mxu0
        %v878 = vadd.f32 0.0, %v877
        %v879 = vpop.f32.mrf.mxu0
        %v880 = vadd.f32 0.0, %v879
        %881 = vmatmul.bf16.gmra.mxu0 %v845
        %v882 = vpop.f32.mrf.mxu0
        %v883 = vadd.f32 0.0, %v882
        %v884 = vpop.f32.mrf.mxu0
        %v885 = vadd.f32 0.0, %v884
        %886 = vmatmul.bf16.gmra.mxu0 %v848
        %v887 = vpop.f32.mrf.mxu0
        %v888 = vadd.f32 0.0, %v887
        %v889 = vpop.f32.mrf.mxu0
        %v890 = vadd.f32 0.0, %v889
        %891 = vmatmul.bf16.gmra.mxu0 %v851
        %v892 = vpop.f32.mrf.mxu0
        %v893 = vadd.f32 0.0, %v892
        %v894 = vpop.f32.mrf.mxu0
        %v895 = vadd.f32 0.0, %v894
        %896 = vmatmul.bf16.gmra.mxu0 %v854
        %v897 = vpop.f32.mrf.mxu0
        %v898 = vadd.f32 0.0, %v897
        %v899 = vpop.f32.mrf.mxu0
        %v900 = vadd.f32 0.0, %v899
        %901 = vmatmul.bf16.gmra.mxu0 %v857
        %v902 = vpop.f32.mrf.mxu0
        %v903 = vadd.f32 0.0, %v902
        %v904 = vpop.f32.mrf.mxu0
        %v905 = vadd.f32 0.0, %v904
        %906 = vmatmul.bf16.gmra.mxu0 %v860
        %v907 = vpop.f32.mrf.mxu0
        %v908 = vadd.f32 0.0, %v907
        %v909 = vpop.f32.mrf.mxu0
        %v910 = vadd.f32 0.0, %v909
        %911 = vmatmul.bf16.gmra.mxu0 %v863
        %v912 = vpop.f32.mrf.mxu0
        %v913 = vadd.f32 0.0, %v912
        %v914 = vpop.f32.mrf.mxu0
        %v915 = vadd.f32 0.0, %v914
        %916 = vmatmul.bf16.gmra.mxu0 %v866
        %v917 = vpop.f32.mrf.mxu0
        %v918 = vadd.f32 0.0, %v917
        %v919 = vpop.f32.mrf.mxu0
        %v920 = vadd.f32 0.0, %v919
        %921 = vdwg.mxu0
        %v922 = vmax.f32 %v760, %v878
        %v923 = vmax.f32 %v761, %v880
        %v924 = vmax.f32 %v762, %v883
        %v925 = vmax.f32 %v763, %v885
        %v926 = vmax.f32 %v764, %v888
        %v927 = vmax.f32 %v765, %v890
        %v928 = vmax.f32 %v766, %v893
        %v929 = vmax.f32 %v767, %v895
        %v930 = vmax.f32 %v768, %v898
        %v931 = vmax.f32 %v769, %v900
        %v932 = vmax.f32 %v770, %v903
        %v933 = vmax.f32 %v771, %v905
        %v934 = vmax.f32 %v772, %v908
        %v935 = vmax.f32 %v773, %v910
        %v936 = vmax.f32 %v774, %v913
        %v937 = vmax.f32 %v775, %v915
        %v938 = vmax.f32 %v776, %v918
        %v939 = vmax.f32 %v777, %v920
        %v940 = vld [vmem:[%s447 + $0xd8] sm:$0xf]
        %v941 = vld [vmem:[%s447 + $0xdc] sm:$0xf]
        %v942 = vld [vmem:[%s447 + $0xe0] sm:$0xf]
        %v943 = vld [vmem:[%s447 + $0xe4] sm:$0xf]
        %v944 = vld [vmem:[%s447 + $0xe8] sm:$0xf]
        %v945 = vld [vmem:[%s447 + $0xec] sm:$0xf]
        %v946 = vld [vmem:[%s447 + $0xf0] sm:$0xf]
        %v947 = vld [vmem:[%s447 + $0xf4] sm:$0xf]
        %v948 = vld [vmem:[%s447 + $0xf8] sm:$0xf]
        %v949 = vld [vmem:[%s447 + $0xfc] sm:$0xf]
        %v950 = vld [vmem:[%s447 + $0x100] sm:$0xf]
        %v951 = vld [vmem:[%s447 + $0x104] sm:$0xf]
        %v952 = vld [vmem:[%s447 + $0x108] sm:$0xf]
        %v953 = vld [vmem:[%s447 + $0x10c] sm:$0xf]
        %v954 = vld [vmem:[%s447 + $0x110] sm:$0xf]
        %v955 = vld [vmem:[%s447 + $0x114] sm:$0xf]
        %v956 = vld [vmem:[%s447 + $0x118] sm:$0xf]
        %v957 = vld [vmem:[%s447 + $0x11c] sm:$0xf]
        %v976 = vunpack.c.l.b16 %v940
        %v977 = vunpack.c.l.b16 %v941
        %v978 = vunpack.c.l.b16 %v942
        %v979 = vunpack.c.l.b16 %v943
        %v980 = vunpack.c.l.b16 %v944
        %v981 = vunpack.c.l.b16 %v945
        %v982 = vunpack.c.l.b16 %v946
        %v983 = vunpack.c.l.b16 %v947
        %v984 = vunpack.c.l.b16 %v948
        %v985 = vunpack.c.l.b16 %v949
        %v986 = vunpack.c.l.b16 %v950
        %v987 = vunpack.c.l.b16 %v951
        %v988 = vunpack.c.l.b16 %v952
        %v989 = vunpack.c.l.b16 %v953
        %v990 = vunpack.c.l.b16 %v954
        %v991 = vunpack.c.l.b16 %v955
        %v992 = vunpack.c.l.b16 %v956
        %v993 = vunpack.c.l.b16 %v957
        %v994 = vpack.c.b16 %v977, %v976
        %v995 = vpack.c.b16 %v979, %v978
        %v996 = vpack.c.b16 %v981, %v980
        %v997 = vpack.c.b16 %v983, %v982
        %v998 = vpack.c.b16 %v985, %v984
        %v999 = vpack.c.b16 %v987, %v986
        %v1000 = vpack.c.b16 %v989, %v988
        %v1001 = vpack.c.b16 %v991, %v990
        %v1002 = vpack.c.b16 %v993, %v992
        %v1004 = vsel %vm527, %v994, 0
        %v1007 = vsel %vm527, %v995, 0
        %v1010 = vsel %vm527, %v996, 0
        %v1013 = vsel %vm527, %v997, 0
        %v1016 = vsel %vm527, %v998, 0
        %v1019 = vsel %vm527, %v999, 0
        %v1022 = vsel %vm527, %v1000, 0
        %v1025 = vsel %vm527, %v1001, 0
        %v1028 = vsel %vm527, %v1002, 0
        %1030 = vmatpush.bf16.msra.mxu0 0
        %1031 = vmatpush.bf16.msra.mxu0 0
        %1032 = vmatpush.bf16.msra.mxu0 0
        %1033 = vmatpush.bf16.msra.mxu0 0
        %1034 = vmatpush.bf16.msra.mxu0 0
        %1035 = vmatpush.bf16.msra.mxu0 0
        %1036 = vmatpush.bf16.msra.mxu0 %v560
        %1037 = vmatpush.bf16.msra.mxu0 %v524
        %1038 = vmatmul.bf16.gmra.mxu0 %v1004
        %v1039 = vpop.f32.mrf.mxu0
        %v1040 = vadd.f32 0.0, %v1039
        %v1041 = vpop.f32.mrf.mxu0
        %v1042 = vadd.f32 0.0, %v1041
        %1043 = vmatmul.bf16.gmra.mxu0 %v1007
        %v1044 = vpop.f32.mrf.mxu0
        %v1045 = vadd.f32 0.0, %v1044
        %v1046 = vpop.f32.mrf.mxu0
        %v1047 = vadd.f32 0.0, %v1046
        %1048 = vmatmul.bf16.gmra.mxu0 %v1010
        %v1049 = vpop.f32.mrf.mxu0
        %v1050 = vadd.f32 0.0, %v1049
        %v1051 = vpop.f32.mrf.mxu0
        %v1052 = vadd.f32 0.0, %v1051
        %1053 = vmatmul.bf16.gmra.mxu0 %v1013
        %v1054 = vpop.f32.mrf.mxu0
        %v1055 = vadd.f32 0.0, %v1054
        %v1056 = vpop.f32.mrf.mxu0
        %v1057 = vadd.f32 0.0, %v1056
        %1058 = vmatmul.bf16.gmra.mxu0 %v1016
        %v1059 = vpop.f32.mrf.mxu0
        %v1060 = vadd.f32 0.0, %v1059
        %v1061 = vpop.f32.mrf.mxu0
        %v1062 = vadd.f32 0.0, %v1061
        %1063 = vmatmul.bf16.gmra.mxu0 %v1019
        %v1064 = vpop.f32.mrf.mxu0
        %v1065 = vadd.f32 0.0, %v1064
        %v1066 = vpop.f32.mrf.mxu0
        %v1067 = vadd.f32 0.0, %v1066
        %1068 = vmatmul.bf16.gmra.mxu0 %v1022
        %v1069 = vpop.f32.mrf.mxu0
        %v1070 = vadd.f32 0.0, %v1069
        %v1071 = vpop.f32.mrf.mxu0
        %v1072 = vadd.f32 0.0, %v1071
        %1073 = vmatmul.bf16.gmra.mxu0 %v1025
        %v1074 = vpop.f32.mrf.mxu0
        %v1075 = vadd.f32 0.0, %v1074
        %v1076 = vpop.f32.mrf.mxu0
        %v1077 = vadd.f32 0.0, %v1076
        %1078 = vmatmul.bf16.gmra.mxu0 %v1028
        %v1079 = vpop.f32.mrf.mxu0
        %v1080 = vadd.f32 0.0, %v1079
        %v1081 = vpop.f32.mrf.mxu0
        %v1082 = vadd.f32 0.0, %v1081
        %1083 = vdwg.mxu0
        %v1084 = vmax.f32 %v922, %v1040
        %v1085 = vmax.f32 %v923, %v1042
        %v1086 = vmax.f32 %v924, %v1045
        %v1087 = vmax.f32 %v925, %v1047
        %v1088 = vmax.f32 %v926, %v1050
        %v1089 = vmax.f32 %v927, %v1052
        %v1090 = vmax.f32 %v928, %v1055
        %v1091 = vmax.f32 %v929, %v1057
        %v1092 = vmax.f32 %v930, %v1060
        %v1093 = vmax.f32 %v931, %v1062
        %v1094 = vmax.f32 %v932, %v1065
        %v1095 = vmax.f32 %v933, %v1067
        %v1096 = vmax.f32 %v934, %v1070
        %v1097 = vmax.f32 %v935, %v1072
        %v1098 = vmax.f32 %v936, %v1075
        %v1099 = vmax.f32 %v937, %v1077
        %v1100 = vmax.f32 %v938, %v1080
        %v1101 = vmax.f32 %v939, %v1082
        %v1102 = vld [vmem:[%s2] sm:$0x1]
        %v1104 = vperm.slane %v1102, 0
        %v1106 = vadd.f32 %v1084, %v1104
        %v1107 = vadd.f32 %v1085, %v1104
        %v1108 = vadd.f32 %v1086, %v1104
        %v1109 = vadd.f32 %v1087, %v1104
        %v1110 = vadd.f32 %v1088, %v1104
        %v1111 = vadd.f32 %v1089, %v1104
        %v1112 = vadd.f32 %v1090, %v1104
        %v1113 = vadd.f32 %v1091, %v1104
        %v1114 = vadd.f32 %v1092, %v1104
        %v1115 = vadd.f32 %v1093, %v1104
        %v1116 = vadd.f32 %v1094, %v1104
        %v1117 = vadd.f32 %v1095, %v1104
        %v1118 = vadd.f32 %v1096, %v1104
        %v1119 = vadd.f32 %v1097, %v1104
        %v1120 = vadd.f32 %v1098, %v1104
        %v1121 = vadd.f32 %v1099, %v1104
        %v1122 = vadd.f32 %v1100, %v1104
        %v1123 = vadd.f32 %v1101, %v1104
        %v1124 = vmax.f32 %v1106, 0.0
        %v1125 = vmax.f32 %v1107, 0.0
        %v1126 = vmax.f32 %v1108, 0.0
        %v1127 = vmax.f32 %v1109, 0.0
        %v1128 = vmax.f32 %v1110, 0.0
        %v1129 = vmax.f32 %v1111, 0.0
        %v1130 = vmax.f32 %v1112, 0.0
        %v1131 = vmax.f32 %v1113, 0.0
        %v1132 = vmax.f32 %v1114, 0.0
        %v1133 = vmax.f32 %v1115, 0.0
        %v1134 = vmax.f32 %v1116, 0.0
        %v1135 = vmax.f32 %v1117, 0.0
        %v1136 = vmax.f32 %v1118, 0.0
        %v1137 = vmax.f32 %v1119, 0.0
        %v1138 = vmax.f32 %v1120, 0.0
        %v1139 = vmax.f32 %v1121, 0.0
        %v1140 = vmax.f32 %v1122, 0.0
        %v1141 = vmax.f32 %v1123, 0.0
        %v1142 = vpack.c.bf16 %v1125, %v1124
        %v1143 = vpack.c.bf16 %v1127, %v1126
        %v1144 = vpack.c.bf16 %v1129, %v1128
        %v1145 = vpack.c.bf16 %v1131, %v1130
        %v1146 = vpack.c.bf16 %v1133, %v1132
        %v1147 = vpack.c.bf16 %v1135, %v1134
        %v1148 = vpack.c.bf16 %v1137, %v1136
        %v1149 = vpack.c.bf16 %v1139, %v1138
        %v1150 = vpack.c.bf16 %v1141, %v1140
        %v1151 = vld [vmem:[%s3] sm:$0xff]
        %v1152 = vld [vmem:[%s3 + $0x8] sm:$0xff]
        %v1153 = vld [vmem:[%s3 + $0x10] sm:$0xff]
        %v1154 = vld [vmem:[%s3 + $0x18] sm:$0xff]
        %v1155 = vld [vmem:[%s3 + $0x20] sm:$0xff]
        %v1156 = vld [vmem:[%s3 + $0x28] sm:$0xff]
        %v1157 = vld [vmem:[%s3 + $0x30] sm:$0xff]
        %v1158 = vld [vmem:[%s3 + $0x38] sm:$0xff]
        %v1167 = vunpack.c.l.b16 %v1151
        %v1168 = vunpack.c.h.b16 %v1151
        %v1169 = vunpack.c.l.b16 %v1152
        %v1170 = vunpack.c.h.b16 %v1152
        %v1171 = vunpack.c.l.b16 %v1153
        %v1172 = vunpack.c.h.b16 %v1153
        %v1173 = vunpack.c.l.b16 %v1154
        %v1174 = vunpack.c.h.b16 %v1154
        %v1175 = vunpack.c.l.b16 %v1155
        %v1176 = vunpack.c.h.b16 %v1155
        %v1177 = vunpack.c.l.b16 %v1156
        %v1178 = vunpack.c.h.b16 %v1156
        %v1179 = vunpack.c.l.b16 %v1157
        %v1180 = vunpack.c.h.b16 %v1157
        %v1181 = vunpack.c.l.b16 %v1158
        %v1182 = vunpack.c.h.b16 %v1158
        %v1183 = vpack.c.b16 %v1169, %v1167
        %v1184 = vpack.c.b16 %v1170, %v1168
        %v1185 = vpack.c.b16 %v1173, %v1171
        %v1186 = vpack.c.b16 %v1174, %v1172
        %v1187 = vpack.c.b16 %v1177, %v1175
        %v1188 = vpack.c.b16 %v1178, %v1176
        %v1189 = vpack.c.b16 %v1181, %v1179
        %v1190 = vpack.c.b16 %v1182, %v1180
        %vm1195 = vcmask 130048
        %v1197 = vsel %vm1195, %v1184, 0
        %v1200 = vsel %vm1195, %v1186, 0
        %v1203 = vsel %vm1195, %v1188, 0
        %v1206 = vsel %vm1195, %v1190, 0
        %1208 = vmatpush.bf16.msra.mxu0 %v1149
        %1209 = vmatpush.bf16.msra.mxu0 %v1148
        %1210 = vmatpush.bf16.msra.mxu0 %v1147
        %1211 = vmatpush.bf16.msra.mxu0 %v1146
        %1212 = vmatpush.bf16.msra.mxu0 %v1145
        %1213 = vmatpush.bf16.msra.mxu0 %v1144
        %1214 = vmatpush.bf16.msra.mxu0 %v1143
        %1215 = vmatpush.bf16.msra.mxu0 %v1142
        %1216 = vmatmul.bf16.gmra.mxu0 %v1183
        %v1217 = vpop.f32.mrf.mxu0
        %v1218 = vadd.f32 0.0, %v1217
        %v1219 = vpop.f32.mrf.mxu0
        %v1220 = vadd.f32 0.0, %v1219
        %1221 = vmatmul.bf16.gmra.mxu0 %v1185
        %v1222 = vpop.f32.mrf.mxu0
        %v1223 = vadd.f32 0.0, %v1222
        %v1224 = vpop.f32.mrf.mxu0
        %v1225 = vadd.f32 0.0, %v1224
        %1226 = vmatmul.bf16.gmra.mxu0 %v1187
        %v1227 = vpop.f32.mrf.mxu0
        %v1228 = vadd.f32 0.0, %v1227
        %v1229 = vpop.f32.mrf.mxu0
        %v1230 = vadd.f32 0.0, %v1229
        %1231 = vmatmul.bf16.gmra.mxu0 %v1189
        %v1232 = vpop.f32.mrf.mxu0
        %v1233 = vadd.f32 0.0, %v1232
        %v1234 = vpop.f32.mrf.mxu0
        %v1235 = vadd.f32 0.0, %v1234
        %1236 = vdwg.mxu0
        %1237 = vmatpush.bf16.msra.mxu0 0
        %1238 = vmatpush.bf16.msra.mxu0 0
        %1239 = vmatpush.bf16.msra.mxu0 0
        %1240 = vmatpush.bf16.msra.mxu0 0
        %1241 = vmatpush.bf16.msra.mxu0 0
        %1242 = vmatpush.bf16.msra.mxu0 0
        %1243 = vmatpush.bf16.msra.mxu0 0
        %1244 = vmatpush.bf16.msra.mxu0 %v1150
        %1245 = vmatmul.bf16.gmra.mxu0 %v1197
        %v1246 = vpop.f32.mrf.mxu0
        %v1247 = vadd.f32 %v1218, %v1246
        %v1248 = vpop.f32.mrf.mxu0
        %v1249 = vadd.f32 %v1220, %v1248
        %1250 = vmatmul.bf16.gmra.mxu0 %v1200
        %v1251 = vpop.f32.mrf.mxu0
        %v1252 = vadd.f32 %v1223, %v1251
        %v1253 = vpop.f32.mrf.mxu0
        %v1254 = vadd.f32 %v1225, %v1253
        %1255 = vmatmul.bf16.gmra.mxu0 %v1203
        %v1256 = vpop.f32.mrf.mxu0
        %v1257 = vadd.f32 %v1228, %v1256
        %v1258 = vpop.f32.mrf.mxu0
        %v1259 = vadd.f32 %v1230, %v1258
        %1260 = vmatmul.bf16.gmra.mxu0 %v1206
        %v1261 = vpop.f32.mrf.mxu0
        %v1262 = vadd.f32 %v1233, %v1261
        %v1263 = vpop.f32.mrf.mxu0
        %v1264 = vadd.f32 %v1235, %v1263
        %1265 = vdwg.mxu0
        %v1266 = vpack.c.bf16 %v1249, %v1247
        %v1267 = vpack.c.bf16 %v1254, %v1252
        %v1268 = vpack.c.bf16 %v1259, %v1257
        %v1269 = vpack.c.bf16 %v1264, %v1262
        %v1270 = vld [vmem:[%s4] sm:$0xf]
        %v1271 = vld [vmem:[%s4 + $0x4] sm:$0xf]
        %v1272 = vld [vmem:[%s4 + $0x8] sm:$0xf]
        %v1273 = vld [vmem:[%s4 + $0xc] sm:$0xf]
        %v1274 = vld [vmem:[%s4 + $0x10] sm:$0xf]
        %v1275 = vld [vmem:[%s4 + $0x14] sm:$0xf]
        %v1276 = vld [vmem:[%s4 + $0x18] sm:$0xf]
        %v1277 = vld [vmem:[%s4 + $0x1c] sm:$0xf]
        %s1278 = scalar_lea.vmem %s3, 64
        %v1279 = vld [vmem:[%s1278] sm:$0xff]
        %v1280 = vld [vmem:[%s1278 + $0x8] sm:$0xff]
        %v1281 = vld [vmem:[%s1278 + $0x10] sm:$0xff]
        %v1282 = vld [vmem:[%s1278 + $0x18] sm:$0xff]
        %v1283 = vld [vmem:[%s1278 + $0x20] sm:$0xff]
        %v1284 = vld [vmem:[%s1278 + $0x28] sm:$0xff]
        %v1285 = vld [vmem:[%s1278 + $0x30] sm:$0xff]
        %v1286 = vld [vmem:[%s1278 + $0x38] sm:$0xff]
        %v1295 = vunpack.c.l.b16 %v1279
        %v1296 = vunpack.c.h.b16 %v1279
        %v1297 = vunpack.c.l.b16 %v1280
        %v1298 = vunpack.c.h.b16 %v1280
        %v1299 = vunpack.c.l.b16 %v1281
        %v1300 = vunpack.c.h.b16 %v1281
        %v1301 = vunpack.c.l.b16 %v1282
        %v1302 = vunpack.c.h.b16 %v1282
        %v1303 = vunpack.c.l.b16 %v1283
        %v1304 = vunpack.c.h.b16 %v1283
        %v1305 = vunpack.c.l.b16 %v1284
        %v1306 = vunpack.c.h.b16 %v1284
        %v1307 = vunpack.c.l.b16 %v1285
        %v1308 = vunpack.c.h.b16 %v1285
        %v1309 = vunpack.c.l.b16 %v1286
        %v1310 = vunpack.c.h.b16 %v1286
        %v1311 = vpack.c.b16 %v1297, %v1295
        %v1312 = vpack.c.b16 %v1298, %v1296
        %v1313 = vpack.c.b16 %v1301, %v1299
        %v1314 = vpack.c.b16 %v1302, %v1300
        %v1315 = vpack.c.b16 %v1305, %v1303
        %v1316 = vpack.c.b16 %v1306, %v1304
        %v1317 = vpack.c.b16 %v1309, %v1307
        %v1318 = vpack.c.b16 %v1310, %v1308
        %v1324 = vsel %vm1195, %v1312, 0
        %v1327 = vsel %vm1195, %v1314, 0
        %v1330 = vsel %vm1195, %v1316, 0
        %v1333 = vsel %vm1195, %v1318, 0
        %1335 = vmatpush.bf16.msra.mxu0 %v1149
        %1336 = vmatpush.bf16.msra.mxu0 %v1148
        %1337 = vmatpush.bf16.msra.mxu0 %v1147
        %1338 = vmatpush.bf16.msra.mxu0 %v1146
        %1339 = vmatpush.bf16.msra.mxu0 %v1145
        %1340 = vmatpush.bf16.msra.mxu0 %v1144
        %1341 = vmatpush.bf16.msra.mxu0 %v1143
        %1342 = vmatpush.bf16.msra.mxu0 %v1142
        %1343 = vmatmul.bf16.gmra.mxu0 %v1311
        %v1344 = vpop.f32.mrf.mxu0
        %v1345 = vadd.f32 0.0, %v1344
        %v1346 = vpop.f32.mrf.mxu0
        %v1347 = vadd.f32 0.0, %v1346
        %1348 = vmatmul.bf16.gmra.mxu0 %v1313
        %v1349 = vpop.f32.mrf.mxu0
        %v1350 = vadd.f32 0.0, %v1349
        %v1351 = vpop.f32.mrf.mxu0
        %v1352 = vadd.f32 0.0, %v1351
        %1353 = vmatmul.bf16.gmra.mxu0 %v1315
        %v1354 = vpop.f32.mrf.mxu0
        %v1355 = vadd.f32 0.0, %v1354
        %v1356 = vpop.f32.mrf.mxu0
        %v1357 = vadd.f32 0.0, %v1356
        %1358 = vmatmul.bf16.gmra.mxu0 %v1317
        %v1359 = vpop.f32.mrf.mxu0
        %v1360 = vadd.f32 0.0, %v1359
        %v1361 = vpop.f32.mrf.mxu0
        %v1362 = vadd.f32 0.0, %v1361
        %1363 = vdwg.mxu0
        %1364 = vmatpush.bf16.msra.mxu0 0
        %1365 = vmatpush.bf16.msra.mxu0 0
        %1366 = vmatpush.bf16.msra.mxu0 0
        %1367 = vmatpush.bf16.msra.mxu0 0
        %1368 = vmatpush.bf16.msra.mxu0 0
        %1369 = vmatpush.bf16.msra.mxu0 0
        %1370 = vmatpush.bf16.msra.mxu0 0
        %1371 = vmatpush.bf16.msra.mxu0 %v1150
        %1372 = vmatmul.bf16.gmra.mxu0 %v1324
        %v1373 = vpop.f32.mrf.mxu0
        %v1374 = vadd.f32 %v1345, %v1373
        %v1375 = vpop.f32.mrf.mxu0
        %v1376 = vadd.f32 %v1347, %v1375
        %1377 = vmatmul.bf16.gmra.mxu0 %v1327
        %v1378 = vpop.f32.mrf.mxu0
        %v1379 = vadd.f32 %v1350, %v1378
        %v1380 = vpop.f32.mrf.mxu0
        %v1381 = vadd.f32 %v1352, %v1380
        %1382 = vmatmul.bf16.gmra.mxu0 %v1330
        %v1383 = vpop.f32.mrf.mxu0
        %v1384 = vadd.f32 %v1355, %v1383
        %v1385 = vpop.f32.mrf.mxu0
        %v1386 = vadd.f32 %v1357, %v1385
        %1387 = vmatmul.bf16.gmra.mxu0 %v1333
        %v1388 = vpop.f32.mrf.mxu0
        %v1389 = vadd.f32 %v1360, %v1388
        %v1390 = vpop.f32.mrf.mxu0
        %v1391 = vadd.f32 %v1362, %v1390
        %1392 = vdwg.mxu0
        %v1393 = vpack.c.bf16 %v1376, %v1374
        %v1394 = vpack.c.bf16 %v1381, %v1379
        %v1395 = vpack.c.bf16 %v1386, %v1384
        %v1396 = vpack.c.bf16 %v1391, %v1389
        %s1397 = scalar_lea.vmem %s4, 32
        %v1398 = vld [vmem:[%s1397] sm:$0xf]
        %v1399 = vld [vmem:[%s1397 + $0x4] sm:$0xf]
        %v1400 = vld [vmem:[%s1397 + $0x8] sm:$0xf]
        %v1401 = vld [vmem:[%s1397 + $0xc] sm:$0xf]
        %v1402 = vld [vmem:[%s1397 + $0x10] sm:$0xf]
        %v1403 = vld [vmem:[%s1397 + $0x14] sm:$0xf]
        %v1404 = vld [vmem:[%s1397 + $0x18] sm:$0xf]
        %v1405 = vld [vmem:[%s1397 + $0x1c] sm:$0xf]
        %v1414 = vunpack.c.l.b16 %v1398
        %v1415 = vunpack.c.l.b16 %v1399
        %v1416 = vunpack.c.l.b16 %v1400
        %v1417 = vunpack.c.l.b16 %v1401
        %v1418 = vunpack.c.l.b16 %v1402
        %v1419 = vunpack.c.l.b16 %v1403
        %v1420 = vunpack.c.l.b16 %v1404
        %v1421 = vunpack.c.l.b16 %v1405
        %v1422 = vpack.c.b16 %v1415, %v1414
        %v1423 = vpack.c.b16 %v1417, %v1416
        %v1424 = vpack.c.b16 %v1419, %v1418
        %v1425 = vpack.c.b16 %v1421, %v1420
        %vm1430 = vcmask 523264
        %v1432 = vsel %vm1430, %v1393, 0
        %v1435 = vsel %vm1430, %v1394, 0
        %v1438 = vsel %vm1430, %v1395, 0
        %v1441 = vsel %vm1430, %v1396, 0
        %1443 = vmatpush.bf16.msra.mxu0 0
        %1444 = vmatpush.bf16.msra.mxu0 0
        %1445 = vmatpush.bf16.msra.mxu0 0
        %1446 = vmatpush.bf16.msra.mxu0 0
        %1447 = vmatpush.bf16.msra.mxu0 %v1425
        %1448 = vmatpush.bf16.msra.mxu0 %v1424
        %1449 = vmatpush.bf16.msra.mxu0 %v1423
        %1450 = vmatpush.bf16.msra.mxu0 %v1422
        %1451 = vmatmul.bf16.gmra.mxu0 %v1432
        %v1452 = vpop.f32.mrf.mxu0
        %v1453 = vadd.f32 0.0, %v1452
        %v1454 = vpop.f32.mrf.mxu0
        %v1455 = vadd.f32 0.0, %v1454
        %1456 = vmatmul.bf16.gmra.mxu0 %v1435
        %v1457 = vpop.f32.mrf.mxu0
        %v1458 = vadd.f32 0.0, %v1457
        %v1459 = vpop.f32.mrf.mxu0
        %v1460 = vadd.f32 0.0, %v1459
        %1461 = vmatmul.bf16.gmra.mxu0 %v1438
        %v1462 = vpop.f32.mrf.mxu0
        %v1463 = vadd.f32 0.0, %v1462
        %v1464 = vpop.f32.mrf.mxu0
        %v1465 = vadd.f32 0.0, %v1464
        %1466 = vmatmul.bf16.gmra.mxu0 %v1441
        %v1467 = vpop.f32.mrf.mxu0
        %v1468 = vadd.f32 0.0, %v1467
        %v1469 = vpop.f32.mrf.mxu0
        %v1470 = vadd.f32 0.0, %v1469
        %1471 = vdwg.mxu0
        %v1480 = vunpack.c.l.b16 %v1270
        %v1481 = vunpack.c.l.b16 %v1271
        %v1482 = vunpack.c.l.b16 %v1272
        %v1483 = vunpack.c.l.b16 %v1273
        %v1484 = vunpack.c.l.b16 %v1274
        %v1485 = vunpack.c.l.b16 %v1275
        %v1486 = vunpack.c.l.b16 %v1276
        %v1487 = vunpack.c.l.b16 %v1277
        %v1488 = vpack.c.b16 %v1481, %v1480
        %v1489 = vpack.c.b16 %v1483, %v1482
        %v1490 = vpack.c.b16 %v1485, %v1484
        %v1491 = vpack.c.b16 %v1487, %v1486
        %v1497 = vsel %vm1430, %v1266, 0
        %v1500 = vsel %vm1430, %v1267, 0
        %v1503 = vsel %vm1430, %v1268, 0
        %v1506 = vsel %vm1430, %v1269, 0
        %1508 = vmatpush.bf16.msra.mxu0 0
        %1509 = vmatpush.bf16.msra.mxu0 0
        %1510 = vmatpush.bf16.msra.mxu0 0
        %1511 = vmatpush.bf16.msra.mxu0 0
        %1512 = vmatpush.bf16.msra.mxu0 %v1491
        %1513 = vmatpush.bf16.msra.mxu0 %v1490
        %1514 = vmatpush.bf16.msra.mxu0 %v1489
        %1515 = vmatpush.bf16.msra.mxu0 %v1488
        %1516 = vmatmul.bf16.gmra.mxu0 %v1497
        %v1517 = vpop.f32.mrf.mxu0
        %v1518 = vadd.f32 %v1453, %v1517
        %v1519 = vpop.f32.mrf.mxu0
        %v1520 = vadd.f32 %v1455, %v1519
        %1521 = vmatmul.bf16.gmra.mxu0 %v1500
        %v1522 = vpop.f32.mrf.mxu0
        %v1523 = vadd.f32 %v1458, %v1522
        %v1524 = vpop.f32.mrf.mxu0
        %v1525 = vadd.f32 %v1460, %v1524
        %1526 = vmatmul.bf16.gmra.mxu0 %v1503
        %v1527 = vpop.f32.mrf.mxu0
        %v1528 = vadd.f32 %v1463, %v1527
        %v1529 = vpop.f32.mrf.mxu0
        %v1530 = vadd.f32 %v1465, %v1529
        %1531 = vmatmul.bf16.gmra.mxu0 %v1506
        %v1532 = vpop.f32.mrf.mxu0
        %v1533 = vadd.f32 %v1468, %v1532
        %v1534 = vpop.f32.mrf.mxu0
        %v1535 = vadd.f32 %v1470, %v1534
        %1536 = vdwg.mxu0
        %s1537 = scalar_lea.vmem %s3, 128
        %v1538 = vld [vmem:[%s1537] sm:$0xff]
        %v1539 = vld [vmem:[%s1537 + $0x8] sm:$0xff]
        %v1540 = vld [vmem:[%s1537 + $0x10] sm:$0xff]
        %v1541 = vld [vmem:[%s1537 + $0x18] sm:$0xff]
        %v1542 = vld [vmem:[%s1537 + $0x20] sm:$0xff]
        %v1543 = vld [vmem:[%s1537 + $0x28] sm:$0xff]
        %v1544 = vld [vmem:[%s1537 + $0x30] sm:$0xff]
        %v1545 = vld [vmem:[%s1537 + $0x38] sm:$0xff]
        %v1554 = vunpack.c.l.b16 %v1538
        %v1555 = vunpack.c.h.b16 %v1538
        %v1556 = vunpack.c.l.b16 %v1539
        %v1557 = vunpack.c.h.b16 %v1539
        %v1558 = vunpack.c.l.b16 %v1540
        %v1559 = vunpack.c.h.b16 %v1540
        %v1560 = vunpack.c.l.b16 %v1541
        %v1561 = vunpack.c.h.b16 %v1541
        %v1562 = vunpack.c.l.b16 %v1542
        %v1563 = vunpack.c.h.b16 %v1542
        %v1564 = vunpack.c.l.b16 %v1543
        %v1565 = vunpack.c.h.b16 %v1543
        %v1566 = vunpack.c.l.b16 %v1544
        %v1567 = vunpack.c.h.b16 %v1544
        %v1568 = vunpack.c.l.b16 %v1545
        %v1569 = vunpack.c.h.b16 %v1545
        %v1570 = vpack.c.b16 %v1556, %v1554
        %v1571 = vpack.c.b16 %v1557, %v1555
        %v1572 = vpack.c.b16 %v1560, %v1558
        %v1573 = vpack.c.b16 %v1561, %v1559
        %v1574 = vpack.c.b16 %v1564, %v1562
        %v1575 = vpack.c.b16 %v1565, %v1563
        %v1576 = vpack.c.b16 %v1568, %v1566
        %v1577 = vpack.c.b16 %v1569, %v1567
        %v1583 = vsel %vm1195, %v1571, 0
        %v1586 = vsel %vm1195, %v1573, 0
        %v1589 = vsel %vm1195, %v1575, 0
        %v1592 = vsel %vm1195, %v1577, 0
        %1594 = vmatpush.bf16.msra.mxu0 %v1149
        %1595 = vmatpush.bf16.msra.mxu0 %v1148
        %1596 = vmatpush.bf16.msra.mxu0 %v1147
        %1597 = vmatpush.bf16.msra.mxu0 %v1146
        %1598 = vmatpush.bf16.msra.mxu0 %v1145
        %1599 = vmatpush.bf16.msra.mxu0 %v1144
        %1600 = vmatpush.bf16.msra.mxu0 %v1143
        %1601 = vmatpush.bf16.msra.mxu0 %v1142
        %1602 = vmatmul.bf16.gmra.mxu0 %v1570
        %v1603 = vpop.f32.mrf.mxu0
        %v1604 = vadd.f32 0.0, %v1603
        %v1605 = vpop.f32.mrf.mxu0
        %v1606 = vadd.f32 0.0, %v1605
        %1607 = vmatmul.bf16.gmra.mxu0 %v1572
        %v1608 = vpop.f32.mrf.mxu0
        %v1609 = vadd.f32 0.0, %v1608
        %v1610 = vpop.f32.mrf.mxu0
        %v1611 = vadd.f32 0.0, %v1610
        %1612 = vmatmul.bf16.gmra.mxu0 %v1574
        %v1613 = vpop.f32.mrf.mxu0
        %v1614 = vadd.f32 0.0, %v1613
        %v1615 = vpop.f32.mrf.mxu0
        %v1616 = vadd.f32 0.0, %v1615
        %1617 = vmatmul.bf16.gmra.mxu0 %v1576
        %v1618 = vpop.f32.mrf.mxu0
        %v1619 = vadd.f32 0.0, %v1618
        %v1620 = vpop.f32.mrf.mxu0
        %v1621 = vadd.f32 0.0, %v1620
        %1622 = vdwg.mxu0
        %1623 = vmatpush.bf16.msra.mxu0 0
        %1624 = vmatpush.bf16.msra.mxu0 0
        %1625 = vmatpush.bf16.msra.mxu0 0
        %1626 = vmatpush.bf16.msra.mxu0 0
        %1627 = vmatpush.bf16.msra.mxu0 0
        %1628 = vmatpush.bf16.msra.mxu0 0
        %1629 = vmatpush.bf16.msra.mxu0 0
        %1630 = vmatpush.bf16.msra.mxu0 %v1150
        %1631 = vmatmul.bf16.gmra.mxu0 %v1583
        %v1632 = vpop.f32.mrf.mxu0
        %v1633 = vadd.f32 %v1604, %v1632
        %v1634 = vpop.f32.mrf.mxu0
        %v1635 = vadd.f32 %v1606, %v1634
        %1636 = vmatmul.bf16.gmra.mxu0 %v1586
        %v1637 = vpop.f32.mrf.mxu0
        %v1638 = vadd.f32 %v1609, %v1637
        %v1639 = vpop.f32.mrf.mxu0
        %v1640 = vadd.f32 %v1611, %v1639
        %1641 = vmatmul.bf16.gmra.mxu0 %v1589
        %v1642 = vpop.f32.mrf.mxu0
        %v1643 = vadd.f32 %v1614, %v1642
        %v1644 = vpop.f32.mrf.mxu0
        %v1645 = vadd.f32 %v1616, %v1644
        %1646 = vmatmul.bf16.gmra.mxu0 %v1592
        %v1647 = vpop.f32.mrf.mxu0
        %v1648 = vadd.f32 %v1619, %v1647
        %v1649 = vpop.f32.mrf.mxu0
        %v1650 = vadd.f32 %v1621, %v1649
        %1651 = vdwg.mxu0
        %v1652 = vpack.c.bf16 %v1635, %v1633
        %v1653 = vpack.c.bf16 %v1640, %v1638
        %v1654 = vpack.c.bf16 %v1645, %v1643
        %v1655 = vpack.c.bf16 %v1650, %v1648
        %s1656 = scalar_lea.vmem %s4, 64
        %v1657 = vld [vmem:[%s1656] sm:$0xf]
        %v1658 = vld [vmem:[%s1656 + $0x4] sm:$0xf]
        %v1659 = vld [vmem:[%s1656 + $0x8] sm:$0xf]
        %v1660 = vld [vmem:[%s1656 + $0xc] sm:$0xf]
        %v1661 = vld [vmem:[%s1656 + $0x10] sm:$0xf]
        %v1662 = vld [vmem:[%s1656 + $0x14] sm:$0xf]
        %v1663 = vld [vmem:[%s1656 + $0x18] sm:$0xf]
        %v1664 = vld [vmem:[%s1656 + $0x1c] sm:$0xf]
        %v1673 = vunpack.c.l.b16 %v1657
        %v1674 = vunpack.c.l.b16 %v1658
        %v1675 = vunpack.c.l.b16 %v1659
        %v1676 = vunpack.c.l.b16 %v1660
        %v1677 = vunpack.c.l.b16 %v1661
        %v1678 = vunpack.c.l.b16 %v1662
        %v1679 = vunpack.c.l.b16 %v1663
        %v1680 = vunpack.c.l.b16 %v1664
        %v1681 = vpack.c.b16 %v1674, %v1673
        %v1682 = vpack.c.b16 %v1676, %v1675
        %v1683 = vpack.c.b16 %v1678, %v1677
        %v1684 = vpack.c.b16 %v1680, %v1679
        %v1690 = vsel %vm1430, %v1652, 0
        %v1693 = vsel %vm1430, %v1653, 0
        %v1696 = vsel %vm1430, %v1654, 0
        %v1699 = vsel %vm1430, %v1655, 0
        %1701 = vmatpush.bf16.msra.mxu0 0
        %1702 = vmatpush.bf16.msra.mxu0 0
        %1703 = vmatpush.bf16.msra.mxu0 0
        %1704 = vmatpush.bf16.msra.mxu0 0
        %1705 = vmatpush.bf16.msra.mxu0 %v1684
        %1706 = vmatpush.bf16.msra.mxu0 %v1683
        %1707 = vmatpush.bf16.msra.mxu0 %v1682
        %1708 = vmatpush.bf16.msra.mxu0 %v1681
        %1709 = vmatmul.bf16.gmra.mxu0 %v1690
        %v1710 = vpop.f32.mrf.mxu0
        %v1711 = vadd.f32 0.0, %v1710
        %v1712 = vpop.f32.mrf.mxu0
        %v1713 = vadd.f32 0.0, %v1712
        %1714 = vmatmul.bf16.gmra.mxu0 %v1693
        %v1715 = vpop.f32.mrf.mxu0
        %v1716 = vadd.f32 0.0, %v1715
        %v1717 = vpop.f32.mrf.mxu0
        %v1718 = vadd.f32 0.0, %v1717
        %1719 = vmatmul.bf16.gmra.mxu0 %v1696
        %v1720 = vpop.f32.mrf.mxu0
        %v1721 = vadd.f32 0.0, %v1720
        %v1722 = vpop.f32.mrf.mxu0
        %v1723 = vadd.f32 0.0, %v1722
        %1724 = vmatmul.bf16.gmra.mxu0 %v1699
        %v1725 = vpop.f32.mrf.mxu0
        %v1726 = vadd.f32 0.0, %v1725
        %v1727 = vpop.f32.mrf.mxu0
        %v1728 = vadd.f32 0.0, %v1727
        %1729 = vdwg.mxu0
        %v1730 = vadd.f32 %v1518, %v1711
        %v1731 = vadd.f32 %v1520, %v1713
        %v1732 = vadd.f32 %v1523, %v1716
        %v1733 = vadd.f32 %v1525, %v1718
        %v1734 = vadd.f32 %v1528, %v1721
        %v1735 = vadd.f32 %v1530, %v1723
        %v1736 = vadd.f32 %v1533, %v1726
        %v1737 = vadd.f32 %v1535, %v1728
        %s1738 = scalar_lea.vmem %s3, 192
        %v1739 = vld [vmem:[%s1738] sm:$0xff]
        %v1740 = vld [vmem:[%s1738 + $0x8] sm:$0xff]
        %v1741 = vld [vmem:[%s1738 + $0x10] sm:$0xff]
        %v1742 = vld [vmem:[%s1738 + $0x18] sm:$0xff]
        %v1743 = vld [vmem:[%s1738 + $0x20] sm:$0xff]
        %v1744 = vld [vmem:[%s1738 + $0x28] sm:$0xff]
        %v1745 = vld [vmem:[%s1738 + $0x30] sm:$0xff]
        %v1746 = vld [vmem:[%s1738 + $0x38] sm:$0xff]
        %v1755 = vunpack.c.l.b16 %v1739
        %v1756 = vunpack.c.h.b16 %v1739
        %v1757 = vunpack.c.l.b16 %v1740
        %v1758 = vunpack.c.h.b16 %v1740
        %v1759 = vunpack.c.l.b16 %v1741
        %v1760 = vunpack.c.h.b16 %v1741
        %v1761 = vunpack.c.l.b16 %v1742
        %v1762 = vunpack.c.h.b16 %v1742
        %v1763 = vunpack.c.l.b16 %v1743
        %v1764 = vunpack.c.h.b16 %v1743
        %v1765 = vunpack.c.l.b16 %v1744
        %v1766 = vunpack.c.h.b16 %v1744
        %v1767 = vunpack.c.l.b16 %v1745
        %v1768 = vunpack.c.h.b16 %v1745
        %v1769 = vunpack.c.l.b16 %v1746
        %v1770 = vunpack.c.h.b16 %v1746
        %v1771 = vpack.c.b16 %v1757, %v1755
        %v1772 = vpack.c.b16 %v1758, %v1756
        %v1773 = vpack.c.b16 %v1761, %v1759
        %v1774 = vpack.c.b16 %v1762, %v1760
        %v1775 = vpack.c.b16 %v1765, %v1763
        %v1776 = vpack.c.b16 %v1766, %v1764
        %v1777 = vpack.c.b16 %v1769, %v1767
        %v1778 = vpack.c.b16 %v1770, %v1768
        %v1784 = vsel %vm1195, %v1772, 0
        %v1787 = vsel %vm1195, %v1774, 0
        %v1790 = vsel %vm1195, %v1776, 0
        %v1793 = vsel %vm1195, %v1778, 0
        %1795 = vmatpush.bf16.msra.mxu0 %v1149
        %1796 = vmatpush.bf16.msra.mxu0 %v1148
        %1797 = vmatpush.bf16.msra.mxu0 %v1147
        %1798 = vmatpush.bf16.msra.mxu0 %v1146
        %1799 = vmatpush.bf16.msra.mxu0 %v1145
        %1800 = vmatpush.bf16.msra.mxu0 %v1144
        %1801 = vmatpush.bf16.msra.mxu0 %v1143
        %1802 = vmatpush.bf16.msra.mxu0 %v1142
        %1803 = vmatmul.bf16.gmra.mxu0 %v1771
        %v1804 = vpop.f32.mrf.mxu0
        %v1805 = vadd.f32 0.0, %v1804
        %v1806 = vpop.f32.mrf.mxu0
        %v1807 = vadd.f32 0.0, %v1806
        %1808 = vmatmul.bf16.gmra.mxu0 %v1773
        %v1809 = vpop.f32.mrf.mxu0
        %v1810 = vadd.f32 0.0, %v1809
        %v1811 = vpop.f32.mrf.mxu0
        %v1812 = vadd.f32 0.0, %v1811
        %1813 = vmatmul.bf16.gmra.mxu0 %v1775
        %v1814 = vpop.f32.mrf.mxu0
        %v1815 = vadd.f32 0.0, %v1814
        %v1816 = vpop.f32.mrf.mxu0
        %v1817 = vadd.f32 0.0, %v1816
        %1818 = vmatmul.bf16.gmra.mxu0 %v1777
        %v1819 = vpop.f32.mrf.mxu0
        %v1820 = vadd.f32 0.0, %v1819
        %v1821 = vpop.f32.mrf.mxu0
        %v1822 = vadd.f32 0.0, %v1821
        %1823 = vdwg.mxu0
        %1824 = vmatpush.bf16.msra.mxu0 0
        %1825 = vmatpush.bf16.msra.mxu0 0
        %1826 = vmatpush.bf16.msra.mxu0 0
        %1827 = vmatpush.bf16.msra.mxu0 0
        %1828 = vmatpush.bf16.msra.mxu0 0
        %1829 = vmatpush.bf16.msra.mxu0 0
        %1830 = vmatpush.bf16.msra.mxu0 0
        %1831 = vmatpush.bf16.msra.mxu0 %v1150
        %1832 = vmatmul.bf16.gmra.mxu0 %v1784
        %v1833 = vpop.f32.mrf.mxu0
        %v1834 = vadd.f32 %v1805, %v1833
        %v1835 = vpop.f32.mrf.mxu0
        %v1836 = vadd.f32 %v1807, %v1835
        %1837 = vmatmul.bf16.gmra.mxu0 %v1787
        %v1838 = vpop.f32.mrf.mxu0
        %v1839 = vadd.f32 %v1810, %v1838
        %v1840 = vpop.f32.mrf.mxu0
        %v1841 = vadd.f32 %v1812, %v1840
        %1842 = vmatmul.bf16.gmra.mxu0 %v1790
        %v1843 = vpop.f32.mrf.mxu0
        %v1844 = vadd.f32 %v1815, %v1843
        %v1845 = vpop.f32.mrf.mxu0
        %v1846 = vadd.f32 %v1817, %v1845
        %1847 = vmatmul.bf16.gmra.mxu0 %v1793
        %v1848 = vpop.f32.mrf.mxu0
        %v1849 = vadd.f32 %v1820, %v1848
        %v1850 = vpop.f32.mrf.mxu0
        %v1851 = vadd.f32 %v1822, %v1850
        %1852 = vdwg.mxu0
        %v1853 = vpack.c.bf16 %v1836, %v1834
        %v1854 = vpack.c.bf16 %v1841, %v1839
        %v1855 = vpack.c.bf16 %v1846, %v1844
        %v1856 = vpack.c.bf16 %v1851, %v1849
        %s1857 = scalar_lea.vmem %s4, 96
        %v1858 = vld [vmem:[%s1857] sm:$0xf]
        %v1859 = vld [vmem:[%s1857 + $0x4] sm:$0xf]
        %v1860 = vld [vmem:[%s1857 + $0x8] sm:$0xf]
        %v1861 = vld [vmem:[%s1857 + $0xc] sm:$0xf]
        %v1862 = vld [vmem:[%s1857 + $0x10] sm:$0xf]
        %v1863 = vld [vmem:[%s1857 + $0x14] sm:$0xf]
        %v1864 = vld [vmem:[%s1857 + $0x18] sm:$0xf]
        %v1865 = vld [vmem:[%s1857 + $0x1c] sm:$0xf]
        %v1874 = vunpack.c.l.b16 %v1858
        %v1875 = vunpack.c.l.b16 %v1859
        %v1876 = vunpack.c.l.b16 %v1860
        %v1877 = vunpack.c.l.b16 %v1861
        %v1878 = vunpack.c.l.b16 %v1862
        %v1879 = vunpack.c.l.b16 %v1863
        %v1880 = vunpack.c.l.b16 %v1864
        %v1881 = vunpack.c.l.b16 %v1865
        %v1882 = vpack.c.b16 %v1875, %v1874
        %v1883 = vpack.c.b16 %v1877, %v1876
        %v1884 = vpack.c.b16 %v1879, %v1878
        %v1885 = vpack.c.b16 %v1881, %v1880
        %v1891 = vsel %vm1430, %v1853, 0
        %v1894 = vsel %vm1430, %v1854, 0
        %v1897 = vsel %vm1430, %v1855, 0
        %v1900 = vsel %vm1430, %v1856, 0
        %1902 = vmatpush.bf16.msra.mxu0 0
        %1903 = vmatpush.bf16.msra.mxu0 0
        %1904 = vmatpush.bf16.msra.mxu0 0
        %1905 = vmatpush.bf16.msra.mxu0 0
        %1906 = vmatpush.bf16.msra.mxu0 %v1885
        %1907 = vmatpush.bf16.msra.mxu0 %v1884
        %1908 = vmatpush.bf16.msra.mxu0 %v1883
        %1909 = vmatpush.bf16.msra.mxu0 %v1882
        %1910 = vmatmul.bf16.gmra.mxu0 %v1891
        %v1911 = vpop.f32.mrf.mxu0
        %v1912 = vadd.f32 0.0, %v1911
        %v1913 = vpop.f32.mrf.mxu0
        %v1914 = vadd.f32 0.0, %v1913
        %1915 = vmatmul.bf16.gmra.mxu0 %v1894
        %v1916 = vpop.f32.mrf.mxu0
        %v1917 = vadd.f32 0.0, %v1916
        %v1918 = vpop.f32.mrf.mxu0
        %v1919 = vadd.f32 0.0, %v1918
        %1920 = vmatmul.bf16.gmra.mxu0 %v1897
        %v1921 = vpop.f32.mrf.mxu0
        %v1922 = vadd.f32 0.0, %v1921
        %v1923 = vpop.f32.mrf.mxu0
        %v1924 = vadd.f32 0.0, %v1923
        %1925 = vmatmul.bf16.gmra.mxu0 %v1900
        %v1926 = vpop.f32.mrf.mxu0
        %v1927 = vadd.f32 0.0, %v1926
        %v1928 = vpop.f32.mrf.mxu0
        %v1929 = vadd.f32 0.0, %v1928
        %1930 = vdwg.mxu0
        %v1931 = vadd.f32 %v1730, %v1912
        %v1932 = vadd.f32 %v1731, %v1914
        %v1933 = vadd.f32 %v1732, %v1917
        %v1934 = vadd.f32 %v1733, %v1919
        %v1935 = vadd.f32 %v1734, %v1922
        %v1936 = vadd.f32 %v1735, %v1924
        %v1937 = vadd.f32 %v1736, %v1927
        %v1938 = vadd.f32 %v1737, %v1929
        %s1939 = scalar_lea.vmem %s3, 256
        %v1940 = vld [vmem:[%s1939] sm:$0xff]
        %v1941 = vld [vmem:[%s1939 + $0x8] sm:$0xff]
        %v1942 = vld [vmem:[%s1939 + $0x10] sm:$0xff]
        %v1943 = vld [vmem:[%s1939 + $0x18] sm:$0xff]
        %v1944 = vld [vmem:[%s1939 + $0x20] sm:$0xff]
        %v1945 = vld [vmem:[%s1939 + $0x28] sm:$0xff]
        %v1946 = vld [vmem:[%s1939 + $0x30] sm:$0xff]
        %v1947 = vld [vmem:[%s1939 + $0x38] sm:$0xff]
        %v1956 = vunpack.c.l.b16 %v1940
        %v1957 = vunpack.c.h.b16 %v1940
        %v1958 = vunpack.c.l.b16 %v1941
        %v1959 = vunpack.c.h.b16 %v1941
        %v1960 = vunpack.c.l.b16 %v1942
        %v1961 = vunpack.c.h.b16 %v1942
        %v1962 = vunpack.c.l.b16 %v1943
        %v1963 = vunpack.c.h.b16 %v1943
        %v1964 = vunpack.c.l.b16 %v1944
        %v1965 = vunpack.c.h.b16 %v1944
        %v1966 = vunpack.c.l.b16 %v1945
        %v1967 = vunpack.c.h.b16 %v1945
        %v1968 = vunpack.c.l.b16 %v1946
        %v1969 = vunpack.c.h.b16 %v1946
        %v1970 = vunpack.c.l.b16 %v1947
        %v1971 = vunpack.c.h.b16 %v1947
        %v1972 = vpack.c.b16 %v1958, %v1956
        %v1973 = vpack.c.b16 %v1959, %v1957
        %v1974 = vpack.c.b16 %v1962, %v1960
        %v1975 = vpack.c.b16 %v1963, %v1961
        %v1976 = vpack.c.b16 %v1966, %v1964
        %v1977 = vpack.c.b16 %v1967, %v1965
        %v1978 = vpack.c.b16 %v1970, %v1968
        %v1979 = vpack.c.b16 %v1971, %v1969
        %v1985 = vsel %vm1195, %v1973, 0
        %v1988 = vsel %vm1195, %v1975, 0
        %v1991 = vsel %vm1195, %v1977, 0
        %v1994 = vsel %vm1195, %v1979, 0
        %1996 = vmatpush.bf16.msra.mxu0 %v1149
        %1997 = vmatpush.bf16.msra.mxu0 %v1148
        %1998 = vmatpush.bf16.msra.mxu0 %v1147
        %1999 = vmatpush.bf16.msra.mxu0 %v1146
        %2000 = vmatpush.bf16.msra.mxu0 %v1145
        %2001 = vmatpush.bf16.msra.mxu0 %v1144
        %2002 = vmatpush.bf16.msra.mxu0 %v1143
        %2003 = vmatpush.bf16.msra.mxu0 %v1142
        %2004 = vmatmul.bf16.gmra.mxu0 %v1972
        %v2005 = vpop.f32.mrf.mxu0
        %v2006 = vadd.f32 0.0, %v2005
        %v2007 = vpop.f32.mrf.mxu0
        %v2008 = vadd.f32 0.0, %v2007
        %2009 = vmatmul.bf16.gmra.mxu0 %v1974
        %v2010 = vpop.f32.mrf.mxu0
        %v2011 = vadd.f32 0.0, %v2010
        %v2012 = vpop.f32.mrf.mxu0
        %v2013 = vadd.f32 0.0, %v2012
        %2014 = vmatmul.bf16.gmra.mxu0 %v1976
        %v2015 = vpop.f32.mrf.mxu0
        %v2016 = vadd.f32 0.0, %v2015
        %v2017 = vpop.f32.mrf.mxu0
        %v2018 = vadd.f32 0.0, %v2017
        %2019 = vmatmul.bf16.gmra.mxu0 %v1978
        %v2020 = vpop.f32.mrf.mxu0
        %v2021 = vadd.f32 0.0, %v2020
        %v2022 = vpop.f32.mrf.mxu0
        %v2023 = vadd.f32 0.0, %v2022
        %2024 = vdwg.mxu0
        %2025 = vmatpush.bf16.msra.mxu0 0
        %2026 = vmatpush.bf16.msra.mxu0 0
        %2027 = vmatpush.bf16.msra.mxu0 0
        %2028 = vmatpush.bf16.msra.mxu0 0
        %2029 = vmatpush.bf16.msra.mxu0 0
        %2030 = vmatpush.bf16.msra.mxu0 0
        %2031 = vmatpush.bf16.msra.mxu0 0
        %2032 = vmatpush.bf16.msra.mxu0 %v1150
        %2033 = vmatmul.bf16.gmra.mxu0 %v1985
        %v2034 = vpop.f32.mrf.mxu0
        %v2035 = vadd.f32 %v2006, %v2034
        %v2036 = vpop.f32.mrf.mxu0
        %v2037 = vadd.f32 %v2008, %v2036
        %2038 = vmatmul.bf16.gmra.mxu0 %v1988
        %v2039 = vpop.f32.mrf.mxu0
        %v2040 = vadd.f32 %v2011, %v2039
        %v2041 = vpop.f32.mrf.mxu0
        %v2042 = vadd.f32 %v2013, %v2041
        %2043 = vmatmul.bf16.gmra.mxu0 %v1991
        %v2044 = vpop.f32.mrf.mxu0
        %v2045 = vadd.f32 %v2016, %v2044
        %v2046 = vpop.f32.mrf.mxu0
        %v2047 = vadd.f32 %v2018, %v2046
        %2048 = vmatmul.bf16.gmra.mxu0 %v1994
        %v2049 = vpop.f32.mrf.mxu0
        %v2050 = vadd.f32 %v2021, %v2049
        %v2051 = vpop.f32.mrf.mxu0
        %v2052 = vadd.f32 %v2023, %v2051
        %2053 = vdwg.mxu0
        %v2054 = vpack.c.bf16 %v2037, %v2035
        %v2055 = vpack.c.bf16 %v2042, %v2040
        %v2056 = vpack.c.bf16 %v2047, %v2045
        %v2057 = vpack.c.bf16 %v2052, %v2050
        %s2058 = scalar_lea.vmem %s4, 128
        %v2059 = vld [vmem:[%s2058] sm:$0xf]
        %v2060 = vld [vmem:[%s2058 + $0x4] sm:$0xf]
        %v2061 = vld [vmem:[%s2058 + $0x8] sm:$0xf]
        %v2062 = vld [vmem:[%s2058 + $0xc] sm:$0xf]
        %v2063 = vld [vmem:[%s2058 + $0x10] sm:$0xf]
        %v2064 = vld [vmem:[%s2058 + $0x14] sm:$0xf]
        %v2065 = vld [vmem:[%s2058 + $0x18] sm:$0xf]
        %v2066 = vld [vmem:[%s2058 + $0x1c] sm:$0xf]
        %v2075 = vunpack.c.l.b16 %v2059
        %v2076 = vunpack.c.l.b16 %v2060
        %v2077 = vunpack.c.l.b16 %v2061
        %v2078 = vunpack.c.l.b16 %v2062
        %v2079 = vunpack.c.l.b16 %v2063
        %v2080 = vunpack.c.l.b16 %v2064
        %v2081 = vunpack.c.l.b16 %v2065
        %v2082 = vunpack.c.l.b16 %v2066
        %v2083 = vpack.c.b16 %v2076, %v2075
        %v2084 = vpack.c.b16 %v2078, %v2077
        %v2085 = vpack.c.b16 %v2080, %v2079
        %v2086 = vpack.c.b16 %v2082, %v2081
        %v2092 = vsel %vm1430, %v2054, 0
        %v2095 = vsel %vm1430, %v2055, 0
        %v2098 = vsel %vm1430, %v2056, 0
        %v2101 = vsel %vm1430, %v2057, 0
        %2103 = vmatpush.bf16.msra.mxu0 0
        %2104 = vmatpush.bf16.msra.mxu0 0
        %2105 = vmatpush.bf16.msra.mxu0 0
        %2106 = vmatpush.bf16.msra.mxu0 0
        %2107 = vmatpush.bf16.msra.mxu0 %v2086
        %2108 = vmatpush.bf16.msra.mxu0 %v2085
        %2109 = vmatpush.bf16.msra.mxu0 %v2084
        %2110 = vmatpush.bf16.msra.mxu0 %v2083
        %2111 = vmatmul.bf16.gmra.mxu0 %v2092
        %v2112 = vpop.f32.mrf.mxu0
        %v2113 = vadd.f32 0.0, %v2112
        %v2114 = vpop.f32.mrf.mxu0
        %v2115 = vadd.f32 0.0, %v2114
        %2116 = vmatmul.bf16.gmra.mxu0 %v2095
        %v2117 = vpop.f32.mrf.mxu0
        %v2118 = vadd.f32 0.0, %v2117
        %v2119 = vpop.f32.mrf.mxu0
        %v2120 = vadd.f32 0.0, %v2119
        %2121 = vmatmul.bf16.gmra.mxu0 %v2098
        %v2122 = vpop.f32.mrf.mxu0
        %v2123 = vadd.f32 0.0, %v2122
        %v2124 = vpop.f32.mrf.mxu0
        %v2125 = vadd.f32 0.0, %v2124
        %2126 = vmatmul.bf16.gmra.mxu0 %v2101
        %v2127 = vpop.f32.mrf.mxu0
        %v2128 = vadd.f32 0.0, %v2127
        %v2129 = vpop.f32.mrf.mxu0
        %v2130 = vadd.f32 0.0, %v2129
        %2131 = vdwg.mxu0
        %v2132 = vadd.f32 %v1931, %v2113
        %v2133 = vadd.f32 %v1932, %v2115
        %v2134 = vadd.f32 %v1933, %v2118
        %v2135 = vadd.f32 %v1934, %v2120
        %v2136 = vadd.f32 %v1935, %v2123
        %v2137 = vadd.f32 %v1936, %v2125
        %v2138 = vadd.f32 %v1937, %v2128
        %v2139 = vadd.f32 %v1938, %v2130
        %s2140 = scalar_lea.vmem %s3, 320
        %v2141 = vld [vmem:[%s2140] sm:$0xff]
        %v2142 = vld [vmem:[%s2140 + $0x8] sm:$0xff]
        %v2143 = vld [vmem:[%s2140 + $0x10] sm:$0xff]
        %v2144 = vld [vmem:[%s2140 + $0x18] sm:$0xff]
        %v2145 = vld [vmem:[%s2140 + $0x20] sm:$0xff]
        %v2146 = vld [vmem:[%s2140 + $0x28] sm:$0xff]
        %v2147 = vld [vmem:[%s2140 + $0x30] sm:$0xff]
        %v2148 = vld [vmem:[%s2140 + $0x38] sm:$0xff]
        %v2157 = vunpack.c.l.b16 %v2141
        %v2158 = vunpack.c.h.b16 %v2141
        %v2159 = vunpack.c.l.b16 %v2142
        %v2160 = vunpack.c.h.b16 %v2142
        %v2161 = vunpack.c.l.b16 %v2143
        %v2162 = vunpack.c.h.b16 %v2143
        %v2163 = vunpack.c.l.b16 %v2144
        %v2164 = vunpack.c.h.b16 %v2144
        %v2165 = vunpack.c.l.b16 %v2145
        %v2166 = vunpack.c.h.b16 %v2145
        %v2167 = vunpack.c.l.b16 %v2146
        %v2168 = vunpack.c.h.b16 %v2146
        %v2169 = vunpack.c.l.b16 %v2147
        %v2170 = vunpack.c.h.b16 %v2147
        %v2171 = vunpack.c.l.b16 %v2148
        %v2172 = vunpack.c.h.b16 %v2148
        %v2173 = vpack.c.b16 %v2159, %v2157
        %v2174 = vpack.c.b16 %v2160, %v2158
        %v2175 = vpack.c.b16 %v2163, %v2161
        %v2176 = vpack.c.b16 %v2164, %v2162
        %v2177 = vpack.c.b16 %v2167, %v2165
        %v2178 = vpack.c.b16 %v2168, %v2166
        %v2179 = vpack.c.b16 %v2171, %v2169
        %v2180 = vpack.c.b16 %v2172, %v2170
        %v2186 = vsel %vm1195, %v2174, 0
        %v2189 = vsel %vm1195, %v2176, 0
        %v2192 = vsel %vm1195, %v2178, 0
        %v2195 = vsel %vm1195, %v2180, 0
        %2197 = vmatpush.bf16.msra.mxu0 %v1149
        %2198 = vmatpush.bf16.msra.mxu0 %v1148
        %2199 = vmatpush.bf16.msra.mxu0 %v1147
        %2200 = vmatpush.bf16.msra.mxu0 %v1146
        %2201 = vmatpush.bf16.msra.mxu0 %v1145
        %2202 = vmatpush.bf16.msra.mxu0 %v1144
        %2203 = vmatpush.bf16.msra.mxu0 %v1143
        %2204 = vmatpush.bf16.msra.mxu0 %v1142
        %2205 = vmatmul.bf16.gmra.mxu0 %v2173
        %v2206 = vpop.f32.mrf.mxu0
        %v2207 = vadd.f32 0.0, %v2206
        %v2208 = vpop.f32.mrf.mxu0
        %v2209 = vadd.f32 0.0, %v2208
        %2210 = vmatmul.bf16.gmra.mxu0 %v2175
        %v2211 = vpop.f32.mrf.mxu0
        %v2212 = vadd.f32 0.0, %v2211
        %v2213 = vpop.f32.mrf.mxu0
        %v2214 = vadd.f32 0.0, %v2213
        %2215 = vmatmul.bf16.gmra.mxu0 %v2177
        %v2216 = vpop.f32.mrf.mxu0
        %v2217 = vadd.f32 0.0, %v2216
        %v2218 = vpop.f32.mrf.mxu0
        %v2219 = vadd.f32 0.0, %v2218
        %2220 = vmatmul.bf16.gmra.mxu0 %v2179
        %v2221 = vpop.f32.mrf.mxu0
        %v2222 = vadd.f32 0.0, %v2221
        %v2223 = vpop.f32.mrf.mxu0
        %v2224 = vadd.f32 0.0, %v2223
        %2225 = vdwg.mxu0
        %2226 = vmatpush.bf16.msra.mxu0 0
        %2227 = vmatpush.bf16.msra.mxu0 0
        %2228 = vmatpush.bf16.msra.mxu0 0
        %2229 = vmatpush.bf16.msra.mxu0 0
        %2230 = vmatpush.bf16.msra.mxu0 0
        %2231 = vmatpush.bf16.msra.mxu0 0
        %2232 = vmatpush.bf16.msra.mxu0 0
        %2233 = vmatpush.bf16.msra.mxu0 %v1150
        %2234 = vmatmul.bf16.gmra.mxu0 %v2186
        %v2235 = vpop.f32.mrf.mxu0
        %v2236 = vadd.f32 %v2207, %v2235
        %v2237 = vpop.f32.mrf.mxu0
        %v2238 = vadd.f32 %v2209, %v2237
        %2239 = vmatmul.bf16.gmra.mxu0 %v2189
        %v2240 = vpop.f32.mrf.mxu0
        %v2241 = vadd.f32 %v2212, %v2240
        %v2242 = vpop.f32.mrf.mxu0
        %v2243 = vadd.f32 %v2214, %v2242
        %2244 = vmatmul.bf16.gmra.mxu0 %v2192
        %v2245 = vpop.f32.mrf.mxu0
        %v2246 = vadd.f32 %v2217, %v2245
        %v2247 = vpop.f32.mrf.mxu0
        %v2248 = vadd.f32 %v2219, %v2247
        %2249 = vmatmul.bf16.gmra.mxu0 %v2195
        %v2250 = vpop.f32.mrf.mxu0
        %v2251 = vadd.f32 %v2222, %v2250
        %v2252 = vpop.f32.mrf.mxu0
        %v2253 = vadd.f32 %v2224, %v2252
        %2254 = vdwg.mxu0
        %v2255 = vpack.c.bf16 %v2238, %v2236
        %v2256 = vpack.c.bf16 %v2243, %v2241
        %v2257 = vpack.c.bf16 %v2248, %v2246
        %v2258 = vpack.c.bf16 %v2253, %v2251
        %s2259 = scalar_lea.vmem %s4, 160
        %v2260 = vld [vmem:[%s2259] sm:$0xf]
        %v2261 = vld [vmem:[%s2259 + $0x4] sm:$0xf]
        %v2262 = vld [vmem:[%s2259 + $0x8] sm:$0xf]
        %v2263 = vld [vmem:[%s2259 + $0xc] sm:$0xf]
        %v2264 = vld [vmem:[%s2259 + $0x10] sm:$0xf]
        %v2265 = vld [vmem:[%s2259 + $0x14] sm:$0xf]
        %v2266 = vld [vmem:[%s2259 + $0x18] sm:$0xf]
        %v2267 = vld [vmem:[%s2259 + $0x1c] sm:$0xf]
        %v2276 = vunpack.c.l.b16 %v2260
        %v2277 = vunpack.c.l.b16 %v2261
        %v2278 = vunpack.c.l.b16 %v2262
        %v2279 = vunpack.c.l.b16 %v2263
        %v2280 = vunpack.c.l.b16 %v2264
        %v2281 = vunpack.c.l.b16 %v2265
        %v2282 = vunpack.c.l.b16 %v2266
        %v2283 = vunpack.c.l.b16 %v2267
        %v2284 = vpack.c.b16 %v2277, %v2276
        %v2285 = vpack.c.b16 %v2279, %v2278
        %v2286 = vpack.c.b16 %v2281, %v2280
        %v2287 = vpack.c.b16 %v2283, %v2282
        %v2293 = vsel %vm1430, %v2255, 0
        %v2296 = vsel %vm1430, %v2256, 0
        %v2299 = vsel %vm1430, %v2257, 0
        %v2302 = vsel %vm1430, %v2258, 0
        %2304 = vmatpush.bf16.msra.mxu0 0
        %2305 = vmatpush.bf16.msra.mxu0 0
        %2306 = vmatpush.bf16.msra.mxu0 0
        %2307 = vmatpush.bf16.msra.mxu0 0
        %2308 = vmatpush.bf16.msra.mxu0 %v2287
        %2309 = vmatpush.bf16.msra.mxu0 %v2286
        %2310 = vmatpush.bf16.msra.mxu0 %v2285
        %2311 = vmatpush.bf16.msra.mxu0 %v2284
        %2312 = vmatmul.bf16.gmra.mxu0 %v2293
        %v2313 = vpop.f32.mrf.mxu0
        %v2314 = vadd.f32 0.0, %v2313
        %v2315 = vpop.f32.mrf.mxu0
        %v2316 = vadd.f32 0.0, %v2315
        %2317 = vmatmul.bf16.gmra.mxu0 %v2296
        %v2318 = vpop.f32.mrf.mxu0
        %v2319 = vadd.f32 0.0, %v2318
        %v2320 = vpop.f32.mrf.mxu0
        %v2321 = vadd.f32 0.0, %v2320
        %2322 = vmatmul.bf16.gmra.mxu0 %v2299
        %v2323 = vpop.f32.mrf.mxu0
        %v2324 = vadd.f32 0.0, %v2323
        %v2325 = vpop.f32.mrf.mxu0
        %v2326 = vadd.f32 0.0, %v2325
        %2327 = vmatmul.bf16.gmra.mxu0 %v2302
        %v2328 = vpop.f32.mrf.mxu0
        %v2329 = vadd.f32 0.0, %v2328
        %v2330 = vpop.f32.mrf.mxu0
        %v2331 = vadd.f32 0.0, %v2330
        %2332 = vdwg.mxu0
        %v2333 = vadd.f32 %v2132, %v2314
        %v2334 = vadd.f32 %v2133, %v2316
        %v2335 = vadd.f32 %v2134, %v2319
        %v2336 = vadd.f32 %v2135, %v2321
        %v2337 = vadd.f32 %v2136, %v2324
        %v2338 = vadd.f32 %v2137, %v2326
        %v2339 = vadd.f32 %v2138, %v2329
        %v2340 = vadd.f32 %v2139, %v2331
        %s2341 = scalar_lea.vmem %s3, 384
        %v2342 = vld [vmem:[%s2341] sm:$0xff]
        %v2343 = vld [vmem:[%s2341 + $0x8] sm:$0xff]
        %v2344 = vld [vmem:[%s2341 + $0x10] sm:$0xff]
        %v2345 = vld [vmem:[%s2341 + $0x18] sm:$0xff]
        %v2346 = vld [vmem:[%s2341 + $0x20] sm:$0xff]
        %v2347 = vld [vmem:[%s2341 + $0x28] sm:$0xff]
        %v2348 = vld [vmem:[%s2341 + $0x30] sm:$0xff]
        %v2349 = vld [vmem:[%s2341 + $0x38] sm:$0xff]
        %v2358 = vunpack.c.l.b16 %v2342
        %v2359 = vunpack.c.h.b16 %v2342
        %v2360 = vunpack.c.l.b16 %v2343
        %v2361 = vunpack.c.h.b16 %v2343
        %v2362 = vunpack.c.l.b16 %v2344
        %v2363 = vunpack.c.h.b16 %v2344
        %v2364 = vunpack.c.l.b16 %v2345
        %v2365 = vunpack.c.h.b16 %v2345
        %v2366 = vunpack.c.l.b16 %v2346
        %v2367 = vunpack.c.h.b16 %v2346
        %v2368 = vunpack.c.l.b16 %v2347
        %v2369 = vunpack.c.h.b16 %v2347
        %v2370 = vunpack.c.l.b16 %v2348
        %v2371 = vunpack.c.h.b16 %v2348
        %v2372 = vunpack.c.l.b16 %v2349
        %v2373 = vunpack.c.h.b16 %v2349
        %v2374 = vpack.c.b16 %v2360, %v2358
        %v2375 = vpack.c.b16 %v2361, %v2359
        %v2376 = vpack.c.b16 %v2364, %v2362
        %v2377 = vpack.c.b16 %v2365, %v2363
        %v2378 = vpack.c.b16 %v2368, %v2366
        %v2379 = vpack.c.b16 %v2369, %v2367
        %v2380 = vpack.c.b16 %v2372, %v2370
        %v2381 = vpack.c.b16 %v2373, %v2371
        %v2387 = vsel %vm1195, %v2375, 0
        %v2390 = vsel %vm1195, %v2377, 0
        %v2393 = vsel %vm1195, %v2379, 0
        %v2396 = vsel %vm1195, %v2381, 0
        %2398 = vmatpush.bf16.msra.mxu0 %v1149
        %2399 = vmatpush.bf16.msra.mxu0 %v1148
        %2400 = vmatpush.bf16.msra.mxu0 %v1147
        %2401 = vmatpush.bf16.msra.mxu0 %v1146
        %2402 = vmatpush.bf16.msra.mxu0 %v1145
        %2403 = vmatpush.bf16.msra.mxu0 %v1144
        %2404 = vmatpush.bf16.msra.mxu0 %v1143
        %2405 = vmatpush.bf16.msra.mxu0 %v1142
        %2406 = vmatmul.bf16.gmra.mxu0 %v2374
        %v2407 = vpop.f32.mrf.mxu0
        %v2408 = vadd.f32 0.0, %v2407
        %v2409 = vpop.f32.mrf.mxu0
        %v2410 = vadd.f32 0.0, %v2409
        %2411 = vmatmul.bf16.gmra.mxu0 %v2376
        %v2412 = vpop.f32.mrf.mxu0
        %v2413 = vadd.f32 0.0, %v2412
        %v2414 = vpop.f32.mrf.mxu0
        %v2415 = vadd.f32 0.0, %v2414
        %2416 = vmatmul.bf16.gmra.mxu0 %v2378
        %v2417 = vpop.f32.mrf.mxu0
        %v2418 = vadd.f32 0.0, %v2417
        %v2419 = vpop.f32.mrf.mxu0
        %v2420 = vadd.f32 0.0, %v2419
        %2421 = vmatmul.bf16.gmra.mxu0 %v2380
        %v2422 = vpop.f32.mrf.mxu0
        %v2423 = vadd.f32 0.0, %v2422
        %v2424 = vpop.f32.mrf.mxu0
        %v2425 = vadd.f32 0.0, %v2424
        %2426 = vdwg.mxu0
        %2427 = vmatpush.bf16.msra.mxu0 0
        %2428 = vmatpush.bf16.msra.mxu0 0
        %2429 = vmatpush.bf16.msra.mxu0 0
        %2430 = vmatpush.bf16.msra.mxu0 0
        %2431 = vmatpush.bf16.msra.mxu0 0
        %2432 = vmatpush.bf16.msra.mxu0 0
        %2433 = vmatpush.bf16.msra.mxu0 0
        %2434 = vmatpush.bf16.msra.mxu0 %v1150
        %2435 = vmatmul.bf16.gmra.mxu0 %v2387
        %v2436 = vpop.f32.mrf.mxu0
        %v2437 = vadd.f32 %v2408, %v2436
        %v2438 = vpop.f32.mrf.mxu0
        %v2439 = vadd.f32 %v2410, %v2438
        %2440 = vmatmul.bf16.gmra.mxu0 %v2390
        %v2441 = vpop.f32.mrf.mxu0
        %v2442 = vadd.f32 %v2413, %v2441
        %v2443 = vpop.f32.mrf.mxu0
        %v2444 = vadd.f32 %v2415, %v2443
        %2445 = vmatmul.bf16.gmra.mxu0 %v2393
        %v2446 = vpop.f32.mrf.mxu0
        %v2447 = vadd.f32 %v2418, %v2446
        %v2448 = vpop.f32.mrf.mxu0
        %v2449 = vadd.f32 %v2420, %v2448
        %2450 = vmatmul.bf16.gmra.mxu0 %v2396
        %v2451 = vpop.f32.mrf.mxu0
        %v2452 = vadd.f32 %v2423, %v2451
        %v2453 = vpop.f32.mrf.mxu0
        %v2454 = vadd.f32 %v2425, %v2453
        %2455 = vdwg.mxu0
        %v2456 = vpack.c.bf16 %v2439, %v2437
        %v2457 = vpack.c.bf16 %v2444, %v2442
        %v2458 = vpack.c.bf16 %v2449, %v2447
        %v2459 = vpack.c.bf16 %v2454, %v2452
        %s2460 = scalar_lea.vmem %s4, 192
        %v2461 = vld [vmem:[%s2460] sm:$0xf]
        %v2462 = vld [vmem:[%s2460 + $0x4] sm:$0xf]
        %v2463 = vld [vmem:[%s2460 + $0x8] sm:$0xf]
        %v2464 = vld [vmem:[%s2460 + $0xc] sm:$0xf]
        %v2465 = vld [vmem:[%s2460 + $0x10] sm:$0xf]
        %v2466 = vld [vmem:[%s2460 + $0x14] sm:$0xf]
        %v2467 = vld [vmem:[%s2460 + $0x18] sm:$0xf]
        %v2468 = vld [vmem:[%s2460 + $0x1c] sm:$0xf]
        %v2477 = vunpack.c.l.b16 %v2461
        %v2478 = vunpack.c.l.b16 %v2462
        %v2479 = vunpack.c.l.b16 %v2463
        %v2480 = vunpack.c.l.b16 %v2464
        %v2481 = vunpack.c.l.b16 %v2465
        %v2482 = vunpack.c.l.b16 %v2466
        %v2483 = vunpack.c.l.b16 %v2467
        %v2484 = vunpack.c.l.b16 %v2468
        %v2485 = vpack.c.b16 %v2478, %v2477
        %v2486 = vpack.c.b16 %v2480, %v2479
        %v2487 = vpack.c.b16 %v2482, %v2481
        %v2488 = vpack.c.b16 %v2484, %v2483
        %v2494 = vsel %vm1430, %v2456, 0
        %v2497 = vsel %vm1430, %v2457, 0
        %v2500 = vsel %vm1430, %v2458, 0
        %v2503 = vsel %vm1430, %v2459, 0
        %2505 = vmatpush.bf16.msra.mxu0 0
        %2506 = vmatpush.bf16.msra.mxu0 0
        %2507 = vmatpush.bf16.msra.mxu0 0
        %2508 = vmatpush.bf16.msra.mxu0 0
        %2509 = vmatpush.bf16.msra.mxu0 %v2488
        %2510 = vmatpush.bf16.msra.mxu0 %v2487
        %2511 = vmatpush.bf16.msra.mxu0 %v2486
        %2512 = vmatpush.bf16.msra.mxu0 %v2485
        %2513 = vmatmul.bf16.gmra.mxu0 %v2494
        %v2514 = vpop.f32.mrf.mxu0
        %v2515 = vadd.f32 0.0, %v2514
        %v2516 = vpop.f32.mrf.mxu0
        %v2517 = vadd.f32 0.0, %v2516
        %2518 = vmatmul.bf16.gmra.mxu0 %v2497
        %v2519 = vpop.f32.mrf.mxu0
        %v2520 = vadd.f32 0.0, %v2519
        %v2521 = vpop.f32.mrf.mxu0
        %v2522 = vadd.f32 0.0, %v2521
        %2523 = vmatmul.bf16.gmra.mxu0 %v2500
        %v2524 = vpop.f32.mrf.mxu0
        %v2525 = vadd.f32 0.0, %v2524
        %v2526 = vpop.f32.mrf.mxu0
        %v2527 = vadd.f32 0.0, %v2526
        %2528 = vmatmul.bf16.gmra.mxu0 %v2503
        %v2529 = vpop.f32.mrf.mxu0
        %v2530 = vadd.f32 0.0, %v2529
        %v2531 = vpop.f32.mrf.mxu0
        %v2532 = vadd.f32 0.0, %v2531
        %2533 = vdwg.mxu0
        %v2534 = vadd.f32 %v2333, %v2515
        %v2535 = vadd.f32 %v2334, %v2517
        %v2536 = vadd.f32 %v2335, %v2520
        %v2537 = vadd.f32 %v2336, %v2522
        %v2538 = vadd.f32 %v2337, %v2525
        %v2539 = vadd.f32 %v2338, %v2527
        %v2540 = vadd.f32 %v2339, %v2530
        %v2541 = vadd.f32 %v2340, %v2532
        %s2542 = scalar_lea.vmem %s3, 448
        %v2543 = vld [vmem:[%s2542] sm:$0xff]
        %v2544 = vld [vmem:[%s2542 + $0x8] sm:$0xff]
        %v2545 = vld [vmem:[%s2542 + $0x10] sm:$0xff]
        %v2546 = vld [vmem:[%s2542 + $0x18] sm:$0xff]
        %v2547 = vld [vmem:[%s2542 + $0x20] sm:$0xff]
        %v2548 = vld [vmem:[%s2542 + $0x28] sm:$0xff]
        %v2549 = vld [vmem:[%s2542 + $0x30] sm:$0xff]
        %v2550 = vld [vmem:[%s2542 + $0x38] sm:$0xff]
        %v2559 = vunpack.c.l.b16 %v2543
        %v2560 = vunpack.c.h.b16 %v2543
        %v2561 = vunpack.c.l.b16 %v2544
        %v2562 = vunpack.c.h.b16 %v2544
        %v2563 = vunpack.c.l.b16 %v2545
        %v2564 = vunpack.c.h.b16 %v2545
        %v2565 = vunpack.c.l.b16 %v2546
        %v2566 = vunpack.c.h.b16 %v2546
        %v2567 = vunpack.c.l.b16 %v2547
        %v2568 = vunpack.c.h.b16 %v2547
        %v2569 = vunpack.c.l.b16 %v2548
        %v2570 = vunpack.c.h.b16 %v2548
        %v2571 = vunpack.c.l.b16 %v2549
        %v2572 = vunpack.c.h.b16 %v2549
        %v2573 = vunpack.c.l.b16 %v2550
        %v2574 = vunpack.c.h.b16 %v2550
        %v2575 = vpack.c.b16 %v2561, %v2559
        %v2576 = vpack.c.b16 %v2562, %v2560
        %v2577 = vpack.c.b16 %v2565, %v2563
        %v2578 = vpack.c.b16 %v2566, %v2564
        %v2579 = vpack.c.b16 %v2569, %v2567
        %v2580 = vpack.c.b16 %v2570, %v2568
        %v2581 = vpack.c.b16 %v2573, %v2571
        %v2582 = vpack.c.b16 %v2574, %v2572
        %v2588 = vsel %vm1195, %v2576, 0
        %v2591 = vsel %vm1195, %v2578, 0
        %v2594 = vsel %vm1195, %v2580, 0
        %v2597 = vsel %vm1195, %v2582, 0
        %2599 = vmatpush.bf16.msra.mxu0 %v1149
        %2600 = vmatpush.bf16.msra.mxu0 %v1148
        %2601 = vmatpush.bf16.msra.mxu0 %v1147
        %2602 = vmatpush.bf16.msra.mxu0 %v1146
        %2603 = vmatpush.bf16.msra.mxu0 %v1145
        %2604 = vmatpush.bf16.msra.mxu0 %v1144
        %2605 = vmatpush.bf16.msra.mxu0 %v1143
        %2606 = vmatpush.bf16.msra.mxu0 %v1142
        %2607 = vmatmul.bf16.gmra.mxu0 %v2575
        %v2608 = vpop.f32.mrf.mxu0
        %v2609 = vadd.f32 0.0, %v2608
        %v2610 = vpop.f32.mrf.mxu0
        %v2611 = vadd.f32 0.0, %v2610
        %2612 = vmatmul.bf16.gmra.mxu0 %v2577
        %v2613 = vpop.f32.mrf.mxu0
        %v2614 = vadd.f32 0.0, %v2613
        %v2615 = vpop.f32.mrf.mxu0
        %v2616 = vadd.f32 0.0, %v2615
        %2617 = vmatmul.bf16.gmra.mxu0 %v2579
        %v2618 = vpop.f32.mrf.mxu0
        %v2619 = vadd.f32 0.0, %v2618
        %v2620 = vpop.f32.mrf.mxu0
        %v2621 = vadd.f32 0.0, %v2620
        %2622 = vmatmul.bf16.gmra.mxu0 %v2581
        %v2623 = vpop.f32.mrf.mxu0
        %v2624 = vadd.f32 0.0, %v2623
        %v2625 = vpop.f32.mrf.mxu0
        %v2626 = vadd.f32 0.0, %v2625
        %2627 = vdwg.mxu0
        %2628 = vmatpush.bf16.msra.mxu0 0
        %2629 = vmatpush.bf16.msra.mxu0 0
        %2630 = vmatpush.bf16.msra.mxu0 0
        %2631 = vmatpush.bf16.msra.mxu0 0
        %2632 = vmatpush.bf16.msra.mxu0 0
        %2633 = vmatpush.bf16.msra.mxu0 0
        %2634 = vmatpush.bf16.msra.mxu0 0
        %2635 = vmatpush.bf16.msra.mxu0 %v1150
        %2636 = vmatmul.bf16.gmra.mxu0 %v2588
        %v2637 = vpop.f32.mrf.mxu0
        %v2638 = vadd.f32 %v2609, %v2637
        %v2639 = vpop.f32.mrf.mxu0
        %v2640 = vadd.f32 %v2611, %v2639
        %2641 = vmatmul.bf16.gmra.mxu0 %v2591
        %v2642 = vpop.f32.mrf.mxu0
        %v2643 = vadd.f32 %v2614, %v2642
        %v2644 = vpop.f32.mrf.mxu0
        %v2645 = vadd.f32 %v2616, %v2644
        %2646 = vmatmul.bf16.gmra.mxu0 %v2594
        %v2647 = vpop.f32.mrf.mxu0
        %v2648 = vadd.f32 %v2619, %v2647
        %v2649 = vpop.f32.mrf.mxu0
        %v2650 = vadd.f32 %v2621, %v2649
        %2651 = vmatmul.bf16.gmra.mxu0 %v2597
        %v2652 = vpop.f32.mrf.mxu0
        %v2653 = vadd.f32 %v2624, %v2652
        %v2654 = vpop.f32.mrf.mxu0
        %v2655 = vadd.f32 %v2626, %v2654
        %2656 = vdwg.mxu0
        %v2657 = vpack.c.bf16 %v2640, %v2638
        %v2658 = vpack.c.bf16 %v2645, %v2643
        %v2659 = vpack.c.bf16 %v2650, %v2648
        %v2660 = vpack.c.bf16 %v2655, %v2653
        %s2661 = scalar_lea.vmem %s4, 224
        %v2662 = vld [vmem:[%s2661] sm:$0xf]
        %v2663 = vld [vmem:[%s2661 + $0x4] sm:$0xf]
        %v2664 = vld [vmem:[%s2661 + $0x8] sm:$0xf]
        %v2665 = vld [vmem:[%s2661 + $0xc] sm:$0xf]
        %v2666 = vld [vmem:[%s2661 + $0x10] sm:$0xf]
        %v2667 = vld [vmem:[%s2661 + $0x14] sm:$0xf]
        %v2668 = vld [vmem:[%s2661 + $0x18] sm:$0xf]
        %v2669 = vld [vmem:[%s2661 + $0x1c] sm:$0xf]
        %v2678 = vunpack.c.l.b16 %v2662
        %v2679 = vunpack.c.l.b16 %v2663
        %v2680 = vunpack.c.l.b16 %v2664
        %v2681 = vunpack.c.l.b16 %v2665
        %v2682 = vunpack.c.l.b16 %v2666
        %v2683 = vunpack.c.l.b16 %v2667
        %v2684 = vunpack.c.l.b16 %v2668
        %v2685 = vunpack.c.l.b16 %v2669
        %v2686 = vpack.c.b16 %v2679, %v2678
        %v2687 = vpack.c.b16 %v2681, %v2680
        %v2688 = vpack.c.b16 %v2683, %v2682
        %v2689 = vpack.c.b16 %v2685, %v2684
        %v2695 = vsel %vm1430, %v2657, 0
        %v2698 = vsel %vm1430, %v2658, 0
        %v2701 = vsel %vm1430, %v2659, 0
        %v2704 = vsel %vm1430, %v2660, 0
        %2706 = vmatpush.bf16.msra.mxu0 0
        %2707 = vmatpush.bf16.msra.mxu0 0
        %2708 = vmatpush.bf16.msra.mxu0 0
        %2709 = vmatpush.bf16.msra.mxu0 0
        %2710 = vmatpush.bf16.msra.mxu0 %v2689
        %2711 = vmatpush.bf16.msra.mxu0 %v2688
        %2712 = vmatpush.bf16.msra.mxu0 %v2687
        %2713 = vmatpush.bf16.msra.mxu0 %v2686
        %2714 = vmatmul.bf16.gmra.mxu0 %v2695
        %v2715 = vpop.f32.mrf.mxu0
        %v2716 = vadd.f32 0.0, %v2715
        %v2717 = vpop.f32.mrf.mxu0
        %v2718 = vadd.f32 0.0, %v2717
        %2719 = vmatmul.bf16.gmra.mxu0 %v2698
        %v2720 = vpop.f32.mrf.mxu0
        %v2721 = vadd.f32 0.0, %v2720
        %v2722 = vpop.f32.mrf.mxu0
        %v2723 = vadd.f32 0.0, %v2722
        %2724 = vmatmul.bf16.gmra.mxu0 %v2701
        %v2725 = vpop.f32.mrf.mxu0
        %v2726 = vadd.f32 0.0, %v2725
        %v2727 = vpop.f32.mrf.mxu0
        %v2728 = vadd.f32 0.0, %v2727
        %2729 = vmatmul.bf16.gmra.mxu0 %v2704
        %v2730 = vpop.f32.mrf.mxu0
        %v2731 = vadd.f32 0.0, %v2730
        %v2732 = vpop.f32.mrf.mxu0
        %v2733 = vadd.f32 0.0, %v2732
        %2734 = vdwg.mxu0
        %v2735 = vadd.f32 %v2534, %v2716
        %v2736 = vadd.f32 %v2535, %v2718
        %v2737 = vadd.f32 %v2536, %v2721
        %v2738 = vadd.f32 %v2537, %v2723
        %v2739 = vadd.f32 %v2538, %v2726
        %v2740 = vadd.f32 %v2539, %v2728
        %v2741 = vadd.f32 %v2540, %v2731
        %v2742 = vadd.f32 %v2541, %v2733
        %s2743 = scalar_lea.vmem %s3, 512
        %v2744 = vld [vmem:[%s2743] sm:$0xff]
        %v2745 = vld [vmem:[%s2743 + $0x8] sm:$0xff]
        %v2746 = vld [vmem:[%s2743 + $0x10] sm:$0xff]
        %v2747 = vld [vmem:[%s2743 + $0x18] sm:$0xff]
        %v2748 = vld [vmem:[%s2743 + $0x20] sm:$0xff]
        %v2749 = vld [vmem:[%s2743 + $0x28] sm:$0xff]
        %v2750 = vld [vmem:[%s2743 + $0x30] sm:$0xff]
        %v2751 = vld [vmem:[%s2743 + $0x38] sm:$0xff]
        %v2760 = vunpack.c.l.b16 %v2744
        %v2761 = vunpack.c.h.b16 %v2744
        %v2762 = vunpack.c.l.b16 %v2745
        %v2763 = vunpack.c.h.b16 %v2745
        %v2764 = vunpack.c.l.b16 %v2746
        %v2765 = vunpack.c.h.b16 %v2746
        %v2766 = vunpack.c.l.b16 %v2747
        %v2767 = vunpack.c.h.b16 %v2747
        %v2768 = vunpack.c.l.b16 %v2748
        %v2769 = vunpack.c.h.b16 %v2748
        %v2770 = vunpack.c.l.b16 %v2749
        %v2771 = vunpack.c.h.b16 %v2749
        %v2772 = vunpack.c.l.b16 %v2750
        %v2773 = vunpack.c.h.b16 %v2750
        %v2774 = vunpack.c.l.b16 %v2751
        %v2775 = vunpack.c.h.b16 %v2751
        %v2776 = vpack.c.b16 %v2762, %v2760
        %v2777 = vpack.c.b16 %v2763, %v2761
        %v2778 = vpack.c.b16 %v2766, %v2764
        %v2779 = vpack.c.b16 %v2767, %v2765
        %v2780 = vpack.c.b16 %v2770, %v2768
        %v2781 = vpack.c.b16 %v2771, %v2769
        %v2782 = vpack.c.b16 %v2774, %v2772
        %v2783 = vpack.c.b16 %v2775, %v2773
        %v2789 = vsel %vm1195, %v2777, 0
        %v2792 = vsel %vm1195, %v2779, 0
        %v2795 = vsel %vm1195, %v2781, 0
        %v2798 = vsel %vm1195, %v2783, 0
        %2800 = vmatpush.bf16.msra.mxu0 %v1149
        %2801 = vmatpush.bf16.msra.mxu0 %v1148
        %2802 = vmatpush.bf16.msra.mxu0 %v1147
        %2803 = vmatpush.bf16.msra.mxu0 %v1146
        %2804 = vmatpush.bf16.msra.mxu0 %v1145
        %2805 = vmatpush.bf16.msra.mxu0 %v1144
        %2806 = vmatpush.bf16.msra.mxu0 %v1143
        %2807 = vmatpush.bf16.msra.mxu0 %v1142
        %2808 = vmatmul.bf16.gmra.mxu0 %v2776
        %v2809 = vpop.f32.mrf.mxu0
        %v2810 = vadd.f32 0.0, %v2809
        %v2811 = vpop.f32.mrf.mxu0
        %v2812 = vadd.f32 0.0, %v2811
        %2813 = vmatmul.bf16.gmra.mxu0 %v2778
        %v2814 = vpop.f32.mrf.mxu0
        %v2815 = vadd.f32 0.0, %v2814
        %v2816 = vpop.f32.mrf.mxu0
        %v2817 = vadd.f32 0.0, %v2816
        %2818 = vmatmul.bf16.gmra.mxu0 %v2780
        %v2819 = vpop.f32.mrf.mxu0
        %v2820 = vadd.f32 0.0, %v2819
        %v2821 = vpop.f32.mrf.mxu0
        %v2822 = vadd.f32 0.0, %v2821
        %2823 = vmatmul.bf16.gmra.mxu0 %v2782
        %v2824 = vpop.f32.mrf.mxu0
        %v2825 = vadd.f32 0.0, %v2824
        %v2826 = vpop.f32.mrf.mxu0
        %v2827 = vadd.f32 0.0, %v2826
        %2828 = vdwg.mxu0
        %2829 = vmatpush.bf16.msra.mxu0 0
        %2830 = vmatpush.bf16.msra.mxu0 0
        %2831 = vmatpush.bf16.msra.mxu0 0
        %2832 = vmatpush.bf16.msra.mxu0 0
        %2833 = vmatpush.bf16.msra.mxu0 0
        %2834 = vmatpush.bf16.msra.mxu0 0
        %2835 = vmatpush.bf16.msra.mxu0 0
        %2836 = vmatpush.bf16.msra.mxu0 %v1150
        %2837 = vmatmul.bf16.gmra.mxu0 %v2789
        %v2838 = vpop.f32.mrf.mxu0
        %v2839 = vadd.f32 %v2810, %v2838
        %v2840 = vpop.f32.mrf.mxu0
        %v2841 = vadd.f32 %v2812, %v2840
        %2842 = vmatmul.bf16.gmra.mxu0 %v2792
        %v2843 = vpop.f32.mrf.mxu0
        %v2844 = vadd.f32 %v2815, %v2843
        %v2845 = vpop.f32.mrf.mxu0
        %v2846 = vadd.f32 %v2817, %v2845
        %2847 = vmatmul.bf16.gmra.mxu0 %v2795
        %v2848 = vpop.f32.mrf.mxu0
        %v2849 = vadd.f32 %v2820, %v2848
        %v2850 = vpop.f32.mrf.mxu0
        %v2851 = vadd.f32 %v2822, %v2850
        %2852 = vmatmul.bf16.gmra.mxu0 %v2798
        %v2853 = vpop.f32.mrf.mxu0
        %v2854 = vadd.f32 %v2825, %v2853
        %v2855 = vpop.f32.mrf.mxu0
        %v2856 = vadd.f32 %v2827, %v2855
        %2857 = vdwg.mxu0
        %v2858 = vpack.c.bf16 %v2841, %v2839
        %v2859 = vpack.c.bf16 %v2846, %v2844
        %v2860 = vpack.c.bf16 %v2851, %v2849
        %v2861 = vpack.c.bf16 %v2856, %v2854
        %s2862 = scalar_lea.vmem %s4, 256
        %v2863 = vld [vmem:[%s2862] sm:$0xf]
        %v2864 = vld [vmem:[%s2862 + $0x4] sm:$0xf]
        %v2865 = vld [vmem:[%s2862 + $0x8] sm:$0xf]
        %v2866 = vld [vmem:[%s2862 + $0xc] sm:$0xf]
        %v2867 = vld [vmem:[%s2862 + $0x10] sm:$0xf]
        %v2868 = vld [vmem:[%s2862 + $0x14] sm:$0xf]
        %v2869 = vld [vmem:[%s2862 + $0x18] sm:$0xf]
        %v2870 = vld [vmem:[%s2862 + $0x1c] sm:$0xf]
        %v2879 = vunpack.c.l.b16 %v2863
        %v2880 = vunpack.c.l.b16 %v2864
        %v2881 = vunpack.c.l.b16 %v2865
        %v2882 = vunpack.c.l.b16 %v2866
        %v2883 = vunpack.c.l.b16 %v2867
        %v2884 = vunpack.c.l.b16 %v2868
        %v2885 = vunpack.c.l.b16 %v2869
        %v2886 = vunpack.c.l.b16 %v2870
        %v2887 = vpack.c.b16 %v2880, %v2879
        %v2888 = vpack.c.b16 %v2882, %v2881
        %v2889 = vpack.c.b16 %v2884, %v2883
        %v2890 = vpack.c.b16 %v2886, %v2885
        %v2896 = vsel %vm1430, %v2858, 0
        %v2899 = vsel %vm1430, %v2859, 0
        %v2902 = vsel %vm1430, %v2860, 0
        %v2905 = vsel %vm1430, %v2861, 0
        %2907 = vmatpush.bf16.msra.mxu0 0
        %2908 = vmatpush.bf16.msra.mxu0 0
        %2909 = vmatpush.bf16.msra.mxu0 0
        %2910 = vmatpush.bf16.msra.mxu0 0
        %2911 = vmatpush.bf16.msra.mxu0 %v2890
        %2912 = vmatpush.bf16.msra.mxu0 %v2889
        %2913 = vmatpush.bf16.msra.mxu0 %v2888
        %2914 = vmatpush.bf16.msra.mxu0 %v2887
        %2915 = vmatmul.bf16.gmra.mxu0 %v2896
        %v2916 = vpop.f32.mrf.mxu0
        %v2917 = vadd.f32 0.0, %v2916
        %v2918 = vpop.f32.mrf.mxu0
        %v2919 = vadd.f32 0.0, %v2918
        %2920 = vmatmul.bf16.gmra.mxu0 %v2899
        %v2921 = vpop.f32.mrf.mxu0
        %v2922 = vadd.f32 0.0, %v2921
        %v2923 = vpop.f32.mrf.mxu0
        %v2924 = vadd.f32 0.0, %v2923
        %2925 = vmatmul.bf16.gmra.mxu0 %v2902
        %v2926 = vpop.f32.mrf.mxu0
        %v2927 = vadd.f32 0.0, %v2926
        %v2928 = vpop.f32.mrf.mxu0
        %v2929 = vadd.f32 0.0, %v2928
        %2930 = vmatmul.bf16.gmra.mxu0 %v2905
        %v2931 = vpop.f32.mrf.mxu0
        %v2932 = vadd.f32 0.0, %v2931
        %v2933 = vpop.f32.mrf.mxu0
        %v2934 = vadd.f32 0.0, %v2933
        %2935 = vdwg.mxu0
        %v2936 = vadd.f32 %v2735, %v2917
        %v2937 = vadd.f32 %v2736, %v2919
        %v2938 = vadd.f32 %v2737, %v2922
        %v2939 = vadd.f32 %v2738, %v2924
        %v2940 = vadd.f32 %v2739, %v2927
        %v2941 = vadd.f32 %v2740, %v2929
        %v2942 = vadd.f32 %v2741, %v2932
        %v2943 = vadd.f32 %v2742, %v2934
        %s2944 = scalar_lea.vmem %s3, 576
        %v2945 = vld [vmem:[%s2944] sm:$0xff]
        %v2946 = vld [vmem:[%s2944 + $0x8] sm:$0xff]
        %v2947 = vld [vmem:[%s2944 + $0x10] sm:$0xff]
        %v2948 = vld [vmem:[%s2944 + $0x18] sm:$0xff]
        %v2949 = vld [vmem:[%s2944 + $0x20] sm:$0xff]
        %v2950 = vld [vmem:[%s2944 + $0x28] sm:$0xff]
        %v2951 = vld [vmem:[%s2944 + $0x30] sm:$0xff]
        %v2952 = vld [vmem:[%s2944 + $0x38] sm:$0xff]
        %v2961 = vunpack.c.l.b16 %v2945
        %v2962 = vunpack.c.h.b16 %v2945
        %v2963 = vunpack.c.l.b16 %v2946
        %v2964 = vunpack.c.h.b16 %v2946
        %v2965 = vunpack.c.l.b16 %v2947
        %v2966 = vunpack.c.h.b16 %v2947
        %v2967 = vunpack.c.l.b16 %v2948
        %v2968 = vunpack.c.h.b16 %v2948
        %v2969 = vunpack.c.l.b16 %v2949
        %v2970 = vunpack.c.h.b16 %v2949
        %v2971 = vunpack.c.l.b16 %v2950
        %v2972 = vunpack.c.h.b16 %v2950
        %v2973 = vunpack.c.l.b16 %v2951
        %v2974 = vunpack.c.h.b16 %v2951
        %v2975 = vunpack.c.l.b16 %v2952
        %v2976 = vunpack.c.h.b16 %v2952
        %v2977 = vpack.c.b16 %v2963, %v2961
        %v2978 = vpack.c.b16 %v2964, %v2962
        %v2979 = vpack.c.b16 %v2967, %v2965
        %v2980 = vpack.c.b16 %v2968, %v2966
        %v2981 = vpack.c.b16 %v2971, %v2969
        %v2982 = vpack.c.b16 %v2972, %v2970
        %v2983 = vpack.c.b16 %v2975, %v2973
        %v2984 = vpack.c.b16 %v2976, %v2974
        %v2990 = vsel %vm1195, %v2978, 0
        %v2993 = vsel %vm1195, %v2980, 0
        %v2996 = vsel %vm1195, %v2982, 0
        %v2999 = vsel %vm1195, %v2984, 0
        %3001 = vmatpush.bf16.msra.mxu0 %v1149
        %3002 = vmatpush.bf16.msra.mxu0 %v1148
        %3003 = vmatpush.bf16.msra.mxu0 %v1147
        %3004 = vmatpush.bf16.msra.mxu0 %v1146
        %3005 = vmatpush.bf16.msra.mxu0 %v1145
        %3006 = vmatpush.bf16.msra.mxu0 %v1144
        %3007 = vmatpush.bf16.msra.mxu0 %v1143
        %3008 = vmatpush.bf16.msra.mxu0 %v1142
        %3009 = vmatmul.bf16.gmra.mxu0 %v2977
        %v3010 = vpop.f32.mrf.mxu0
        %v3011 = vadd.f32 0.0, %v3010
        %v3012 = vpop.f32.mrf.mxu0
        %v3013 = vadd.f32 0.0, %v3012
        %3014 = vmatmul.bf16.gmra.mxu0 %v2979
        %v3015 = vpop.f32.mrf.mxu0
        %v3016 = vadd.f32 0.0, %v3015
        %v3017 = vpop.f32.mrf.mxu0
        %v3018 = vadd.f32 0.0, %v3017
        %3019 = vmatmul.bf16.gmra.mxu0 %v2981
        %v3020 = vpop.f32.mrf.mxu0
        %v3021 = vadd.f32 0.0, %v3020
        %v3022 = vpop.f32.mrf.mxu0
        %v3023 = vadd.f32 0.0, %v3022
        %3024 = vmatmul.bf16.gmra.mxu0 %v2983
        %v3025 = vpop.f32.mrf.mxu0
        %v3026 = vadd.f32 0.0, %v3025
        %v3027 = vpop.f32.mrf.mxu0
        %v3028 = vadd.f32 0.0, %v3027
        %3029 = vdwg.mxu0
        %3030 = vmatpush.bf16.msra.mxu0 0
        %3031 = vmatpush.bf16.msra.mxu0 0
        %3032 = vmatpush.bf16.msra.mxu0 0
        %3033 = vmatpush.bf16.msra.mxu0 0
        %3034 = vmatpush.bf16.msra.mxu0 0
        %3035 = vmatpush.bf16.msra.mxu0 0
        %3036 = vmatpush.bf16.msra.mxu0 0
        %3037 = vmatpush.bf16.msra.mxu0 %v1150
        %3038 = vmatmul.bf16.gmra.mxu0 %v2990
        %v3039 = vpop.f32.mrf.mxu0
        %v3040 = vadd.f32 %v3011, %v3039
        %v3041 = vpop.f32.mrf.mxu0
        %v3042 = vadd.f32 %v3013, %v3041
        %3043 = vmatmul.bf16.gmra.mxu0 %v2993
        %v3044 = vpop.f32.mrf.mxu0
        %v3045 = vadd.f32 %v3016, %v3044
        %v3046 = vpop.f32.mrf.mxu0
        %v3047 = vadd.f32 %v3018, %v3046
        %3048 = vmatmul.bf16.gmra.mxu0 %v2996
        %v3049 = vpop.f32.mrf.mxu0
        %v3050 = vadd.f32 %v3021, %v3049
        %v3051 = vpop.f32.mrf.mxu0
        %v3052 = vadd.f32 %v3023, %v3051
        %3053 = vmatmul.bf16.gmra.mxu0 %v2999
        %v3054 = vpop.f32.mrf.mxu0
        %v3055 = vadd.f32 %v3026, %v3054
        %v3056 = vpop.f32.mrf.mxu0
        %v3057 = vadd.f32 %v3028, %v3056
        %3058 = vdwg.mxu0
        %v3059 = vpack.c.bf16 %v3042, %v3040
        %v3060 = vpack.c.bf16 %v3047, %v3045
        %v3061 = vpack.c.bf16 %v3052, %v3050
        %v3062 = vpack.c.bf16 %v3057, %v3055
        %s3063 = scalar_lea.vmem %s4, 288
        %v3064 = vld [vmem:[%s3063] sm:$0xf]
        %v3065 = vld [vmem:[%s3063 + $0x4] sm:$0xf]
        %v3066 = vld [vmem:[%s3063 + $0x8] sm:$0xf]
        %v3067 = vld [vmem:[%s3063 + $0xc] sm:$0xf]
        %v3068 = vld [vmem:[%s3063 + $0x10] sm:$0xf]
        %v3069 = vld [vmem:[%s3063 + $0x14] sm:$0xf]
        %v3070 = vld [vmem:[%s3063 + $0x18] sm:$0xf]
        %v3071 = vld [vmem:[%s3063 + $0x1c] sm:$0xf]
        %v3080 = vunpack.c.l.b16 %v3064
        %v3081 = vunpack.c.l.b16 %v3065
        %v3082 = vunpack.c.l.b16 %v3066
        %v3083 = vunpack.c.l.b16 %v3067
        %v3084 = vunpack.c.l.b16 %v3068
        %v3085 = vunpack.c.l.b16 %v3069
        %v3086 = vunpack.c.l.b16 %v3070
        %v3087 = vunpack.c.l.b16 %v3071
        %v3088 = vpack.c.b16 %v3081, %v3080
        %v3089 = vpack.c.b16 %v3083, %v3082
        %v3090 = vpack.c.b16 %v3085, %v3084
        %v3091 = vpack.c.b16 %v3087, %v3086
        %v3097 = vsel %vm1430, %v3059, 0
        %v3100 = vsel %vm1430, %v3060, 0
        %v3103 = vsel %vm1430, %v3061, 0
        %v3106 = vsel %vm1430, %v3062, 0
        %3108 = vmatpush.bf16.msra.mxu0 0
        %3109 = vmatpush.bf16.msra.mxu0 0
        %3110 = vmatpush.bf16.msra.mxu0 0
        %3111 = vmatpush.bf16.msra.mxu0 0
        %3112 = vmatpush.bf16.msra.mxu0 %v3091
        %3113 = vmatpush.bf16.msra.mxu0 %v3090
        %3114 = vmatpush.bf16.msra.mxu0 %v3089
        %3115 = vmatpush.bf16.msra.mxu0 %v3088
        %3116 = vmatmul.bf16.gmra.mxu0 %v3097
        %v3117 = vpop.f32.mrf.mxu0
        %v3118 = vadd.f32 0.0, %v3117
        %v3119 = vpop.f32.mrf.mxu0
        %v3120 = vadd.f32 0.0, %v3119
        %3121 = vmatmul.bf16.gmra.mxu0 %v3100
        %v3122 = vpop.f32.mrf.mxu0
        %v3123 = vadd.f32 0.0, %v3122
        %v3124 = vpop.f32.mrf.mxu0
        %v3125 = vadd.f32 0.0, %v3124
        %3126 = vmatmul.bf16.gmra.mxu0 %v3103
        %v3127 = vpop.f32.mrf.mxu0
        %v3128 = vadd.f32 0.0, %v3127
        %v3129 = vpop.f32.mrf.mxu0
        %v3130 = vadd.f32 0.0, %v3129
        %3131 = vmatmul.bf16.gmra.mxu0 %v3106
        %v3132 = vpop.f32.mrf.mxu0
        %v3133 = vadd.f32 0.0, %v3132
        %v3134 = vpop.f32.mrf.mxu0
        %v3135 = vadd.f32 0.0, %v3134
        %3136 = vdwg.mxu0
        %v3137 = vadd.f32 %v2936, %v3118
        %v3138 = vadd.f32 %v2937, %v3120
        %v3139 = vadd.f32 %v2938, %v3123
        %v3140 = vadd.f32 %v2939, %v3125
        %v3141 = vadd.f32 %v2940, %v3128
        %v3142 = vadd.f32 %v2941, %v3130
        %v3143 = vadd.f32 %v2942, %v3133
        %v3144 = vadd.f32 %v2943, %v3135
        %s3145 = scalar_lea.vmem %s3, 640
        %v3146 = vld [vmem:[%s3145] sm:$0xff]
        %v3147 = vld [vmem:[%s3145 + $0x8] sm:$0xff]
        %v3148 = vld [vmem:[%s3145 + $0x10] sm:$0xff]
        %v3149 = vld [vmem:[%s3145 + $0x18] sm:$0xff]
        %v3150 = vld [vmem:[%s3145 + $0x20] sm:$0xff]
        %v3151 = vld [vmem:[%s3145 + $0x28] sm:$0xff]
        %v3152 = vld [vmem:[%s3145 + $0x30] sm:$0xff]
        %v3153 = vld [vmem:[%s3145 + $0x38] sm:$0xff]
        %v3162 = vunpack.c.l.b16 %v3146
        %v3163 = vunpack.c.h.b16 %v3146
        %v3164 = vunpack.c.l.b16 %v3147
        %v3165 = vunpack.c.h.b16 %v3147
        %v3166 = vunpack.c.l.b16 %v3148
        %v3167 = vunpack.c.h.b16 %v3148
        %v3168 = vunpack.c.l.b16 %v3149
        %v3169 = vunpack.c.h.b16 %v3149
        %v3170 = vunpack.c.l.b16 %v3150
        %v3171 = vunpack.c.h.b16 %v3150
        %v3172 = vunpack.c.l.b16 %v3151
        %v3173 = vunpack.c.h.b16 %v3151
        %v3174 = vunpack.c.l.b16 %v3152
        %v3175 = vunpack.c.h.b16 %v3152
        %v3176 = vunpack.c.l.b16 %v3153
        %v3177 = vunpack.c.h.b16 %v3153
        %v3178 = vpack.c.b16 %v3164, %v3162
        %v3179 = vpack.c.b16 %v3165, %v3163
        %v3180 = vpack.c.b16 %v3168, %v3166
        %v3181 = vpack.c.b16 %v3169, %v3167
        %v3182 = vpack.c.b16 %v3172, %v3170
        %v3183 = vpack.c.b16 %v3173, %v3171
        %v3184 = vpack.c.b16 %v3176, %v3174
        %v3185 = vpack.c.b16 %v3177, %v3175
        %v3191 = vsel %vm1195, %v3179, 0
        %v3194 = vsel %vm1195, %v3181, 0
        %v3197 = vsel %vm1195, %v3183, 0
        %v3200 = vsel %vm1195, %v3185, 0
        %3202 = vmatpush.bf16.msra.mxu0 %v1149
        %3203 = vmatpush.bf16.msra.mxu0 %v1148
        %3204 = vmatpush.bf16.msra.mxu0 %v1147
        %3205 = vmatpush.bf16.msra.mxu0 %v1146
        %3206 = vmatpush.bf16.msra.mxu0 %v1145
        %3207 = vmatpush.bf16.msra.mxu0 %v1144
        %3208 = vmatpush.bf16.msra.mxu0 %v1143
        %3209 = vmatpush.bf16.msra.mxu0 %v1142
        %3210 = vmatmul.bf16.gmra.mxu0 %v3178
        %v3211 = vpop.f32.mrf.mxu0
        %v3212 = vadd.f32 0.0, %v3211
        %v3213 = vpop.f32.mrf.mxu0
        %v3214 = vadd.f32 0.0, %v3213
        %3215 = vmatmul.bf16.gmra.mxu0 %v3180
        %v3216 = vpop.f32.mrf.mxu0
        %v3217 = vadd.f32 0.0, %v3216
        %v3218 = vpop.f32.mrf.mxu0
        %v3219 = vadd.f32 0.0, %v3218
        %3220 = vmatmul.bf16.gmra.mxu0 %v3182
        %v3221 = vpop.f32.mrf.mxu0
        %v3222 = vadd.f32 0.0, %v3221
        %v3223 = vpop.f32.mrf.mxu0
        %v3224 = vadd.f32 0.0, %v3223
        %3225 = vmatmul.bf16.gmra.mxu0 %v3184
        %v3226 = vpop.f32.mrf.mxu0
        %v3227 = vadd.f32 0.0, %v3226
        %v3228 = vpop.f32.mrf.mxu0
        %v3229 = vadd.f32 0.0, %v3228
        %3230 = vdwg.mxu0
        %3231 = vmatpush.bf16.msra.mxu0 0
        %3232 = vmatpush.bf16.msra.mxu0 0
        %3233 = vmatpush.bf16.msra.mxu0 0
        %3234 = vmatpush.bf16.msra.mxu0 0
        %3235 = vmatpush.bf16.msra.mxu0 0
        %3236 = vmatpush.bf16.msra.mxu0 0
        %3237 = vmatpush.bf16.msra.mxu0 0
        %3238 = vmatpush.bf16.msra.mxu0 %v1150
        %3239 = vmatmul.bf16.gmra.mxu0 %v3191
        %v3240 = vpop.f32.mrf.mxu0
        %v3241 = vadd.f32 %v3212, %v3240
        %v3242 = vpop.f32.mrf.mxu0
        %v3243 = vadd.f32 %v3214, %v3242
        %3244 = vmatmul.bf16.gmra.mxu0 %v3194
        %v3245 = vpop.f32.mrf.mxu0
        %v3246 = vadd.f32 %v3217, %v3245
        %v3247 = vpop.f32.mrf.mxu0
        %v3248 = vadd.f32 %v3219, %v3247
        %3249 = vmatmul.bf16.gmra.mxu0 %v3197
        %v3250 = vpop.f32.mrf.mxu0
        %v3251 = vadd.f32 %v3222, %v3250
        %v3252 = vpop.f32.mrf.mxu0
        %v3253 = vadd.f32 %v3224, %v3252
        %3254 = vmatmul.bf16.gmra.mxu0 %v3200
        %v3255 = vpop.f32.mrf.mxu0
        %v3256 = vadd.f32 %v3227, %v3255
        %v3257 = vpop.f32.mrf.mxu0
        %v3258 = vadd.f32 %v3229, %v3257
        %3259 = vdwg.mxu0
        %v3260 = vpack.c.bf16 %v3243, %v3241
        %v3261 = vpack.c.bf16 %v3248, %v3246
        %v3262 = vpack.c.bf16 %v3253, %v3251
        %v3263 = vpack.c.bf16 %v3258, %v3256
        %s3264 = scalar_lea.vmem %s4, 320
        %v3265 = vld [vmem:[%s3264] sm:$0xf]
        %v3266 = vld [vmem:[%s3264 + $0x4] sm:$0xf]
        %v3267 = vld [vmem:[%s3264 + $0x8] sm:$0xf]
        %v3268 = vld [vmem:[%s3264 + $0xc] sm:$0xf]
        %v3269 = vld [vmem:[%s3264 + $0x10] sm:$0xf]
        %v3270 = vld [vmem:[%s3264 + $0x14] sm:$0xf]
        %v3271 = vld [vmem:[%s3264 + $0x18] sm:$0xf]
        %v3272 = vld [vmem:[%s3264 + $0x1c] sm:$0xf]
        %v3281 = vunpack.c.l.b16 %v3265
        %v3282 = vunpack.c.l.b16 %v3266
        %v3283 = vunpack.c.l.b16 %v3267
        %v3284 = vunpack.c.l.b16 %v3268
        %v3285 = vunpack.c.l.b16 %v3269
        %v3286 = vunpack.c.l.b16 %v3270
        %v3287 = vunpack.c.l.b16 %v3271
        %v3288 = vunpack.c.l.b16 %v3272
        %v3289 = vpack.c.b16 %v3282, %v3281
        %v3290 = vpack.c.b16 %v3284, %v3283
        %v3291 = vpack.c.b16 %v3286, %v3285
        %v3292 = vpack.c.b16 %v3288, %v3287
        %v3298 = vsel %vm1430, %v3260, 0
        %v3301 = vsel %vm1430, %v3261, 0
        %v3304 = vsel %vm1430, %v3262, 0
        %v3307 = vsel %vm1430, %v3263, 0
        %3309 = vmatpush.bf16.msra.mxu0 0
        %3310 = vmatpush.bf16.msra.mxu0 0
        %3311 = vmatpush.bf16.msra.mxu0 0
        %3312 = vmatpush.bf16.msra.mxu0 0
        %3313 = vmatpush.bf16.msra.mxu0 %v3292
        %3314 = vmatpush.bf16.msra.mxu0 %v3291
        %3315 = vmatpush.bf16.msra.mxu0 %v3290
        %3316 = vmatpush.bf16.msra.mxu0 %v3289
        %3317 = vmatmul.bf16.gmra.mxu0 %v3298
        %v3318 = vpop.f32.mrf.mxu0
        %v3319 = vadd.f32 0.0, %v3318
        %v3320 = vpop.f32.mrf.mxu0
        %v3321 = vadd.f32 0.0, %v3320
        %3322 = vmatmul.bf16.gmra.mxu0 %v3301
        %v3323 = vpop.f32.mrf.mxu0
        %v3324 = vadd.f32 0.0, %v3323
        %v3325 = vpop.f32.mrf.mxu0
        %v3326 = vadd.f32 0.0, %v3325
        %3327 = vmatmul.bf16.gmra.mxu0 %v3304
        %v3328 = vpop.f32.mrf.mxu0
        %v3329 = vadd.f32 0.0, %v3328
        %v3330 = vpop.f32.mrf.mxu0
        %v3331 = vadd.f32 0.0, %v3330
        %3332 = vmatmul.bf16.gmra.mxu0 %v3307
        %v3333 = vpop.f32.mrf.mxu0
        %v3334 = vadd.f32 0.0, %v3333
        %v3335 = vpop.f32.mrf.mxu0
        %v3336 = vadd.f32 0.0, %v3335
        %3337 = vdwg.mxu0
        %v3338 = vadd.f32 %v3137, %v3319
        %v3339 = vadd.f32 %v3138, %v3321
        %v3340 = vadd.f32 %v3139, %v3324
        %v3341 = vadd.f32 %v3140, %v3326
        %v3342 = vadd.f32 %v3141, %v3329
        %v3343 = vadd.f32 %v3142, %v3331
        %v3344 = vadd.f32 %v3143, %v3334
        %v3345 = vadd.f32 %v3144, %v3336
        %s3346 = scalar_lea.vmem %s3, 704
        %v3347 = vld [vmem:[%s3346] sm:$0xff]
        %v3348 = vld [vmem:[%s3346 + $0x8] sm:$0xff]
        %v3349 = vld [vmem:[%s3346 + $0x10] sm:$0xff]
        %v3350 = vld [vmem:[%s3346 + $0x18] sm:$0xff]
        %v3351 = vld [vmem:[%s3346 + $0x20] sm:$0xff]
        %v3352 = vld [vmem:[%s3346 + $0x28] sm:$0xff]
        %v3353 = vld [vmem:[%s3346 + $0x30] sm:$0xff]
        %v3354 = vld [vmem:[%s3346 + $0x38] sm:$0xff]
        %v3363 = vunpack.c.l.b16 %v3347
        %v3364 = vunpack.c.h.b16 %v3347
        %v3365 = vunpack.c.l.b16 %v3348
        %v3366 = vunpack.c.h.b16 %v3348
        %v3367 = vunpack.c.l.b16 %v3349
        %v3368 = vunpack.c.h.b16 %v3349
        %v3369 = vunpack.c.l.b16 %v3350
        %v3370 = vunpack.c.h.b16 %v3350
        %v3371 = vunpack.c.l.b16 %v3351
        %v3372 = vunpack.c.h.b16 %v3351
        %v3373 = vunpack.c.l.b16 %v3352
        %v3374 = vunpack.c.h.b16 %v3352
        %v3375 = vunpack.c.l.b16 %v3353
        %v3376 = vunpack.c.h.b16 %v3353
        %v3377 = vunpack.c.l.b16 %v3354
        %v3378 = vunpack.c.h.b16 %v3354
        %v3379 = vpack.c.b16 %v3365, %v3363
        %v3380 = vpack.c.b16 %v3366, %v3364
        %v3381 = vpack.c.b16 %v3369, %v3367
        %v3382 = vpack.c.b16 %v3370, %v3368
        %v3383 = vpack.c.b16 %v3373, %v3371
        %v3384 = vpack.c.b16 %v3374, %v3372
        %v3385 = vpack.c.b16 %v3377, %v3375
        %v3386 = vpack.c.b16 %v3378, %v3376
        %v3392 = vsel %vm1195, %v3380, 0
        %v3395 = vsel %vm1195, %v3382, 0
        %v3398 = vsel %vm1195, %v3384, 0
        %v3401 = vsel %vm1195, %v3386, 0
        %3403 = vmatpush.bf16.msra.mxu0 %v1149
        %3404 = vmatpush.bf16.msra.mxu0 %v1148
        %3405 = vmatpush.bf16.msra.mxu0 %v1147
        %3406 = vmatpush.bf16.msra.mxu0 %v1146
        %3407 = vmatpush.bf16.msra.mxu0 %v1145
        %3408 = vmatpush.bf16.msra.mxu0 %v1144
        %3409 = vmatpush.bf16.msra.mxu0 %v1143
        %3410 = vmatpush.bf16.msra.mxu0 %v1142
        %3411 = vmatmul.bf16.gmra.mxu0 %v3379
        %v3412 = vpop.f32.mrf.mxu0
        %v3413 = vadd.f32 0.0, %v3412
        %v3414 = vpop.f32.mrf.mxu0
        %v3415 = vadd.f32 0.0, %v3414
        %3416 = vmatmul.bf16.gmra.mxu0 %v3381
        %v3417 = vpop.f32.mrf.mxu0
        %v3418 = vadd.f32 0.0, %v3417
        %v3419 = vpop.f32.mrf.mxu0
        %v3420 = vadd.f32 0.0, %v3419
        %3421 = vmatmul.bf16.gmra.mxu0 %v3383
        %v3422 = vpop.f32.mrf.mxu0
        %v3423 = vadd.f32 0.0, %v3422
        %v3424 = vpop.f32.mrf.mxu0
        %v3425 = vadd.f32 0.0, %v3424
        %3426 = vmatmul.bf16.gmra.mxu0 %v3385
        %v3427 = vpop.f32.mrf.mxu0
        %v3428 = vadd.f32 0.0, %v3427
        %v3429 = vpop.f32.mrf.mxu0
        %v3430 = vadd.f32 0.0, %v3429
        %3431 = vdwg.mxu0
        %3432 = vmatpush.bf16.msra.mxu0 0
        %3433 = vmatpush.bf16.msra.mxu0 0
        %3434 = vmatpush.bf16.msra.mxu0 0
        %3435 = vmatpush.bf16.msra.mxu0 0
        %3436 = vmatpush.bf16.msra.mxu0 0
        %3437 = vmatpush.bf16.msra.mxu0 0
        %3438 = vmatpush.bf16.msra.mxu0 0
        %3439 = vmatpush.bf16.msra.mxu0 %v1150
        %3440 = vmatmul.bf16.gmra.mxu0 %v3392
        %v3441 = vpop.f32.mrf.mxu0
        %v3442 = vadd.f32 %v3413, %v3441
        %v3443 = vpop.f32.mrf.mxu0
        %v3444 = vadd.f32 %v3415, %v3443
        %3445 = vmatmul.bf16.gmra.mxu0 %v3395
        %v3446 = vpop.f32.mrf.mxu0
        %v3447 = vadd.f32 %v3418, %v3446
        %v3448 = vpop.f32.mrf.mxu0
        %v3449 = vadd.f32 %v3420, %v3448
        %3450 = vmatmul.bf16.gmra.mxu0 %v3398
        %v3451 = vpop.f32.mrf.mxu0
        %v3452 = vadd.f32 %v3423, %v3451
        %v3453 = vpop.f32.mrf.mxu0
        %v3454 = vadd.f32 %v3425, %v3453
        %3455 = vmatmul.bf16.gmra.mxu0 %v3401
        %v3456 = vpop.f32.mrf.mxu0
        %v3457 = vadd.f32 %v3428, %v3456
        %v3458 = vpop.f32.mrf.mxu0
        %v3459 = vadd.f32 %v3430, %v3458
        %3460 = vdwg.mxu0
        %v3461 = vpack.c.bf16 %v3444, %v3442
        %v3462 = vpack.c.bf16 %v3449, %v3447
        %v3463 = vpack.c.bf16 %v3454, %v3452
        %v3464 = vpack.c.bf16 %v3459, %v3457
        %s3465 = scalar_lea.vmem %s4, 352
        %v3466 = vld [vmem:[%s3465] sm:$0xf]
        %v3467 = vld [vmem:[%s3465 + $0x4] sm:$0xf]
        %v3468 = vld [vmem:[%s3465 + $0x8] sm:$0xf]
        %v3469 = vld [vmem:[%s3465 + $0xc] sm:$0xf]
        %v3470 = vld [vmem:[%s3465 + $0x10] sm:$0xf]
        %v3471 = vld [vmem:[%s3465 + $0x14] sm:$0xf]
        %v3472 = vld [vmem:[%s3465 + $0x18] sm:$0xf]
        %v3473 = vld [vmem:[%s3465 + $0x1c] sm:$0xf]
        %v3482 = vunpack.c.l.b16 %v3466
        %v3483 = vunpack.c.l.b16 %v3467
        %v3484 = vunpack.c.l.b16 %v3468
        %v3485 = vunpack.c.l.b16 %v3469
        %v3486 = vunpack.c.l.b16 %v3470
        %v3487 = vunpack.c.l.b16 %v3471
        %v3488 = vunpack.c.l.b16 %v3472
        %v3489 = vunpack.c.l.b16 %v3473
        %v3490 = vpack.c.b16 %v3483, %v3482
        %v3491 = vpack.c.b16 %v3485, %v3484
        %v3492 = vpack.c.b16 %v3487, %v3486
        %v3493 = vpack.c.b16 %v3489, %v3488
        %v3499 = vsel %vm1430, %v3461, 0
        %v3502 = vsel %vm1430, %v3462, 0
        %v3505 = vsel %vm1430, %v3463, 0
        %v3508 = vsel %vm1430, %v3464, 0
        %3510 = vmatpush.bf16.msra.mxu0 0
        %3511 = vmatpush.bf16.msra.mxu0 0
        %3512 = vmatpush.bf16.msra.mxu0 0
        %3513 = vmatpush.bf16.msra.mxu0 0
        %3514 = vmatpush.bf16.msra.mxu0 %v3493
        %3515 = vmatpush.bf16.msra.mxu0 %v3492
        %3516 = vmatpush.bf16.msra.mxu0 %v3491
        %3517 = vmatpush.bf16.msra.mxu0 %v3490
        %3518 = vmatmul.bf16.gmra.mxu0 %v3499
        %v3519 = vpop.f32.mrf.mxu0
        %v3520 = vadd.f32 0.0, %v3519
        %v3521 = vpop.f32.mrf.mxu0
        %v3522 = vadd.f32 0.0, %v3521
        %3523 = vmatmul.bf16.gmra.mxu0 %v3502
        %v3524 = vpop.f32.mrf.mxu0
        %v3525 = vadd.f32 0.0, %v3524
        %v3526 = vpop.f32.mrf.mxu0
        %v3527 = vadd.f32 0.0, %v3526
        %3528 = vmatmul.bf16.gmra.mxu0 %v3505
        %v3529 = vpop.f32.mrf.mxu0
        %v3530 = vadd.f32 0.0, %v3529
        %v3531 = vpop.f32.mrf.mxu0
        %v3532 = vadd.f32 0.0, %v3531
        %3533 = vmatmul.bf16.gmra.mxu0 %v3508
        %v3534 = vpop.f32.mrf.mxu0
        %v3535 = vadd.f32 0.0, %v3534
        %v3536 = vpop.f32.mrf.mxu0
        %v3537 = vadd.f32 0.0, %v3536
        %3538 = vdwg.mxu0
        %v3539 = vadd.f32 %v3338, %v3520
        %v3540 = vadd.f32 %v3339, %v3522
        %v3541 = vadd.f32 %v3340, %v3525
        %v3542 = vadd.f32 %v3341, %v3527
        %v3543 = vadd.f32 %v3342, %v3530
        %v3544 = vadd.f32 %v3343, %v3532
        %v3545 = vadd.f32 %v3344, %v3535
        %v3546 = vadd.f32 %v3345, %v3537
        %s3547 = scalar_lea.vmem %s3, 768
        %v3548 = vld [vmem:[%s3547] sm:$0xff]
        %v3549 = vld [vmem:[%s3547 + $0x8] sm:$0xff]
        %v3550 = vld [vmem:[%s3547 + $0x10] sm:$0xff]
        %v3551 = vld [vmem:[%s3547 + $0x18] sm:$0xff]
        %v3552 = vld [vmem:[%s3547 + $0x20] sm:$0xff]
        %v3553 = vld [vmem:[%s3547 + $0x28] sm:$0xff]
        %v3554 = vld [vmem:[%s3547 + $0x30] sm:$0xff]
        %v3555 = vld [vmem:[%s3547 + $0x38] sm:$0xff]
        %v3564 = vunpack.c.l.b16 %v3548
        %v3565 = vunpack.c.h.b16 %v3548
        %v3566 = vunpack.c.l.b16 %v3549
        %v3567 = vunpack.c.h.b16 %v3549
        %v3568 = vunpack.c.l.b16 %v3550
        %v3569 = vunpack.c.h.b16 %v3550
        %v3570 = vunpack.c.l.b16 %v3551
        %v3571 = vunpack.c.h.b16 %v3551
        %v3572 = vunpack.c.l.b16 %v3552
        %v3573 = vunpack.c.h.b16 %v3552
        %v3574 = vunpack.c.l.b16 %v3553
        %v3575 = vunpack.c.h.b16 %v3553
        %v3576 = vunpack.c.l.b16 %v3554
        %v3577 = vunpack.c.h.b16 %v3554
        %v3578 = vunpack.c.l.b16 %v3555
        %v3579 = vunpack.c.h.b16 %v3555
        %v3580 = vpack.c.b16 %v3566, %v3564
        %v3581 = vpack.c.b16 %v3567, %v3565
        %v3582 = vpack.c.b16 %v3570, %v3568
        %v3583 = vpack.c.b16 %v3571, %v3569
        %v3584 = vpack.c.b16 %v3574, %v3572
        %v3585 = vpack.c.b16 %v3575, %v3573
        %v3586 = vpack.c.b16 %v3578, %v3576
        %v3587 = vpack.c.b16 %v3579, %v3577
        %v3593 = vsel %vm1195, %v3581, 0
        %v3596 = vsel %vm1195, %v3583, 0
        %v3599 = vsel %vm1195, %v3585, 0
        %v3602 = vsel %vm1195, %v3587, 0
        %3604 = vmatpush.bf16.msra.mxu0 %v1149
        %3605 = vmatpush.bf16.msra.mxu0 %v1148
        %3606 = vmatpush.bf16.msra.mxu0 %v1147
        %3607 = vmatpush.bf16.msra.mxu0 %v1146
        %3608 = vmatpush.bf16.msra.mxu0 %v1145
        %3609 = vmatpush.bf16.msra.mxu0 %v1144
        %3610 = vmatpush.bf16.msra.mxu0 %v1143
        %3611 = vmatpush.bf16.msra.mxu0 %v1142
        %3612 = vmatmul.bf16.gmra.mxu0 %v3580
        %v3613 = vpop.f32.mrf.mxu0
        %v3614 = vadd.f32 0.0, %v3613
        %v3615 = vpop.f32.mrf.mxu0
        %v3616 = vadd.f32 0.0, %v3615
        %3617 = vmatmul.bf16.gmra.mxu0 %v3582
        %v3618 = vpop.f32.mrf.mxu0
        %v3619 = vadd.f32 0.0, %v3618
        %v3620 = vpop.f32.mrf.mxu0
        %v3621 = vadd.f32 0.0, %v3620
        %3622 = vmatmul.bf16.gmra.mxu0 %v3584
        %v3623 = vpop.f32.mrf.mxu0
        %v3624 = vadd.f32 0.0, %v3623
        %v3625 = vpop.f32.mrf.mxu0
        %v3626 = vadd.f32 0.0, %v3625
        %3627 = vmatmul.bf16.gmra.mxu0 %v3586
        %v3628 = vpop.f32.mrf.mxu0
        %v3629 = vadd.f32 0.0, %v3628
        %v3630 = vpop.f32.mrf.mxu0
        %v3631 = vadd.f32 0.0, %v3630
        %3632 = vdwg.mxu0
        %3633 = vmatpush.bf16.msra.mxu0 0
        %3634 = vmatpush.bf16.msra.mxu0 0
        %3635 = vmatpush.bf16.msra.mxu0 0
        %3636 = vmatpush.bf16.msra.mxu0 0
        %3637 = vmatpush.bf16.msra.mxu0 0
        %3638 = vmatpush.bf16.msra.mxu0 0
        %3639 = vmatpush.bf16.msra.mxu0 0
        %3640 = vmatpush.bf16.msra.mxu0 %v1150
        %3641 = vmatmul.bf16.gmra.mxu0 %v3593
        %v3642 = vpop.f32.mrf.mxu0
        %v3643 = vadd.f32 %v3614, %v3642
        %v3644 = vpop.f32.mrf.mxu0
        %v3645 = vadd.f32 %v3616, %v3644
        %3646 = vmatmul.bf16.gmra.mxu0 %v3596
        %v3647 = vpop.f32.mrf.mxu0
        %v3648 = vadd.f32 %v3619, %v3647
        %v3649 = vpop.f32.mrf.mxu0
        %v3650 = vadd.f32 %v3621, %v3649
        %3651 = vmatmul.bf16.gmra.mxu0 %v3599
        %v3652 = vpop.f32.mrf.mxu0
        %v3653 = vadd.f32 %v3624, %v3652
        %v3654 = vpop.f32.mrf.mxu0
        %v3655 = vadd.f32 %v3626, %v3654
        %3656 = vmatmul.bf16.gmra.mxu0 %v3602
        %v3657 = vpop.f32.mrf.mxu0
        %v3658 = vadd.f32 %v3629, %v3657
        %v3659 = vpop.f32.mrf.mxu0
        %v3660 = vadd.f32 %v3631, %v3659
        %3661 = vdwg.mxu0
        %v3662 = vpack.c.bf16 %v3645, %v3643
        %v3663 = vpack.c.bf16 %v3650, %v3648
        %v3664 = vpack.c.bf16 %v3655, %v3653
        %v3665 = vpack.c.bf16 %v3660, %v3658
        %s3666 = scalar_lea.vmem %s4, 384
        %v3667 = vld [vmem:[%s3666] sm:$0xf]
        %v3668 = vld [vmem:[%s3666 + $0x4] sm:$0xf]
        %v3669 = vld [vmem:[%s3666 + $0x8] sm:$0xf]
        %v3670 = vld [vmem:[%s3666 + $0xc] sm:$0xf]
        %v3671 = vld [vmem:[%s3666 + $0x10] sm:$0xf]
        %v3672 = vld [vmem:[%s3666 + $0x14] sm:$0xf]
        %v3673 = vld [vmem:[%s3666 + $0x18] sm:$0xf]
        %v3674 = vld [vmem:[%s3666 + $0x1c] sm:$0xf]
        %v3683 = vunpack.c.l.b16 %v3667
        %v3684 = vunpack.c.l.b16 %v3668
        %v3685 = vunpack.c.l.b16 %v3669
        %v3686 = vunpack.c.l.b16 %v3670
        %v3687 = vunpack.c.l.b16 %v3671
        %v3688 = vunpack.c.l.b16 %v3672
        %v3689 = vunpack.c.l.b16 %v3673
        %v3690 = vunpack.c.l.b16 %v3674
        %v3691 = vpack.c.b16 %v3684, %v3683
        %v3692 = vpack.c.b16 %v3686, %v3685
        %v3693 = vpack.c.b16 %v3688, %v3687
        %v3694 = vpack.c.b16 %v3690, %v3689
        %v3700 = vsel %vm1430, %v3662, 0
        %v3703 = vsel %vm1430, %v3663, 0
        %v3706 = vsel %vm1430, %v3664, 0
        %v3709 = vsel %vm1430, %v3665, 0
        %3711 = vmatpush.bf16.msra.mxu0 0
        %3712 = vmatpush.bf16.msra.mxu0 0
        %3713 = vmatpush.bf16.msra.mxu0 0
        %3714 = vmatpush.bf16.msra.mxu0 0
        %3715 = vmatpush.bf16.msra.mxu0 %v3694
        %3716 = vmatpush.bf16.msra.mxu0 %v3693
        %3717 = vmatpush.bf16.msra.mxu0 %v3692
        %3718 = vmatpush.bf16.msra.mxu0 %v3691
        %3719 = vmatmul.bf16.gmra.mxu0 %v3700
        %v3720 = vpop.f32.mrf.mxu0
        %v3721 = vadd.f32 0.0, %v3720
        %v3722 = vpop.f32.mrf.mxu0
        %v3723 = vadd.f32 0.0, %v3722
        %3724 = vmatmul.bf16.gmra.mxu0 %v3703
        %v3725 = vpop.f32.mrf.mxu0
        %v3726 = vadd.f32 0.0, %v3725
        %v3727 = vpop.f32.mrf.mxu0
        %v3728 = vadd.f32 0.0, %v3727
        %3729 = vmatmul.bf16.gmra.mxu0 %v3706
        %v3730 = vpop.f32.mrf.mxu0
        %v3731 = vadd.f32 0.0, %v3730
        %v3732 = vpop.f32.mrf.mxu0
        %v3733 = vadd.f32 0.0, %v3732
        %3734 = vmatmul.bf16.gmra.mxu0 %v3709
        %v3735 = vpop.f32.mrf.mxu0
        %v3736 = vadd.f32 0.0, %v3735
        %v3737 = vpop.f32.mrf.mxu0
        %v3738 = vadd.f32 0.0, %v3737
        %3739 = vdwg.mxu0
        %v3740 = vadd.f32 %v3539, %v3721
        %v3741 = vadd.f32 %v3540, %v3723
        %v3742 = vadd.f32 %v3541, %v3726
        %v3743 = vadd.f32 %v3542, %v3728
        %v3744 = vadd.f32 %v3543, %v3731
        %v3745 = vadd.f32 %v3544, %v3733
        %v3746 = vadd.f32 %v3545, %v3736
        %v3747 = vadd.f32 %v3546, %v3738
        %s3748 = scalar_lea.vmem %s3, 832
        %v3749 = vld [vmem:[%s3748] sm:$0xff]
        %v3750 = vld [vmem:[%s3748 + $0x8] sm:$0xff]
        %v3751 = vld [vmem:[%s3748 + $0x10] sm:$0xff]
        %v3752 = vld [vmem:[%s3748 + $0x18] sm:$0xff]
        %v3753 = vld [vmem:[%s3748 + $0x20] sm:$0xff]
        %v3754 = vld [vmem:[%s3748 + $0x28] sm:$0xff]
        %v3755 = vld [vmem:[%s3748 + $0x30] sm:$0xff]
        %v3756 = vld [vmem:[%s3748 + $0x38] sm:$0xff]
        %v3765 = vunpack.c.l.b16 %v3749
        %v3766 = vunpack.c.h.b16 %v3749
        %v3767 = vunpack.c.l.b16 %v3750
        %v3768 = vunpack.c.h.b16 %v3750
        %v3769 = vunpack.c.l.b16 %v3751
        %v3770 = vunpack.c.h.b16 %v3751
        %v3771 = vunpack.c.l.b16 %v3752
        %v3772 = vunpack.c.h.b16 %v3752
        %v3773 = vunpack.c.l.b16 %v3753
        %v3774 = vunpack.c.h.b16 %v3753
        %v3775 = vunpack.c.l.b16 %v3754
        %v3776 = vunpack.c.h.b16 %v3754
        %v3777 = vunpack.c.l.b16 %v3755
        %v3778 = vunpack.c.h.b16 %v3755
        %v3779 = vunpack.c.l.b16 %v3756
        %v3780 = vunpack.c.h.b16 %v3756
        %v3781 = vpack.c.b16 %v3767, %v3765
        %v3782 = vpack.c.b16 %v3768, %v3766
        %v3783 = vpack.c.b16 %v3771, %v3769
        %v3784 = vpack.c.b16 %v3772, %v3770
        %v3785 = vpack.c.b16 %v3775, %v3773
        %v3786 = vpack.c.b16 %v3776, %v3774
        %v3787 = vpack.c.b16 %v3779, %v3777
        %v3788 = vpack.c.b16 %v3780, %v3778
        %v3794 = vsel %vm1195, %v3782, 0
        %v3797 = vsel %vm1195, %v3784, 0
        %v3800 = vsel %vm1195, %v3786, 0
        %v3803 = vsel %vm1195, %v3788, 0
        %3805 = vmatpush.bf16.msra.mxu0 %v1149
        %3806 = vmatpush.bf16.msra.mxu0 %v1148
        %3807 = vmatpush.bf16.msra.mxu0 %v1147
        %3808 = vmatpush.bf16.msra.mxu0 %v1146
        %3809 = vmatpush.bf16.msra.mxu0 %v1145
        %3810 = vmatpush.bf16.msra.mxu0 %v1144
        %3811 = vmatpush.bf16.msra.mxu0 %v1143
        %3812 = vmatpush.bf16.msra.mxu0 %v1142
        %3813 = vmatmul.bf16.gmra.mxu0 %v3781
        %v3814 = vpop.f32.mrf.mxu0
        %v3815 = vadd.f32 0.0, %v3814
        %v3816 = vpop.f32.mrf.mxu0
        %v3817 = vadd.f32 0.0, %v3816
        %3818 = vmatmul.bf16.gmra.mxu0 %v3783
        %v3819 = vpop.f32.mrf.mxu0
        %v3820 = vadd.f32 0.0, %v3819
        %v3821 = vpop.f32.mrf.mxu0
        %v3822 = vadd.f32 0.0, %v3821
        %3823 = vmatmul.bf16.gmra.mxu0 %v3785
        %v3824 = vpop.f32.mrf.mxu0
        %v3825 = vadd.f32 0.0, %v3824
        %v3826 = vpop.f32.mrf.mxu0
        %v3827 = vadd.f32 0.0, %v3826
        %3828 = vmatmul.bf16.gmra.mxu0 %v3787
        %v3829 = vpop.f32.mrf.mxu0
        %v3830 = vadd.f32 0.0, %v3829
        %v3831 = vpop.f32.mrf.mxu0
        %v3832 = vadd.f32 0.0, %v3831
        %3833 = vdwg.mxu0
        %3834 = vmatpush.bf16.msra.mxu0 0
        %3835 = vmatpush.bf16.msra.mxu0 0
        %3836 = vmatpush.bf16.msra.mxu0 0
        %3837 = vmatpush.bf16.msra.mxu0 0
        %3838 = vmatpush.bf16.msra.mxu0 0
        %3839 = vmatpush.bf16.msra.mxu0 0
        %3840 = vmatpush.bf16.msra.mxu0 0
        %3841 = vmatpush.bf16.msra.mxu0 %v1150
        %3842 = vmatmul.bf16.gmra.mxu0 %v3794
        %v3843 = vpop.f32.mrf.mxu0
        %v3844 = vadd.f32 %v3815, %v3843
        %v3845 = vpop.f32.mrf.mxu0
        %v3846 = vadd.f32 %v3817, %v3845
        %3847 = vmatmul.bf16.gmra.mxu0 %v3797
        %v3848 = vpop.f32.mrf.mxu0
        %v3849 = vadd.f32 %v3820, %v3848
        %v3850 = vpop.f32.mrf.mxu0
        %v3851 = vadd.f32 %v3822, %v3850
        %3852 = vmatmul.bf16.gmra.mxu0 %v3800
        %v3853 = vpop.f32.mrf.mxu0
        %v3854 = vadd.f32 %v3825, %v3853
        %v3855 = vpop.f32.mrf.mxu0
        %v3856 = vadd.f32 %v3827, %v3855
        %3857 = vmatmul.bf16.gmra.mxu0 %v3803
        %v3858 = vpop.f32.mrf.mxu0
        %v3859 = vadd.f32 %v3830, %v3858
        %v3860 = vpop.f32.mrf.mxu0
        %v3861 = vadd.f32 %v3832, %v3860
        %3862 = vdwg.mxu0
        %v3863 = vpack.c.bf16 %v3846, %v3844
        %v3864 = vpack.c.bf16 %v3851, %v3849
        %v3865 = vpack.c.bf16 %v3856, %v3854
        %v3866 = vpack.c.bf16 %v3861, %v3859
        %s3867 = scalar_lea.vmem %s4, 416
        %v3868 = vld [vmem:[%s3867] sm:$0xf]
        %v3869 = vld [vmem:[%s3867 + $0x4] sm:$0xf]
        %v3870 = vld [vmem:[%s3867 + $0x8] sm:$0xf]
        %v3871 = vld [vmem:[%s3867 + $0xc] sm:$0xf]
        %v3872 = vld [vmem:[%s3867 + $0x10] sm:$0xf]
        %v3873 = vld [vmem:[%s3867 + $0x14] sm:$0xf]
        %v3874 = vld [vmem:[%s3867 + $0x18] sm:$0xf]
        %v3875 = vld [vmem:[%s3867 + $0x1c] sm:$0xf]
        %v3884 = vunpack.c.l.b16 %v3868
        %v3885 = vunpack.c.l.b16 %v3869
        %v3886 = vunpack.c.l.b16 %v3870
        %v3887 = vunpack.c.l.b16 %v3871
        %v3888 = vunpack.c.l.b16 %v3872
        %v3889 = vunpack.c.l.b16 %v3873
        %v3890 = vunpack.c.l.b16 %v3874
        %v3891 = vunpack.c.l.b16 %v3875
        %v3892 = vpack.c.b16 %v3885, %v3884
        %v3893 = vpack.c.b16 %v3887, %v3886
        %v3894 = vpack.c.b16 %v3889, %v3888
        %v3895 = vpack.c.b16 %v3891, %v3890
        %v3901 = vsel %vm1430, %v3863, 0
        %v3904 = vsel %vm1430, %v3864, 0
        %v3907 = vsel %vm1430, %v3865, 0
        %v3910 = vsel %vm1430, %v3866, 0
        %3912 = vmatpush.bf16.msra.mxu0 0
        %3913 = vmatpush.bf16.msra.mxu0 0
        %3914 = vmatpush.bf16.msra.mxu0 0
        %3915 = vmatpush.bf16.msra.mxu0 0
        %3916 = vmatpush.bf16.msra.mxu0 %v3895
        %3917 = vmatpush.bf16.msra.mxu0 %v3894
        %3918 = vmatpush.bf16.msra.mxu0 %v3893
        %3919 = vmatpush.bf16.msra.mxu0 %v3892
        %3920 = vmatmul.bf16.gmra.mxu0 %v3901
        %v3921 = vpop.f32.mrf.mxu0
        %v3922 = vadd.f32 0.0, %v3921
        %v3923 = vpop.f32.mrf.mxu0
        %v3924 = vadd.f32 0.0, %v3923
        %3925 = vmatmul.bf16.gmra.mxu0 %v3904
        %v3926 = vpop.f32.mrf.mxu0
        %v3927 = vadd.f32 0.0, %v3926
        %v3928 = vpop.f32.mrf.mxu0
        %v3929 = vadd.f32 0.0, %v3928
        %3930 = vmatmul.bf16.gmra.mxu0 %v3907
        %v3931 = vpop.f32.mrf.mxu0
        %v3932 = vadd.f32 0.0, %v3931
        %v3933 = vpop.f32.mrf.mxu0
        %v3934 = vadd.f32 0.0, %v3933
        %3935 = vmatmul.bf16.gmra.mxu0 %v3910
        %v3936 = vpop.f32.mrf.mxu0
        %v3937 = vadd.f32 0.0, %v3936
        %v3938 = vpop.f32.mrf.mxu0
        %v3939 = vadd.f32 0.0, %v3938
        %3940 = vdwg.mxu0
        %v3941 = vadd.f32 %v3740, %v3922
        %v3942 = vadd.f32 %v3741, %v3924
        %v3943 = vadd.f32 %v3742, %v3927
        %v3944 = vadd.f32 %v3743, %v3929
        %v3945 = vadd.f32 %v3744, %v3932
        %v3946 = vadd.f32 %v3745, %v3934
        %v3947 = vadd.f32 %v3746, %v3937
        %v3948 = vadd.f32 %v3747, %v3939
        %s3949 = scalar_lea.vmem %s3, 896
        %v3950 = vld [vmem:[%s3949] sm:$0xff]
        %v3951 = vld [vmem:[%s3949 + $0x8] sm:$0xff]
        %v3952 = vld [vmem:[%s3949 + $0x10] sm:$0xff]
        %v3953 = vld [vmem:[%s3949 + $0x18] sm:$0xff]
        %v3954 = vld [vmem:[%s3949 + $0x20] sm:$0xff]
        %v3955 = vld [vmem:[%s3949 + $0x28] sm:$0xff]
        %v3956 = vld [vmem:[%s3949 + $0x30] sm:$0xff]
        %v3957 = vld [vmem:[%s3949 + $0x38] sm:$0xff]
        %v3966 = vunpack.c.l.b16 %v3950
        %v3967 = vunpack.c.h.b16 %v3950
        %v3968 = vunpack.c.l.b16 %v3951
        %v3969 = vunpack.c.h.b16 %v3951
        %v3970 = vunpack.c.l.b16 %v3952
        %v3971 = vunpack.c.h.b16 %v3952
        %v3972 = vunpack.c.l.b16 %v3953
        %v3973 = vunpack.c.h.b16 %v3953
        %v3974 = vunpack.c.l.b16 %v3954
        %v3975 = vunpack.c.h.b16 %v3954
        %v3976 = vunpack.c.l.b16 %v3955
        %v3977 = vunpack.c.h.b16 %v3955
        %v3978 = vunpack.c.l.b16 %v3956
        %v3979 = vunpack.c.h.b16 %v3956
        %v3980 = vunpack.c.l.b16 %v3957
        %v3981 = vunpack.c.h.b16 %v3957
        %v3982 = vpack.c.b16 %v3968, %v3966
        %v3983 = vpack.c.b16 %v3969, %v3967
        %v3984 = vpack.c.b16 %v3972, %v3970
        %v3985 = vpack.c.b16 %v3973, %v3971
        %v3986 = vpack.c.b16 %v3976, %v3974
        %v3987 = vpack.c.b16 %v3977, %v3975
        %v3988 = vpack.c.b16 %v3980, %v3978
        %v3989 = vpack.c.b16 %v3981, %v3979
        %v3995 = vsel %vm1195, %v3983, 0
        %v3998 = vsel %vm1195, %v3985, 0
        %v4001 = vsel %vm1195, %v3987, 0
        %v4004 = vsel %vm1195, %v3989, 0
        %4006 = vmatpush.bf16.msra.mxu0 %v1149
        %4007 = vmatpush.bf16.msra.mxu0 %v1148
        %4008 = vmatpush.bf16.msra.mxu0 %v1147
        %4009 = vmatpush.bf16.msra.mxu0 %v1146
        %4010 = vmatpush.bf16.msra.mxu0 %v1145
        %4011 = vmatpush.bf16.msra.mxu0 %v1144
        %4012 = vmatpush.bf16.msra.mxu0 %v1143
        %4013 = vmatpush.bf16.msra.mxu0 %v1142
        %4014 = vmatmul.bf16.gmra.mxu0 %v3982
        %v4015 = vpop.f32.mrf.mxu0
        %v4016 = vadd.f32 0.0, %v4015
        %v4017 = vpop.f32.mrf.mxu0
        %v4018 = vadd.f32 0.0, %v4017
        %4019 = vmatmul.bf16.gmra.mxu0 %v3984
        %v4020 = vpop.f32.mrf.mxu0
        %v4021 = vadd.f32 0.0, %v4020
        %v4022 = vpop.f32.mrf.mxu0
        %v4023 = vadd.f32 0.0, %v4022
        %4024 = vmatmul.bf16.gmra.mxu0 %v3986
        %v4025 = vpop.f32.mrf.mxu0
        %v4026 = vadd.f32 0.0, %v4025
        %v4027 = vpop.f32.mrf.mxu0
        %v4028 = vadd.f32 0.0, %v4027
        %4029 = vmatmul.bf16.gmra.mxu0 %v3988
        %v4030 = vpop.f32.mrf.mxu0
        %v4031 = vadd.f32 0.0, %v4030
        %v4032 = vpop.f32.mrf.mxu0
        %v4033 = vadd.f32 0.0, %v4032
        %4034 = vdwg.mxu0
        %4035 = vmatpush.bf16.msra.mxu0 0
        %4036 = vmatpush.bf16.msra.mxu0 0
        %4037 = vmatpush.bf16.msra.mxu0 0
        %4038 = vmatpush.bf16.msra.mxu0 0
        %4039 = vmatpush.bf16.msra.mxu0 0
        %4040 = vmatpush.bf16.msra.mxu0 0
        %4041 = vmatpush.bf16.msra.mxu0 0
        %4042 = vmatpush.bf16.msra.mxu0 %v1150
        %4043 = vmatmul.bf16.gmra.mxu0 %v3995
        %v4044 = vpop.f32.mrf.mxu0
        %v4045 = vadd.f32 %v4016, %v4044
        %v4046 = vpop.f32.mrf.mxu0
        %v4047 = vadd.f32 %v4018, %v4046
        %4048 = vmatmul.bf16.gmra.mxu0 %v3998
        %v4049 = vpop.f32.mrf.mxu0
        %v4050 = vadd.f32 %v4021, %v4049
        %v4051 = vpop.f32.mrf.mxu0
        %v4052 = vadd.f32 %v4023, %v4051
        %4053 = vmatmul.bf16.gmra.mxu0 %v4001
        %v4054 = vpop.f32.mrf.mxu0
        %v4055 = vadd.f32 %v4026, %v4054
        %v4056 = vpop.f32.mrf.mxu0
        %v4057 = vadd.f32 %v4028, %v4056
        %4058 = vmatmul.bf16.gmra.mxu0 %v4004
        %v4059 = vpop.f32.mrf.mxu0
        %v4060 = vadd.f32 %v4031, %v4059
        %v4061 = vpop.f32.mrf.mxu0
        %v4062 = vadd.f32 %v4033, %v4061
        %4063 = vdwg.mxu0
        %v4064 = vpack.c.bf16 %v4047, %v4045
        %v4065 = vpack.c.bf16 %v4052, %v4050
        %v4066 = vpack.c.bf16 %v4057, %v4055
        %v4067 = vpack.c.bf16 %v4062, %v4060
        %s4068 = scalar_lea.vmem %s4, 448
        %v4069 = vld [vmem:[%s4068] sm:$0xf]
        %v4070 = vld [vmem:[%s4068 + $0x4] sm:$0xf]
        %v4071 = vld [vmem:[%s4068 + $0x8] sm:$0xf]
        %v4072 = vld [vmem:[%s4068 + $0xc] sm:$0xf]
        %v4073 = vld [vmem:[%s4068 + $0x10] sm:$0xf]
        %v4074 = vld [vmem:[%s4068 + $0x14] sm:$0xf]
        %v4075 = vld [vmem:[%s4068 + $0x18] sm:$0xf]
        %v4076 = vld [vmem:[%s4068 + $0x1c] sm:$0xf]
        %v4085 = vunpack.c.l.b16 %v4069
        %v4086 = vunpack.c.l.b16 %v4070
        %v4087 = vunpack.c.l.b16 %v4071
        %v4088 = vunpack.c.l.b16 %v4072
        %v4089 = vunpack.c.l.b16 %v4073
        %v4090 = vunpack.c.l.b16 %v4074
        %v4091 = vunpack.c.l.b16 %v4075
        %v4092 = vunpack.c.l.b16 %v4076
        %v4093 = vpack.c.b16 %v4086, %v4085
        %v4094 = vpack.c.b16 %v4088, %v4087
        %v4095 = vpack.c.b16 %v4090, %v4089
        %v4096 = vpack.c.b16 %v4092, %v4091
        %v4102 = vsel %vm1430, %v4064, 0
        %v4105 = vsel %vm1430, %v4065, 0
        %v4108 = vsel %vm1430, %v4066, 0
        %v4111 = vsel %vm1430, %v4067, 0
        %4113 = vmatpush.bf16.msra.mxu0 0
        %4114 = vmatpush.bf16.msra.mxu0 0
        %4115 = vmatpush.bf16.msra.mxu0 0
        %4116 = vmatpush.bf16.msra.mxu0 0
        %4117 = vmatpush.bf16.msra.mxu0 %v4096
        %4118 = vmatpush.bf16.msra.mxu0 %v4095
        %4119 = vmatpush.bf16.msra.mxu0 %v4094
        %4120 = vmatpush.bf16.msra.mxu0 %v4093
        %4121 = vmatmul.bf16.gmra.mxu0 %v4102
        %v4122 = vpop.f32.mrf.mxu0
        %v4123 = vadd.f32 0.0, %v4122
        %v4124 = vpop.f32.mrf.mxu0
        %v4125 = vadd.f32 0.0, %v4124
        %4126 = vmatmul.bf16.gmra.mxu0 %v4105
        %v4127 = vpop.f32.mrf.mxu0
        %v4128 = vadd.f32 0.0, %v4127
        %v4129 = vpop.f32.mrf.mxu0
        %v4130 = vadd.f32 0.0, %v4129
        %4131 = vmatmul.bf16.gmra.mxu0 %v4108
        %v4132 = vpop.f32.mrf.mxu0
        %v4133 = vadd.f32 0.0, %v4132
        %v4134 = vpop.f32.mrf.mxu0
        %v4135 = vadd.f32 0.0, %v4134
        %4136 = vmatmul.bf16.gmra.mxu0 %v4111
        %v4137 = vpop.f32.mrf.mxu0
        %v4138 = vadd.f32 0.0, %v4137
        %v4139 = vpop.f32.mrf.mxu0
        %v4140 = vadd.f32 0.0, %v4139
        %4141 = vdwg.mxu0
        %v4142 = vadd.f32 %v3941, %v4123
        %v4143 = vadd.f32 %v3942, %v4125
        %v4144 = vadd.f32 %v3943, %v4128
        %v4145 = vadd.f32 %v3944, %v4130
        %v4146 = vadd.f32 %v3945, %v4133
        %v4147 = vadd.f32 %v3946, %v4135
        %v4148 = vadd.f32 %v3947, %v4138
        %v4149 = vadd.f32 %v3948, %v4140
        %s4150 = scalar_lea.vmem %s3, 960
        %v4151 = vld [vmem:[%s4150] sm:$0xff]
        %v4152 = vld [vmem:[%s4150 + $0x8] sm:$0xff]
        %v4153 = vld [vmem:[%s4150 + $0x10] sm:$0xff]
        %v4154 = vld [vmem:[%s4150 + $0x18] sm:$0xff]
        %v4155 = vld [vmem:[%s4150 + $0x20] sm:$0xff]
        %v4156 = vld [vmem:[%s4150 + $0x28] sm:$0xff]
        %v4157 = vld [vmem:[%s4150 + $0x30] sm:$0xff]
        %v4158 = vld [vmem:[%s4150 + $0x38] sm:$0xff]
        %v4167 = vunpack.c.l.b16 %v4151
        %v4168 = vunpack.c.h.b16 %v4151
        %v4169 = vunpack.c.l.b16 %v4152
        %v4170 = vunpack.c.h.b16 %v4152
        %v4171 = vunpack.c.l.b16 %v4153
        %v4172 = vunpack.c.h.b16 %v4153
        %v4173 = vunpack.c.l.b16 %v4154
        %v4174 = vunpack.c.h.b16 %v4154
        %v4175 = vunpack.c.l.b16 %v4155
        %v4176 = vunpack.c.h.b16 %v4155
        %v4177 = vunpack.c.l.b16 %v4156
        %v4178 = vunpack.c.h.b16 %v4156
        %v4179 = vunpack.c.l.b16 %v4157
        %v4180 = vunpack.c.h.b16 %v4157
        %v4181 = vunpack.c.l.b16 %v4158
        %v4182 = vunpack.c.h.b16 %v4158
        %v4183 = vpack.c.b16 %v4169, %v4167
        %v4184 = vpack.c.b16 %v4170, %v4168
        %v4185 = vpack.c.b16 %v4173, %v4171
        %v4186 = vpack.c.b16 %v4174, %v4172
        %v4187 = vpack.c.b16 %v4177, %v4175
        %v4188 = vpack.c.b16 %v4178, %v4176
        %v4189 = vpack.c.b16 %v4181, %v4179
        %v4190 = vpack.c.b16 %v4182, %v4180
        %v4196 = vsel %vm1195, %v4184, 0
        %v4199 = vsel %vm1195, %v4186, 0
        %v4202 = vsel %vm1195, %v4188, 0
        %v4205 = vsel %vm1195, %v4190, 0
        %4207 = vmatpush.bf16.msra.mxu0 %v1149
        %4208 = vmatpush.bf16.msra.mxu0 %v1148
        %4209 = vmatpush.bf16.msra.mxu0 %v1147
        %4210 = vmatpush.bf16.msra.mxu0 %v1146
        %4211 = vmatpush.bf16.msra.mxu0 %v1145
        %4212 = vmatpush.bf16.msra.mxu0 %v1144
        %4213 = vmatpush.bf16.msra.mxu0 %v1143
        %4214 = vmatpush.bf16.msra.mxu0 %v1142
        %4215 = vmatmul.bf16.gmra.mxu0 %v4183
        %v4216 = vpop.f32.mrf.mxu0
        %v4217 = vadd.f32 0.0, %v4216
        %v4218 = vpop.f32.mrf.mxu0
        %v4219 = vadd.f32 0.0, %v4218
        %4220 = vmatmul.bf16.gmra.mxu0 %v4185
        %v4221 = vpop.f32.mrf.mxu0
        %v4222 = vadd.f32 0.0, %v4221
        %v4223 = vpop.f32.mrf.mxu0
        %v4224 = vadd.f32 0.0, %v4223
        %4225 = vmatmul.bf16.gmra.mxu0 %v4187
        %v4226 = vpop.f32.mrf.mxu0
        %v4227 = vadd.f32 0.0, %v4226
        %v4228 = vpop.f32.mrf.mxu0
        %v4229 = vadd.f32 0.0, %v4228
        %4230 = vmatmul.bf16.gmra.mxu0 %v4189
        %v4231 = vpop.f32.mrf.mxu0
        %v4232 = vadd.f32 0.0, %v4231
        %v4233 = vpop.f32.mrf.mxu0
        %v4234 = vadd.f32 0.0, %v4233
        %4235 = vdwg.mxu0
        %4236 = vmatpush.bf16.msra.mxu0 0
        %4237 = vmatpush.bf16.msra.mxu0 0
        %4238 = vmatpush.bf16.msra.mxu0 0
        %4239 = vmatpush.bf16.msra.mxu0 0
        %4240 = vmatpush.bf16.msra.mxu0 0
        %4241 = vmatpush.bf16.msra.mxu0 0
        %4242 = vmatpush.bf16.msra.mxu0 0
        %4243 = vmatpush.bf16.msra.mxu0 %v1150
        %4244 = vmatmul.bf16.gmra.mxu0 %v4196
        %v4245 = vpop.f32.mrf.mxu0
        %v4246 = vadd.f32 %v4217, %v4245
        %v4247 = vpop.f32.mrf.mxu0
        %v4248 = vadd.f32 %v4219, %v4247
        %4249 = vmatmul.bf16.gmra.mxu0 %v4199
        %v4250 = vpop.f32.mrf.mxu0
        %v4251 = vadd.f32 %v4222, %v4250
        %v4252 = vpop.f32.mrf.mxu0
        %v4253 = vadd.f32 %v4224, %v4252
        %4254 = vmatmul.bf16.gmra.mxu0 %v4202
        %v4255 = vpop.f32.mrf.mxu0
        %v4256 = vadd.f32 %v4227, %v4255
        %v4257 = vpop.f32.mrf.mxu0
        %v4258 = vadd.f32 %v4229, %v4257
        %4259 = vmatmul.bf16.gmra.mxu0 %v4205
        %v4260 = vpop.f32.mrf.mxu0
        %v4261 = vadd.f32 %v4232, %v4260
        %v4262 = vpop.f32.mrf.mxu0
        %v4263 = vadd.f32 %v4234, %v4262
        %4264 = vdwg.mxu0
        %v4265 = vpack.c.bf16 %v4248, %v4246
        %v4266 = vpack.c.bf16 %v4253, %v4251
        %v4267 = vpack.c.bf16 %v4258, %v4256
        %v4268 = vpack.c.bf16 %v4263, %v4261
        %s4269 = scalar_lea.vmem %s4, 480
        %v4270 = vld [vmem:[%s4269] sm:$0xf]
        %v4271 = vld [vmem:[%s4269 + $0x4] sm:$0xf]
        %v4272 = vld [vmem:[%s4269 + $0x8] sm:$0xf]
        %v4273 = vld [vmem:[%s4269 + $0xc] sm:$0xf]
        %v4274 = vld [vmem:[%s4269 + $0x10] sm:$0xf]
        %v4275 = vld [vmem:[%s4269 + $0x14] sm:$0xf]
        %v4276 = vld [vmem:[%s4269 + $0x18] sm:$0xf]
        %v4277 = vld [vmem:[%s4269 + $0x1c] sm:$0xf]
        %v4286 = vunpack.c.l.b16 %v4270
        %v4287 = vunpack.c.l.b16 %v4271
        %v4288 = vunpack.c.l.b16 %v4272
        %v4289 = vunpack.c.l.b16 %v4273
        %v4290 = vunpack.c.l.b16 %v4274
        %v4291 = vunpack.c.l.b16 %v4275
        %v4292 = vunpack.c.l.b16 %v4276
        %v4293 = vunpack.c.l.b16 %v4277
        %v4294 = vpack.c.b16 %v4287, %v4286
        %v4295 = vpack.c.b16 %v4289, %v4288
        %v4296 = vpack.c.b16 %v4291, %v4290
        %v4297 = vpack.c.b16 %v4293, %v4292
        %v4303 = vsel %vm1430, %v4265, 0
        %v4306 = vsel %vm1430, %v4266, 0
        %v4309 = vsel %vm1430, %v4267, 0
        %v4312 = vsel %vm1430, %v4268, 0
        %4314 = vmatpush.bf16.msra.mxu0 0
        %4315 = vmatpush.bf16.msra.mxu0 0
        %4316 = vmatpush.bf16.msra.mxu0 0
        %4317 = vmatpush.bf16.msra.mxu0 0
        %4318 = vmatpush.bf16.msra.mxu0 %v4297
        %4319 = vmatpush.bf16.msra.mxu0 %v4296
        %4320 = vmatpush.bf16.msra.mxu0 %v4295
        %4321 = vmatpush.bf16.msra.mxu0 %v4294
        %4322 = vmatmul.bf16.gmra.mxu0 %v4303
        %v4323 = vpop.f32.mrf.mxu0
        %v4324 = vadd.f32 0.0, %v4323
        %v4325 = vpop.f32.mrf.mxu0
        %v4326 = vadd.f32 0.0, %v4325
        %4327 = vmatmul.bf16.gmra.mxu0 %v4306
        %v4328 = vpop.f32.mrf.mxu0
        %v4329 = vadd.f32 0.0, %v4328
        %v4330 = vpop.f32.mrf.mxu0
        %v4331 = vadd.f32 0.0, %v4330
        %4332 = vmatmul.bf16.gmra.mxu0 %v4309
        %v4333 = vpop.f32.mrf.mxu0
        %v4334 = vadd.f32 0.0, %v4333
        %v4335 = vpop.f32.mrf.mxu0
        %v4336 = vadd.f32 0.0, %v4335
        %4337 = vmatmul.bf16.gmra.mxu0 %v4312
        %v4338 = vpop.f32.mrf.mxu0
        %v4339 = vadd.f32 0.0, %v4338
        %v4340 = vpop.f32.mrf.mxu0
        %v4341 = vadd.f32 0.0, %v4340
        %4342 = vdwg.mxu0
        %v4343 = vadd.f32 %v4142, %v4324
        %v4344 = vadd.f32 %v4143, %v4326
        %v4345 = vadd.f32 %v4144, %v4329
        %v4346 = vadd.f32 %v4145, %v4331
        %v4347 = vadd.f32 %v4146, %v4334
        %v4348 = vadd.f32 %v4147, %v4336
        %v4349 = vadd.f32 %v4148, %v4339
        %v4350 = vadd.f32 %v4149, %v4341
        %s4351 = scalar_lea.vmem %s3, 1024
        %v4352 = vld [vmem:[%s4351] sm:$0xff]
        %v4353 = vld [vmem:[%s4351 + $0x8] sm:$0xff]
        %v4354 = vld [vmem:[%s4351 + $0x10] sm:$0xff]
        %v4355 = vld [vmem:[%s4351 + $0x18] sm:$0xff]
        %v4356 = vld [vmem:[%s4351 + $0x20] sm:$0xff]
        %v4357 = vld [vmem:[%s4351 + $0x28] sm:$0xff]
        %v4358 = vld [vmem:[%s4351 + $0x30] sm:$0xff]
        %v4359 = vld [vmem:[%s4351 + $0x38] sm:$0xff]
        %v4368 = vunpack.c.l.b16 %v4352
        %v4369 = vunpack.c.h.b16 %v4352
        %v4370 = vunpack.c.l.b16 %v4353
        %v4371 = vunpack.c.h.b16 %v4353
        %v4372 = vunpack.c.l.b16 %v4354
        %v4373 = vunpack.c.h.b16 %v4354
        %v4374 = vunpack.c.l.b16 %v4355
        %v4375 = vunpack.c.h.b16 %v4355
        %v4376 = vunpack.c.l.b16 %v4356
        %v4377 = vunpack.c.h.b16 %v4356
        %v4378 = vunpack.c.l.b16 %v4357
        %v4379 = vunpack.c.h.b16 %v4357
        %v4380 = vunpack.c.l.b16 %v4358
        %v4381 = vunpack.c.h.b16 %v4358
        %v4382 = vunpack.c.l.b16 %v4359
        %v4383 = vunpack.c.h.b16 %v4359
        %v4384 = vpack.c.b16 %v4370, %v4368
        %v4385 = vpack.c.b16 %v4371, %v4369
        %v4386 = vpack.c.b16 %v4374, %v4372
        %v4387 = vpack.c.b16 %v4375, %v4373
        %v4388 = vpack.c.b16 %v4378, %v4376
        %v4389 = vpack.c.b16 %v4379, %v4377
        %v4390 = vpack.c.b16 %v4382, %v4380
        %v4391 = vpack.c.b16 %v4383, %v4381
        %v4397 = vsel %vm1195, %v4385, 0
        %v4400 = vsel %vm1195, %v4387, 0
        %v4403 = vsel %vm1195, %v4389, 0
        %v4406 = vsel %vm1195, %v4391, 0
        %4408 = vmatpush.bf16.msra.mxu0 %v1149
        %4409 = vmatpush.bf16.msra.mxu0 %v1148
        %4410 = vmatpush.bf16.msra.mxu0 %v1147
        %4411 = vmatpush.bf16.msra.mxu0 %v1146
        %4412 = vmatpush.bf16.msra.mxu0 %v1145
        %4413 = vmatpush.bf16.msra.mxu0 %v1144
        %4414 = vmatpush.bf16.msra.mxu0 %v1143
        %4415 = vmatpush.bf16.msra.mxu0 %v1142
        %4416 = vmatmul.bf16.gmra.mxu0 %v4384
        %v4417 = vpop.f32.mrf.mxu0
        %v4418 = vadd.f32 0.0, %v4417
        %v4419 = vpop.f32.mrf.mxu0
        %v4420 = vadd.f32 0.0, %v4419
        %4421 = vmatmul.bf16.gmra.mxu0 %v4386
        %v4422 = vpop.f32.mrf.mxu0
        %v4423 = vadd.f32 0.0, %v4422
        %v4424 = vpop.f32.mrf.mxu0
        %v4425 = vadd.f32 0.0, %v4424
        %4426 = vmatmul.bf16.gmra.mxu0 %v4388
        %v4427 = vpop.f32.mrf.mxu0
        %v4428 = vadd.f32 0.0, %v4427
        %v4429 = vpop.f32.mrf.mxu0
        %v4430 = vadd.f32 0.0, %v4429
        %4431 = vmatmul.bf16.gmra.mxu0 %v4390
        %v4432 = vpop.f32.mrf.mxu0
        %v4433 = vadd.f32 0.0, %v4432
        %v4434 = vpop.f32.mrf.mxu0
        %v4435 = vadd.f32 0.0, %v4434
        %4436 = vdwg.mxu0
        %4437 = vmatpush.bf16.msra.mxu0 0
        %4438 = vmatpush.bf16.msra.mxu0 0
        %4439 = vmatpush.bf16.msra.mxu0 0
        %4440 = vmatpush.bf16.msra.mxu0 0
        %4441 = vmatpush.bf16.msra.mxu0 0
        %4442 = vmatpush.bf16.msra.mxu0 0
        %4443 = vmatpush.bf16.msra.mxu0 0
        %4444 = vmatpush.bf16.msra.mxu0 %v1150
        %4445 = vmatmul.bf16.gmra.mxu0 %v4397
        %v4446 = vpop.f32.mrf.mxu0
        %v4447 = vadd.f32 %v4418, %v4446
        %v4448 = vpop.f32.mrf.mxu0
        %v4449 = vadd.f32 %v4420, %v4448
        %4450 = vmatmul.bf16.gmra.mxu0 %v4400
        %v4451 = vpop.f32.mrf.mxu0
        %v4452 = vadd.f32 %v4423, %v4451
        %v4453 = vpop.f32.mrf.mxu0
        %v4454 = vadd.f32 %v4425, %v4453
        %4455 = vmatmul.bf16.gmra.mxu0 %v4403
        %v4456 = vpop.f32.mrf.mxu0
        %v4457 = vadd.f32 %v4428, %v4456
        %v4458 = vpop.f32.mrf.mxu0
        %v4459 = vadd.f32 %v4430, %v4458
        %4460 = vmatmul.bf16.gmra.mxu0 %v4406
        %v4461 = vpop.f32.mrf.mxu0
        %v4462 = vadd.f32 %v4433, %v4461
        %v4463 = vpop.f32.mrf.mxu0
        %v4464 = vadd.f32 %v4435, %v4463
        %4465 = vdwg.mxu0
        %v4466 = vpack.c.bf16 %v4449, %v4447
        %v4467 = vpack.c.bf16 %v4454, %v4452
        %v4468 = vpack.c.bf16 %v4459, %v4457
        %v4469 = vpack.c.bf16 %v4464, %v4462
        %s4470 = scalar_lea.vmem %s4, 512
        %v4471 = vld [vmem:[%s4470] sm:$0xf]
        %v4472 = vld [vmem:[%s4470 + $0x4] sm:$0xf]
        %v4473 = vld [vmem:[%s4470 + $0x8] sm:$0xf]
        %v4474 = vld [vmem:[%s4470 + $0xc] sm:$0xf]
        %v4475 = vld [vmem:[%s4470 + $0x10] sm:$0xf]
        %v4476 = vld [vmem:[%s4470 + $0x14] sm:$0xf]
        %v4477 = vld [vmem:[%s4470 + $0x18] sm:$0xf]
        %v4478 = vld [vmem:[%s4470 + $0x1c] sm:$0xf]
        %v4487 = vunpack.c.l.b16 %v4471
        %v4488 = vunpack.c.l.b16 %v4472
        %v4489 = vunpack.c.l.b16 %v4473
        %v4490 = vunpack.c.l.b16 %v4474
        %v4491 = vunpack.c.l.b16 %v4475
        %v4492 = vunpack.c.l.b16 %v4476
        %v4493 = vunpack.c.l.b16 %v4477
        %v4494 = vunpack.c.l.b16 %v4478
        %v4495 = vpack.c.b16 %v4488, %v4487
        %v4496 = vpack.c.b16 %v4490, %v4489
        %v4497 = vpack.c.b16 %v4492, %v4491
        %v4498 = vpack.c.b16 %v4494, %v4493
        %v4504 = vsel %vm1430, %v4466, 0
        %v4507 = vsel %vm1430, %v4467, 0
        %v4510 = vsel %vm1430, %v4468, 0
        %v4513 = vsel %vm1430, %v4469, 0
        %4515 = vmatpush.bf16.msra.mxu0 0
        %4516 = vmatpush.bf16.msra.mxu0 0
        %4517 = vmatpush.bf16.msra.mxu0 0
        %4518 = vmatpush.bf16.msra.mxu0 0
        %4519 = vmatpush.bf16.msra.mxu0 %v4498
        %4520 = vmatpush.bf16.msra.mxu0 %v4497
        %4521 = vmatpush.bf16.msra.mxu0 %v4496
        %4522 = vmatpush.bf16.msra.mxu0 %v4495
        %4523 = vmatmul.bf16.gmra.mxu0 %v4504
        %v4524 = vpop.f32.mrf.mxu0
        %v4525 = vadd.f32 0.0, %v4524
        %v4526 = vpop.f32.mrf.mxu0
        %v4527 = vadd.f32 0.0, %v4526
        %4528 = vmatmul.bf16.gmra.mxu0 %v4507
        %v4529 = vpop.f32.mrf.mxu0
        %v4530 = vadd.f32 0.0, %v4529
        %v4531 = vpop.f32.mrf.mxu0
        %v4532 = vadd.f32 0.0, %v4531
        %4533 = vmatmul.bf16.gmra.mxu0 %v4510
        %v4534 = vpop.f32.mrf.mxu0
        %v4535 = vadd.f32 0.0, %v4534
        %v4536 = vpop.f32.mrf.mxu0
        %v4537 = vadd.f32 0.0, %v4536
        %4538 = vmatmul.bf16.gmra.mxu0 %v4513
        %v4539 = vpop.f32.mrf.mxu0
        %v4540 = vadd.f32 0.0, %v4539
        %v4541 = vpop.f32.mrf.mxu0
        %v4542 = vadd.f32 0.0, %v4541
        %4543 = vdwg.mxu0
        %v4544 = vadd.f32 %v4343, %v4525
        %v4545 = vadd.f32 %v4344, %v4527
        %v4546 = vadd.f32 %v4345, %v4530
        %v4547 = vadd.f32 %v4346, %v4532
        %v4548 = vadd.f32 %v4347, %v4535
        %v4549 = vadd.f32 %v4348, %v4537
        %v4550 = vadd.f32 %v4349, %v4540
        %v4551 = vadd.f32 %v4350, %v4542
        %s4552 = scalar_lea.vmem %s3, 1088
        %v4553 = vld [vmem:[%s4552] sm:$0xff]
        %v4554 = vld [vmem:[%s4552 + $0x8] sm:$0xff]
        %v4555 = vld [vmem:[%s4552 + $0x10] sm:$0xff]
        %v4556 = vld [vmem:[%s4552 + $0x18] sm:$0xff]
        %v4557 = vld [vmem:[%s4552 + $0x20] sm:$0xff]
        %v4558 = vld [vmem:[%s4552 + $0x28] sm:$0xff]
        %v4559 = vld [vmem:[%s4552 + $0x30] sm:$0xff]
        %v4560 = vld [vmem:[%s4552 + $0x38] sm:$0xff]
        %v4569 = vunpack.c.l.b16 %v4553
        %v4570 = vunpack.c.h.b16 %v4553
        %v4571 = vunpack.c.l.b16 %v4554
        %v4572 = vunpack.c.h.b16 %v4554
        %v4573 = vunpack.c.l.b16 %v4555
        %v4574 = vunpack.c.h.b16 %v4555
        %v4575 = vunpack.c.l.b16 %v4556
        %v4576 = vunpack.c.h.b16 %v4556
        %v4577 = vunpack.c.l.b16 %v4557
        %v4578 = vunpack.c.h.b16 %v4557
        %v4579 = vunpack.c.l.b16 %v4558
        %v4580 = vunpack.c.h.b16 %v4558
        %v4581 = vunpack.c.l.b16 %v4559
        %v4582 = vunpack.c.h.b16 %v4559
        %v4583 = vunpack.c.l.b16 %v4560
        %v4584 = vunpack.c.h.b16 %v4560
        %v4585 = vpack.c.b16 %v4571, %v4569
        %v4586 = vpack.c.b16 %v4572, %v4570
        %v4587 = vpack.c.b16 %v4575, %v4573
        %v4588 = vpack.c.b16 %v4576, %v4574
        %v4589 = vpack.c.b16 %v4579, %v4577
        %v4590 = vpack.c.b16 %v4580, %v4578
        %v4591 = vpack.c.b16 %v4583, %v4581
        %v4592 = vpack.c.b16 %v4584, %v4582
        %v4598 = vsel %vm1195, %v4586, 0
        %v4601 = vsel %vm1195, %v4588, 0
        %v4604 = vsel %vm1195, %v4590, 0
        %v4607 = vsel %vm1195, %v4592, 0
        %4609 = vmatpush.bf16.msra.mxu0 %v1149
        %4610 = vmatpush.bf16.msra.mxu0 %v1148
        %4611 = vmatpush.bf16.msra.mxu0 %v1147
        %4612 = vmatpush.bf16.msra.mxu0 %v1146
        %4613 = vmatpush.bf16.msra.mxu0 %v1145
        %4614 = vmatpush.bf16.msra.mxu0 %v1144
        %4615 = vmatpush.bf16.msra.mxu0 %v1143
        %4616 = vmatpush.bf16.msra.mxu0 %v1142
        %4617 = vmatmul.bf16.gmra.mxu0 %v4585
        %v4618 = vpop.f32.mrf.mxu0
        %v4619 = vadd.f32 0.0, %v4618
        %v4620 = vpop.f32.mrf.mxu0
        %v4621 = vadd.f32 0.0, %v4620
        %4622 = vmatmul.bf16.gmra.mxu0 %v4587
        %v4623 = vpop.f32.mrf.mxu0
        %v4624 = vadd.f32 0.0, %v4623
        %v4625 = vpop.f32.mrf.mxu0
        %v4626 = vadd.f32 0.0, %v4625
        %4627 = vmatmul.bf16.gmra.mxu0 %v4589
        %v4628 = vpop.f32.mrf.mxu0
        %v4629 = vadd.f32 0.0, %v4628
        %v4630 = vpop.f32.mrf.mxu0
        %v4631 = vadd.f32 0.0, %v4630
        %4632 = vmatmul.bf16.gmra.mxu0 %v4591
        %v4633 = vpop.f32.mrf.mxu0
        %v4634 = vadd.f32 0.0, %v4633
        %v4635 = vpop.f32.mrf.mxu0
        %v4636 = vadd.f32 0.0, %v4635
        %4637 = vdwg.mxu0
        %4638 = vmatpush.bf16.msra.mxu0 0
        %4639 = vmatpush.bf16.msra.mxu0 0
        %4640 = vmatpush.bf16.msra.mxu0 0
        %4641 = vmatpush.bf16.msra.mxu0 0
        %4642 = vmatpush.bf16.msra.mxu0 0
        %4643 = vmatpush.bf16.msra.mxu0 0
        %4644 = vmatpush.bf16.msra.mxu0 0
        %4645 = vmatpush.bf16.msra.mxu0 %v1150
        %4646 = vmatmul.bf16.gmra.mxu0 %v4598
        %v4647 = vpop.f32.mrf.mxu0
        %v4648 = vadd.f32 %v4619, %v4647
        %v4649 = vpop.f32.mrf.mxu0
        %v4650 = vadd.f32 %v4621, %v4649
        %4651 = vmatmul.bf16.gmra.mxu0 %v4601
        %v4652 = vpop.f32.mrf.mxu0
        %v4653 = vadd.f32 %v4624, %v4652
        %v4654 = vpop.f32.mrf.mxu0
        %v4655 = vadd.f32 %v4626, %v4654
        %4656 = vmatmul.bf16.gmra.mxu0 %v4604
        %v4657 = vpop.f32.mrf.mxu0
        %v4658 = vadd.f32 %v4629, %v4657
        %v4659 = vpop.f32.mrf.mxu0
        %v4660 = vadd.f32 %v4631, %v4659
        %4661 = vmatmul.bf16.gmra.mxu0 %v4607
        %v4662 = vpop.f32.mrf.mxu0
        %v4663 = vadd.f32 %v4634, %v4662
        %v4664 = vpop.f32.mrf.mxu0
        %v4665 = vadd.f32 %v4636, %v4664
        %4666 = vdwg.mxu0
        %v4667 = vpack.c.bf16 %v4650, %v4648
        %v4668 = vpack.c.bf16 %v4655, %v4653
        %v4669 = vpack.c.bf16 %v4660, %v4658
        %v4670 = vpack.c.bf16 %v4665, %v4663
        %s4671 = scalar_lea.vmem %s4, 544
        %v4672 = vld [vmem:[%s4671] sm:$0xf]
        %v4673 = vld [vmem:[%s4671 + $0x4] sm:$0xf]
        %v4674 = vld [vmem:[%s4671 + $0x8] sm:$0xf]
        %v4675 = vld [vmem:[%s4671 + $0xc] sm:$0xf]
        %v4676 = vld [vmem:[%s4671 + $0x10] sm:$0xf]
        %v4677 = vld [vmem:[%s4671 + $0x14] sm:$0xf]
        %v4678 = vld [vmem:[%s4671 + $0x18] sm:$0xf]
        %v4679 = vld [vmem:[%s4671 + $0x1c] sm:$0xf]
        %v4688 = vunpack.c.l.b16 %v4672
        %v4689 = vunpack.c.l.b16 %v4673
        %v4690 = vunpack.c.l.b16 %v4674
        %v4691 = vunpack.c.l.b16 %v4675
        %v4692 = vunpack.c.l.b16 %v4676
        %v4693 = vunpack.c.l.b16 %v4677
        %v4694 = vunpack.c.l.b16 %v4678
        %v4695 = vunpack.c.l.b16 %v4679
        %v4696 = vpack.c.b16 %v4689, %v4688
        %v4697 = vpack.c.b16 %v4691, %v4690
        %v4698 = vpack.c.b16 %v4693, %v4692
        %v4699 = vpack.c.b16 %v4695, %v4694
        %v4705 = vsel %vm1430, %v4667, 0
        %v4708 = vsel %vm1430, %v4668, 0
        %v4711 = vsel %vm1430, %v4669, 0
        %v4714 = vsel %vm1430, %v4670, 0
        %4716 = vmatpush.bf16.msra.mxu0 0
        %4717 = vmatpush.bf16.msra.mxu0 0
        %4718 = vmatpush.bf16.msra.mxu0 0
        %4719 = vmatpush.bf16.msra.mxu0 0
        %4720 = vmatpush.bf16.msra.mxu0 %v4699
        %4721 = vmatpush.bf16.msra.mxu0 %v4698
        %4722 = vmatpush.bf16.msra.mxu0 %v4697
        %4723 = vmatpush.bf16.msra.mxu0 %v4696
        %4724 = vmatmul.bf16.gmra.mxu0 %v4705
        %v4725 = vpop.f32.mrf.mxu0
        %v4726 = vadd.f32 0.0, %v4725
        %v4727 = vpop.f32.mrf.mxu0
        %v4728 = vadd.f32 0.0, %v4727
        %4729 = vmatmul.bf16.gmra.mxu0 %v4708
        %v4730 = vpop.f32.mrf.mxu0
        %v4731 = vadd.f32 0.0, %v4730
        %v4732 = vpop.f32.mrf.mxu0
        %v4733 = vadd.f32 0.0, %v4732
        %4734 = vmatmul.bf16.gmra.mxu0 %v4711
        %v4735 = vpop.f32.mrf.mxu0
        %v4736 = vadd.f32 0.0, %v4735
        %v4737 = vpop.f32.mrf.mxu0
        %v4738 = vadd.f32 0.0, %v4737
        %4739 = vmatmul.bf16.gmra.mxu0 %v4714
        %v4740 = vpop.f32.mrf.mxu0
        %v4741 = vadd.f32 0.0, %v4740
        %v4742 = vpop.f32.mrf.mxu0
        %v4743 = vadd.f32 0.0, %v4742
        %4744 = vdwg.mxu0
        %v4745 = vadd.f32 %v4544, %v4726
        %v4746 = vadd.f32 %v4545, %v4728
        %v4747 = vadd.f32 %v4546, %v4731
        %v4748 = vadd.f32 %v4547, %v4733
        %v4749 = vadd.f32 %v4548, %v4736
        %v4750 = vadd.f32 %v4549, %v4738
        %v4751 = vadd.f32 %v4550, %v4741
        %v4752 = vadd.f32 %v4551, %v4743
        %s4753 = scalar_lea.vmem %s3, 1152
        %v4754 = vld [vmem:[%s4753] sm:$0xff]
        %v4755 = vld [vmem:[%s4753 + $0x8] sm:$0xff]
        %v4756 = vld [vmem:[%s4753 + $0x10] sm:$0xff]
        %v4757 = vld [vmem:[%s4753 + $0x18] sm:$0xff]
        %v4758 = vld [vmem:[%s4753 + $0x20] sm:$0xff]
        %v4759 = vld [vmem:[%s4753 + $0x28] sm:$0xff]
        %v4760 = vld [vmem:[%s4753 + $0x30] sm:$0xff]
        %v4761 = vld [vmem:[%s4753 + $0x38] sm:$0xff]
        %v4770 = vunpack.c.l.b16 %v4754
        %v4771 = vunpack.c.h.b16 %v4754
        %v4772 = vunpack.c.l.b16 %v4755
        %v4773 = vunpack.c.h.b16 %v4755
        %v4774 = vunpack.c.l.b16 %v4756
        %v4775 = vunpack.c.h.b16 %v4756
        %v4776 = vunpack.c.l.b16 %v4757
        %v4777 = vunpack.c.h.b16 %v4757
        %v4778 = vunpack.c.l.b16 %v4758
        %v4779 = vunpack.c.h.b16 %v4758
        %v4780 = vunpack.c.l.b16 %v4759
        %v4781 = vunpack.c.h.b16 %v4759
        %v4782 = vunpack.c.l.b16 %v4760
        %v4783 = vunpack.c.h.b16 %v4760
        %v4784 = vunpack.c.l.b16 %v4761
        %v4785 = vunpack.c.h.b16 %v4761
        %v4786 = vpack.c.b16 %v4772, %v4770
        %v4787 = vpack.c.b16 %v4773, %v4771
        %v4788 = vpack.c.b16 %v4776, %v4774
        %v4789 = vpack.c.b16 %v4777, %v4775
        %v4790 = vpack.c.b16 %v4780, %v4778
        %v4791 = vpack.c.b16 %v4781, %v4779
        %v4792 = vpack.c.b16 %v4784, %v4782
        %v4793 = vpack.c.b16 %v4785, %v4783
        %v4799 = vsel %vm1195, %v4787, 0
        %v4802 = vsel %vm1195, %v4789, 0
        %v4805 = vsel %vm1195, %v4791, 0
        %v4808 = vsel %vm1195, %v4793, 0
        %4810 = vmatpush.bf16.msra.mxu0 %v1149
        %4811 = vmatpush.bf16.msra.mxu0 %v1148
        %4812 = vmatpush.bf16.msra.mxu0 %v1147
        %4813 = vmatpush.bf16.msra.mxu0 %v1146
        %4814 = vmatpush.bf16.msra.mxu0 %v1145
        %4815 = vmatpush.bf16.msra.mxu0 %v1144
        %4816 = vmatpush.bf16.msra.mxu0 %v1143
        %4817 = vmatpush.bf16.msra.mxu0 %v1142
        %4818 = vmatmul.bf16.gmra.mxu0 %v4786
        %v4819 = vpop.f32.mrf.mxu0
        %v4820 = vadd.f32 0.0, %v4819
        %v4821 = vpop.f32.mrf.mxu0
        %v4822 = vadd.f32 0.0, %v4821
        %4823 = vmatmul.bf16.gmra.mxu0 %v4788
        %v4824 = vpop.f32.mrf.mxu0
        %v4825 = vadd.f32 0.0, %v4824
        %v4826 = vpop.f32.mrf.mxu0
        %v4827 = vadd.f32 0.0, %v4826
        %4828 = vmatmul.bf16.gmra.mxu0 %v4790
        %v4829 = vpop.f32.mrf.mxu0
        %v4830 = vadd.f32 0.0, %v4829
        %v4831 = vpop.f32.mrf.mxu0
        %v4832 = vadd.f32 0.0, %v4831
        %4833 = vmatmul.bf16.gmra.mxu0 %v4792
        %v4834 = vpop.f32.mrf.mxu0
        %v4835 = vadd.f32 0.0, %v4834
        %v4836 = vpop.f32.mrf.mxu0
        %v4837 = vadd.f32 0.0, %v4836
        %4838 = vdwg.mxu0
        %4839 = vmatpush.bf16.msra.mxu0 0
        %4840 = vmatpush.bf16.msra.mxu0 0
        %4841 = vmatpush.bf16.msra.mxu0 0
        %4842 = vmatpush.bf16.msra.mxu0 0
        %4843 = vmatpush.bf16.msra.mxu0 0
        %4844 = vmatpush.bf16.msra.mxu0 0
        %4845 = vmatpush.bf16.msra.mxu0 0
        %4846 = vmatpush.bf16.msra.mxu0 %v1150
        %4847 = vmatmul.bf16.gmra.mxu0 %v4799
        %v4848 = vpop.f32.mrf.mxu0
        %v4849 = vadd.f32 %v4820, %v4848
        %v4850 = vpop.f32.mrf.mxu0
        %v4851 = vadd.f32 %v4822, %v4850
        %4852 = vmatmul.bf16.gmra.mxu0 %v4802
        %v4853 = vpop.f32.mrf.mxu0
        %v4854 = vadd.f32 %v4825, %v4853
        %v4855 = vpop.f32.mrf.mxu0
        %v4856 = vadd.f32 %v4827, %v4855
        %4857 = vmatmul.bf16.gmra.mxu0 %v4805
        %v4858 = vpop.f32.mrf.mxu0
        %v4859 = vadd.f32 %v4830, %v4858
        %v4860 = vpop.f32.mrf.mxu0
        %v4861 = vadd.f32 %v4832, %v4860
        %4862 = vmatmul.bf16.gmra.mxu0 %v4808
        %v4863 = vpop.f32.mrf.mxu0
        %v4864 = vadd.f32 %v4835, %v4863
        %v4865 = vpop.f32.mrf.mxu0
        %v4866 = vadd.f32 %v4837, %v4865
        %4867 = vdwg.mxu0
        %v4868 = vpack.c.bf16 %v4851, %v4849
        %v4869 = vpack.c.bf16 %v4856, %v4854
        %v4870 = vpack.c.bf16 %v4861, %v4859
        %v4871 = vpack.c.bf16 %v4866, %v4864
        %s4872 = scalar_lea.vmem %s4, 576
        %v4873 = vld [vmem:[%s4872] sm:$0xf]
        %v4874 = vld [vmem:[%s4872 + $0x4] sm:$0xf]
        %v4875 = vld [vmem:[%s4872 + $0x8] sm:$0xf]
        %v4876 = vld [vmem:[%s4872 + $0xc] sm:$0xf]
        %v4877 = vld [vmem:[%s4872 + $0x10] sm:$0xf]
        %v4878 = vld [vmem:[%s4872 + $0x14] sm:$0xf]
        %v4879 = vld [vmem:[%s4872 + $0x18] sm:$0xf]
        %v4880 = vld [vmem:[%s4872 + $0x1c] sm:$0xf]
        %v4889 = vunpack.c.l.b16 %v4873
        %v4890 = vunpack.c.l.b16 %v4874
        %v4891 = vunpack.c.l.b16 %v4875
        %v4892 = vunpack.c.l.b16 %v4876
        %v4893 = vunpack.c.l.b16 %v4877
        %v4894 = vunpack.c.l.b16 %v4878
        %v4895 = vunpack.c.l.b16 %v4879
        %v4896 = vunpack.c.l.b16 %v4880
        %v4897 = vpack.c.b16 %v4890, %v4889
        %v4898 = vpack.c.b16 %v4892, %v4891
        %v4899 = vpack.c.b16 %v4894, %v4893
        %v4900 = vpack.c.b16 %v4896, %v4895
        %v4906 = vsel %vm1430, %v4868, 0
        %v4909 = vsel %vm1430, %v4869, 0
        %v4912 = vsel %vm1430, %v4870, 0
        %v4915 = vsel %vm1430, %v4871, 0
        %4917 = vmatpush.bf16.msra.mxu0 0
        %4918 = vmatpush.bf16.msra.mxu0 0
        %4919 = vmatpush.bf16.msra.mxu0 0
        %4920 = vmatpush.bf16.msra.mxu0 0
        %4921 = vmatpush.bf16.msra.mxu0 %v4900
        %4922 = vmatpush.bf16.msra.mxu0 %v4899
        %4923 = vmatpush.bf16.msra.mxu0 %v4898
        %4924 = vmatpush.bf16.msra.mxu0 %v4897
        %4925 = vmatmul.bf16.gmra.mxu0 %v4906
        %v4926 = vpop.f32.mrf.mxu0
        %v4927 = vadd.f32 0.0, %v4926
        %v4928 = vpop.f32.mrf.mxu0
        %v4929 = vadd.f32 0.0, %v4928
        %4930 = vmatmul.bf16.gmra.mxu0 %v4909
        %v4931 = vpop.f32.mrf.mxu0
        %v4932 = vadd.f32 0.0, %v4931
        %v4933 = vpop.f32.mrf.mxu0
        %v4934 = vadd.f32 0.0, %v4933
        %4935 = vmatmul.bf16.gmra.mxu0 %v4912
        %v4936 = vpop.f32.mrf.mxu0
        %v4937 = vadd.f32 0.0, %v4936
        %v4938 = vpop.f32.mrf.mxu0
        %v4939 = vadd.f32 0.0, %v4938
        %4940 = vmatmul.bf16.gmra.mxu0 %v4915
        %v4941 = vpop.f32.mrf.mxu0
        %v4942 = vadd.f32 0.0, %v4941
        %v4943 = vpop.f32.mrf.mxu0
        %v4944 = vadd.f32 0.0, %v4943
        %4945 = vdwg.mxu0
        %v4946 = vadd.f32 %v4745, %v4927
        %v4947 = vadd.f32 %v4746, %v4929
        %v4948 = vadd.f32 %v4747, %v4932
        %v4949 = vadd.f32 %v4748, %v4934
        %v4950 = vadd.f32 %v4749, %v4937
        %v4951 = vadd.f32 %v4750, %v4939
        %v4952 = vadd.f32 %v4751, %v4942
        %v4953 = vadd.f32 %v4752, %v4944
        %s4954 = scalar_lea.vmem %s3, 1216
        %v4955 = vld [vmem:[%s4954] sm:$0xff]
        %v4956 = vld [vmem:[%s4954 + $0x8] sm:$0xff]
        %v4957 = vld [vmem:[%s4954 + $0x10] sm:$0xff]
        %v4958 = vld [vmem:[%s4954 + $0x18] sm:$0xff]
        %v4959 = vld [vmem:[%s4954 + $0x20] sm:$0xff]
        %v4960 = vld [vmem:[%s4954 + $0x28] sm:$0xff]
        %v4961 = vld [vmem:[%s4954 + $0x30] sm:$0xff]
        %v4962 = vld [vmem:[%s4954 + $0x38] sm:$0xff]
        %v4971 = vunpack.c.l.b16 %v4955
        %v4972 = vunpack.c.h.b16 %v4955
        %v4973 = vunpack.c.l.b16 %v4956
        %v4974 = vunpack.c.h.b16 %v4956
        %v4975 = vunpack.c.l.b16 %v4957
        %v4976 = vunpack.c.h.b16 %v4957
        %v4977 = vunpack.c.l.b16 %v4958
        %v4978 = vunpack.c.h.b16 %v4958
        %v4979 = vunpack.c.l.b16 %v4959
        %v4980 = vunpack.c.h.b16 %v4959
        %v4981 = vunpack.c.l.b16 %v4960
        %v4982 = vunpack.c.h.b16 %v4960
        %v4983 = vunpack.c.l.b16 %v4961
        %v4984 = vunpack.c.h.b16 %v4961
        %v4985 = vunpack.c.l.b16 %v4962
        %v4986 = vunpack.c.h.b16 %v4962
        %v4987 = vpack.c.b16 %v4973, %v4971
        %v4988 = vpack.c.b16 %v4974, %v4972
        %v4989 = vpack.c.b16 %v4977, %v4975
        %v4990 = vpack.c.b16 %v4978, %v4976
        %v4991 = vpack.c.b16 %v4981, %v4979
        %v4992 = vpack.c.b16 %v4982, %v4980
        %v4993 = vpack.c.b16 %v4985, %v4983
        %v4994 = vpack.c.b16 %v4986, %v4984
        %v5000 = vsel %vm1195, %v4988, 0
        %v5003 = vsel %vm1195, %v4990, 0
        %v5006 = vsel %vm1195, %v4992, 0
        %v5009 = vsel %vm1195, %v4994, 0
        %5011 = vmatpush.bf16.msra.mxu0 %v1149
        %5012 = vmatpush.bf16.msra.mxu0 %v1148
        %5013 = vmatpush.bf16.msra.mxu0 %v1147
        %5014 = vmatpush.bf16.msra.mxu0 %v1146
        %5015 = vmatpush.bf16.msra.mxu0 %v1145
        %5016 = vmatpush.bf16.msra.mxu0 %v1144
        %5017 = vmatpush.bf16.msra.mxu0 %v1143
        %5018 = vmatpush.bf16.msra.mxu0 %v1142
        %5019 = vmatmul.bf16.gmra.mxu0 %v4987
        %v5020 = vpop.f32.mrf.mxu0
        %v5021 = vadd.f32 0.0, %v5020
        %v5022 = vpop.f32.mrf.mxu0
        %v5023 = vadd.f32 0.0, %v5022
        %5024 = vmatmul.bf16.gmra.mxu0 %v4989
        %v5025 = vpop.f32.mrf.mxu0
        %v5026 = vadd.f32 0.0, %v5025
        %v5027 = vpop.f32.mrf.mxu0
        %v5028 = vadd.f32 0.0, %v5027
        %5029 = vmatmul.bf16.gmra.mxu0 %v4991
        %v5030 = vpop.f32.mrf.mxu0
        %v5031 = vadd.f32 0.0, %v5030
        %v5032 = vpop.f32.mrf.mxu0
        %v5033 = vadd.f32 0.0, %v5032
        %5034 = vmatmul.bf16.gmra.mxu0 %v4993
        %v5035 = vpop.f32.mrf.mxu0
        %v5036 = vadd.f32 0.0, %v5035
        %v5037 = vpop.f32.mrf.mxu0
        %v5038 = vadd.f32 0.0, %v5037
        %5039 = vdwg.mxu0
        %5040 = vmatpush.bf16.msra.mxu0 0
        %5041 = vmatpush.bf16.msra.mxu0 0
        %5042 = vmatpush.bf16.msra.mxu0 0
        %5043 = vmatpush.bf16.msra.mxu0 0
        %5044 = vmatpush.bf16.msra.mxu0 0
        %5045 = vmatpush.bf16.msra.mxu0 0
        %5046 = vmatpush.bf16.msra.mxu0 0
        %5047 = vmatpush.bf16.msra.mxu0 %v1150
        %5048 = vmatmul.bf16.gmra.mxu0 %v5000
        %v5049 = vpop.f32.mrf.mxu0
        %v5050 = vadd.f32 %v5021, %v5049
        %v5051 = vpop.f32.mrf.mxu0
        %v5052 = vadd.f32 %v5023, %v5051
        %5053 = vmatmul.bf16.gmra.mxu0 %v5003
        %v5054 = vpop.f32.mrf.mxu0
        %v5055 = vadd.f32 %v5026, %v5054
        %v5056 = vpop.f32.mrf.mxu0
        %v5057 = vadd.f32 %v5028, %v5056
        %5058 = vmatmul.bf16.gmra.mxu0 %v5006
        %v5059 = vpop.f32.mrf.mxu0
        %v5060 = vadd.f32 %v5031, %v5059
        %v5061 = vpop.f32.mrf.mxu0
        %v5062 = vadd.f32 %v5033, %v5061
        %5063 = vmatmul.bf16.gmra.mxu0 %v5009
        %v5064 = vpop.f32.mrf.mxu0
        %v5065 = vadd.f32 %v5036, %v5064
        %v5066 = vpop.f32.mrf.mxu0
        %v5067 = vadd.f32 %v5038, %v5066
        %5068 = vdwg.mxu0
        %v5069 = vpack.c.bf16 %v5052, %v5050
        %v5070 = vpack.c.bf16 %v5057, %v5055
        %v5071 = vpack.c.bf16 %v5062, %v5060
        %v5072 = vpack.c.bf16 %v5067, %v5065
        %s5073 = scalar_lea.vmem %s4, 608
        %v5074 = vld [vmem:[%s5073] sm:$0xf]
        %v5075 = vld [vmem:[%s5073 + $0x4] sm:$0xf]
        %v5076 = vld [vmem:[%s5073 + $0x8] sm:$0xf]
        %v5077 = vld [vmem:[%s5073 + $0xc] sm:$0xf]
        %v5078 = vld [vmem:[%s5073 + $0x10] sm:$0xf]
        %v5079 = vld [vmem:[%s5073 + $0x14] sm:$0xf]
        %v5080 = vld [vmem:[%s5073 + $0x18] sm:$0xf]
        %v5081 = vld [vmem:[%s5073 + $0x1c] sm:$0xf]
        %v5090 = vunpack.c.l.b16 %v5074
        %v5091 = vunpack.c.l.b16 %v5075
        %v5092 = vunpack.c.l.b16 %v5076
        %v5093 = vunpack.c.l.b16 %v5077
        %v5094 = vunpack.c.l.b16 %v5078
        %v5095 = vunpack.c.l.b16 %v5079
        %v5096 = vunpack.c.l.b16 %v5080
        %v5097 = vunpack.c.l.b16 %v5081
        %v5098 = vpack.c.b16 %v5091, %v5090
        %v5099 = vpack.c.b16 %v5093, %v5092
        %v5100 = vpack.c.b16 %v5095, %v5094
        %v5101 = vpack.c.b16 %v5097, %v5096
        %v5107 = vsel %vm1430, %v5069, 0
        %v5110 = vsel %vm1430, %v5070, 0
        %v5113 = vsel %vm1430, %v5071, 0
        %v5116 = vsel %vm1430, %v5072, 0
        %5118 = vmatpush.bf16.msra.mxu0 0
        %5119 = vmatpush.bf16.msra.mxu0 0
        %5120 = vmatpush.bf16.msra.mxu0 0
        %5121 = vmatpush.bf16.msra.mxu0 0
        %5122 = vmatpush.bf16.msra.mxu0 %v5101
        %5123 = vmatpush.bf16.msra.mxu0 %v5100
        %5124 = vmatpush.bf16.msra.mxu0 %v5099
        %5125 = vmatpush.bf16.msra.mxu0 %v5098
        %5126 = vmatmul.bf16.gmra.mxu0 %v5107
        %v5127 = vpop.f32.mrf.mxu0
        %v5128 = vadd.f32 0.0, %v5127
        %v5129 = vpop.f32.mrf.mxu0
        %v5130 = vadd.f32 0.0, %v5129
        %5131 = vmatmul.bf16.gmra.mxu0 %v5110
        %v5132 = vpop.f32.mrf.mxu0
        %v5133 = vadd.f32 0.0, %v5132
        %v5134 = vpop.f32.mrf.mxu0
        %v5135 = vadd.f32 0.0, %v5134
        %5136 = vmatmul.bf16.gmra.mxu0 %v5113
        %v5137 = vpop.f32.mrf.mxu0
        %v5138 = vadd.f32 0.0, %v5137
        %v5139 = vpop.f32.mrf.mxu0
        %v5140 = vadd.f32 0.0, %v5139
        %5141 = vmatmul.bf16.gmra.mxu0 %v5116
        %v5142 = vpop.f32.mrf.mxu0
        %v5143 = vadd.f32 0.0, %v5142
        %v5144 = vpop.f32.mrf.mxu0
        %v5145 = vadd.f32 0.0, %v5144
        %5146 = vdwg.mxu0
        %v5147 = vadd.f32 %v4946, %v5128
        %v5148 = vadd.f32 %v4947, %v5130
        %v5149 = vadd.f32 %v4948, %v5133
        %v5150 = vadd.f32 %v4949, %v5135
        %v5151 = vadd.f32 %v4950, %v5138
        %v5152 = vadd.f32 %v4951, %v5140
        %v5153 = vadd.f32 %v4952, %v5143
        %v5154 = vadd.f32 %v4953, %v5145
        %s5155 = scalar_lea.vmem %s3, 1280
        %v5156 = vld [vmem:[%s5155] sm:$0xff]
        %v5157 = vld [vmem:[%s5155 + $0x8] sm:$0xff]
        %v5158 = vld [vmem:[%s5155 + $0x10] sm:$0xff]
        %v5159 = vld [vmem:[%s5155 + $0x18] sm:$0xff]
        %v5160 = vld [vmem:[%s5155 + $0x20] sm:$0xff]
        %v5161 = vld [vmem:[%s5155 + $0x28] sm:$0xff]
        %v5162 = vld [vmem:[%s5155 + $0x30] sm:$0xff]
        %v5163 = vld [vmem:[%s5155 + $0x38] sm:$0xff]
        %v5172 = vunpack.c.l.b16 %v5156
        %v5173 = vunpack.c.h.b16 %v5156
        %v5174 = vunpack.c.l.b16 %v5157
        %v5175 = vunpack.c.h.b16 %v5157
        %v5176 = vunpack.c.l.b16 %v5158
        %v5177 = vunpack.c.h.b16 %v5158
        %v5178 = vunpack.c.l.b16 %v5159
        %v5179 = vunpack.c.h.b16 %v5159
        %v5180 = vunpack.c.l.b16 %v5160
        %v5181 = vunpack.c.h.b16 %v5160
        %v5182 = vunpack.c.l.b16 %v5161
        %v5183 = vunpack.c.h.b16 %v5161
        %v5184 = vunpack.c.l.b16 %v5162
        %v5185 = vunpack.c.h.b16 %v5162
        %v5186 = vunpack.c.l.b16 %v5163
        %v5187 = vunpack.c.h.b16 %v5163
        %v5188 = vpack.c.b16 %v5174, %v5172
        %v5189 = vpack.c.b16 %v5175, %v5173
        %v5190 = vpack.c.b16 %v5178, %v5176
        %v5191 = vpack.c.b16 %v5179, %v5177
        %v5192 = vpack.c.b16 %v5182, %v5180
        %v5193 = vpack.c.b16 %v5183, %v5181
        %v5194 = vpack.c.b16 %v5186, %v5184
        %v5195 = vpack.c.b16 %v5187, %v5185
        %v5201 = vsel %vm1195, %v5189, 0
        %v5204 = vsel %vm1195, %v5191, 0
        %v5207 = vsel %vm1195, %v5193, 0
        %v5210 = vsel %vm1195, %v5195, 0
        %5212 = vmatpush.bf16.msra.mxu0 %v1149
        %5213 = vmatpush.bf16.msra.mxu0 %v1148
        %5214 = vmatpush.bf16.msra.mxu0 %v1147
        %5215 = vmatpush.bf16.msra.mxu0 %v1146
        %5216 = vmatpush.bf16.msra.mxu0 %v1145
        %5217 = vmatpush.bf16.msra.mxu0 %v1144
        %5218 = vmatpush.bf16.msra.mxu0 %v1143
        %5219 = vmatpush.bf16.msra.mxu0 %v1142
        %5220 = vmatmul.bf16.gmra.mxu0 %v5188
        %v5221 = vpop.f32.mrf.mxu0
        %v5222 = vadd.f32 0.0, %v5221
        %v5223 = vpop.f32.mrf.mxu0
        %v5224 = vadd.f32 0.0, %v5223
        %5225 = vmatmul.bf16.gmra.mxu0 %v5190
        %v5226 = vpop.f32.mrf.mxu0
        %v5227 = vadd.f32 0.0, %v5226
        %v5228 = vpop.f32.mrf.mxu0
        %v5229 = vadd.f32 0.0, %v5228
        %5230 = vmatmul.bf16.gmra.mxu0 %v5192
        %v5231 = vpop.f32.mrf.mxu0
        %v5232 = vadd.f32 0.0, %v5231
        %v5233 = vpop.f32.mrf.mxu0
        %v5234 = vadd.f32 0.0, %v5233
        %5235 = vmatmul.bf16.gmra.mxu0 %v5194
        %v5236 = vpop.f32.mrf.mxu0
        %v5237 = vadd.f32 0.0, %v5236
        %v5238 = vpop.f32.mrf.mxu0
        %v5239 = vadd.f32 0.0, %v5238
        %5240 = vdwg.mxu0
        %5241 = vmatpush.bf16.msra.mxu0 0
        %5242 = vmatpush.bf16.msra.mxu0 0
        %5243 = vmatpush.bf16.msra.mxu0 0
        %5244 = vmatpush.bf16.msra.mxu0 0
        %5245 = vmatpush.bf16.msra.mxu0 0
        %5246 = vmatpush.bf16.msra.mxu0 0
        %5247 = vmatpush.bf16.msra.mxu0 0
        %5248 = vmatpush.bf16.msra.mxu0 %v1150
        %5249 = vmatmul.bf16.gmra.mxu0 %v5201
        %v5250 = vpop.f32.mrf.mxu0
        %v5251 = vadd.f32 %v5222, %v5250
        %v5252 = vpop.f32.mrf.mxu0
        %v5253 = vadd.f32 %v5224, %v5252
        %5254 = vmatmul.bf16.gmra.mxu0 %v5204
        %v5255 = vpop.f32.mrf.mxu0
        %v5256 = vadd.f32 %v5227, %v5255
        %v5257 = vpop.f32.mrf.mxu0
        %v5258 = vadd.f32 %v5229, %v5257
        %5259 = vmatmul.bf16.gmra.mxu0 %v5207
        %v5260 = vpop.f32.mrf.mxu0
        %v5261 = vadd.f32 %v5232, %v5260
        %v5262 = vpop.f32.mrf.mxu0
        %v5263 = vadd.f32 %v5234, %v5262
        %5264 = vmatmul.bf16.gmra.mxu0 %v5210
        %v5265 = vpop.f32.mrf.mxu0
        %v5266 = vadd.f32 %v5237, %v5265
        %v5267 = vpop.f32.mrf.mxu0
        %v5268 = vadd.f32 %v5239, %v5267
        %5269 = vdwg.mxu0
        %v5270 = vpack.c.bf16 %v5253, %v5251
        %v5271 = vpack.c.bf16 %v5258, %v5256
        %v5272 = vpack.c.bf16 %v5263, %v5261
        %v5273 = vpack.c.bf16 %v5268, %v5266
        %s5274 = scalar_lea.vmem %s4, 640
        %v5275 = vld [vmem:[%s5274] sm:$0xf]
        %v5276 = vld [vmem:[%s5274 + $0x4] sm:$0xf]
        %v5277 = vld [vmem:[%s5274 + $0x8] sm:$0xf]
        %v5278 = vld [vmem:[%s5274 + $0xc] sm:$0xf]
        %v5279 = vld [vmem:[%s5274 + $0x10] sm:$0xf]
        %v5280 = vld [vmem:[%s5274 + $0x14] sm:$0xf]
        %v5281 = vld [vmem:[%s5274 + $0x18] sm:$0xf]
        %v5282 = vld [vmem:[%s5274 + $0x1c] sm:$0xf]
        %v5291 = vunpack.c.l.b16 %v5275
        %v5292 = vunpack.c.l.b16 %v5276
        %v5293 = vunpack.c.l.b16 %v5277
        %v5294 = vunpack.c.l.b16 %v5278
        %v5295 = vunpack.c.l.b16 %v5279
        %v5296 = vunpack.c.l.b16 %v5280
        %v5297 = vunpack.c.l.b16 %v5281
        %v5298 = vunpack.c.l.b16 %v5282
        %v5299 = vpack.c.b16 %v5292, %v5291
        %v5300 = vpack.c.b16 %v5294, %v5293
        %v5301 = vpack.c.b16 %v5296, %v5295
        %v5302 = vpack.c.b16 %v5298, %v5297
        %v5308 = vsel %vm1430, %v5270, 0
        %v5311 = vsel %vm1430, %v5271, 0
        %v5314 = vsel %vm1430, %v5272, 0
        %v5317 = vsel %vm1430, %v5273, 0
        %5319 = vmatpush.bf16.msra.mxu0 0
        %5320 = vmatpush.bf16.msra.mxu0 0
        %5321 = vmatpush.bf16.msra.mxu0 0
        %5322 = vmatpush.bf16.msra.mxu0 0
        %5323 = vmatpush.bf16.msra.mxu0 %v5302
        %5324 = vmatpush.bf16.msra.mxu0 %v5301
        %5325 = vmatpush.bf16.msra.mxu0 %v5300
        %5326 = vmatpush.bf16.msra.mxu0 %v5299
        %5327 = vmatmul.bf16.gmra.mxu0 %v5308
        %v5328 = vpop.f32.mrf.mxu0
        %v5329 = vadd.f32 0.0, %v5328
        %v5330 = vpop.f32.mrf.mxu0
        %v5331 = vadd.f32 0.0, %v5330
        %5332 = vmatmul.bf16.gmra.mxu0 %v5311
        %v5333 = vpop.f32.mrf.mxu0
        %v5334 = vadd.f32 0.0, %v5333
        %v5335 = vpop.f32.mrf.mxu0
        %v5336 = vadd.f32 0.0, %v5335
        %5337 = vmatmul.bf16.gmra.mxu0 %v5314
        %v5338 = vpop.f32.mrf.mxu0
        %v5339 = vadd.f32 0.0, %v5338
        %v5340 = vpop.f32.mrf.mxu0
        %v5341 = vadd.f32 0.0, %v5340
        %5342 = vmatmul.bf16.gmra.mxu0 %v5317
        %v5343 = vpop.f32.mrf.mxu0
        %v5344 = vadd.f32 0.0, %v5343
        %v5345 = vpop.f32.mrf.mxu0
        %v5346 = vadd.f32 0.0, %v5345
        %5347 = vdwg.mxu0
        %v5348 = vadd.f32 %v5147, %v5329
        %v5349 = vadd.f32 %v5148, %v5331
        %v5350 = vadd.f32 %v5149, %v5334
        %v5351 = vadd.f32 %v5150, %v5336
        %v5352 = vadd.f32 %v5151, %v5339
        %v5353 = vadd.f32 %v5152, %v5341
        %v5354 = vadd.f32 %v5153, %v5344
        %v5355 = vadd.f32 %v5154, %v5346
        %s5356 = scalar_lea.vmem %s3, 1344
        %v5357 = vld [vmem:[%s5356] sm:$0xff]
        %v5358 = vld [vmem:[%s5356 + $0x8] sm:$0xff]
        %v5359 = vld [vmem:[%s5356 + $0x10] sm:$0xff]
        %v5360 = vld [vmem:[%s5356 + $0x18] sm:$0xff]
        %v5361 = vld [vmem:[%s5356 + $0x20] sm:$0xff]
        %v5362 = vld [vmem:[%s5356 + $0x28] sm:$0xff]
        %v5363 = vld [vmem:[%s5356 + $0x30] sm:$0xff]
        %v5364 = vld [vmem:[%s5356 + $0x38] sm:$0xff]
        %v5373 = vunpack.c.l.b16 %v5357
        %v5374 = vunpack.c.h.b16 %v5357
        %v5375 = vunpack.c.l.b16 %v5358
        %v5376 = vunpack.c.h.b16 %v5358
        %v5377 = vunpack.c.l.b16 %v5359
        %v5378 = vunpack.c.h.b16 %v5359
        %v5379 = vunpack.c.l.b16 %v5360
        %v5380 = vunpack.c.h.b16 %v5360
        %v5381 = vunpack.c.l.b16 %v5361
        %v5382 = vunpack.c.h.b16 %v5361
        %v5383 = vunpack.c.l.b16 %v5362
        %v5384 = vunpack.c.h.b16 %v5362
        %v5385 = vunpack.c.l.b16 %v5363
        %v5386 = vunpack.c.h.b16 %v5363
        %v5387 = vunpack.c.l.b16 %v5364
        %v5388 = vunpack.c.h.b16 %v5364
        %v5389 = vpack.c.b16 %v5375, %v5373
        %v5390 = vpack.c.b16 %v5376, %v5374
        %v5391 = vpack.c.b16 %v5379, %v5377
        %v5392 = vpack.c.b16 %v5380, %v5378
        %v5393 = vpack.c.b16 %v5383, %v5381
        %v5394 = vpack.c.b16 %v5384, %v5382
        %v5395 = vpack.c.b16 %v5387, %v5385
        %v5396 = vpack.c.b16 %v5388, %v5386
        %v5402 = vsel %vm1195, %v5390, 0
        %v5405 = vsel %vm1195, %v5392, 0
        %v5408 = vsel %vm1195, %v5394, 0
        %v5411 = vsel %vm1195, %v5396, 0
        %5413 = vmatpush.bf16.msra.mxu0 %v1149
        %5414 = vmatpush.bf16.msra.mxu0 %v1148
        %5415 = vmatpush.bf16.msra.mxu0 %v1147
        %5416 = vmatpush.bf16.msra.mxu0 %v1146
        %5417 = vmatpush.bf16.msra.mxu0 %v1145
        %5418 = vmatpush.bf16.msra.mxu0 %v1144
        %5419 = vmatpush.bf16.msra.mxu0 %v1143
        %5420 = vmatpush.bf16.msra.mxu0 %v1142
        %5421 = vmatmul.bf16.gmra.mxu0 %v5389
        %v5422 = vpop.f32.mrf.mxu0
        %v5423 = vadd.f32 0.0, %v5422
        %v5424 = vpop.f32.mrf.mxu0
        %v5425 = vadd.f32 0.0, %v5424
        %5426 = vmatmul.bf16.gmra.mxu0 %v5391
        %v5427 = vpop.f32.mrf.mxu0
        %v5428 = vadd.f32 0.0, %v5427
        %v5429 = vpop.f32.mrf.mxu0
        %v5430 = vadd.f32 0.0, %v5429
        %5431 = vmatmul.bf16.gmra.mxu0 %v5393
        %v5432 = vpop.f32.mrf.mxu0
        %v5433 = vadd.f32 0.0, %v5432
        %v5434 = vpop.f32.mrf.mxu0
        %v5435 = vadd.f32 0.0, %v5434
        %5436 = vmatmul.bf16.gmra.mxu0 %v5395
        %v5437 = vpop.f32.mrf.mxu0
        %v5438 = vadd.f32 0.0, %v5437
        %v5439 = vpop.f32.mrf.mxu0
        %v5440 = vadd.f32 0.0, %v5439
        %5441 = vdwg.mxu0
        %5442 = vmatpush.bf16.msra.mxu0 0
        %5443 = vmatpush.bf16.msra.mxu0 0
        %5444 = vmatpush.bf16.msra.mxu0 0
        %5445 = vmatpush.bf16.msra.mxu0 0
        %5446 = vmatpush.bf16.msra.mxu0 0
        %5447 = vmatpush.bf16.msra.mxu0 0
        %5448 = vmatpush.bf16.msra.mxu0 0
        %5449 = vmatpush.bf16.msra.mxu0 %v1150
        %5450 = vmatmul.bf16.gmra.mxu0 %v5402
        %v5451 = vpop.f32.mrf.mxu0
        %v5452 = vadd.f32 %v5423, %v5451
        %v5453 = vpop.f32.mrf.mxu0
        %v5454 = vadd.f32 %v5425, %v5453
        %5455 = vmatmul.bf16.gmra.mxu0 %v5405
        %v5456 = vpop.f32.mrf.mxu0
        %v5457 = vadd.f32 %v5428, %v5456
        %v5458 = vpop.f32.mrf.mxu0
        %v5459 = vadd.f32 %v5430, %v5458
        %5460 = vmatmul.bf16.gmra.mxu0 %v5408
        %v5461 = vpop.f32.mrf.mxu0
        %v5462 = vadd.f32 %v5433, %v5461
        %v5463 = vpop.f32.mrf.mxu0
        %v5464 = vadd.f32 %v5435, %v5463
        %5465 = vmatmul.bf16.gmra.mxu0 %v5411
        %v5466 = vpop.f32.mrf.mxu0
        %v5467 = vadd.f32 %v5438, %v5466
        %v5468 = vpop.f32.mrf.mxu0
        %v5469 = vadd.f32 %v5440, %v5468
        %5470 = vdwg.mxu0
        %v5471 = vpack.c.bf16 %v5454, %v5452
        %v5472 = vpack.c.bf16 %v5459, %v5457
        %v5473 = vpack.c.bf16 %v5464, %v5462
        %v5474 = vpack.c.bf16 %v5469, %v5467
        %s5475 = scalar_lea.vmem %s4, 672
        %v5476 = vld [vmem:[%s5475] sm:$0xf]
        %v5477 = vld [vmem:[%s5475 + $0x4] sm:$0xf]
        %v5478 = vld [vmem:[%s5475 + $0x8] sm:$0xf]
        %v5479 = vld [vmem:[%s5475 + $0xc] sm:$0xf]
        %v5480 = vld [vmem:[%s5475 + $0x10] sm:$0xf]
        %v5481 = vld [vmem:[%s5475 + $0x14] sm:$0xf]
        %v5482 = vld [vmem:[%s5475 + $0x18] sm:$0xf]
        %v5483 = vld [vmem:[%s5475 + $0x1c] sm:$0xf]
        %v5492 = vunpack.c.l.b16 %v5476
        %v5493 = vunpack.c.l.b16 %v5477
        %v5494 = vunpack.c.l.b16 %v5478
        %v5495 = vunpack.c.l.b16 %v5479
        %v5496 = vunpack.c.l.b16 %v5480
        %v5497 = vunpack.c.l.b16 %v5481
        %v5498 = vunpack.c.l.b16 %v5482
        %v5499 = vunpack.c.l.b16 %v5483
        %v5500 = vpack.c.b16 %v5493, %v5492
        %v5501 = vpack.c.b16 %v5495, %v5494
        %v5502 = vpack.c.b16 %v5497, %v5496
        %v5503 = vpack.c.b16 %v5499, %v5498
        %v5509 = vsel %vm1430, %v5471, 0
        %v5512 = vsel %vm1430, %v5472, 0
        %v5515 = vsel %vm1430, %v5473, 0
        %v5518 = vsel %vm1430, %v5474, 0
        %5520 = vmatpush.bf16.msra.mxu0 0
        %5521 = vmatpush.bf16.msra.mxu0 0
        %5522 = vmatpush.bf16.msra.mxu0 0
        %5523 = vmatpush.bf16.msra.mxu0 0
        %5524 = vmatpush.bf16.msra.mxu0 %v5503
        %5525 = vmatpush.bf16.msra.mxu0 %v5502
        %5526 = vmatpush.bf16.msra.mxu0 %v5501
        %5527 = vmatpush.bf16.msra.mxu0 %v5500
        %5528 = vmatmul.bf16.gmra.mxu0 %v5509
        %v5529 = vpop.f32.mrf.mxu0
        %v5530 = vadd.f32 0.0, %v5529
        %v5531 = vpop.f32.mrf.mxu0
        %v5532 = vadd.f32 0.0, %v5531
        %5533 = vmatmul.bf16.gmra.mxu0 %v5512
        %v5534 = vpop.f32.mrf.mxu0
        %v5535 = vadd.f32 0.0, %v5534
        %v5536 = vpop.f32.mrf.mxu0
        %v5537 = vadd.f32 0.0, %v5536
        %5538 = vmatmul.bf16.gmra.mxu0 %v5515
        %v5539 = vpop.f32.mrf.mxu0
        %v5540 = vadd.f32 0.0, %v5539
        %v5541 = vpop.f32.mrf.mxu0
        %v5542 = vadd.f32 0.0, %v5541
        %5543 = vmatmul.bf16.gmra.mxu0 %v5518
        %v5544 = vpop.f32.mrf.mxu0
        %v5545 = vadd.f32 0.0, %v5544
        %v5546 = vpop.f32.mrf.mxu0
        %v5547 = vadd.f32 0.0, %v5546
        %5548 = vdwg.mxu0
        %v5549 = vadd.f32 %v5348, %v5530
        %v5550 = vadd.f32 %v5349, %v5532
        %v5551 = vadd.f32 %v5350, %v5535
        %v5552 = vadd.f32 %v5351, %v5537
        %v5553 = vadd.f32 %v5352, %v5540
        %v5554 = vadd.f32 %v5353, %v5542
        %v5555 = vadd.f32 %v5354, %v5545
        %v5556 = vadd.f32 %v5355, %v5547
        %s5557 = scalar_lea.vmem %s3, 1408
        %v5558 = vld [vmem:[%s5557] sm:$0xff]
        %v5559 = vld [vmem:[%s5557 + $0x8] sm:$0xff]
        %v5560 = vld [vmem:[%s5557 + $0x10] sm:$0xff]
        %v5561 = vld [vmem:[%s5557 + $0x18] sm:$0xff]
        %v5562 = vld [vmem:[%s5557 + $0x20] sm:$0xff]
        %v5563 = vld [vmem:[%s5557 + $0x28] sm:$0xff]
        %v5564 = vld [vmem:[%s5557 + $0x30] sm:$0xff]
        %v5565 = vld [vmem:[%s5557 + $0x38] sm:$0xff]
        %v5574 = vunpack.c.l.b16 %v5558
        %v5575 = vunpack.c.h.b16 %v5558
        %v5576 = vunpack.c.l.b16 %v5559
        %v5577 = vunpack.c.h.b16 %v5559
        %v5578 = vunpack.c.l.b16 %v5560
        %v5579 = vunpack.c.h.b16 %v5560
        %v5580 = vunpack.c.l.b16 %v5561
        %v5581 = vunpack.c.h.b16 %v5561
        %v5582 = vunpack.c.l.b16 %v5562
        %v5583 = vunpack.c.h.b16 %v5562
        %v5584 = vunpack.c.l.b16 %v5563
        %v5585 = vunpack.c.h.b16 %v5563
        %v5586 = vunpack.c.l.b16 %v5564
        %v5587 = vunpack.c.h.b16 %v5564
        %v5588 = vunpack.c.l.b16 %v5565
        %v5589 = vunpack.c.h.b16 %v5565
        %v5590 = vpack.c.b16 %v5576, %v5574
        %v5591 = vpack.c.b16 %v5577, %v5575
        %v5592 = vpack.c.b16 %v5580, %v5578
        %v5593 = vpack.c.b16 %v5581, %v5579
        %v5594 = vpack.c.b16 %v5584, %v5582
        %v5595 = vpack.c.b16 %v5585, %v5583
        %v5596 = vpack.c.b16 %v5588, %v5586
        %v5597 = vpack.c.b16 %v5589, %v5587
        %v5603 = vsel %vm1195, %v5591, 0
        %v5606 = vsel %vm1195, %v5593, 0
        %v5609 = vsel %vm1195, %v5595, 0
        %v5612 = vsel %vm1195, %v5597, 0
        %5614 = vmatpush.bf16.msra.mxu0 %v1149
        %5615 = vmatpush.bf16.msra.mxu0 %v1148
        %5616 = vmatpush.bf16.msra.mxu0 %v1147
        %5617 = vmatpush.bf16.msra.mxu0 %v1146
        %5618 = vmatpush.bf16.msra.mxu0 %v1145
        %5619 = vmatpush.bf16.msra.mxu0 %v1144
        %5620 = vmatpush.bf16.msra.mxu0 %v1143
        %5621 = vmatpush.bf16.msra.mxu0 %v1142
        %5622 = vmatmul.bf16.gmra.mxu0 %v5590
        %v5623 = vpop.f32.mrf.mxu0
        %v5624 = vadd.f32 0.0, %v5623
        %v5625 = vpop.f32.mrf.mxu0
        %v5626 = vadd.f32 0.0, %v5625
        %5627 = vmatmul.bf16.gmra.mxu0 %v5592
        %v5628 = vpop.f32.mrf.mxu0
        %v5629 = vadd.f32 0.0, %v5628
        %v5630 = vpop.f32.mrf.mxu0
        %v5631 = vadd.f32 0.0, %v5630
        %5632 = vmatmul.bf16.gmra.mxu0 %v5594
        %v5633 = vpop.f32.mrf.mxu0
        %v5634 = vadd.f32 0.0, %v5633
        %v5635 = vpop.f32.mrf.mxu0
        %v5636 = vadd.f32 0.0, %v5635
        %5637 = vmatmul.bf16.gmra.mxu0 %v5596
        %v5638 = vpop.f32.mrf.mxu0
        %v5639 = vadd.f32 0.0, %v5638
        %v5640 = vpop.f32.mrf.mxu0
        %v5641 = vadd.f32 0.0, %v5640
        %5642 = vdwg.mxu0
        %5643 = vmatpush.bf16.msra.mxu0 0
        %5644 = vmatpush.bf16.msra.mxu0 0
        %5645 = vmatpush.bf16.msra.mxu0 0
        %5646 = vmatpush.bf16.msra.mxu0 0
        %5647 = vmatpush.bf16.msra.mxu0 0
        %5648 = vmatpush.bf16.msra.mxu0 0
        %5649 = vmatpush.bf16.msra.mxu0 0
        %5650 = vmatpush.bf16.msra.mxu0 %v1150
        %5651 = vmatmul.bf16.gmra.mxu0 %v5603
        %v5652 = vpop.f32.mrf.mxu0
        %v5653 = vadd.f32 %v5624, %v5652
        %v5654 = vpop.f32.mrf.mxu0
        %v5655 = vadd.f32 %v5626, %v5654
        %5656 = vmatmul.bf16.gmra.mxu0 %v5606
        %v5657 = vpop.f32.mrf.mxu0
        %v5658 = vadd.f32 %v5629, %v5657
        %v5659 = vpop.f32.mrf.mxu0
        %v5660 = vadd.f32 %v5631, %v5659
        %5661 = vmatmul.bf16.gmra.mxu0 %v5609
        %v5662 = vpop.f32.mrf.mxu0
        %v5663 = vadd.f32 %v5634, %v5662
        %v5664 = vpop.f32.mrf.mxu0
        %v5665 = vadd.f32 %v5636, %v5664
        %5666 = vmatmul.bf16.gmra.mxu0 %v5612
        %v5667 = vpop.f32.mrf.mxu0
        %v5668 = vadd.f32 %v5639, %v5667
        %v5669 = vpop.f32.mrf.mxu0
        %v5670 = vadd.f32 %v5641, %v5669
        %5671 = vdwg.mxu0
        %v5672 = vpack.c.bf16 %v5655, %v5653
        %v5673 = vpack.c.bf16 %v5660, %v5658
        %v5674 = vpack.c.bf16 %v5665, %v5663
        %v5675 = vpack.c.bf16 %v5670, %v5668
        %s5676 = scalar_lea.vmem %s4, 704
        %v5677 = vld [vmem:[%s5676] sm:$0xf]
        %v5678 = vld [vmem:[%s5676 + $0x4] sm:$0xf]
        %v5679 = vld [vmem:[%s5676 + $0x8] sm:$0xf]
        %v5680 = vld [vmem:[%s5676 + $0xc] sm:$0xf]
        %v5681 = vld [vmem:[%s5676 + $0x10] sm:$0xf]
        %v5682 = vld [vmem:[%s5676 + $0x14] sm:$0xf]
        %v5683 = vld [vmem:[%s5676 + $0x18] sm:$0xf]
        %v5684 = vld [vmem:[%s5676 + $0x1c] sm:$0xf]
        %v5693 = vunpack.c.l.b16 %v5677
        %v5694 = vunpack.c.l.b16 %v5678
        %v5695 = vunpack.c.l.b16 %v5679
        %v5696 = vunpack.c.l.b16 %v5680
        %v5697 = vunpack.c.l.b16 %v5681
        %v5698 = vunpack.c.l.b16 %v5682
        %v5699 = vunpack.c.l.b16 %v5683
        %v5700 = vunpack.c.l.b16 %v5684
        %v5701 = vpack.c.b16 %v5694, %v5693
        %v5702 = vpack.c.b16 %v5696, %v5695
        %v5703 = vpack.c.b16 %v5698, %v5697
        %v5704 = vpack.c.b16 %v5700, %v5699
        %v5710 = vsel %vm1430, %v5672, 0
        %v5713 = vsel %vm1430, %v5673, 0
        %v5716 = vsel %vm1430, %v5674, 0
        %v5719 = vsel %vm1430, %v5675, 0
        %5721 = vmatpush.bf16.msra.mxu0 0
        %5722 = vmatpush.bf16.msra.mxu0 0
        %5723 = vmatpush.bf16.msra.mxu0 0
        %5724 = vmatpush.bf16.msra.mxu0 0
        %5725 = vmatpush.bf16.msra.mxu0 %v5704
        %5726 = vmatpush.bf16.msra.mxu0 %v5703
        %5727 = vmatpush.bf16.msra.mxu0 %v5702
        %5728 = vmatpush.bf16.msra.mxu0 %v5701
        %5729 = vmatmul.bf16.gmra.mxu0 %v5710
        %v5730 = vpop.f32.mrf.mxu0
        %v5731 = vadd.f32 0.0, %v5730
        %v5732 = vpop.f32.mrf.mxu0
        %v5733 = vadd.f32 0.0, %v5732
        %5734 = vmatmul.bf16.gmra.mxu0 %v5713
        %v5735 = vpop.f32.mrf.mxu0
        %v5736 = vadd.f32 0.0, %v5735
        %v5737 = vpop.f32.mrf.mxu0
        %v5738 = vadd.f32 0.0, %v5737
        %5739 = vmatmul.bf16.gmra.mxu0 %v5716
        %v5740 = vpop.f32.mrf.mxu0
        %v5741 = vadd.f32 0.0, %v5740
        %v5742 = vpop.f32.mrf.mxu0
        %v5743 = vadd.f32 0.0, %v5742
        %5744 = vmatmul.bf16.gmra.mxu0 %v5719
        %v5745 = vpop.f32.mrf.mxu0
        %v5746 = vadd.f32 0.0, %v5745
        %v5747 = vpop.f32.mrf.mxu0
        %v5748 = vadd.f32 0.0, %v5747
        %5749 = vdwg.mxu0
        %v5750 = vadd.f32 %v5549, %v5731
        %v5751 = vadd.f32 %v5550, %v5733
        %v5752 = vadd.f32 %v5551, %v5736
        %v5753 = vadd.f32 %v5552, %v5738
        %v5754 = vadd.f32 %v5553, %v5741
        %v5755 = vadd.f32 %v5554, %v5743
        %v5756 = vadd.f32 %v5555, %v5746
        %v5757 = vadd.f32 %v5556, %v5748
        %s5758 = scalar_lea.vmem %s3, 1472
        %v5759 = vld [vmem:[%s5758] sm:$0xff]
        %v5760 = vld [vmem:[%s5758 + $0x8] sm:$0xff]
        %v5761 = vld [vmem:[%s5758 + $0x10] sm:$0xff]
        %v5762 = vld [vmem:[%s5758 + $0x18] sm:$0xff]
        %v5763 = vld [vmem:[%s5758 + $0x20] sm:$0xff]
        %v5764 = vld [vmem:[%s5758 + $0x28] sm:$0xff]
        %v5765 = vld [vmem:[%s5758 + $0x30] sm:$0xff]
        %v5766 = vld [vmem:[%s5758 + $0x38] sm:$0xff]
        %v5775 = vunpack.c.l.b16 %v5759
        %v5776 = vunpack.c.h.b16 %v5759
        %v5777 = vunpack.c.l.b16 %v5760
        %v5778 = vunpack.c.h.b16 %v5760
        %v5779 = vunpack.c.l.b16 %v5761
        %v5780 = vunpack.c.h.b16 %v5761
        %v5781 = vunpack.c.l.b16 %v5762
        %v5782 = vunpack.c.h.b16 %v5762
        %v5783 = vunpack.c.l.b16 %v5763
        %v5784 = vunpack.c.h.b16 %v5763
        %v5785 = vunpack.c.l.b16 %v5764
        %v5786 = vunpack.c.h.b16 %v5764
        %v5787 = vunpack.c.l.b16 %v5765
        %v5788 = vunpack.c.h.b16 %v5765
        %v5789 = vunpack.c.l.b16 %v5766
        %v5790 = vunpack.c.h.b16 %v5766
        %v5791 = vpack.c.b16 %v5777, %v5775
        %v5792 = vpack.c.b16 %v5778, %v5776
        %v5793 = vpack.c.b16 %v5781, %v5779
        %v5794 = vpack.c.b16 %v5782, %v5780
        %v5795 = vpack.c.b16 %v5785, %v5783
        %v5796 = vpack.c.b16 %v5786, %v5784
        %v5797 = vpack.c.b16 %v5789, %v5787
        %v5798 = vpack.c.b16 %v5790, %v5788
        %v5804 = vsel %vm1195, %v5792, 0
        %v5807 = vsel %vm1195, %v5794, 0
        %v5810 = vsel %vm1195, %v5796, 0
        %v5813 = vsel %vm1195, %v5798, 0
        %5815 = vmatpush.bf16.msra.mxu0 %v1149
        %5816 = vmatpush.bf16.msra.mxu0 %v1148
        %5817 = vmatpush.bf16.msra.mxu0 %v1147
        %5818 = vmatpush.bf16.msra.mxu0 %v1146
        %5819 = vmatpush.bf16.msra.mxu0 %v1145
        %5820 = vmatpush.bf16.msra.mxu0 %v1144
        %5821 = vmatpush.bf16.msra.mxu0 %v1143
        %5822 = vmatpush.bf16.msra.mxu0 %v1142
        %5823 = vmatmul.bf16.gmra.mxu0 %v5791
        %v5824 = vpop.f32.mrf.mxu0
        %v5825 = vadd.f32 0.0, %v5824
        %v5826 = vpop.f32.mrf.mxu0
        %v5827 = vadd.f32 0.0, %v5826
        %5828 = vmatmul.bf16.gmra.mxu0 %v5793
        %v5829 = vpop.f32.mrf.mxu0
        %v5830 = vadd.f32 0.0, %v5829
        %v5831 = vpop.f32.mrf.mxu0
        %v5832 = vadd.f32 0.0, %v5831
        %5833 = vmatmul.bf16.gmra.mxu0 %v5795
        %v5834 = vpop.f32.mrf.mxu0
        %v5835 = vadd.f32 0.0, %v5834
        %v5836 = vpop.f32.mrf.mxu0
        %v5837 = vadd.f32 0.0, %v5836
        %5838 = vmatmul.bf16.gmra.mxu0 %v5797
        %v5839 = vpop.f32.mrf.mxu0
        %v5840 = vadd.f32 0.0, %v5839
        %v5841 = vpop.f32.mrf.mxu0
        %v5842 = vadd.f32 0.0, %v5841
        %5843 = vdwg.mxu0
        %5844 = vmatpush.bf16.msra.mxu0 0
        %5845 = vmatpush.bf16.msra.mxu0 0
        %5846 = vmatpush.bf16.msra.mxu0 0
        %5847 = vmatpush.bf16.msra.mxu0 0
        %5848 = vmatpush.bf16.msra.mxu0 0
        %5849 = vmatpush.bf16.msra.mxu0 0
        %5850 = vmatpush.bf16.msra.mxu0 0
        %5851 = vmatpush.bf16.msra.mxu0 %v1150
        %5852 = vmatmul.bf16.gmra.mxu0 %v5804
        %v5853 = vpop.f32.mrf.mxu0
        %v5854 = vadd.f32 %v5825, %v5853
        %v5855 = vpop.f32.mrf.mxu0
        %v5856 = vadd.f32 %v5827, %v5855
        %5857 = vmatmul.bf16.gmra.mxu0 %v5807
        %v5858 = vpop.f32.mrf.mxu0
        %v5859 = vadd.f32 %v5830, %v5858
        %v5860 = vpop.f32.mrf.mxu0
        %v5861 = vadd.f32 %v5832, %v5860
        %5862 = vmatmul.bf16.gmra.mxu0 %v5810
        %v5863 = vpop.f32.mrf.mxu0
        %v5864 = vadd.f32 %v5835, %v5863
        %v5865 = vpop.f32.mrf.mxu0
        %v5866 = vadd.f32 %v5837, %v5865
        %5867 = vmatmul.bf16.gmra.mxu0 %v5813
        %v5868 = vpop.f32.mrf.mxu0
        %v5869 = vadd.f32 %v5840, %v5868
        %v5870 = vpop.f32.mrf.mxu0
        %v5871 = vadd.f32 %v5842, %v5870
        %5872 = vdwg.mxu0
        %v5873 = vpack.c.bf16 %v5856, %v5854
        %v5874 = vpack.c.bf16 %v5861, %v5859
        %v5875 = vpack.c.bf16 %v5866, %v5864
        %v5876 = vpack.c.bf16 %v5871, %v5869
        %s5877 = scalar_lea.vmem %s4, 736
        %v5878 = vld [vmem:[%s5877] sm:$0xf]
        %v5879 = vld [vmem:[%s5877 + $0x4] sm:$0xf]
        %v5880 = vld [vmem:[%s5877 + $0x8] sm:$0xf]
        %v5881 = vld [vmem:[%s5877 + $0xc] sm:$0xf]
        %v5882 = vld [vmem:[%s5877 + $0x10] sm:$0xf]
        %v5883 = vld [vmem:[%s5877 + $0x14] sm:$0xf]
        %v5884 = vld [vmem:[%s5877 + $0x18] sm:$0xf]
        %v5885 = vld [vmem:[%s5877 + $0x1c] sm:$0xf]
        %v5894 = vunpack.c.l.b16 %v5878
        %v5895 = vunpack.c.l.b16 %v5879
        %v5896 = vunpack.c.l.b16 %v5880
        %v5897 = vunpack.c.l.b16 %v5881
        %v5898 = vunpack.c.l.b16 %v5882
        %v5899 = vunpack.c.l.b16 %v5883
        %v5900 = vunpack.c.l.b16 %v5884
        %v5901 = vunpack.c.l.b16 %v5885
        %v5902 = vpack.c.b16 %v5895, %v5894
        %v5903 = vpack.c.b16 %v5897, %v5896
        %v5904 = vpack.c.b16 %v5899, %v5898
        %v5905 = vpack.c.b16 %v5901, %v5900
        %v5911 = vsel %vm1430, %v5873, 0
        %v5914 = vsel %vm1430, %v5874, 0
        %v5917 = vsel %vm1430, %v5875, 0
        %v5920 = vsel %vm1430, %v5876, 0
        %5922 = vmatpush.bf16.msra.mxu0 0
        %5923 = vmatpush.bf16.msra.mxu0 0
        %5924 = vmatpush.bf16.msra.mxu0 0
        %5925 = vmatpush.bf16.msra.mxu0 0
        %5926 = vmatpush.bf16.msra.mxu0 %v5905
        %5927 = vmatpush.bf16.msra.mxu0 %v5904
        %5928 = vmatpush.bf16.msra.mxu0 %v5903
        %5929 = vmatpush.bf16.msra.mxu0 %v5902
        %5930 = vmatmul.bf16.gmra.mxu0 %v5911
        %v5931 = vpop.f32.mrf.mxu0
        %v5932 = vadd.f32 0.0, %v5931
        %v5933 = vpop.f32.mrf.mxu0
        %v5934 = vadd.f32 0.0, %v5933
        %5935 = vmatmul.bf16.gmra.mxu0 %v5914
        %v5936 = vpop.f32.mrf.mxu0
        %v5937 = vadd.f32 0.0, %v5936
        %v5938 = vpop.f32.mrf.mxu0
        %v5939 = vadd.f32 0.0, %v5938
        %5940 = vmatmul.bf16.gmra.mxu0 %v5917
        %v5941 = vpop.f32.mrf.mxu0
        %v5942 = vadd.f32 0.0, %v5941
        %v5943 = vpop.f32.mrf.mxu0
        %v5944 = vadd.f32 0.0, %v5943
        %5945 = vmatmul.bf16.gmra.mxu0 %v5920
        %v5946 = vpop.f32.mrf.mxu0
        %v5947 = vadd.f32 0.0, %v5946
        %v5948 = vpop.f32.mrf.mxu0
        %v5949 = vadd.f32 0.0, %v5948
        %5950 = vdwg.mxu0
        %v5951 = vadd.f32 %v5750, %v5932
        %v5952 = vadd.f32 %v5751, %v5934
        %v5953 = vadd.f32 %v5752, %v5937
        %v5954 = vadd.f32 %v5753, %v5939
        %v5955 = vadd.f32 %v5754, %v5942
        %v5956 = vadd.f32 %v5755, %v5944
        %v5957 = vadd.f32 %v5756, %v5947
        %v5958 = vadd.f32 %v5757, %v5949
        %s5959 = scalar_lea.vmem %s3, 1536
        %v5960 = vld [vmem:[%s5959] sm:$0xff]
        %v5961 = vld [vmem:[%s5959 + $0x8] sm:$0xff]
        %v5962 = vld [vmem:[%s5959 + $0x10] sm:$0xff]
        %v5963 = vld [vmem:[%s5959 + $0x18] sm:$0xff]
        %v5964 = vld [vmem:[%s5959 + $0x20] sm:$0xff]
        %v5965 = vld [vmem:[%s5959 + $0x28] sm:$0xff]
        %v5966 = vld [vmem:[%s5959 + $0x30] sm:$0xff]
        %v5967 = vld [vmem:[%s5959 + $0x38] sm:$0xff]
        %v5976 = vunpack.c.l.b16 %v5960
        %v5977 = vunpack.c.h.b16 %v5960
        %v5978 = vunpack.c.l.b16 %v5961
        %v5979 = vunpack.c.h.b16 %v5961
        %v5980 = vunpack.c.l.b16 %v5962
        %v5981 = vunpack.c.h.b16 %v5962
        %v5982 = vunpack.c.l.b16 %v5963
        %v5983 = vunpack.c.h.b16 %v5963
        %v5984 = vunpack.c.l.b16 %v5964
        %v5985 = vunpack.c.h.b16 %v5964
        %v5986 = vunpack.c.l.b16 %v5965
        %v5987 = vunpack.c.h.b16 %v5965
        %v5988 = vunpack.c.l.b16 %v5966
        %v5989 = vunpack.c.h.b16 %v5966
        %v5990 = vunpack.c.l.b16 %v5967
        %v5991 = vunpack.c.h.b16 %v5967
        %v5992 = vpack.c.b16 %v5978, %v5976
        %v5993 = vpack.c.b16 %v5979, %v5977
        %v5994 = vpack.c.b16 %v5982, %v5980
        %v5995 = vpack.c.b16 %v5983, %v5981
        %v5996 = vpack.c.b16 %v5986, %v5984
        %v5997 = vpack.c.b16 %v5987, %v5985
        %v5998 = vpack.c.b16 %v5990, %v5988
        %v5999 = vpack.c.b16 %v5991, %v5989
        %v6005 = vsel %vm1195, %v5993, 0
        %v6008 = vsel %vm1195, %v5995, 0
        %v6011 = vsel %vm1195, %v5997, 0
        %v6014 = vsel %vm1195, %v5999, 0
        %6016 = vmatpush.bf16.msra.mxu0 %v1149
        %6017 = vmatpush.bf16.msra.mxu0 %v1148
        %6018 = vmatpush.bf16.msra.mxu0 %v1147
        %6019 = vmatpush.bf16.msra.mxu0 %v1146
        %6020 = vmatpush.bf16.msra.mxu0 %v1145
        %6021 = vmatpush.bf16.msra.mxu0 %v1144
        %6022 = vmatpush.bf16.msra.mxu0 %v1143
        %6023 = vmatpush.bf16.msra.mxu0 %v1142
        %6024 = vmatmul.bf16.gmra.mxu0 %v5992
        %v6025 = vpop.f32.mrf.mxu0
        %v6026 = vadd.f32 0.0, %v6025
        %v6027 = vpop.f32.mrf.mxu0
        %v6028 = vadd.f32 0.0, %v6027
        %6029 = vmatmul.bf16.gmra.mxu0 %v5994
        %v6030 = vpop.f32.mrf.mxu0
        %v6031 = vadd.f32 0.0, %v6030
        %v6032 = vpop.f32.mrf.mxu0
        %v6033 = vadd.f32 0.0, %v6032
        %6034 = vmatmul.bf16.gmra.mxu0 %v5996
        %v6035 = vpop.f32.mrf.mxu0
        %v6036 = vadd.f32 0.0, %v6035
        %v6037 = vpop.f32.mrf.mxu0
        %v6038 = vadd.f32 0.0, %v6037
        %6039 = vmatmul.bf16.gmra.mxu0 %v5998
        %v6040 = vpop.f32.mrf.mxu0
        %v6041 = vadd.f32 0.0, %v6040
        %v6042 = vpop.f32.mrf.mxu0
        %v6043 = vadd.f32 0.0, %v6042
        %6044 = vdwg.mxu0
        %6045 = vmatpush.bf16.msra.mxu0 0
        %6046 = vmatpush.bf16.msra.mxu0 0
        %6047 = vmatpush.bf16.msra.mxu0 0
        %6048 = vmatpush.bf16.msra.mxu0 0
        %6049 = vmatpush.bf16.msra.mxu0 0
        %6050 = vmatpush.bf16.msra.mxu0 0
        %6051 = vmatpush.bf16.msra.mxu0 0
        %6052 = vmatpush.bf16.msra.mxu0 %v1150
        %6053 = vmatmul.bf16.gmra.mxu0 %v6005
        %v6054 = vpop.f32.mrf.mxu0
        %v6055 = vadd.f32 %v6026, %v6054
        %v6056 = vpop.f32.mrf.mxu0
        %v6057 = vadd.f32 %v6028, %v6056
        %6058 = vmatmul.bf16.gmra.mxu0 %v6008
        %v6059 = vpop.f32.mrf.mxu0
        %v6060 = vadd.f32 %v6031, %v6059
        %v6061 = vpop.f32.mrf.mxu0
        %v6062 = vadd.f32 %v6033, %v6061
        %6063 = vmatmul.bf16.gmra.mxu0 %v6011
        %v6064 = vpop.f32.mrf.mxu0
        %v6065 = vadd.f32 %v6036, %v6064
        %v6066 = vpop.f32.mrf.mxu0
        %v6067 = vadd.f32 %v6038, %v6066
        %6068 = vmatmul.bf16.gmra.mxu0 %v6014
        %v6069 = vpop.f32.mrf.mxu0
        %v6070 = vadd.f32 %v6041, %v6069
        %v6071 = vpop.f32.mrf.mxu0
        %v6072 = vadd.f32 %v6043, %v6071
        %6073 = vdwg.mxu0
        %v6074 = vpack.c.bf16 %v6057, %v6055
        %v6075 = vpack.c.bf16 %v6062, %v6060
        %v6076 = vpack.c.bf16 %v6067, %v6065
        %v6077 = vpack.c.bf16 %v6072, %v6070
        %s6078 = scalar_lea.vmem %s4, 768
        %v6079 = vld [vmem:[%s6078] sm:$0xf]
        %v6080 = vld [vmem:[%s6078 + $0x4] sm:$0xf]
        %v6081 = vld [vmem:[%s6078 + $0x8] sm:$0xf]
        %v6082 = vld [vmem:[%s6078 + $0xc] sm:$0xf]
        %v6083 = vld [vmem:[%s6078 + $0x10] sm:$0xf]
        %v6084 = vld [vmem:[%s6078 + $0x14] sm:$0xf]
        %v6085 = vld [vmem:[%s6078 + $0x18] sm:$0xf]
        %v6086 = vld [vmem:[%s6078 + $0x1c] sm:$0xf]
        %v6095 = vunpack.c.l.b16 %v6079
        %v6096 = vunpack.c.l.b16 %v6080
        %v6097 = vunpack.c.l.b16 %v6081
        %v6098 = vunpack.c.l.b16 %v6082
        %v6099 = vunpack.c.l.b16 %v6083
        %v6100 = vunpack.c.l.b16 %v6084
        %v6101 = vunpack.c.l.b16 %v6085
        %v6102 = vunpack.c.l.b16 %v6086
        %v6103 = vpack.c.b16 %v6096, %v6095
        %v6104 = vpack.c.b16 %v6098, %v6097
        %v6105 = vpack.c.b16 %v6100, %v6099
        %v6106 = vpack.c.b16 %v6102, %v6101
        %v6112 = vsel %vm1430, %v6074, 0
        %v6115 = vsel %vm1430, %v6075, 0
        %v6118 = vsel %vm1430, %v6076, 0
        %v6121 = vsel %vm1430, %v6077, 0
        %6123 = vmatpush.bf16.msra.mxu0 0
        %6124 = vmatpush.bf16.msra.mxu0 0
        %6125 = vmatpush.bf16.msra.mxu0 0
        %6126 = vmatpush.bf16.msra.mxu0 0
        %6127 = vmatpush.bf16.msra.mxu0 %v6106
        %6128 = vmatpush.bf16.msra.mxu0 %v6105
        %6129 = vmatpush.bf16.msra.mxu0 %v6104
        %6130 = vmatpush.bf16.msra.mxu0 %v6103
        %6131 = vmatmul.bf16.gmra.mxu0 %v6112
        %v6132 = vpop.f32.mrf.mxu0
        %v6133 = vadd.f32 0.0, %v6132
        %v6134 = vpop.f32.mrf.mxu0
        %v6135 = vadd.f32 0.0, %v6134
        %6136 = vmatmul.bf16.gmra.mxu0 %v6115
        %v6137 = vpop.f32.mrf.mxu0
        %v6138 = vadd.f32 0.0, %v6137
        %v6139 = vpop.f32.mrf.mxu0
        %v6140 = vadd.f32 0.0, %v6139
        %6141 = vmatmul.bf16.gmra.mxu0 %v6118
        %v6142 = vpop.f32.mrf.mxu0
        %v6143 = vadd.f32 0.0, %v6142
        %v6144 = vpop.f32.mrf.mxu0
        %v6145 = vadd.f32 0.0, %v6144
        %6146 = vmatmul.bf16.gmra.mxu0 %v6121
        %v6147 = vpop.f32.mrf.mxu0
        %v6148 = vadd.f32 0.0, %v6147
        %v6149 = vpop.f32.mrf.mxu0
        %v6150 = vadd.f32 0.0, %v6149
        %6151 = vdwg.mxu0
        %v6152 = vadd.f32 %v5951, %v6133
        %v6153 = vadd.f32 %v5952, %v6135
        %v6154 = vadd.f32 %v5953, %v6138
        %v6155 = vadd.f32 %v5954, %v6140
        %v6156 = vadd.f32 %v5955, %v6143
        %v6157 = vadd.f32 %v5956, %v6145
        %v6158 = vadd.f32 %v5957, %v6148
        %v6159 = vadd.f32 %v5958, %v6150
        %v6160 = vld [vmem:[%s5] sm:$0x1]
        %v6162 = vperm.slane %v6160, 0
        %v6164 = vadd.f32 %v6152, %v6162
        %v6165 = vadd.f32 %v6153, %v6162
        %v6166 = vadd.f32 %v6154, %v6162
        %v6167 = vadd.f32 %v6155, %v6162
        %v6168 = vadd.f32 %v6156, %v6162
        %v6169 = vadd.f32 %v6157, %v6162
        %v6170 = vadd.f32 %v6158, %v6162
        %v6171 = vadd.f32 %v6159, %v6162
        %v6172 = vmax.f32 %v6164, 0.0
        %v6173 = vmax.f32 %v6165, 0.0
        %v6174 = vmax.f32 %v6166, 0.0
        %v6175 = vmax.f32 %v6167, 0.0
        %v6176 = vmax.f32 %v6168, 0.0
        %v6177 = vmax.f32 %v6169, 0.0
        %v6178 = vmax.f32 %v6170, 0.0
        %v6179 = vmax.f32 %v6171, 0.0
        %v6180 = vmax.f32 %v6172, %v6174
        %v6181 = vmax.f32 %v6173, %v6175
        %v6182 = vmax.f32 %v6176, %v6178
        %v6183 = vmax.f32 %v6177, %v6179
        %v6184 = vmax.f32 %v6180, %v6182
        %v6185 = vmax.f32 %v6181, %v6183
        %v6186 = vld [vmem:[%s7] sm:$0x7]
        %v6187 = vpack.c.bf16 %v6184, %v6184
        %v6188 = vld [vmem:[%s6] sm:$0xff]
        %v6189 = vld [vmem:[%s6 + $0x8] sm:$0xf]
        %v6190 = vld [vmem:[%s6 + $0xc] sm:$0xff]
        %v6191 = vld [vmem:[%s6 + $0x14] sm:$0xf]
        %v6192 = vld [vmem:[%s6 + $0x18] sm:$0xff]
        %v6193 = vld [vmem:[%s6 + $0x20] sm:$0xf]
        %v6194 = vld [vmem:[%s6 + $0x24] sm:$0xff]
        %v6195 = vld [vmem:[%s6 + $0x2c] sm:$0xf]
        %v6196 = vld [vmem:[%s6 + $0x30] sm:$0xff]
        %v6197 = vld [vmem:[%s6 + $0x38] sm:$0xf]
        %v6198 = vld [vmem:[%s6 + $0x3c] sm:$0xff]
        %v6199 = vld [vmem:[%s6 + $0x44] sm:$0xf]
        %v6200 = vld [vmem:[%s6 + $0x48] sm:$0xff]
        %v6201 = vld [vmem:[%s6 + $0x50] sm:$0xf]
        %v6202 = vld [vmem:[%s6 + $0x54] sm:$0xff]
        %v6203 = vld [vmem:[%s6 + $0x5c] sm:$0xf]
        %v6220 = vunpack.c.l.b16 %v6188
        %v6221 = vunpack.c.h.b16 %v6188
        %v6222 = vunpack.c.l.b16 %v6189
        %v6223 = vunpack.c.l.b16 %v6190
        %v6224 = vunpack.c.h.b16 %v6190
        %v6225 = vunpack.c.l.b16 %v6191
        %v6226 = vunpack.c.l.b16 %v6192
        %v6227 = vunpack.c.h.b16 %v6192
        %v6228 = vunpack.c.l.b16 %v6193
        %v6229 = vunpack.c.l.b16 %v6194
        %v6230 = vunpack.c.h.b16 %v6194
        %v6231 = vunpack.c.l.b16 %v6195
        %v6232 = vunpack.c.l.b16 %v6196
        %v6233 = vunpack.c.h.b16 %v6196
        %v6234 = vunpack.c.l.b16 %v6197
        %v6235 = vunpack.c.l.b16 %v6198
        %v6236 = vunpack.c.h.b16 %v6198
        %v6237 = vunpack.c.l.b16 %v6199
        %v6238 = vunpack.c.l.b16 %v6200
        %v6239 = vunpack.c.h.b16 %v6200
        %v6240 = vunpack.c.l.b16 %v6201
        %v6241 = vunpack.c.l.b16 %v6202
        %v6242 = vunpack.c.h.b16 %v6202
        %v6243 = vunpack.c.l.b16 %v6203
        %v6244 = vpack.c.b16 %v6223, %v6220
        %v6245 = vpack.c.b16 %v6224, %v6221
        %v6246 = vpack.c.b16 %v6225, %v6222
        %v6247 = vpack.c.b16 %v6229, %v6226
        %v6248 = vpack.c.b16 %v6230, %v6227
        %v6249 = vpack.c.b16 %v6231, %v6228
        %v6250 = vpack.c.b16 %v6235, %v6232
        %v6251 = vpack.c.b16 %v6236, %v6233
        %v6252 = vpack.c.b16 %v6237, %v6234
        %v6253 = vpack.c.b16 %v6241, %v6238
        %v6254 = vpack.c.b16 %v6242, %v6239
        %v6255 = vpack.c.b16 %v6243, %v6240
        %v6269 = vsel %vm1430, %v6187, 0
        %6271 = vmatpush.bf16.msra.mxu0 0
        %6272 = vmatpush.bf16.msra.mxu0 0
        %6273 = vmatpush.bf16.msra.mxu0 0
        %6274 = vmatpush.bf16.msra.mxu0 0
        %6275 = vmatpush.bf16.msra.mxu0 %v6253
        %6276 = vmatpush.bf16.msra.mxu0 %v6250
        %6277 = vmatpush.bf16.msra.mxu0 %v6247
        %6278 = vmatpush.bf16.msra.mxu0 %v6244
        %6279 = vmatmul.bf16.gmra.mxu0 %v6269
        %v6280 = vpop.f32.mrf.mxu0
        %v6281 = vadd.f32 0.0, %v6280
        %v6282 = vpop.f32.mrf.mxu0
        %6283 = vdwg.mxu0
        %6284 = vmatpush.bf16.msra.mxu0 0
        %6285 = vmatpush.bf16.msra.mxu0 0
        %6286 = vmatpush.bf16.msra.mxu0 0
        %6287 = vmatpush.bf16.msra.mxu0 0
        %6288 = vmatpush.bf16.msra.mxu0 %v6254
        %6289 = vmatpush.bf16.msra.mxu0 %v6251
        %6290 = vmatpush.bf16.msra.mxu0 %v6248
        %6291 = vmatpush.bf16.msra.mxu0 %v6245
        %6292 = vmatmul.bf16.gmra.mxu0 %v6269
        %v6293 = vpop.f32.mrf.mxu0
        %v6294 = vadd.f32 0.0, %v6293
        %v6295 = vpop.f32.mrf.mxu0
        %6296 = vdwg.mxu0
        %6297 = vmatpush.bf16.msra.mxu0 0
        %6298 = vmatpush.bf16.msra.mxu0 0
        %6299 = vmatpush.bf16.msra.mxu0 0
        %6300 = vmatpush.bf16.msra.mxu0 0
        %6301 = vmatpush.bf16.msra.mxu0 %v6255
        %6302 = vmatpush.bf16.msra.mxu0 %v6252
        %6303 = vmatpush.bf16.msra.mxu0 %v6249
        %6304 = vmatpush.bf16.msra.mxu0 %v6246
        %6305 = vmatmul.bf16.gmra.mxu0 %v6269
        %v6306 = vpop.f32.mrf.mxu0
        %v6307 = vadd.f32 0.0, %v6306
        %v6308 = vpop.f32.mrf.mxu0
        %6309 = vdwg.mxu0
        %v6313 = vrot.slane %v6294, 7
        %v6314 = vrot.slane %v6307, 6
        %vm6315 = vcmask 1040384
        %v6316 = vsel %vm6315, %v6281, %v6313
        %vm6317 = vcmask 1041408
        %v6318 = vsel %vm6317, %v6316, %v6314
        %v6320 = vadd.f32 %v6186, %v6318
        %s6321 = scalar_lea.vmem %s6, 96
        %v6322 = vld [vmem:[%s6321] sm:$0xff]
        %v6323 = vld [vmem:[%s6321 + $0x8] sm:$0xf]
        %v6324 = vld [vmem:[%s6321 + $0xc] sm:$0xff]
        %v6325 = vld [vmem:[%s6321 + $0x14] sm:$0xf]
        %v6326 = vld [vmem:[%s6321 + $0x18] sm:$0xff]
        %v6327 = vld [vmem:[%s6321 + $0x20] sm:$0xf]
        %v6328 = vld [vmem:[%s6321 + $0x24] sm:$0xff]
        %v6329 = vld [vmem:[%s6321 + $0x2c] sm:$0xf]
        %v6330 = vld [vmem:[%s6321 + $0x30] sm:$0xff]
        %v6331 = vld [vmem:[%s6321 + $0x38] sm:$0xf]
        %v6332 = vld [vmem:[%s6321 + $0x3c] sm:$0xff]
        %v6333 = vld [vmem:[%s6321 + $0x44] sm:$0xf]
        %v6334 = vld [vmem:[%s6321 + $0x48] sm:$0xff]
        %v6335 = vld [vmem:[%s6321 + $0x50] sm:$0xf]
        %v6336 = vld [vmem:[%s6321 + $0x54] sm:$0xff]
        %v6337 = vld [vmem:[%s6321 + $0x5c] sm:$0xf]
        %v6338 = vshrl.u32 %v6187, 16
        %v6356 = vunpack.c.l.b16 %v6322
        %v6357 = vunpack.c.h.b16 %v6322
        %v6358 = vunpack.c.l.b16 %v6323
        %v6359 = vunpack.c.l.b16 %v6324
        %v6360 = vunpack.c.h.b16 %v6324
        %v6361 = vunpack.c.l.b16 %v6325
        %v6362 = vunpack.c.l.b16 %v6326
        %v6363 = vunpack.c.h.b16 %v6326
        %v6364 = vunpack.c.l.b16 %v6327
        %v6365 = vunpack.c.l.b16 %v6328
        %v6366 = vunpack.c.h.b16 %v6328
        %v6367 = vunpack.c.l.b16 %v6329
        %v6368 = vunpack.c.l.b16 %v6330
        %v6369 = vunpack.c.h.b16 %v6330
        %v6370 = vunpack.c.l.b16 %v6331
        %v6371 = vunpack.c.l.b16 %v6332
        %v6372 = vunpack.c.h.b16 %v6332
        %v6373 = vunpack.c.l.b16 %v6333
        %v6374 = vunpack.c.l.b16 %v6334
        %v6375 = vunpack.c.h.b16 %v6334
        %v6376 = vunpack.c.l.b16 %v6335
        %v6377 = vunpack.c.l.b16 %v6336
        %v6378 = vunpack.c.h.b16 %v6336
        %v6379 = vunpack.c.l.b16 %v6337
        %v6380 = vpack.c.b16 %v6359, %v6356
        %v6381 = vpack.c.b16 %v6360, %v6357
        %v6382 = vpack.c.b16 %v6361, %v6358
        %v6383 = vpack.c.b16 %v6365, %v6362
        %v6384 = vpack.c.b16 %v6366, %v6363
        %v6385 = vpack.c.b16 %v6367, %v6364
        %v6386 = vpack.c.b16 %v6371, %v6368
        %v6387 = vpack.c.b16 %v6372, %v6369
        %v6388 = vpack.c.b16 %v6373, %v6370
        %v6389 = vpack.c.b16 %v6377, %v6374
        %v6390 = vpack.c.b16 %v6378, %v6375
        %v6391 = vpack.c.b16 %v6379, %v6376
        %v6405 = vsel %vm1430, %v6338, 0
        %6407 = vmatpush.bf16.msra.mxu0 0
        %6408 = vmatpush.bf16.msra.mxu0 0
        %6409 = vmatpush.bf16.msra.mxu0 0
        %6410 = vmatpush.bf16.msra.mxu0 0
        %6411 = vmatpush.bf16.msra.mxu0 %v6389
        %6412 = vmatpush.bf16.msra.mxu0 %v6386
        %6413 = vmatpush.bf16.msra.mxu0 %v6383
        %6414 = vmatpush.bf16.msra.mxu0 %v6380
        %6415 = vmatmul.bf16.gmra.mxu0 %v6405
        %v6416 = vpop.f32.mrf.mxu0
        %v6417 = vadd.f32 0.0, %v6416
        %v6418 = vpop.f32.mrf.mxu0
        %6419 = vdwg.mxu0
        %6420 = vmatpush.bf16.msra.mxu0 0
        %6421 = vmatpush.bf16.msra.mxu0 0
        %6422 = vmatpush.bf16.msra.mxu0 0
        %6423 = vmatpush.bf16.msra.mxu0 0
        %6424 = vmatpush.bf16.msra.mxu0 %v6390
        %6425 = vmatpush.bf16.msra.mxu0 %v6387
        %6426 = vmatpush.bf16.msra.mxu0 %v6384
        %6427 = vmatpush.bf16.msra.mxu0 %v6381
        %6428 = vmatmul.bf16.gmra.mxu0 %v6405
        %v6429 = vpop.f32.mrf.mxu0
        %v6430 = vadd.f32 0.0, %v6429
        %v6431 = vpop.f32.mrf.mxu0
        %6432 = vdwg.mxu0
        %6433 = vmatpush.bf16.msra.mxu0 0
        %6434 = vmatpush.bf16.msra.mxu0 0
        %6435 = vmatpush.bf16.msra.mxu0 0
        %6436 = vmatpush.bf16.msra.mxu0 0
        %6437 = vmatpush.bf16.msra.mxu0 %v6391
        %6438 = vmatpush.bf16.msra.mxu0 %v6388
        %6439 = vmatpush.bf16.msra.mxu0 %v6385
        %6440 = vmatpush.bf16.msra.mxu0 %v6382
        %6441 = vmatmul.bf16.gmra.mxu0 %v6405
        %v6442 = vpop.f32.mrf.mxu0
        %v6443 = vadd.f32 0.0, %v6442
        %v6444 = vpop.f32.mrf.mxu0
        %6445 = vdwg.mxu0
        %v6449 = vrot.slane %v6430, 7
        %v6450 = vrot.slane %v6443, 6
        %v6451 = vsel %vm6315, %v6417, %v6449
        %v6452 = vsel %vm6317, %v6451, %v6450
        %v6454 = vadd.f32 %v6320, %v6452
        %s6455 = scalar_lea.vmem %s6, 192
        %v6456 = vld [vmem:[%s6455] sm:$0xff]
        %v6457 = vld [vmem:[%s6455 + $0x8] sm:$0xf]
        %v6458 = vld [vmem:[%s6455 + $0xc] sm:$0xff]
        %v6459 = vld [vmem:[%s6455 + $0x14] sm:$0xf]
        %v6460 = vld [vmem:[%s6455 + $0x18] sm:$0xff]
        %v6461 = vld [vmem:[%s6455 + $0x20] sm:$0xf]
        %v6462 = vld [vmem:[%s6455 + $0x24] sm:$0xff]
        %v6463 = vld [vmem:[%s6455 + $0x2c] sm:$0xf]
        %v6464 = vld [vmem:[%s6455 + $0x30] sm:$0xff]
        %v6465 = vld [vmem:[%s6455 + $0x38] sm:$0xf]
        %v6466 = vld [vmem:[%s6455 + $0x3c] sm:$0xff]
        %v6467 = vld [vmem:[%s6455 + $0x44] sm:$0xf]
        %v6468 = vld [vmem:[%s6455 + $0x48] sm:$0xff]
        %v6469 = vld [vmem:[%s6455 + $0x50] sm:$0xf]
        %v6470 = vld [vmem:[%s6455 + $0x54] sm:$0xff]
        %v6471 = vld [vmem:[%s6455 + $0x5c] sm:$0xf]
        %v6473 = vrot.slane %v6187, 1
        %v6490 = vunpack.c.l.b16 %v6456
        %v6491 = vunpack.c.h.b16 %v6456
        %v6492 = vunpack.c.l.b16 %v6457
        %v6493 = vunpack.c.l.b16 %v6458
        %v6494 = vunpack.c.h.b16 %v6458
        %v6495 = vunpack.c.l.b16 %v6459
        %v6496 = vunpack.c.l.b16 %v6460
        %v6497 = vunpack.c.h.b16 %v6460
        %v6498 = vunpack.c.l.b16 %v6461
        %v6499 = vunpack.c.l.b16 %v6462
        %v6500 = vunpack.c.h.b16 %v6462
        %v6501 = vunpack.c.l.b16 %v6463
        %v6502 = vunpack.c.l.b16 %v6464
        %v6503 = vunpack.c.h.b16 %v6464
        %v6504 = vunpack.c.l.b16 %v6465
        %v6505 = vunpack.c.l.b16 %v6466
        %v6506 = vunpack.c.h.b16 %v6466
        %v6507 = vunpack.c.l.b16 %v6467
        %v6508 = vunpack.c.l.b16 %v6468
        %v6509 = vunpack.c.h.b16 %v6468
        %v6510 = vunpack.c.l.b16 %v6469
        %v6511 = vunpack.c.l.b16 %v6470
        %v6512 = vunpack.c.h.b16 %v6470
        %v6513 = vunpack.c.l.b16 %v6471
        %v6514 = vpack.c.b16 %v6493, %v6490
        %v6515 = vpack.c.b16 %v6494, %v6491
        %v6516 = vpack.c.b16 %v6495, %v6492
        %v6517 = vpack.c.b16 %v6499, %v6496
        %v6518 = vpack.c.b16 %v6500, %v6497
        %v6519 = vpack.c.b16 %v6501, %v6498
        %v6520 = vpack.c.b16 %v6505, %v6502
        %v6521 = vpack.c.b16 %v6506, %v6503
        %v6522 = vpack.c.b16 %v6507, %v6504
        %v6523 = vpack.c.b16 %v6511, %v6508
        %v6524 = vpack.c.b16 %v6512, %v6509
        %v6525 = vpack.c.b16 %v6513, %v6510
        %v6539 = vsel %vm1430, %v6473, 0
        %6541 = vmatpush.bf16.msra.mxu0 0
        %6542 = vmatpush.bf16.msra.mxu0 0
        %6543 = vmatpush.bf16.msra.mxu0 0
        %6544 = vmatpush.bf16.msra.mxu0 0
        %6545 = vmatpush.bf16.msra.mxu0 %v6523
        %6546 = vmatpush.bf16.msra.mxu0 %v6520
        %6547 = vmatpush.bf16.msra.mxu0 %v6517
        %6548 = vmatpush.bf16.msra.mxu0 %v6514
        %6549 = vmatmul.bf16.gmra.mxu0 %v6539
        %v6550 = vpop.f32.mrf.mxu0
        %v6551 = vadd.f32 0.0, %v6550
        %v6552 = vpop.f32.mrf.mxu0
        %6553 = vdwg.mxu0
        %6554 = vmatpush.bf16.msra.mxu0 0
        %6555 = vmatpush.bf16.msra.mxu0 0
        %6556 = vmatpush.bf16.msra.mxu0 0
        %6557 = vmatpush.bf16.msra.mxu0 0
        %6558 = vmatpush.bf16.msra.mxu0 %v6524
        %6559 = vmatpush.bf16.msra.mxu0 %v6521
        %6560 = vmatpush.bf16.msra.mxu0 %v6518
        %6561 = vmatpush.bf16.msra.mxu0 %v6515
        %6562 = vmatmul.bf16.gmra.mxu0 %v6539
        %v6563 = vpop.f32.mrf.mxu0
        %v6564 = vadd.f32 0.0, %v6563
        %v6565 = vpop.f32.mrf.mxu0
        %6566 = vdwg.mxu0
        %6567 = vmatpush.bf16.msra.mxu0 0
        %6568 = vmatpush.bf16.msra.mxu0 0
        %6569 = vmatpush.bf16.msra.mxu0 0
        %6570 = vmatpush.bf16.msra.mxu0 0
        %6571 = vmatpush.bf16.msra.mxu0 %v6525
        %6572 = vmatpush.bf16.msra.mxu0 %v6522
        %6573 = vmatpush.bf16.msra.mxu0 %v6519
        %6574 = vmatpush.bf16.msra.mxu0 %v6516
        %6575 = vmatmul.bf16.gmra.mxu0 %v6539
        %v6576 = vpop.f32.mrf.mxu0
        %v6577 = vadd.f32 0.0, %v6576
        %v6578 = vpop.f32.mrf.mxu0
        %6579 = vdwg.mxu0
        %v6583 = vrot.slane %v6564, 7
        %v6584 = vrot.slane %v6577, 6
        %v6585 = vsel %vm6315, %v6551, %v6583
        %v6586 = vsel %vm6317, %v6585, %v6584
        %v6588 = vadd.f32 %v6454, %v6586
        %s6589 = scalar_lea.vmem %s6, 288
        %v6590 = vld [vmem:[%s6589] sm:$0xff]
        %v6591 = vld [vmem:[%s6589 + $0x8] sm:$0xf]
        %v6592 = vld [vmem:[%s6589 + $0xc] sm:$0xff]
        %v6593 = vld [vmem:[%s6589 + $0x14] sm:$0xf]
        %v6594 = vld [vmem:[%s6589 + $0x18] sm:$0xff]
        %v6595 = vld [vmem:[%s6589 + $0x20] sm:$0xf]
        %v6596 = vld [vmem:[%s6589 + $0x24] sm:$0xff]
        %v6597 = vld [vmem:[%s6589 + $0x2c] sm:$0xf]
        %v6598 = vld [vmem:[%s6589 + $0x30] sm:$0xff]
        %v6599 = vld [vmem:[%s6589 + $0x38] sm:$0xf]
        %v6600 = vld [vmem:[%s6589 + $0x3c] sm:$0xff]
        %v6601 = vld [vmem:[%s6589 + $0x44] sm:$0xf]
        %v6602 = vld [vmem:[%s6589 + $0x48] sm:$0xff]
        %v6603 = vld [vmem:[%s6589 + $0x50] sm:$0xf]
        %v6604 = vld [vmem:[%s6589 + $0x54] sm:$0xff]
        %v6605 = vld [vmem:[%s6589 + $0x5c] sm:$0xf]
        %v6606 = vrot.slane %v6338, 1
        %v6623 = vunpack.c.l.b16 %v6590
        %v6624 = vunpack.c.h.b16 %v6590
        %v6625 = vunpack.c.l.b16 %v6591
        %v6626 = vunpack.c.l.b16 %v6592
        %v6627 = vunpack.c.h.b16 %v6592
        %v6628 = vunpack.c.l.b16 %v6593
        %v6629 = vunpack.c.l.b16 %v6594
        %v6630 = vunpack.c.h.b16 %v6594
        %v6631 = vunpack.c.l.b16 %v6595
        %v6632 = vunpack.c.l.b16 %v6596
        %v6633 = vunpack.c.h.b16 %v6596
        %v6634 = vunpack.c.l.b16 %v6597
        %v6635 = vunpack.c.l.b16 %v6598
        %v6636 = vunpack.c.h.b16 %v6598
        %v6637 = vunpack.c.l.b16 %v6599
        %v6638 = vunpack.c.l.b16 %v6600
        %v6639 = vunpack.c.h.b16 %v6600
        %v6640 = vunpack.c.l.b16 %v6601
        %v6641 = vunpack.c.l.b16 %v6602
        %v6642 = vunpack.c.h.b16 %v6602
        %v6643 = vunpack.c.l.b16 %v6603
        %v6644 = vunpack.c.l.b16 %v6604
        %v6645 = vunpack.c.h.b16 %v6604
        %v6646 = vunpack.c.l.b16 %v6605
        %v6647 = vpack.c.b16 %v6626, %v6623
        %v6648 = vpack.c.b16 %v6627, %v6624
        %v6649 = vpack.c.b16 %v6628, %v6625
        %v6650 = vpack.c.b16 %v6632, %v6629
        %v6651 = vpack.c.b16 %v6633, %v6630
        %v6652 = vpack.c.b16 %v6634, %v6631
        %v6653 = vpack.c.b16 %v6638, %v6635
        %v6654 = vpack.c.b16 %v6639, %v6636
        %v6655 = vpack.c.b16 %v6640, %v6637
        %v6656 = vpack.c.b16 %v6644, %v6641
        %v6657 = vpack.c.b16 %v6645, %v6642
        %v6658 = vpack.c.b16 %v6646, %v6643
        %v6672 = vsel %vm1430, %v6606, 0
        %6674 = vmatpush.bf16.msra.mxu0 0
        %6675 = vmatpush.bf16.msra.mxu0 0
        %6676 = vmatpush.bf16.msra.mxu0 0
        %6677 = vmatpush.bf16.msra.mxu0 0
        %6678 = vmatpush.bf16.msra.mxu0 %v6656
        %6679 = vmatpush.bf16.msra.mxu0 %v6653
        %6680 = vmatpush.bf16.msra.mxu0 %v6650
        %6681 = vmatpush.bf16.msra.mxu0 %v6647
        %6682 = vmatmul.bf16.gmra.mxu0 %v6672
        %v6683 = vpop.f32.mrf.mxu0
        %v6684 = vadd.f32 0.0, %v6683
        %v6685 = vpop.f32.mrf.mxu0
        %6686 = vdwg.mxu0
        %6687 = vmatpush.bf16.msra.mxu0 0
        %6688 = vmatpush.bf16.msra.mxu0 0
        %6689 = vmatpush.bf16.msra.mxu0 0
        %6690 = vmatpush.bf16.msra.mxu0 0
        %6691 = vmatpush.bf16.msra.mxu0 %v6657
        %6692 = vmatpush.bf16.msra.mxu0 %v6654
        %6693 = vmatpush.bf16.msra.mxu0 %v6651
        %6694 = vmatpush.bf16.msra.mxu0 %v6648
        %6695 = vmatmul.bf16.gmra.mxu0 %v6672
        %v6696 = vpop.f32.mrf.mxu0
        %v6697 = vadd.f32 0.0, %v6696
        %v6698 = vpop.f32.mrf.mxu0
        %6699 = vdwg.mxu0
        %6700 = vmatpush.bf16.msra.mxu0 0
        %6701 = vmatpush.bf16.msra.mxu0 0
        %6702 = vmatpush.bf16.msra.mxu0 0
        %6703 = vmatpush.bf16.msra.mxu0 0
        %6704 = vmatpush.bf16.msra.mxu0 %v6658
        %6705 = vmatpush.bf16.msra.mxu0 %v6655
        %6706 = vmatpush.bf16.msra.mxu0 %v6652
        %6707 = vmatpush.bf16.msra.mxu0 %v6649
        %6708 = vmatmul.bf16.gmra.mxu0 %v6672
        %v6709 = vpop.f32.mrf.mxu0
        %v6710 = vadd.f32 0.0, %v6709
        %v6711 = vpop.f32.mrf.mxu0
        %6712 = vdwg.mxu0
        %v6716 = vrot.slane %v6697, 7
        %v6717 = vrot.slane %v6710, 6
        %v6718 = vsel %vm6315, %v6684, %v6716
        %v6719 = vsel %vm6317, %v6718, %v6717
        %v6721 = vadd.f32 %v6588, %v6719
        %s6722 = scalar_lea.vmem %s6, 384
        %v6723 = vld [vmem:[%s6722] sm:$0xff]
        %v6724 = vld [vmem:[%s6722 + $0x8] sm:$0xf]
        %v6725 = vld [vmem:[%s6722 + $0xc] sm:$0xff]
        %v6726 = vld [vmem:[%s6722 + $0x14] sm:$0xf]
        %v6727 = vld [vmem:[%s6722 + $0x18] sm:$0xff]
        %v6728 = vld [vmem:[%s6722 + $0x20] sm:$0xf]
        %v6729 = vld [vmem:[%s6722 + $0x24] sm:$0xff]
        %v6730 = vld [vmem:[%s6722 + $0x2c] sm:$0xf]
        %v6731 = vld [vmem:[%s6722 + $0x30] sm:$0xff]
        %v6732 = vld [vmem:[%s6722 + $0x38] sm:$0xf]
        %v6733 = vld [vmem:[%s6722 + $0x3c] sm:$0xff]
        %v6734 = vld [vmem:[%s6722 + $0x44] sm:$0xf]
        %v6735 = vld [vmem:[%s6722 + $0x48] sm:$0xff]
        %v6736 = vld [vmem:[%s6722 + $0x50] sm:$0xf]
        %v6737 = vld [vmem:[%s6722 + $0x54] sm:$0xff]
        %v6738 = vld [vmem:[%s6722 + $0x5c] sm:$0xf]
        %v6739 = vrot.slane %v6187, 2
        %v6756 = vunpack.c.l.b16 %v6723
        %v6757 = vunpack.c.h.b16 %v6723
        %v6758 = vunpack.c.l.b16 %v6724
        %v6759 = vunpack.c.l.b16 %v6725
        %v6760 = vunpack.c.h.b16 %v6725
        %v6761 = vunpack.c.l.b16 %v6726
        %v6762 = vunpack.c.l.b16 %v6727
        %v6763 = vunpack.c.h.b16 %v6727
        %v6764 = vunpack.c.l.b16 %v6728
        %v6765 = vunpack.c.l.b16 %v6729
        %v6766 = vunpack.c.h.b16 %v6729
        %v6767 = vunpack.c.l.b16 %v6730
        %v6768 = vunpack.c.l.b16 %v6731
        %v6769 = vunpack.c.h.b16 %v6731
        %v6770 = vunpack.c.l.b16 %v6732
        %v6771 = vunpack.c.l.b16 %v6733
        %v6772 = vunpack.c.h.b16 %v6733
        %v6773 = vunpack.c.l.b16 %v6734
        %v6774 = vunpack.c.l.b16 %v6735
        %v6775 = vunpack.c.h.b16 %v6735
        %v6776 = vunpack.c.l.b16 %v6736
        %v6777 = vunpack.c.l.b16 %v6737
        %v6778 = vunpack.c.h.b16 %v6737
        %v6779 = vunpack.c.l.b16 %v6738
        %v6780 = vpack.c.b16 %v6759, %v6756
        %v6781 = vpack.c.b16 %v6760, %v6757
        %v6782 = vpack.c.b16 %v6761, %v6758
        %v6783 = vpack.c.b16 %v6765, %v6762
        %v6784 = vpack.c.b16 %v6766, %v6763
        %v6785 = vpack.c.b16 %v6767, %v6764
        %v6786 = vpack.c.b16 %v6771, %v6768
        %v6787 = vpack.c.b16 %v6772, %v6769
        %v6788 = vpack.c.b16 %v6773, %v6770
        %v6789 = vpack.c.b16 %v6777, %v6774
        %v6790 = vpack.c.b16 %v6778, %v6775
        %v6791 = vpack.c.b16 %v6779, %v6776
        %v6805 = vsel %vm1430, %v6739, 0
        %6807 = vmatpush.bf16.msra.mxu0 0
        %6808 = vmatpush.bf16.msra.mxu0 0
        %6809 = vmatpush.bf16.msra.mxu0 0
        %6810 = vmatpush.bf16.msra.mxu0 0
        %6811 = vmatpush.bf16.msra.mxu0 %v6789
        %6812 = vmatpush.bf16.msra.mxu0 %v6786
        %6813 = vmatpush.bf16.msra.mxu0 %v6783
        %6814 = vmatpush.bf16.msra.mxu0 %v6780
        %6815 = vmatmul.bf16.gmra.mxu0 %v6805
        %v6816 = vpop.f32.mrf.mxu0
        %v6817 = vadd.f32 0.0, %v6816
        %v6818 = vpop.f32.mrf.mxu0
        %6819 = vdwg.mxu0
        %6820 = vmatpush.bf16.msra.mxu0 0
        %6821 = vmatpush.bf16.msra.mxu0 0
        %6822 = vmatpush.bf16.msra.mxu0 0
        %6823 = vmatpush.bf16.msra.mxu0 0
        %6824 = vmatpush.bf16.msra.mxu0 %v6790
        %6825 = vmatpush.bf16.msra.mxu0 %v6787
        %6826 = vmatpush.bf16.msra.mxu0 %v6784
        %6827 = vmatpush.bf16.msra.mxu0 %v6781
        %6828 = vmatmul.bf16.gmra.mxu0 %v6805
        %v6829 = vpop.f32.mrf.mxu0
        %v6830 = vadd.f32 0.0, %v6829
        %v6831 = vpop.f32.mrf.mxu0
        %6832 = vdwg.mxu0
        %6833 = vmatpush.bf16.msra.mxu0 0
        %6834 = vmatpush.bf16.msra.mxu0 0
        %6835 = vmatpush.bf16.msra.mxu0 0
        %6836 = vmatpush.bf16.msra.mxu0 0
        %6837 = vmatpush.bf16.msra.mxu0 %v6791
        %6838 = vmatpush.bf16.msra.mxu0 %v6788
        %6839 = vmatpush.bf16.msra.mxu0 %v6785
        %6840 = vmatpush.bf16.msra.mxu0 %v6782
        %6841 = vmatmul.bf16.gmra.mxu0 %v6805
        %v6842 = vpop.f32.mrf.mxu0
        %v6843 = vadd.f32 0.0, %v6842
        %v6844 = vpop.f32.mrf.mxu0
        %6845 = vdwg.mxu0
        %v6849 = vrot.slane %v6830, 7
        %v6850 = vrot.slane %v6843, 6
        %v6851 = vsel %vm6315, %v6817, %v6849
        %v6852 = vsel %vm6317, %v6851, %v6850
        %v6854 = vadd.f32 %v6721, %v6852
        %s6855 = scalar_lea.vmem %s6, 480
        %v6856 = vld [vmem:[%s6855] sm:$0xff]
        %v6857 = vld [vmem:[%s6855 + $0x8] sm:$0xf]
        %v6858 = vld [vmem:[%s6855 + $0xc] sm:$0xff]
        %v6859 = vld [vmem:[%s6855 + $0x14] sm:$0xf]
        %v6860 = vld [vmem:[%s6855 + $0x18] sm:$0xff]
        %v6861 = vld [vmem:[%s6855 + $0x20] sm:$0xf]
        %v6862 = vld [vmem:[%s6855 + $0x24] sm:$0xff]
        %v6863 = vld [vmem:[%s6855 + $0x2c] sm:$0xf]
        %v6864 = vld [vmem:[%s6855 + $0x30] sm:$0xff]
        %v6865 = vld [vmem:[%s6855 + $0x38] sm:$0xf]
        %v6866 = vld [vmem:[%s6855 + $0x3c] sm:$0xff]
        %v6867 = vld [vmem:[%s6855 + $0x44] sm:$0xf]
        %v6868 = vld [vmem:[%s6855 + $0x48] sm:$0xff]
        %v6869 = vld [vmem:[%s6855 + $0x50] sm:$0xf]
        %v6870 = vld [vmem:[%s6855 + $0x54] sm:$0xff]
        %v6871 = vld [vmem:[%s6855 + $0x5c] sm:$0xf]
        %v6872 = vrot.slane %v6338, 2
        %v6889 = vunpack.c.l.b16 %v6856
        %v6890 = vunpack.c.h.b16 %v6856
        %v6891 = vunpack.c.l.b16 %v6857
        %v6892 = vunpack.c.l.b16 %v6858
        %v6893 = vunpack.c.h.b16 %v6858
        %v6894 = vunpack.c.l.b16 %v6859
        %v6895 = vunpack.c.l.b16 %v6860
        %v6896 = vunpack.c.h.b16 %v6860
        %v6897 = vunpack.c.l.b16 %v6861
        %v6898 = vunpack.c.l.b16 %v6862
        %v6899 = vunpack.c.h.b16 %v6862
        %v6900 = vunpack.c.l.b16 %v6863
        %v6901 = vunpack.c.l.b16 %v6864
        %v6902 = vunpack.c.h.b16 %v6864
        %v6903 = vunpack.c.l.b16 %v6865
        %v6904 = vunpack.c.l.b16 %v6866
        %v6905 = vunpack.c.h.b16 %v6866
        %v6906 = vunpack.c.l.b16 %v6867
        %v6907 = vunpack.c.l.b16 %v6868
        %v6908 = vunpack.c.h.b16 %v6868
        %v6909 = vunpack.c.l.b16 %v6869
        %v6910 = vunpack.c.l.b16 %v6870
        %v6911 = vunpack.c.h.b16 %v6870
        %v6912 = vunpack.c.l.b16 %v6871
        %v6913 = vpack.c.b16 %v6892, %v6889
        %v6914 = vpack.c.b16 %v6893, %v6890
        %v6915 = vpack.c.b16 %v6894, %v6891
        %v6916 = vpack.c.b16 %v6898, %v6895
        %v6917 = vpack.c.b16 %v6899, %v6896
        %v6918 = vpack.c.b16 %v6900, %v6897
        %v6919 = vpack.c.b16 %v6904, %v6901
        %v6920 = vpack.c.b16 %v6905, %v6902
        %v6921 = vpack.c.b16 %v6906, %v6903
        %v6922 = vpack.c.b16 %v6910, %v6907
        %v6923 = vpack.c.b16 %v6911, %v6908
        %v6924 = vpack.c.b16 %v6912, %v6909
        %v6938 = vsel %vm1430, %v6872, 0
        %6940 = vmatpush.bf16.msra.mxu0 0
        %6941 = vmatpush.bf16.msra.mxu0 0
        %6942 = vmatpush.bf16.msra.mxu0 0
        %6943 = vmatpush.bf16.msra.mxu0 0
        %6944 = vmatpush.bf16.msra.mxu0 %v6922
        %6945 = vmatpush.bf16.msra.mxu0 %v6919
        %6946 = vmatpush.bf16.msra.mxu0 %v6916
        %6947 = vmatpush.bf16.msra.mxu0 %v6913
        %6948 = vmatmul.bf16.gmra.mxu0 %v6938
        %v6949 = vpop.f32.mrf.mxu0
        %v6950 = vadd.f32 0.0, %v6949
        %v6951 = vpop.f32.mrf.mxu0
        %6952 = vdwg.mxu0
        %6953 = vmatpush.bf16.msra.mxu0 0
        %6954 = vmatpush.bf16.msra.mxu0 0
        %6955 = vmatpush.bf16.msra.mxu0 0
        %6956 = vmatpush.bf16.msra.mxu0 0
        %6957 = vmatpush.bf16.msra.mxu0 %v6923
        %6958 = vmatpush.bf16.msra.mxu0 %v6920
        %6959 = vmatpush.bf16.msra.mxu0 %v6917
        %6960 = vmatpush.bf16.msra.mxu0 %v6914
        %6961 = vmatmul.bf16.gmra.mxu0 %v6938
        %v6962 = vpop.f32.mrf.mxu0
        %v6963 = vadd.f32 0.0, %v6962
        %v6964 = vpop.f32.mrf.mxu0
        %6965 = vdwg.mxu0
        %6966 = vmatpush.bf16.msra.mxu0 0
        %6967 = vmatpush.bf16.msra.mxu0 0
        %6968 = vmatpush.bf16.msra.mxu0 0
        %6969 = vmatpush.bf16.msra.mxu0 0
        %6970 = vmatpush.bf16.msra.mxu0 %v6924
        %6971 = vmatpush.bf16.msra.mxu0 %v6921
        %6972 = vmatpush.bf16.msra.mxu0 %v6918
        %6973 = vmatpush.bf16.msra.mxu0 %v6915
        %6974 = vmatmul.bf16.gmra.mxu0 %v6938
        %v6975 = vpop.f32.mrf.mxu0
        %v6976 = vadd.f32 0.0, %v6975
        %v6977 = vpop.f32.mrf.mxu0
        %6978 = vdwg.mxu0
        %v6982 = vrot.slane %v6963, 7
        %v6983 = vrot.slane %v6976, 6
        %v6984 = vsel %vm6315, %v6950, %v6982
        %v6985 = vsel %vm6317, %v6984, %v6983
        %v6987 = vadd.f32 %v6854, %v6985
        %s6988 = scalar_lea.vmem %s6, 576
        %v6989 = vld [vmem:[%s6988] sm:$0xff]
        %v6990 = vld [vmem:[%s6988 + $0x8] sm:$0xf]
        %v6991 = vld [vmem:[%s6988 + $0xc] sm:$0xff]
        %v6992 = vld [vmem:[%s6988 + $0x14] sm:$0xf]
        %v6993 = vld [vmem:[%s6988 + $0x18] sm:$0xff]
        %v6994 = vld [vmem:[%s6988 + $0x20] sm:$0xf]
        %v6995 = vld [vmem:[%s6988 + $0x24] sm:$0xff]
        %v6996 = vld [vmem:[%s6988 + $0x2c] sm:$0xf]
        %v6997 = vld [vmem:[%s6988 + $0x30] sm:$0xff]
        %v6998 = vld [vmem:[%s6988 + $0x38] sm:$0xf]
        %v6999 = vld [vmem:[%s6988 + $0x3c] sm:$0xff]
        %v7000 = vld [vmem:[%s6988 + $0x44] sm:$0xf]
        %v7001 = vld [vmem:[%s6988 + $0x48] sm:$0xff]
        %v7002 = vld [vmem:[%s6988 + $0x50] sm:$0xf]
        %v7003 = vld [vmem:[%s6988 + $0x54] sm:$0xff]
        %v7004 = vld [vmem:[%s6988 + $0x5c] sm:$0xf]
        %v7005 = vrot.slane %v6187, 3
        %v7022 = vunpack.c.l.b16 %v6989
        %v7023 = vunpack.c.h.b16 %v6989
        %v7024 = vunpack.c.l.b16 %v6990
        %v7025 = vunpack.c.l.b16 %v6991
        %v7026 = vunpack.c.h.b16 %v6991
        %v7027 = vunpack.c.l.b16 %v6992
        %v7028 = vunpack.c.l.b16 %v6993
        %v7029 = vunpack.c.h.b16 %v6993
        %v7030 = vunpack.c.l.b16 %v6994
        %v7031 = vunpack.c.l.b16 %v6995
        %v7032 = vunpack.c.h.b16 %v6995
        %v7033 = vunpack.c.l.b16 %v6996
        %v7034 = vunpack.c.l.b16 %v6997
        %v7035 = vunpack.c.h.b16 %v6997
        %v7036 = vunpack.c.l.b16 %v6998
        %v7037 = vunpack.c.l.b16 %v6999
        %v7038 = vunpack.c.h.b16 %v6999
        %v7039 = vunpack.c.l.b16 %v7000
        %v7040 = vunpack.c.l.b16 %v7001
        %v7041 = vunpack.c.h.b16 %v7001
        %v7042 = vunpack.c.l.b16 %v7002
        %v7043 = vunpack.c.l.b16 %v7003
        %v7044 = vunpack.c.h.b16 %v7003
        %v7045 = vunpack.c.l.b16 %v7004
        %v7046 = vpack.c.b16 %v7025, %v7022
        %v7047 = vpack.c.b16 %v7026, %v7023
        %v7048 = vpack.c.b16 %v7027, %v7024
        %v7049 = vpack.c.b16 %v7031, %v7028
        %v7050 = vpack.c.b16 %v7032, %v7029
        %v7051 = vpack.c.b16 %v7033, %v7030
        %v7052 = vpack.c.b16 %v7037, %v7034
        %v7053 = vpack.c.b16 %v7038, %v7035
        %v7054 = vpack.c.b16 %v7039, %v7036
        %v7055 = vpack.c.b16 %v7043, %v7040
        %v7056 = vpack.c.b16 %v7044, %v7041
        %v7057 = vpack.c.b16 %v7045, %v7042
        %v7071 = vsel %vm1430, %v7005, 0
        %7073 = vmatpush.bf16.msra.mxu0 0
        %7074 = vmatpush.bf16.msra.mxu0 0
        %7075 = vmatpush.bf16.msra.mxu0 0
        %7076 = vmatpush.bf16.msra.mxu0 0
        %7077 = vmatpush.bf16.msra.mxu0 %v7055
        %7078 = vmatpush.bf16.msra.mxu0 %v7052
        %7079 = vmatpush.bf16.msra.mxu0 %v7049
        %7080 = vmatpush.bf16.msra.mxu0 %v7046
        %7081 = vmatmul.bf16.gmra.mxu0 %v7071
        %v7082 = vpop.f32.mrf.mxu0
        %v7083 = vadd.f32 0.0, %v7082
        %v7084 = vpop.f32.mrf.mxu0
        %7085 = vdwg.mxu0
        %7086 = vmatpush.bf16.msra.mxu0 0
        %7087 = vmatpush.bf16.msra.mxu0 0
        %7088 = vmatpush.bf16.msra.mxu0 0
        %7089 = vmatpush.bf16.msra.mxu0 0
        %7090 = vmatpush.bf16.msra.mxu0 %v7056
        %7091 = vmatpush.bf16.msra.mxu0 %v7053
        %7092 = vmatpush.bf16.msra.mxu0 %v7050
        %7093 = vmatpush.bf16.msra.mxu0 %v7047
        %7094 = vmatmul.bf16.gmra.mxu0 %v7071
        %v7095 = vpop.f32.mrf.mxu0
        %v7096 = vadd.f32 0.0, %v7095
        %v7097 = vpop.f32.mrf.mxu0
        %7098 = vdwg.mxu0
        %7099 = vmatpush.bf16.msra.mxu0 0
        %7100 = vmatpush.bf16.msra.mxu0 0
        %7101 = vmatpush.bf16.msra.mxu0 0
        %7102 = vmatpush.bf16.msra.mxu0 0
        %7103 = vmatpush.bf16.msra.mxu0 %v7057
        %7104 = vmatpush.bf16.msra.mxu0 %v7054
        %7105 = vmatpush.bf16.msra.mxu0 %v7051
        %7106 = vmatpush.bf16.msra.mxu0 %v7048
        %7107 = vmatmul.bf16.gmra.mxu0 %v7071
        %v7108 = vpop.f32.mrf.mxu0
        %v7109 = vadd.f32 0.0, %v7108
        %v7110 = vpop.f32.mrf.mxu0
        %7111 = vdwg.mxu0
        %v7115 = vrot.slane %v7096, 7
        %v7116 = vrot.slane %v7109, 6
        %v7117 = vsel %vm6315, %v7083, %v7115
        %v7118 = vsel %vm6317, %v7117, %v7116
        %v7120 = vadd.f32 %v6987, %v7118
        %s7121 = scalar_lea.vmem %s6, 672
        %v7122 = vld [vmem:[%s7121] sm:$0xff]
        %v7123 = vld [vmem:[%s7121 + $0x8] sm:$0xf]
        %v7124 = vld [vmem:[%s7121 + $0xc] sm:$0xff]
        %v7125 = vld [vmem:[%s7121 + $0x14] sm:$0xf]
        %v7126 = vld [vmem:[%s7121 + $0x18] sm:$0xff]
        %v7127 = vld [vmem:[%s7121 + $0x20] sm:$0xf]
        %v7128 = vld [vmem:[%s7121 + $0x24] sm:$0xff]
        %v7129 = vld [vmem:[%s7121 + $0x2c] sm:$0xf]
        %v7130 = vld [vmem:[%s7121 + $0x30] sm:$0xff]
        %v7131 = vld [vmem:[%s7121 + $0x38] sm:$0xf]
        %v7132 = vld [vmem:[%s7121 + $0x3c] sm:$0xff]
        %v7133 = vld [vmem:[%s7121 + $0x44] sm:$0xf]
        %v7134 = vld [vmem:[%s7121 + $0x48] sm:$0xff]
        %v7135 = vld [vmem:[%s7121 + $0x50] sm:$0xf]
        %v7136 = vld [vmem:[%s7121 + $0x54] sm:$0xff]
        %v7137 = vld [vmem:[%s7121 + $0x5c] sm:$0xf]
        %v7138 = vrot.slane %v6338, 3
        %v7155 = vunpack.c.l.b16 %v7122
        %v7156 = vunpack.c.h.b16 %v7122
        %v7157 = vunpack.c.l.b16 %v7123
        %v7158 = vunpack.c.l.b16 %v7124
        %v7159 = vunpack.c.h.b16 %v7124
        %v7160 = vunpack.c.l.b16 %v7125
        %v7161 = vunpack.c.l.b16 %v7126
        %v7162 = vunpack.c.h.b16 %v7126
        %v7163 = vunpack.c.l.b16 %v7127
        %v7164 = vunpack.c.l.b16 %v7128
        %v7165 = vunpack.c.h.b16 %v7128
        %v7166 = vunpack.c.l.b16 %v7129
        %v7167 = vunpack.c.l.b16 %v7130
        %v7168 = vunpack.c.h.b16 %v7130
        %v7169 = vunpack.c.l.b16 %v7131
        %v7170 = vunpack.c.l.b16 %v7132
        %v7171 = vunpack.c.h.b16 %v7132
        %v7172 = vunpack.c.l.b16 %v7133
        %v7173 = vunpack.c.l.b16 %v7134
        %v7174 = vunpack.c.h.b16 %v7134
        %v7175 = vunpack.c.l.b16 %v7135
        %v7176 = vunpack.c.l.b16 %v7136
        %v7177 = vunpack.c.h.b16 %v7136
        %v7178 = vunpack.c.l.b16 %v7137
        %v7179 = vpack.c.b16 %v7158, %v7155
        %v7180 = vpack.c.b16 %v7159, %v7156
        %v7181 = vpack.c.b16 %v7160, %v7157
        %v7182 = vpack.c.b16 %v7164, %v7161
        %v7183 = vpack.c.b16 %v7165, %v7162
        %v7184 = vpack.c.b16 %v7166, %v7163
        %v7185 = vpack.c.b16 %v7170, %v7167
        %v7186 = vpack.c.b16 %v7171, %v7168
        %v7187 = vpack.c.b16 %v7172, %v7169
        %v7188 = vpack.c.b16 %v7176, %v7173
        %v7189 = vpack.c.b16 %v7177, %v7174
        %v7190 = vpack.c.b16 %v7178, %v7175
        %v7204 = vsel %vm1430, %v7138, 0
        %7206 = vmatpush.bf16.msra.mxu0 0
        %7207 = vmatpush.bf16.msra.mxu0 0
        %7208 = vmatpush.bf16.msra.mxu0 0
        %7209 = vmatpush.bf16.msra.mxu0 0
        %7210 = vmatpush.bf16.msra.mxu0 %v7188
        %7211 = vmatpush.bf16.msra.mxu0 %v7185
        %7212 = vmatpush.bf16.msra.mxu0 %v7182
        %7213 = vmatpush.bf16.msra.mxu0 %v7179
        %7214 = vmatmul.bf16.gmra.mxu0 %v7204
        %v7215 = vpop.f32.mrf.mxu0
        %v7216 = vadd.f32 0.0, %v7215
        %v7217 = vpop.f32.mrf.mxu0
        %7218 = vdwg.mxu0
        %7219 = vmatpush.bf16.msra.mxu0 0
        %7220 = vmatpush.bf16.msra.mxu0 0
        %7221 = vmatpush.bf16.msra.mxu0 0
        %7222 = vmatpush.bf16.msra.mxu0 0
        %7223 = vmatpush.bf16.msra.mxu0 %v7189
        %7224 = vmatpush.bf16.msra.mxu0 %v7186
        %7225 = vmatpush.bf16.msra.mxu0 %v7183
        %7226 = vmatpush.bf16.msra.mxu0 %v7180
        %7227 = vmatmul.bf16.gmra.mxu0 %v7204
        %v7228 = vpop.f32.mrf.mxu0
        %v7229 = vadd.f32 0.0, %v7228
        %v7230 = vpop.f32.mrf.mxu0
        %7231 = vdwg.mxu0
        %7232 = vmatpush.bf16.msra.mxu0 0
        %7233 = vmatpush.bf16.msra.mxu0 0
        %7234 = vmatpush.bf16.msra.mxu0 0
        %7235 = vmatpush.bf16.msra.mxu0 0
        %7236 = vmatpush.bf16.msra.mxu0 %v7190
        %7237 = vmatpush.bf16.msra.mxu0 %v7187
        %7238 = vmatpush.bf16.msra.mxu0 %v7184
        %7239 = vmatpush.bf16.msra.mxu0 %v7181
        %7240 = vmatmul.bf16.gmra.mxu0 %v7204
        %v7241 = vpop.f32.mrf.mxu0
        %v7242 = vadd.f32 0.0, %v7241
        %v7243 = vpop.f32.mrf.mxu0
        %7244 = vdwg.mxu0
        %v7248 = vrot.slane %v7229, 7
        %v7249 = vrot.slane %v7242, 6
        %v7250 = vsel %vm6315, %v7216, %v7248
        %v7251 = vsel %vm6317, %v7250, %v7249
        %v7253 = vadd.f32 %v7120, %v7251
        %v7254 = vpack.c.bf16 %v6185, %v6185
        %s7255 = scalar_lea.vmem %s6, 768
        %v7256 = vld [vmem:[%s7255] sm:$0xff]
        %v7257 = vld [vmem:[%s7255 + $0x8] sm:$0xf]
        %v7258 = vld [vmem:[%s7255 + $0xc] sm:$0xff]
        %v7259 = vld [vmem:[%s7255 + $0x14] sm:$0xf]
        %v7260 = vld [vmem:[%s7255 + $0x18] sm:$0xff]
        %v7261 = vld [vmem:[%s7255 + $0x20] sm:$0xf]
        %v7262 = vld [vmem:[%s7255 + $0x24] sm:$0xff]
        %v7263 = vld [vmem:[%s7255 + $0x2c] sm:$0xf]
        %v7264 = vld [vmem:[%s7255 + $0x30] sm:$0xff]
        %v7265 = vld [vmem:[%s7255 + $0x38] sm:$0xf]
        %v7266 = vld [vmem:[%s7255 + $0x3c] sm:$0xff]
        %v7267 = vld [vmem:[%s7255 + $0x44] sm:$0xf]
        %v7268 = vld [vmem:[%s7255 + $0x48] sm:$0xff]
        %v7269 = vld [vmem:[%s7255 + $0x50] sm:$0xf]
        %v7270 = vld [vmem:[%s7255 + $0x54] sm:$0xff]
        %v7271 = vld [vmem:[%s7255 + $0x5c] sm:$0xf]
        %v7288 = vunpack.c.l.b16 %v7256
        %v7289 = vunpack.c.h.b16 %v7256
        %v7290 = vunpack.c.l.b16 %v7257
        %v7291 = vunpack.c.l.b16 %v7258
        %v7292 = vunpack.c.h.b16 %v7258
        %v7293 = vunpack.c.l.b16 %v7259
        %v7294 = vunpack.c.l.b16 %v7260
        %v7295 = vunpack.c.h.b16 %v7260
        %v7296 = vunpack.c.l.b16 %v7261
        %v7297 = vunpack.c.l.b16 %v7262
        %v7298 = vunpack.c.h.b16 %v7262
        %v7299 = vunpack.c.l.b16 %v7263
        %v7300 = vunpack.c.l.b16 %v7264
        %v7301 = vunpack.c.h.b16 %v7264
        %v7302 = vunpack.c.l.b16 %v7265
        %v7303 = vunpack.c.l.b16 %v7266
        %v7304 = vunpack.c.h.b16 %v7266
        %v7305 = vunpack.c.l.b16 %v7267
        %v7306 = vunpack.c.l.b16 %v7268
        %v7307 = vunpack.c.h.b16 %v7268
        %v7308 = vunpack.c.l.b16 %v7269
        %v7309 = vunpack.c.l.b16 %v7270
        %v7310 = vunpack.c.h.b16 %v7270
        %v7311 = vunpack.c.l.b16 %v7271
        %v7312 = vpack.c.b16 %v7291, %v7288
        %v7313 = vpack.c.b16 %v7292, %v7289
        %v7314 = vpack.c.b16 %v7293, %v7290
        %v7315 = vpack.c.b16 %v7297, %v7294
        %v7316 = vpack.c.b16 %v7298, %v7295
        %v7317 = vpack.c.b16 %v7299, %v7296
        %v7318 = vpack.c.b16 %v7303, %v7300
        %v7319 = vpack.c.b16 %v7304, %v7301
        %v7320 = vpack.c.b16 %v7305, %v7302
        %v7321 = vpack.c.b16 %v7309, %v7306
        %v7322 = vpack.c.b16 %v7310, %v7307
        %v7323 = vpack.c.b16 %v7311, %v7308
        %v7337 = vsel %vm1430, %v7254, 0
        %7339 = vmatpush.bf16.msra.mxu0 0
        %7340 = vmatpush.bf16.msra.mxu0 0
        %7341 = vmatpush.bf16.msra.mxu0 0
        %7342 = vmatpush.bf16.msra.mxu0 0
        %7343 = vmatpush.bf16.msra.mxu0 %v7321
        %7344 = vmatpush.bf16.msra.mxu0 %v7318
        %7345 = vmatpush.bf16.msra.mxu0 %v7315
        %7346 = vmatpush.bf16.msra.mxu0 %v7312
        %7347 = vmatmul.bf16.gmra.mxu0 %v7337
        %v7348 = vpop.f32.mrf.mxu0
        %v7349 = vadd.f32 0.0, %v7348
        %v7350 = vpop.f32.mrf.mxu0
        %7351 = vdwg.mxu0
        %7352 = vmatpush.bf16.msra.mxu0 0
        %7353 = vmatpush.bf16.msra.mxu0 0
        %7354 = vmatpush.bf16.msra.mxu0 0
        %7355 = vmatpush.bf16.msra.mxu0 0
        %7356 = vmatpush.bf16.msra.mxu0 %v7322
        %7357 = vmatpush.bf16.msra.mxu0 %v7319
        %7358 = vmatpush.bf16.msra.mxu0 %v7316
        %7359 = vmatpush.bf16.msra.mxu0 %v7313
        %7360 = vmatmul.bf16.gmra.mxu0 %v7337
        %v7361 = vpop.f32.mrf.mxu0
        %v7362 = vadd.f32 0.0, %v7361
        %v7363 = vpop.f32.mrf.mxu0
        %7364 = vdwg.mxu0
        %7365 = vmatpush.bf16.msra.mxu0 0
        %7366 = vmatpush.bf16.msra.mxu0 0
        %7367 = vmatpush.bf16.msra.mxu0 0
        %7368 = vmatpush.bf16.msra.mxu0 0
        %7369 = vmatpush.bf16.msra.mxu0 %v7323
        %7370 = vmatpush.bf16.msra.mxu0 %v7320
        %7371 = vmatpush.bf16.msra.mxu0 %v7317
        %7372 = vmatpush.bf16.msra.mxu0 %v7314
        %7373 = vmatmul.bf16.gmra.mxu0 %v7337
        %v7374 = vpop.f32.mrf.mxu0
        %v7375 = vadd.f32 0.0, %v7374
        %v7376 = vpop.f32.mrf.mxu0
        %7377 = vdwg.mxu0
        %v7381 = vrot.slane %v7362, 7
        %v7382 = vrot.slane %v7375, 6
        %v7383 = vsel %vm6315, %v7349, %v7381
        %v7384 = vsel %vm6317, %v7383, %v7382
        %v7386 = vadd.f32 %v7253, %v7384
        %s7387 = scalar_lea.vmem %s6, 864
        %v7388 = vld [vmem:[%s7387] sm:$0xff]
        %v7389 = vld [vmem:[%s7387 + $0x8] sm:$0xf]
        %v7390 = vld [vmem:[%s7387 + $0xc] sm:$0xff]
        %v7391 = vld [vmem:[%s7387 + $0x14] sm:$0xf]
        %v7392 = vld [vmem:[%s7387 + $0x18] sm:$0xff]
        %v7393 = vld [vmem:[%s7387 + $0x20] sm:$0xf]
        %v7394 = vld [vmem:[%s7387 + $0x24] sm:$0xff]
        %v7395 = vld [vmem:[%s7387 + $0x2c] sm:$0xf]
        %v7396 = vld [vmem:[%s7387 + $0x30] sm:$0xff]
        %v7397 = vld [vmem:[%s7387 + $0x38] sm:$0xf]
        %v7398 = vld [vmem:[%s7387 + $0x3c] sm:$0xff]
        %v7399 = vld [vmem:[%s7387 + $0x44] sm:$0xf]
        %v7400 = vld [vmem:[%s7387 + $0x48] sm:$0xff]
        %v7401 = vld [vmem:[%s7387 + $0x50] sm:$0xf]
        %v7402 = vld [vmem:[%s7387 + $0x54] sm:$0xff]
        %v7403 = vld [vmem:[%s7387 + $0x5c] sm:$0xf]
        %v7404 = vshrl.u32 %v7254, 16
        %v7422 = vunpack.c.l.b16 %v7388
        %v7423 = vunpack.c.h.b16 %v7388
        %v7424 = vunpack.c.l.b16 %v7389
        %v7425 = vunpack.c.l.b16 %v7390
        %v7426 = vunpack.c.h.b16 %v7390
        %v7427 = vunpack.c.l.b16 %v7391
        %v7428 = vunpack.c.l.b16 %v7392
        %v7429 = vunpack.c.h.b16 %v7392
        %v7430 = vunpack.c.l.b16 %v7393
        %v7431 = vunpack.c.l.b16 %v7394
        %v7432 = vunpack.c.h.b16 %v7394
        %v7433 = vunpack.c.l.b16 %v7395
        %v7434 = vunpack.c.l.b16 %v7396
        %v7435 = vunpack.c.h.b16 %v7396
        %v7436 = vunpack.c.l.b16 %v7397
        %v7437 = vunpack.c.l.b16 %v7398
        %v7438 = vunpack.c.h.b16 %v7398
        %v7439 = vunpack.c.l.b16 %v7399
        %v7440 = vunpack.c.l.b16 %v7400
        %v7441 = vunpack.c.h.b16 %v7400
        %v7442 = vunpack.c.l.b16 %v7401
        %v7443 = vunpack.c.l.b16 %v7402
        %v7444 = vunpack.c.h.b16 %v7402
        %v7445 = vunpack.c.l.b16 %v7403
        %v7446 = vpack.c.b16 %v7425, %v7422
        %v7447 = vpack.c.b16 %v7426, %v7423
        %v7448 = vpack.c.b16 %v7427, %v7424
        %v7449 = vpack.c.b16 %v7431, %v7428
        %v7450 = vpack.c.b16 %v7432, %v7429
        %v7451 = vpack.c.b16 %v7433, %v7430
        %v7452 = vpack.c.b16 %v7437, %v7434
        %v7453 = vpack.c.b16 %v7438, %v7435
        %v7454 = vpack.c.b16 %v7439, %v7436
        %v7455 = vpack.c.b16 %v7443, %v7440
        %v7456 = vpack.c.b16 %v7444, %v7441
        %v7457 = vpack.c.b16 %v7445, %v7442
        %v7471 = vsel %vm1430, %v7404, 0
        %7473 = vmatpush.bf16.msra.mxu0 0
        %7474 = vmatpush.bf16.msra.mxu0 0
        %7475 = vmatpush.bf16.msra.mxu0 0
        %7476 = vmatpush.bf16.msra.mxu0 0
        %7477 = vmatpush.bf16.msra.mxu0 %v7455
        %7478 = vmatpush.bf16.msra.mxu0 %v7452
        %7479 = vmatpush.bf16.msra.mxu0 %v7449
        %7480 = vmatpush.bf16.msra.mxu0 %v7446
        %7481 = vmatmul.bf16.gmra.mxu0 %v7471
        %v7482 = vpop.f32.mrf.mxu0
        %v7483 = vadd.f32 0.0, %v7482
        %v7484 = vpop.f32.mrf.mxu0
        %7485 = vdwg.mxu0
        %7486 = vmatpush.bf16.msra.mxu0 0
        %7487 = vmatpush.bf16.msra.mxu0 0
        %7488 = vmatpush.bf16.msra.mxu0 0
        %7489 = vmatpush.bf16.msra.mxu0 0
        %7490 = vmatpush.bf16.msra.mxu0 %v7456
        %7491 = vmatpush.bf16.msra.mxu0 %v7453
        %7492 = vmatpush.bf16.msra.mxu0 %v7450
        %7493 = vmatpush.bf16.msra.mxu0 %v7447
        %7494 = vmatmul.bf16.gmra.mxu0 %v7471
        %v7495 = vpop.f32.mrf.mxu0
        %v7496 = vadd.f32 0.0, %v7495
        %v7497 = vpop.f32.mrf.mxu0
        %7498 = vdwg.mxu0
        %7499 = vmatpush.bf16.msra.mxu0 0
        %7500 = vmatpush.bf16.msra.mxu0 0
        %7501 = vmatpush.bf16.msra.mxu0 0
        %7502 = vmatpush.bf16.msra.mxu0 0
        %7503 = vmatpush.bf16.msra.mxu0 %v7457
        %7504 = vmatpush.bf16.msra.mxu0 %v7454
        %7505 = vmatpush.bf16.msra.mxu0 %v7451
        %7506 = vmatpush.bf16.msra.mxu0 %v7448
        %7507 = vmatmul.bf16.gmra.mxu0 %v7471
        %v7508 = vpop.f32.mrf.mxu0
        %v7509 = vadd.f32 0.0, %v7508
        %v7510 = vpop.f32.mrf.mxu0
        %7511 = vdwg.mxu0
        %v7515 = vrot.slane %v7496, 7
        %v7516 = vrot.slane %v7509, 6
        %v7517 = vsel %vm6315, %v7483, %v7515
        %v7518 = vsel %vm6317, %v7517, %v7516
        %v7520 = vadd.f32 %v7386, %v7518
        %s7521 = scalar_lea.vmem %s6, 960
        %v7522 = vld [vmem:[%s7521] sm:$0xff]
        %v7523 = vld [vmem:[%s7521 + $0x8] sm:$0xf]
        %v7524 = vld [vmem:[%s7521 + $0xc] sm:$0xff]
        %v7525 = vld [vmem:[%s7521 + $0x14] sm:$0xf]
        %v7526 = vld [vmem:[%s7521 + $0x18] sm:$0xff]
        %v7527 = vld [vmem:[%s7521 + $0x20] sm:$0xf]
        %v7528 = vld [vmem:[%s7521 + $0x24] sm:$0xff]
        %v7529 = vld [vmem:[%s7521 + $0x2c] sm:$0xf]
        %v7530 = vld [vmem:[%s7521 + $0x30] sm:$0xff]
        %v7531 = vld [vmem:[%s7521 + $0x38] sm:$0xf]
        %v7532 = vld [vmem:[%s7521 + $0x3c] sm:$0xff]
        %v7533 = vld [vmem:[%s7521 + $0x44] sm:$0xf]
        %v7534 = vld [vmem:[%s7521 + $0x48] sm:$0xff]
        %v7535 = vld [vmem:[%s7521 + $0x50] sm:$0xf]
        %v7536 = vld [vmem:[%s7521 + $0x54] sm:$0xff]
        %v7537 = vld [vmem:[%s7521 + $0x5c] sm:$0xf]
        %v7539 = vrot.slane %v7254, 1
        %v7556 = vunpack.c.l.b16 %v7522
        %v7557 = vunpack.c.h.b16 %v7522
        %v7558 = vunpack.c.l.b16 %v7523
        %v7559 = vunpack.c.l.b16 %v7524
        %v7560 = vunpack.c.h.b16 %v7524
        %v7561 = vunpack.c.l.b16 %v7525
        %v7562 = vunpack.c.l.b16 %v7526
        %v7563 = vunpack.c.h.b16 %v7526
        %v7564 = vunpack.c.l.b16 %v7527
        %v7565 = vunpack.c.l.b16 %v7528
        %v7566 = vunpack.c.h.b16 %v7528
        %v7567 = vunpack.c.l.b16 %v7529
        %v7568 = vunpack.c.l.b16 %v7530
        %v7569 = vunpack.c.h.b16 %v7530
        %v7570 = vunpack.c.l.b16 %v7531
        %v7571 = vunpack.c.l.b16 %v7532
        %v7572 = vunpack.c.h.b16 %v7532
        %v7573 = vunpack.c.l.b16 %v7533
        %v7574 = vunpack.c.l.b16 %v7534
        %v7575 = vunpack.c.h.b16 %v7534
        %v7576 = vunpack.c.l.b16 %v7535
        %v7577 = vunpack.c.l.b16 %v7536
        %v7578 = vunpack.c.h.b16 %v7536
        %v7579 = vunpack.c.l.b16 %v7537
        %v7580 = vpack.c.b16 %v7559, %v7556
        %v7581 = vpack.c.b16 %v7560, %v7557
        %v7582 = vpack.c.b16 %v7561, %v7558
        %v7583 = vpack.c.b16 %v7565, %v7562
        %v7584 = vpack.c.b16 %v7566, %v7563
        %v7585 = vpack.c.b16 %v7567, %v7564
        %v7586 = vpack.c.b16 %v7571, %v7568
        %v7587 = vpack.c.b16 %v7572, %v7569
        %v7588 = vpack.c.b16 %v7573, %v7570
        %v7589 = vpack.c.b16 %v7577, %v7574
        %v7590 = vpack.c.b16 %v7578, %v7575
        %v7591 = vpack.c.b16 %v7579, %v7576
        %v7605 = vsel %vm1430, %v7539, 0
        %7607 = vmatpush.bf16.msra.mxu0 0
        %7608 = vmatpush.bf16.msra.mxu0 0
        %7609 = vmatpush.bf16.msra.mxu0 0
        %7610 = vmatpush.bf16.msra.mxu0 0
        %7611 = vmatpush.bf16.msra.mxu0 %v7589
        %7612 = vmatpush.bf16.msra.mxu0 %v7586
        %7613 = vmatpush.bf16.msra.mxu0 %v7583
        %7614 = vmatpush.bf16.msra.mxu0 %v7580
        %7615 = vmatmul.bf16.gmra.mxu0 %v7605
        %v7616 = vpop.f32.mrf.mxu0
        %v7617 = vadd.f32 0.0, %v7616
        %v7618 = vpop.f32.mrf.mxu0
        %7619 = vdwg.mxu0
        %7620 = vmatpush.bf16.msra.mxu0 0
        %7621 = vmatpush.bf16.msra.mxu0 0
        %7622 = vmatpush.bf16.msra.mxu0 0
        %7623 = vmatpush.bf16.msra.mxu0 0
        %7624 = vmatpush.bf16.msra.mxu0 %v7590
        %7625 = vmatpush.bf16.msra.mxu0 %v7587
        %7626 = vmatpush.bf16.msra.mxu0 %v7584
        %7627 = vmatpush.bf16.msra.mxu0 %v7581
        %7628 = vmatmul.bf16.gmra.mxu0 %v7605
        %v7629 = vpop.f32.mrf.mxu0
        %v7630 = vadd.f32 0.0, %v7629
        %v7631 = vpop.f32.mrf.mxu0
        %7632 = vdwg.mxu0
        %7633 = vmatpush.bf16.msra.mxu0 0
        %7634 = vmatpush.bf16.msra.mxu0 0
        %7635 = vmatpush.bf16.msra.mxu0 0
        %7636 = vmatpush.bf16.msra.mxu0 0
        %7637 = vmatpush.bf16.msra.mxu0 %v7591
        %7638 = vmatpush.bf16.msra.mxu0 %v7588
        %7639 = vmatpush.bf16.msra.mxu0 %v7585
        %7640 = vmatpush.bf16.msra.mxu0 %v7582
        %7641 = vmatmul.bf16.gmra.mxu0 %v7605
        %v7642 = vpop.f32.mrf.mxu0
        %v7643 = vadd.f32 0.0, %v7642
        %v7644 = vpop.f32.mrf.mxu0
        %7645 = vdwg.mxu0
        %v7649 = vrot.slane %v7630, 7
        %v7650 = vrot.slane %v7643, 6
        %v7651 = vsel %vm6315, %v7617, %v7649
        %v7652 = vsel %vm6317, %v7651, %v7650
        %v7654 = vadd.f32 %v7520, %v7652
        %s7655 = scalar_lea.vmem %s6, 1056
        %v7656 = vld [vmem:[%s7655] sm:$0xff]
        %v7657 = vld [vmem:[%s7655 + $0x8] sm:$0xf]
        %v7658 = vld [vmem:[%s7655 + $0xc] sm:$0xff]
        %v7659 = vld [vmem:[%s7655 + $0x14] sm:$0xf]
        %v7660 = vld [vmem:[%s7655 + $0x18] sm:$0xff]
        %v7661 = vld [vmem:[%s7655 + $0x20] sm:$0xf]
        %v7662 = vld [vmem:[%s7655 + $0x24] sm:$0xff]
        %v7663 = vld [vmem:[%s7655 + $0x2c] sm:$0xf]
        %v7664 = vld [vmem:[%s7655 + $0x30] sm:$0xff]
        %v7665 = vld [vmem:[%s7655 + $0x38] sm:$0xf]
        %v7666 = vld [vmem:[%s7655 + $0x3c] sm:$0xff]
        %v7667 = vld [vmem:[%s7655 + $0x44] sm:$0xf]
        %v7668 = vld [vmem:[%s7655 + $0x48] sm:$0xff]
        %v7669 = vld [vmem:[%s7655 + $0x50] sm:$0xf]
        %v7670 = vld [vmem:[%s7655 + $0x54] sm:$0xff]
        %v7671 = vld [vmem:[%s7655 + $0x5c] sm:$0xf]
        %v7672 = vrot.slane %v7404, 1
        %v7689 = vunpack.c.l.b16 %v7656
        %v7690 = vunpack.c.h.b16 %v7656
        %v7691 = vunpack.c.l.b16 %v7657
        %v7692 = vunpack.c.l.b16 %v7658
        %v7693 = vunpack.c.h.b16 %v7658
        %v7694 = vunpack.c.l.b16 %v7659
        %v7695 = vunpack.c.l.b16 %v7660
        %v7696 = vunpack.c.h.b16 %v7660
        %v7697 = vunpack.c.l.b16 %v7661
        %v7698 = vunpack.c.l.b16 %v7662
        %v7699 = vunpack.c.h.b16 %v7662
        %v7700 = vunpack.c.l.b16 %v7663
        %v7701 = vunpack.c.l.b16 %v7664
        %v7702 = vunpack.c.h.b16 %v7664
        %v7703 = vunpack.c.l.b16 %v7665
        %v7704 = vunpack.c.l.b16 %v7666
        %v7705 = vunpack.c.h.b16 %v7666
        %v7706 = vunpack.c.l.b16 %v7667
        %v7707 = vunpack.c.l.b16 %v7668
        %v7708 = vunpack.c.h.b16 %v7668
        %v7709 = vunpack.c.l.b16 %v7669
        %v7710 = vunpack.c.l.b16 %v7670
        %v7711 = vunpack.c.h.b16 %v7670
        %v7712 = vunpack.c.l.b16 %v7671
        %v7713 = vpack.c.b16 %v7692, %v7689
        %v7714 = vpack.c.b16 %v7693, %v7690
        %v7715 = vpack.c.b16 %v7694, %v7691
        %v7716 = vpack.c.b16 %v7698, %v7695
        %v7717 = vpack.c.b16 %v7699, %v7696
        %v7718 = vpack.c.b16 %v7700, %v7697
        %v7719 = vpack.c.b16 %v7704, %v7701
        %v7720 = vpack.c.b16 %v7705, %v7702
        %v7721 = vpack.c.b16 %v7706, %v7703
        %v7722 = vpack.c.b16 %v7710, %v7707
        %v7723 = vpack.c.b16 %v7711, %v7708
        %v7724 = vpack.c.b16 %v7712, %v7709
        %v7738 = vsel %vm1430, %v7672, 0
        %7740 = vmatpush.bf16.msra.mxu0 0
        %7741 = vmatpush.bf16.msra.mxu0 0
        %7742 = vmatpush.bf16.msra.mxu0 0
        %7743 = vmatpush.bf16.msra.mxu0 0
        %7744 = vmatpush.bf16.msra.mxu0 %v7722
        %7745 = vmatpush.bf16.msra.mxu0 %v7719
        %7746 = vmatpush.bf16.msra.mxu0 %v7716
        %7747 = vmatpush.bf16.msra.mxu0 %v7713
        %7748 = vmatmul.bf16.gmra.mxu0 %v7738
        %v7749 = vpop.f32.mrf.mxu0
        %v7750 = vadd.f32 0.0, %v7749
        %v7751 = vpop.f32.mrf.mxu0
        %7752 = vdwg.mxu0
        %7753 = vmatpush.bf16.msra.mxu0 0
        %7754 = vmatpush.bf16.msra.mxu0 0
        %7755 = vmatpush.bf16.msra.mxu0 0
        %7756 = vmatpush.bf16.msra.mxu0 0
        %7757 = vmatpush.bf16.msra.mxu0 %v7723
        %7758 = vmatpush.bf16.msra.mxu0 %v7720
        %7759 = vmatpush.bf16.msra.mxu0 %v7717
        %7760 = vmatpush.bf16.msra.mxu0 %v7714
        %7761 = vmatmul.bf16.gmra.mxu0 %v7738
        %v7762 = vpop.f32.mrf.mxu0
        %v7763 = vadd.f32 0.0, %v7762
        %v7764 = vpop.f32.mrf.mxu0
        %7765 = vdwg.mxu0
        %7766 = vmatpush.bf16.msra.mxu0 0
        %7767 = vmatpush.bf16.msra.mxu0 0
        %7768 = vmatpush.bf16.msra.mxu0 0
        %7769 = vmatpush.bf16.msra.mxu0 0
        %7770 = vmatpush.bf16.msra.mxu0 %v7724
        %7771 = vmatpush.bf16.msra.mxu0 %v7721
        %7772 = vmatpush.bf16.msra.mxu0 %v7718
        %7773 = vmatpush.bf16.msra.mxu0 %v7715
        %7774 = vmatmul.bf16.gmra.mxu0 %v7738
        %v7775 = vpop.f32.mrf.mxu0
        %v7776 = vadd.f32 0.0, %v7775
        %v7777 = vpop.f32.mrf.mxu0
        %7778 = vdwg.mxu0
        %v7782 = vrot.slane %v7763, 7
        %v7783 = vrot.slane %v7776, 6
        %v7784 = vsel %vm6315, %v7750, %v7782
        %v7785 = vsel %vm6317, %v7784, %v7783
        %v7787 = vadd.f32 %v7654, %v7785
        %s7788 = scalar_lea.vmem %s6, 1152
        %v7789 = vld [vmem:[%s7788] sm:$0xff]
        %v7790 = vld [vmem:[%s7788 + $0x8] sm:$0xf]
        %v7791 = vld [vmem:[%s7788 + $0xc] sm:$0xff]
        %v7792 = vld [vmem:[%s7788 + $0x14] sm:$0xf]
        %v7793 = vld [vmem:[%s7788 + $0x18] sm:$0xff]
        %v7794 = vld [vmem:[%s7788 + $0x20] sm:$0xf]
        %v7795 = vld [vmem:[%s7788 + $0x24] sm:$0xff]
        %v7796 = vld [vmem:[%s7788 + $0x2c] sm:$0xf]
        %v7797 = vld [vmem:[%s7788 + $0x30] sm:$0xff]
        %v7798 = vld [vmem:[%s7788 + $0x38] sm:$0xf]
        %v7799 = vld [vmem:[%s7788 + $0x3c] sm:$0xff]
        %v7800 = vld [vmem:[%s7788 + $0x44] sm:$0xf]
        %v7801 = vld [vmem:[%s7788 + $0x48] sm:$0xff]
        %v7802 = vld [vmem:[%s7788 + $0x50] sm:$0xf]
        %v7803 = vld [vmem:[%s7788 + $0x54] sm:$0xff]
        %v7804 = vld [vmem:[%s7788 + $0x5c] sm:$0xf]
        %v7805 = vrot.slane %v7254, 2
        %v7822 = vunpack.c.l.b16 %v7789
        %v7823 = vunpack.c.h.b16 %v7789
        %v7824 = vunpack.c.l.b16 %v7790
        %v7825 = vunpack.c.l.b16 %v7791
        %v7826 = vunpack.c.h.b16 %v7791
        %v7827 = vunpack.c.l.b16 %v7792
        %v7828 = vunpack.c.l.b16 %v7793
        %v7829 = vunpack.c.h.b16 %v7793
        %v7830 = vunpack.c.l.b16 %v7794
        %v7831 = vunpack.c.l.b16 %v7795
        %v7832 = vunpack.c.h.b16 %v7795
        %v7833 = vunpack.c.l.b16 %v7796
        %v7834 = vunpack.c.l.b16 %v7797
        %v7835 = vunpack.c.h.b16 %v7797
        %v7836 = vunpack.c.l.b16 %v7798
        %v7837 = vunpack.c.l.b16 %v7799
        %v7838 = vunpack.c.h.b16 %v7799
        %v7839 = vunpack.c.l.b16 %v7800
        %v7840 = vunpack.c.l.b16 %v7801
        %v7841 = vunpack.c.h.b16 %v7801
        %v7842 = vunpack.c.l.b16 %v7802
        %v7843 = vunpack.c.l.b16 %v7803
        %v7844 = vunpack.c.h.b16 %v7803
        %v7845 = vunpack.c.l.b16 %v7804
        %v7846 = vpack.c.b16 %v7825, %v7822
        %v7847 = vpack.c.b16 %v7826, %v7823
        %v7848 = vpack.c.b16 %v7827, %v7824
        %v7849 = vpack.c.b16 %v7831, %v7828
        %v7850 = vpack.c.b16 %v7832, %v7829
        %v7851 = vpack.c.b16 %v7833, %v7830
        %v7852 = vpack.c.b16 %v7837, %v7834
        %v7853 = vpack.c.b16 %v7838, %v7835
        %v7854 = vpack.c.b16 %v7839, %v7836
        %v7855 = vpack.c.b16 %v7843, %v7840
        %v7856 = vpack.c.b16 %v7844, %v7841
        %v7857 = vpack.c.b16 %v7845, %v7842
        %v7871 = vsel %vm1430, %v7805, 0
        %7873 = vmatpush.bf16.msra.mxu0 0
        %7874 = vmatpush.bf16.msra.mxu0 0
        %7875 = vmatpush.bf16.msra.mxu0 0
        %7876 = vmatpush.bf16.msra.mxu0 0
        %7877 = vmatpush.bf16.msra.mxu0 %v7855
        %7878 = vmatpush.bf16.msra.mxu0 %v7852
        %7879 = vmatpush.bf16.msra.mxu0 %v7849
        %7880 = vmatpush.bf16.msra.mxu0 %v7846
        %7881 = vmatmul.bf16.gmra.mxu0 %v7871
        %v7882 = vpop.f32.mrf.mxu0
        %v7883 = vadd.f32 0.0, %v7882
        %v7884 = vpop.f32.mrf.mxu0
        %7885 = vdwg.mxu0
        %7886 = vmatpush.bf16.msra.mxu0 0
        %7887 = vmatpush.bf16.msra.mxu0 0
        %7888 = vmatpush.bf16.msra.mxu0 0
        %7889 = vmatpush.bf16.msra.mxu0 0
        %7890 = vmatpush.bf16.msra.mxu0 %v7856
        %7891 = vmatpush.bf16.msra.mxu0 %v7853
        %7892 = vmatpush.bf16.msra.mxu0 %v7850
        %7893 = vmatpush.bf16.msra.mxu0 %v7847
        %7894 = vmatmul.bf16.gmra.mxu0 %v7871
        %v7895 = vpop.f32.mrf.mxu0
        %v7896 = vadd.f32 0.0, %v7895
        %v7897 = vpop.f32.mrf.mxu0
        %7898 = vdwg.mxu0
        %7899 = vmatpush.bf16.msra.mxu0 0
        %7900 = vmatpush.bf16.msra.mxu0 0
        %7901 = vmatpush.bf16.msra.mxu0 0
        %7902 = vmatpush.bf16.msra.mxu0 0
        %7903 = vmatpush.bf16.msra.mxu0 %v7857
        %7904 = vmatpush.bf16.msra.mxu0 %v7854
        %7905 = vmatpush.bf16.msra.mxu0 %v7851
        %7906 = vmatpush.bf16.msra.mxu0 %v7848
        %7907 = vmatmul.bf16.gmra.mxu0 %v7871
        %v7908 = vpop.f32.mrf.mxu0
        %v7909 = vadd.f32 0.0, %v7908
        %v7910 = vpop.f32.mrf.mxu0
        %7911 = vdwg.mxu0
        %v7915 = vrot.slane %v7896, 7
        %v7916 = vrot.slane %v7909, 6
        %v7917 = vsel %vm6315, %v7883, %v7915
        %v7918 = vsel %vm6317, %v7917, %v7916
        %v7920 = vadd.f32 %v7787, %v7918
        %s7921 = scalar_lea.vmem %s6, 1248
        %v7922 = vld [vmem:[%s7921] sm:$0xff]
        %v7923 = vld [vmem:[%s7921 + $0x8] sm:$0xf]
        %v7924 = vld [vmem:[%s7921 + $0xc] sm:$0xff]
        %v7925 = vld [vmem:[%s7921 + $0x14] sm:$0xf]
        %v7926 = vld [vmem:[%s7921 + $0x18] sm:$0xff]
        %v7927 = vld [vmem:[%s7921 + $0x20] sm:$0xf]
        %v7928 = vld [vmem:[%s7921 + $0x24] sm:$0xff]
        %v7929 = vld [vmem:[%s7921 + $0x2c] sm:$0xf]
        %v7930 = vld [vmem:[%s7921 + $0x30] sm:$0xff]
        %v7931 = vld [vmem:[%s7921 + $0x38] sm:$0xf]
        %v7932 = vld [vmem:[%s7921 + $0x3c] sm:$0xff]
        %v7933 = vld [vmem:[%s7921 + $0x44] sm:$0xf]
        %v7934 = vld [vmem:[%s7921 + $0x48] sm:$0xff]
        %v7935 = vld [vmem:[%s7921 + $0x50] sm:$0xf]
        %v7936 = vld [vmem:[%s7921 + $0x54] sm:$0xff]
        %v7937 = vld [vmem:[%s7921 + $0x5c] sm:$0xf]
        %v7938 = vrot.slane %v7404, 2
        %v7955 = vunpack.c.l.b16 %v7922
        %v7956 = vunpack.c.h.b16 %v7922
        %v7957 = vunpack.c.l.b16 %v7923
        %v7958 = vunpack.c.l.b16 %v7924
        %v7959 = vunpack.c.h.b16 %v7924
        %v7960 = vunpack.c.l.b16 %v7925
        %v7961 = vunpack.c.l.b16 %v7926
        %v7962 = vunpack.c.h.b16 %v7926
        %v7963 = vunpack.c.l.b16 %v7927
        %v7964 = vunpack.c.l.b16 %v7928
        %v7965 = vunpack.c.h.b16 %v7928
        %v7966 = vunpack.c.l.b16 %v7929
        %v7967 = vunpack.c.l.b16 %v7930
        %v7968 = vunpack.c.h.b16 %v7930
        %v7969 = vunpack.c.l.b16 %v7931
        %v7970 = vunpack.c.l.b16 %v7932
        %v7971 = vunpack.c.h.b16 %v7932
        %v7972 = vunpack.c.l.b16 %v7933
        %v7973 = vunpack.c.l.b16 %v7934
        %v7974 = vunpack.c.h.b16 %v7934
        %v7975 = vunpack.c.l.b16 %v7935
        %v7976 = vunpack.c.l.b16 %v7936
        %v7977 = vunpack.c.h.b16 %v7936
        %v7978 = vunpack.c.l.b16 %v7937
        %v7979 = vpack.c.b16 %v7958, %v7955
        %v7980 = vpack.c.b16 %v7959, %v7956
        %v7981 = vpack.c.b16 %v7960, %v7957
        %v7982 = vpack.c.b16 %v7964, %v7961
        %v7983 = vpack.c.b16 %v7965, %v7962
        %v7984 = vpack.c.b16 %v7966, %v7963
        %v7985 = vpack.c.b16 %v7970, %v7967
        %v7986 = vpack.c.b16 %v7971, %v7968
        %v7987 = vpack.c.b16 %v7972, %v7969
        %v7988 = vpack.c.b16 %v7976, %v7973
        %v7989 = vpack.c.b16 %v7977, %v7974
        %v7990 = vpack.c.b16 %v7978, %v7975
        %v8004 = vsel %vm1430, %v7938, 0
        %8006 = vmatpush.bf16.msra.mxu0 0
        %8007 = vmatpush.bf16.msra.mxu0 0
        %8008 = vmatpush.bf16.msra.mxu0 0
        %8009 = vmatpush.bf16.msra.mxu0 0
        %8010 = vmatpush.bf16.msra.mxu0 %v7988
        %8011 = vmatpush.bf16.msra.mxu0 %v7985
        %8012 = vmatpush.bf16.msra.mxu0 %v7982
        %8013 = vmatpush.bf16.msra.mxu0 %v7979
        %8014 = vmatmul.bf16.gmra.mxu0 %v8004
        %v8015 = vpop.f32.mrf.mxu0
        %v8016 = vadd.f32 0.0, %v8015
        %v8017 = vpop.f32.mrf.mxu0
        %8018 = vdwg.mxu0
        %8019 = vmatpush.bf16.msra.mxu0 0
        %8020 = vmatpush.bf16.msra.mxu0 0
        %8021 = vmatpush.bf16.msra.mxu0 0
        %8022 = vmatpush.bf16.msra.mxu0 0
        %8023 = vmatpush.bf16.msra.mxu0 %v7989
        %8024 = vmatpush.bf16.msra.mxu0 %v7986
        %8025 = vmatpush.bf16.msra.mxu0 %v7983
        %8026 = vmatpush.bf16.msra.mxu0 %v7980
        %8027 = vmatmul.bf16.gmra.mxu0 %v8004
        %v8028 = vpop.f32.mrf.mxu0
        %v8029 = vadd.f32 0.0, %v8028
        %v8030 = vpop.f32.mrf.mxu0
        %8031 = vdwg.mxu0
        %8032 = vmatpush.bf16.msra.mxu0 0
        %8033 = vmatpush.bf16.msra.mxu0 0
        %8034 = vmatpush.bf16.msra.mxu0 0
        %8035 = vmatpush.bf16.msra.mxu0 0
        %8036 = vmatpush.bf16.msra.mxu0 %v7990
        %8037 = vmatpush.bf16.msra.mxu0 %v7987
        %8038 = vmatpush.bf16.msra.mxu0 %v7984
        %8039 = vmatpush.bf16.msra.mxu0 %v7981
        %8040 = vmatmul.bf16.gmra.mxu0 %v8004
        %v8041 = vpop.f32.mrf.mxu0
        %v8042 = vadd.f32 0.0, %v8041
        %v8043 = vpop.f32.mrf.mxu0
        %8044 = vdwg.mxu0
        %v8048 = vrot.slane %v8029, 7
        %v8049 = vrot.slane %v8042, 6
        %v8050 = vsel %vm6315, %v8016, %v8048
        %v8051 = vsel %vm6317, %v8050, %v8049
        %v8053 = vadd.f32 %v7920, %v8051
        %s8054 = scalar_lea.vmem %s6, 1344
        %v8055 = vld [vmem:[%s8054] sm:$0xff]
        %v8056 = vld [vmem:[%s8054 + $0x8] sm:$0xf]
        %v8057 = vld [vmem:[%s8054 + $0xc] sm:$0xff]
        %v8058 = vld [vmem:[%s8054 + $0x14] sm:$0xf]
        %v8059 = vld [vmem:[%s8054 + $0x18] sm:$0xff]
        %v8060 = vld [vmem:[%s8054 + $0x20] sm:$0xf]
        %v8061 = vld [vmem:[%s8054 + $0x24] sm:$0xff]
        %v8062 = vld [vmem:[%s8054 + $0x2c] sm:$0xf]
        %v8063 = vld [vmem:[%s8054 + $0x30] sm:$0xff]
        %v8064 = vld [vmem:[%s8054 + $0x38] sm:$0xf]
        %v8065 = vld [vmem:[%s8054 + $0x3c] sm:$0xff]
        %v8066 = vld [vmem:[%s8054 + $0x44] sm:$0xf]
        %v8067 = vld [vmem:[%s8054 + $0x48] sm:$0xff]
        %v8068 = vld [vmem:[%s8054 + $0x50] sm:$0xf]
        %v8069 = vld [vmem:[%s8054 + $0x54] sm:$0xff]
        %v8070 = vld [vmem:[%s8054 + $0x5c] sm:$0xf]
        %v8071 = vrot.slane %v7254, 3
        %v8088 = vunpack.c.l.b16 %v8055
        %v8089 = vunpack.c.h.b16 %v8055
        %v8090 = vunpack.c.l.b16 %v8056
        %v8091 = vunpack.c.l.b16 %v8057
        %v8092 = vunpack.c.h.b16 %v8057
        %v8093 = vunpack.c.l.b16 %v8058
        %v8094 = vunpack.c.l.b16 %v8059
        %v8095 = vunpack.c.h.b16 %v8059
        %v8096 = vunpack.c.l.b16 %v8060
        %v8097 = vunpack.c.l.b16 %v8061
        %v8098 = vunpack.c.h.b16 %v8061
        %v8099 = vunpack.c.l.b16 %v8062
        %v8100 = vunpack.c.l.b16 %v8063
        %v8101 = vunpack.c.h.b16 %v8063
        %v8102 = vunpack.c.l.b16 %v8064
        %v8103 = vunpack.c.l.b16 %v8065
        %v8104 = vunpack.c.h.b16 %v8065
        %v8105 = vunpack.c.l.b16 %v8066
        %v8106 = vunpack.c.l.b16 %v8067
        %v8107 = vunpack.c.h.b16 %v8067
        %v8108 = vunpack.c.l.b16 %v8068
        %v8109 = vunpack.c.l.b16 %v8069
        %v8110 = vunpack.c.h.b16 %v8069
        %v8111 = vunpack.c.l.b16 %v8070
        %v8112 = vpack.c.b16 %v8091, %v8088
        %v8113 = vpack.c.b16 %v8092, %v8089
        %v8114 = vpack.c.b16 %v8093, %v8090
        %v8115 = vpack.c.b16 %v8097, %v8094
        %v8116 = vpack.c.b16 %v8098, %v8095
        %v8117 = vpack.c.b16 %v8099, %v8096
        %v8118 = vpack.c.b16 %v8103, %v8100
        %v8119 = vpack.c.b16 %v8104, %v8101
        %v8120 = vpack.c.b16 %v8105, %v8102
        %v8121 = vpack.c.b16 %v8109, %v8106
        %v8122 = vpack.c.b16 %v8110, %v8107
        %v8123 = vpack.c.b16 %v8111, %v8108
        %v8137 = vsel %vm1430, %v8071, 0
        %8139 = vmatpush.bf16.msra.mxu0 0
        %8140 = vmatpush.bf16.msra.mxu0 0
        %8141 = vmatpush.bf16.msra.mxu0 0
        %8142 = vmatpush.bf16.msra.mxu0 0
        %8143 = vmatpush.bf16.msra.mxu0 %v8121
        %8144 = vmatpush.bf16.msra.mxu0 %v8118
        %8145 = vmatpush.bf16.msra.mxu0 %v8115
        %8146 = vmatpush.bf16.msra.mxu0 %v8112
        %8147 = vmatmul.bf16.gmra.mxu0 %v8137
        %v8148 = vpop.f32.mrf.mxu0
        %v8149 = vadd.f32 0.0, %v8148
        %v8150 = vpop.f32.mrf.mxu0
        %8151 = vdwg.mxu0
        %8152 = vmatpush.bf16.msra.mxu0 0
        %8153 = vmatpush.bf16.msra.mxu0 0
        %8154 = vmatpush.bf16.msra.mxu0 0
        %8155 = vmatpush.bf16.msra.mxu0 0
        %8156 = vmatpush.bf16.msra.mxu0 %v8122
        %8157 = vmatpush.bf16.msra.mxu0 %v8119
        %8158 = vmatpush.bf16.msra.mxu0 %v8116
        %8159 = vmatpush.bf16.msra.mxu0 %v8113
        %8160 = vmatmul.bf16.gmra.mxu0 %v8137
        %v8161 = vpop.f32.mrf.mxu0
        %v8162 = vadd.f32 0.0, %v8161
        %v8163 = vpop.f32.mrf.mxu0
        %8164 = vdwg.mxu0
        %8165 = vmatpush.bf16.msra.mxu0 0
        %8166 = vmatpush.bf16.msra.mxu0 0
        %8167 = vmatpush.bf16.msra.mxu0 0
        %8168 = vmatpush.bf16.msra.mxu0 0
        %8169 = vmatpush.bf16.msra.mxu0 %v8123
        %8170 = vmatpush.bf16.msra.mxu0 %v8120
        %8171 = vmatpush.bf16.msra.mxu0 %v8117
        %8172 = vmatpush.bf16.msra.mxu0 %v8114
        %8173 = vmatmul.bf16.gmra.mxu0 %v8137
        %v8174 = vpop.f32.mrf.mxu0
        %v8175 = vadd.f32 0.0, %v8174
        %v8176 = vpop.f32.mrf.mxu0
        %8177 = vdwg.mxu0
        %v8181 = vrot.slane %v8162, 7
        %v8182 = vrot.slane %v8175, 6
        %v8183 = vsel %vm6315, %v8149, %v8181
        %v8184 = vsel %vm6317, %v8183, %v8182
        %v8186 = vadd.f32 %v8053, %v8184
        %s8187 = scalar_lea.vmem %s6, 1440
        %v8188 = vld [vmem:[%s8187] sm:$0xff]
        %v8189 = vld [vmem:[%s8187 + $0x8] sm:$0xf]
        %v8190 = vld [vmem:[%s8187 + $0xc] sm:$0xff]
        %v8191 = vld [vmem:[%s8187 + $0x14] sm:$0xf]
        %v8192 = vld [vmem:[%s8187 + $0x18] sm:$0xff]
        %v8193 = vld [vmem:[%s8187 + $0x20] sm:$0xf]
        %v8194 = vld [vmem:[%s8187 + $0x24] sm:$0xff]
        %v8195 = vld [vmem:[%s8187 + $0x2c] sm:$0xf]
        %v8196 = vld [vmem:[%s8187 + $0x30] sm:$0xff]
        %v8197 = vld [vmem:[%s8187 + $0x38] sm:$0xf]
        %v8198 = vld [vmem:[%s8187 + $0x3c] sm:$0xff]
        %v8199 = vld [vmem:[%s8187 + $0x44] sm:$0xf]
        %v8200 = vld [vmem:[%s8187 + $0x48] sm:$0xff]
        %v8201 = vld [vmem:[%s8187 + $0x50] sm:$0xf]
        %v8202 = vld [vmem:[%s8187 + $0x54] sm:$0xff]
        %v8203 = vld [vmem:[%s8187 + $0x5c] sm:$0xf]
        %v8204 = vrot.slane %v7404, 3
        %v8221 = vunpack.c.l.b16 %v8188
        %v8222 = vunpack.c.h.b16 %v8188
        %v8223 = vunpack.c.l.b16 %v8189
        %v8224 = vunpack.c.l.b16 %v8190
        %v8225 = vunpack.c.h.b16 %v8190
        %v8226 = vunpack.c.l.b16 %v8191
        %v8227 = vunpack.c.l.b16 %v8192
        %v8228 = vunpack.c.h.b16 %v8192
        %v8229 = vunpack.c.l.b16 %v8193
        %v8230 = vunpack.c.l.b16 %v8194
        %v8231 = vunpack.c.h.b16 %v8194
        %v8232 = vunpack.c.l.b16 %v8195
        %v8233 = vunpack.c.l.b16 %v8196
        %v8234 = vunpack.c.h.b16 %v8196
        %v8235 = vunpack.c.l.b16 %v8197
        %v8236 = vunpack.c.l.b16 %v8198
        %v8237 = vunpack.c.h.b16 %v8198
        %v8238 = vunpack.c.l.b16 %v8199
        %v8239 = vunpack.c.l.b16 %v8200
        %v8240 = vunpack.c.h.b16 %v8200
        %v8241 = vunpack.c.l.b16 %v8201
        %v8242 = vunpack.c.l.b16 %v8202
        %v8243 = vunpack.c.h.b16 %v8202
        %v8244 = vunpack.c.l.b16 %v8203
        %v8245 = vpack.c.b16 %v8224, %v8221
        %v8246 = vpack.c.b16 %v8225, %v8222
        %v8247 = vpack.c.b16 %v8226, %v8223
        %v8248 = vpack.c.b16 %v8230, %v8227
        %v8249 = vpack.c.b16 %v8231, %v8228
        %v8250 = vpack.c.b16 %v8232, %v8229
        %v8251 = vpack.c.b16 %v8236, %v8233
        %v8252 = vpack.c.b16 %v8237, %v8234
        %v8253 = vpack.c.b16 %v8238, %v8235
        %v8254 = vpack.c.b16 %v8242, %v8239
        %v8255 = vpack.c.b16 %v8243, %v8240
        %v8256 = vpack.c.b16 %v8244, %v8241
        %v8270 = vsel %vm1430, %v8204, 0
        %8272 = vmatpush.bf16.msra.mxu0 0
        %8273 = vmatpush.bf16.msra.mxu0 0
        %8274 = vmatpush.bf16.msra.mxu0 0
        %8275 = vmatpush.bf16.msra.mxu0 0
        %8276 = vmatpush.bf16.msra.mxu0 %v8254
        %8277 = vmatpush.bf16.msra.mxu0 %v8251
        %8278 = vmatpush.bf16.msra.mxu0 %v8248
        %8279 = vmatpush.bf16.msra.mxu0 %v8245
        %8280 = vmatmul.bf16.gmra.mxu0 %v8270
        %v8281 = vpop.f32.mrf.mxu0
        %v8282 = vadd.f32 0.0, %v8281
        %v8283 = vpop.f32.mrf.mxu0
        %8284 = vdwg.mxu0
        %8285 = vmatpush.bf16.msra.mxu0 0
        %8286 = vmatpush.bf16.msra.mxu0 0
        %8287 = vmatpush.bf16.msra.mxu0 0
        %8288 = vmatpush.bf16.msra.mxu0 0
        %8289 = vmatpush.bf16.msra.mxu0 %v8255
        %8290 = vmatpush.bf16.msra.mxu0 %v8252
        %8291 = vmatpush.bf16.msra.mxu0 %v8249
        %8292 = vmatpush.bf16.msra.mxu0 %v8246
        %8293 = vmatmul.bf16.gmra.mxu0 %v8270
        %v8294 = vpop.f32.mrf.mxu0
        %v8295 = vadd.f32 0.0, %v8294
        %v8296 = vpop.f32.mrf.mxu0
        %8297 = vdwg.mxu0
        %8298 = vmatpush.bf16.msra.mxu0 0
        %8299 = vmatpush.bf16.msra.mxu0 0
        %8300 = vmatpush.bf16.msra.mxu0 0
        %8301 = vmatpush.bf16.msra.mxu0 0
        %8302 = vmatpush.bf16.msra.mxu0 %v8256
        %8303 = vmatpush.bf16.msra.mxu0 %v8253
        %8304 = vmatpush.bf16.msra.mxu0 %v8250
        %8305 = vmatpush.bf16.msra.mxu0 %v8247
        %8306 = vmatmul.bf16.gmra.mxu0 %v8270
        %v8307 = vpop.f32.mrf.mxu0
        %v8308 = vadd.f32 0.0, %v8307
        %v8309 = vpop.f32.mrf.mxu0
        %8310 = vdwg.mxu0
        %v8314 = vrot.slane %v8295, 7
        %v8315 = vrot.slane %v8308, 6
        %v8316 = vsel %vm6315, %v8282, %v8314
        %v8317 = vsel %vm6317, %v8316, %v8315
        %v8319 = vadd.f32 %v8186, %v8317
        %v8320 = vmax.f32 %v8319, 0.0
        %v8322 = vperm.slane %v8320, 0
        %v8323 = vperm.slane %v8320, 1
        %v8324 = vperm.slane %v8320, 2
        %v8328 = vpack.c.bf16 %v8322, %v8322
        %v8329 = vpack.c.bf16 %v8323, %v8323
        %v8330 = vpack.c.bf16 %v8324, %v8324
        %v8331 = vld [vmem:[%s8] sm:$0xff]
        %v8332 = vld [vmem:[%s8 + $0x8] sm:$0xff]
        %v8333 = vld [vmem:[%s8 + $0x10] sm:$0xff]
        %v8334 = vld [vmem:[%s8 + $0x18] sm:$0xff]
        %v8335 = vld [vmem:[%s8 + $0x20] sm:$0xff]
        %v8336 = vld [vmem:[%s8 + $0x28] sm:$0xff]
        %v8337 = vld [vmem:[%s8 + $0x30] sm:$0xff]
        %v8338 = vld [vmem:[%s8 + $0x38] sm:$0xff]
        %v8339 = vld [vmem:[%s8 + $0x40] sm:$0xff]
        %v8340 = vld [vmem:[%s8 + $0x48] sm:$0xff]
        %v8341 = vld [vmem:[%s8 + $0x50] sm:$0xff]
        %v8342 = vld [vmem:[%s8 + $0x58] sm:$0xff]
        %v8343 = vld [vmem:[%s8 + $0x60] sm:$0xff]
        %v8344 = vld [vmem:[%s8 + $0x68] sm:$0xff]
        %v8345 = vld [vmem:[%s8 + $0x70] sm:$0xff]
        %v8346 = vld [vmem:[%s8 + $0x78] sm:$0xff]
        %v8347 = vld [vmem:[%s8 + $0x80] sm:$0xff]
        %v8348 = vld [vmem:[%s8 + $0x88] sm:$0xff]
        %v8349 = vld [vmem:[%s8 + $0x90] sm:$0xff]
        %v8350 = vld [vmem:[%s8 + $0x98] sm:$0xff]
        %v8351 = vld [vmem:[%s8 + $0xa0] sm:$0xff]
        %v8352 = vld [vmem:[%s8 + $0xa8] sm:$0xff]
        %v8353 = vld [vmem:[%s8 + $0xb0] sm:$0xff]
        %v8354 = vld [vmem:[%s8 + $0xb8] sm:$0xff]
        %v8355 = vld [vmem:[%s8 + $0xc0] sm:$0xff]
        %v8356 = vld [vmem:[%s8 + $0xc8] sm:$0xff]
        %v8357 = vld [vmem:[%s8 + $0xd0] sm:$0xff]
        %v8358 = vld [vmem:[%s8 + $0xd8] sm:$0xff]
        %v8359 = vld [vmem:[%s8 + $0xe0] sm:$0xff]
        %v8360 = vld [vmem:[%s8 + $0xe8] sm:$0xff]
        %v8361 = vld [vmem:[%s8 + $0xf0] sm:$0xff]
        %v8362 = vld [vmem:[%s8 + $0xf8] sm:$0xff]
        %v8363 = vld [vmem:[%s8 + $0x100] sm:$0xff]
        %v8364 = vld [vmem:[%s8 + $0x108] sm:$0xff]
        %v8365 = vld [vmem:[%s8 + $0x110] sm:$0xff]
        %v8366 = vld [vmem:[%s8 + $0x118] sm:$0xff]
        %v8367 = vld [vmem:[%s8 + $0x120] sm:$0xff]
        %v8368 = vld [vmem:[%s8 + $0x128] sm:$0xff]
        %v8369 = vld [vmem:[%s8 + $0x130] sm:$0xff]
        %v8370 = vld [vmem:[%s8 + $0x138] sm:$0xff]
        %v8371 = vld [vmem:[%s8 + $0x140] sm:$0xff]
        %v8372 = vld [vmem:[%s8 + $0x148] sm:$0xff]
        %v8373 = vld [vmem:[%s8 + $0x150] sm:$0xff]
        %v8374 = vld [vmem:[%s8 + $0x158] sm:$0xff]
        %v8375 = vld [vmem:[%s8 + $0x160] sm:$0xff]
        %v8376 = vld [vmem:[%s8 + $0x168] sm:$0xff]
        %v8377 = vld [vmem:[%s8 + $0x170] sm:$0xff]
        %v8378 = vld [vmem:[%s8 + $0x178] sm:$0xff]
        %v8379 = vld [vmem:[%s9] sm:$0x3]
        %v8428 = vunpack.c.l.b16 %v8331
        %v8429 = vunpack.c.h.b16 %v8331
        %v8430 = vunpack.c.l.b16 %v8332
        %v8431 = vunpack.c.h.b16 %v8332
        %v8432 = vunpack.c.l.b16 %v8333
        %v8433 = vunpack.c.h.b16 %v8333
        %v8434 = vunpack.c.l.b16 %v8334
        %v8435 = vunpack.c.h.b16 %v8334
        %v8436 = vunpack.c.l.b16 %v8335
        %v8437 = vunpack.c.h.b16 %v8335
        %v8438 = vunpack.c.l.b16 %v8336
        %v8439 = vunpack.c.h.b16 %v8336
        %v8440 = vunpack.c.l.b16 %v8337
        %v8441 = vunpack.c.h.b16 %v8337
        %v8442 = vunpack.c.l.b16 %v8338
        %v8443 = vunpack.c.h.b16 %v8338
        %v8444 = vunpack.c.l.b16 %v8339
        %v8445 = vunpack.c.h.b16 %v8339
        %v8446 = vunpack.c.l.b16 %v8340
        %v8447 = vunpack.c.h.b16 %v8340
        %v8448 = vunpack.c.l.b16 %v8341
        %v8449 = vunpack.c.h.b16 %v8341
        %v8450 = vunpack.c.l.b16 %v8342
        %v8451 = vunpack.c.h.b16 %v8342
        %v8452 = vunpack.c.l.b16 %v8343
        %v8453 = vunpack.c.h.b16 %v8343
        %v8454 = vunpack.c.l.b16 %v8344
        %v8455 = vunpack.c.h.b16 %v8344
        %v8456 = vunpack.c.l.b16 %v8345
        %v8457 = vunpack.c.h.b16 %v8345
        %v8458 = vunpack.c.l.b16 %v8346
        %v8459 = vunpack.c.h.b16 %v8346
        %v8460 = vunpack.c.l.b16 %v8347
        %v8461 = vunpack.c.h.b16 %v8347
        %v8462 = vunpack.c.l.b16 %v8348
        %v8463 = vunpack.c.h.b16 %v8348
        %v8464 = vunpack.c.l.b16 %v8349
        %v8465 = vunpack.c.h.b16 %v8349
        %v8466 = vunpack.c.l.b16 %v8350
        %v8467 = vunpack.c.h.b16 %v8350
        %v8468 = vunpack.c.l.b16 %v8351
        %v8469 = vunpack.c.h.b16 %v8351
        %v8470 = vunpack.c.l.b16 %v8352
        %v8471 = vunpack.c.h.b16 %v8352
        %v8472 = vunpack.c.l.b16 %v8353
        %v8473 = vunpack.c.h.b16 %v8353
        %v8474 = vunpack.c.l.b16 %v8354
        %v8475 = vunpack.c.h.b16 %v8354
        %v8476 = vunpack.c.l.b16 %v8355
        %v8477 = vunpack.c.h.b16 %v8355
        %v8478 = vunpack.c.l.b16 %v8356
        %v8479 = vunpack.c.h.b16 %v8356
        %v8480 = vunpack.c.l.b16 %v8357
        %v8481 = vunpack.c.h.b16 %v8357
        %v8482 = vunpack.c.l.b16 %v8358
        %v8483 = vunpack.c.h.b16 %v8358
        %v8484 = vunpack.c.l.b16 %v8359
        %v8485 = vunpack.c.h.b16 %v8359
        %v8486 = vunpack.c.l.b16 %v8360
        %v8487 = vunpack.c.h.b16 %v8360
        %v8488 = vunpack.c.l.b16 %v8361
        %v8489 = vunpack.c.h.b16 %v8361
        %v8490 = vunpack.c.l.b16 %v8362
        %v8491 = vunpack.c.h.b16 %v8362
        %v8492 = vunpack.c.l.b16 %v8363
        %v8493 = vunpack.c.h.b16 %v8363
        %v8494 = vunpack.c.l.b16 %v8364
        %v8495 = vunpack.c.h.b16 %v8364
        %v8496 = vunpack.c.l.b16 %v8365
        %v8497 = vunpack.c.h.b16 %v8365
        %v8498 = vunpack.c.l.b16 %v8366
        %v8499 = vunpack.c.h.b16 %v8366
        %v8500 = vunpack.c.l.b16 %v8367
        %v8501 = vunpack.c.h.b16 %v8367
        %v8502 = vunpack.c.l.b16 %v8368
        %v8503 = vunpack.c.h.b16 %v8368
        %v8504 = vunpack.c.l.b16 %v8369
        %v8505 = vunpack.c.h.b16 %v8369
        %v8506 = vunpack.c.l.b16 %v8370
        %v8507 = vunpack.c.h.b16 %v8370
        %v8508 = vunpack.c.l.b16 %v8371
        %v8509 = vunpack.c.h.b16 %v8371
        %v8510 = vunpack.c.l.b16 %v8372
        %v8511 = vunpack.c.h.b16 %v8372
        %v8512 = vunpack.c.l.b16 %v8373
        %v8513 = vunpack.c.h.b16 %v8373
        %v8514 = vunpack.c.l.b16 %v8374
        %v8515 = vunpack.c.h.b16 %v8374
        %v8516 = vunpack.c.l.b16 %v8375
        %v8517 = vunpack.c.h.b16 %v8375
        %v8518 = vunpack.c.l.b16 %v8376
        %v8519 = vunpack.c.h.b16 %v8376
        %v8520 = vunpack.c.l.b16 %v8377
        %v8521 = vunpack.c.h.b16 %v8377
        %v8522 = vunpack.c.l.b16 %v8378
        %v8523 = vunpack.c.h.b16 %v8378
        %v8524 = vpack.c.b16 %v8430, %v8428
        %v8525 = vpack.c.b16 %v8431, %v8429
        %v8526 = vpack.c.b16 %v8434, %v8432
        %v8527 = vpack.c.b16 %v8435, %v8433
        %v8528 = vpack.c.b16 %v8438, %v8436
        %v8529 = vpack.c.b16 %v8439, %v8437
        %v8530 = vpack.c.b16 %v8442, %v8440
        %v8531 = vpack.c.b16 %v8443, %v8441
        %v8532 = vpack.c.b16 %v8446, %v8444
        %v8533 = vpack.c.b16 %v8447, %v8445
        %v8534 = vpack.c.b16 %v8450, %v8448
        %v8535 = vpack.c.b16 %v8451, %v8449
        %v8536 = vpack.c.b16 %v8454, %v8452
        %v8537 = vpack.c.b16 %v8455, %v8453
        %v8538 = vpack.c.b16 %v8458, %v8456
        %v8539 = vpack.c.b16 %v8459, %v8457
        %v8540 = vpack.c.b16 %v8462, %v8460
        %v8541 = vpack.c.b16 %v8463, %v8461
        %v8542 = vpack.c.b16 %v8466, %v8464
        %v8543 = vpack.c.b16 %v8467, %v8465
        %v8544 = vpack.c.b16 %v8470, %v8468
        %v8545 = vpack.c.b16 %v8471, %v8469
        %v8546 = vpack.c.b16 %v8474, %v8472
        %v8547 = vpack.c.b16 %v8475, %v8473
        %v8548 = vpack.c.b16 %v8478, %v8476
        %v8549 = vpack.c.b16 %v8479, %v8477
        %v8550 = vpack.c.b16 %v8482, %v8480
        %v8551 = vpack.c.b16 %v8483, %v8481
        %v8552 = vpack.c.b16 %v8486, %v8484
        %v8553 = vpack.c.b16 %v8487, %v8485
        %v8554 = vpack.c.b16 %v8490, %v8488
        %v8555 = vpack.c.b16 %v8491, %v8489
        %v8556 = vpack.c.b16 %v8494, %v8492
        %v8557 = vpack.c.b16 %v8495, %v8493
        %v8558 = vpack.c.b16 %v8498, %v8496
        %v8559 = vpack.c.b16 %v8499, %v8497
        %v8560 = vpack.c.b16 %v8502, %v8500
        %v8561 = vpack.c.b16 %v8503, %v8501
        %v8562 = vpack.c.b16 %v8506, %v8504
        %v8563 = vpack.c.b16 %v8507, %v8505
        %v8564 = vpack.c.b16 %v8510, %v8508
        %v8565 = vpack.c.b16 %v8511, %v8509
        %v8566 = vpack.c.b16 %v8514, %v8512
        %v8567 = vpack.c.b16 %v8515, %v8513
        %v8568 = vpack.c.b16 %v8518, %v8516
        %v8569 = vpack.c.b16 %v8519, %v8517
        %v8570 = vpack.c.b16 %v8522, %v8520
        %v8571 = vpack.c.b16 %v8523, %v8521
        %v8621 = vperm.slane %v8379, 0
        %v8622 = vperm.slane %v8379, 1
        %8625 = vmatpush.bf16.msra.mxu0 %v8538
        %8626 = vmatpush.bf16.msra.mxu0 %v8536
        %8627 = vmatpush.bf16.msra.mxu0 %v8534
        %8628 = vmatpush.bf16.msra.mxu0 %v8532
        %8629 = vmatpush.bf16.msra.mxu0 %v8530
        %8630 = vmatpush.bf16.msra.mxu0 %v8528
        %8631 = vmatpush.bf16.msra.mxu0 %v8526
        %8632 = vmatpush.bf16.msra.mxu0 %v8524
        %8633 = vmatmul.bf16.gmra.mxu0 %v8328
        %v8634 = vpop.f32.mrf.mxu0
        %v8635 = vadd.f32 %v8621, %v8634
        %v8636 = vpop.f32.mrf.mxu0
        %8637 = vdwg.mxu0
        %8638 = vmatpush.bf16.msra.mxu0 %v8554
        %8639 = vmatpush.bf16.msra.mxu0 %v8552
        %8640 = vmatpush.bf16.msra.mxu0 %v8550
        %8641 = vmatpush.bf16.msra.mxu0 %v8548
        %8642 = vmatpush.bf16.msra.mxu0 %v8546
        %8643 = vmatpush.bf16.msra.mxu0 %v8544
        %8644 = vmatpush.bf16.msra.mxu0 %v8542
        %8645 = vmatpush.bf16.msra.mxu0 %v8540
        %8646 = vmatmul.bf16.gmra.mxu0 %v8329
        %v8647 = vpop.f32.mrf.mxu0
        %v8648 = vadd.f32 %v8635, %v8647
        %v8649 = vpop.f32.mrf.mxu0
        %8650 = vdwg.mxu0
        %8651 = vmatpush.bf16.msra.mxu0 %v8570
        %8652 = vmatpush.bf16.msra.mxu0 %v8568
        %8653 = vmatpush.bf16.msra.mxu0 %v8566
        %8654 = vmatpush.bf16.msra.mxu0 %v8564
        %8655 = vmatpush.bf16.msra.mxu0 %v8562
        %8656 = vmatpush.bf16.msra.mxu0 %v8560
        %8657 = vmatpush.bf16.msra.mxu0 %v8558
        %8658 = vmatpush.bf16.msra.mxu0 %v8556
        %8659 = vmatmul.bf16.gmra.mxu0 %v8330
        %v8660 = vpop.f32.mrf.mxu0
        %v8661 = vadd.f32 %v8648, %v8660
        %v8662 = vpop.f32.mrf.mxu0
        %8663 = vdwg.mxu0
        %8664 = vmatpush.bf16.msra.mxu0 %v8539
        %8665 = vmatpush.bf16.msra.mxu0 %v8537
        %8666 = vmatpush.bf16.msra.mxu0 %v8535
        %8667 = vmatpush.bf16.msra.mxu0 %v8533
        %8668 = vmatpush.bf16.msra.mxu0 %v8531
        %8669 = vmatpush.bf16.msra.mxu0 %v8529
        %8670 = vmatpush.bf16.msra.mxu0 %v8527
        %8671 = vmatpush.bf16.msra.mxu0 %v8525
        %8672 = vmatmul.bf16.gmra.mxu0 %v8328
        %v8673 = vpop.f32.mrf.mxu0
        %v8674 = vadd.f32 %v8622, %v8673
        %v8675 = vpop.f32.mrf.mxu0
        %8676 = vdwg.mxu0
        %8677 = vmatpush.bf16.msra.mxu0 %v8555
        %8678 = vmatpush.bf16.msra.mxu0 %v8553
        %8679 = vmatpush.bf16.msra.mxu0 %v8551
        %8680 = vmatpush.bf16.msra.mxu0 %v8549
        %8681 = vmatpush.bf16.msra.mxu0 %v8547
        %8682 = vmatpush.bf16.msra.mxu0 %v8545
        %8683 = vmatpush.bf16.msra.mxu0 %v8543
        %8684 = vmatpush.bf16.msra.mxu0 %v8541
        %8685 = vmatmul.bf16.gmra.mxu0 %v8329
        %v8686 = vpop.f32.mrf.mxu0
        %v8687 = vadd.f32 %v8674, %v8686
        %v8688 = vpop.f32.mrf.mxu0
        %8689 = vdwg.mxu0
        %8690 = vmatpush.bf16.msra.mxu0 %v8571
        %8691 = vmatpush.bf16.msra.mxu0 %v8569
        %8692 = vmatpush.bf16.msra.mxu0 %v8567
        %8693 = vmatpush.bf16.msra.mxu0 %v8565
        %8694 = vmatpush.bf16.msra.mxu0 %v8563
        %8695 = vmatpush.bf16.msra.mxu0 %v8561
        %8696 = vmatpush.bf16.msra.mxu0 %v8559
        %8697 = vmatpush.bf16.msra.mxu0 %v8557
        %8698 = vmatmul.bf16.gmra.mxu0 %v8330
        %v8699 = vpop.f32.mrf.mxu0
        %v8700 = vadd.f32 %v8687, %v8699
        %v8701 = vpop.f32.mrf.mxu0
        %8702 = vdwg.mxu0
        %v8703 = vmax.f32 %v8661, 0.0
        %v8704 = vmax.f32 %v8700, 0.0
        %v8705 = vpack.c.bf16 %v8703, %v8703
        %v8706 = vpack.c.bf16 %v8704, %v8704
        %v8707 = vld [vmem:[%s10] sm:$0xf]
        %v8708 = vld [vmem:[%s10 + $0x4] sm:$0xf]
        %v8709 = vld [vmem:[%s10 + $0x8] sm:$0xf]
        %v8710 = vld [vmem:[%s10 + $0xc] sm:$0xf]
        %v8711 = vld [vmem:[%s10 + $0x10] sm:$0xf]
        %v8712 = vld [vmem:[%s10 + $0x14] sm:$0xf]
        %v8713 = vld [vmem:[%s10 + $0x18] sm:$0xf]
        %v8714 = vld [vmem:[%s10 + $0x1c] sm:$0xf]
        %v8715 = vld [vmem:[%s10 + $0x20] sm:$0xf]
        %v8716 = vld [vmem:[%s10 + $0x24] sm:$0xf]
        %v8717 = vld [vmem:[%s10 + $0x28] sm:$0xf]
        %v8718 = vld [vmem:[%s10 + $0x2c] sm:$0xf]
        %v8719 = vld [vmem:[%s10 + $0x30] sm:$0xf]
        %v8720 = vld [vmem:[%s10 + $0x34] sm:$0xf]
        %v8721 = vld [vmem:[%s10 + $0x38] sm:$0xf]
        %v8722 = vld [vmem:[%s10 + $0x3c] sm:$0xf]
        %v8723 = vld [vmem:[%s10 + $0x40] sm:$0xf]
        %v8724 = vld [vmem:[%s10 + $0x44] sm:$0xf]
        %v8725 = vld [vmem:[%s10 + $0x48] sm:$0xf]
        %v8726 = vld [vmem:[%s10 + $0x4c] sm:$0xf]
        %v8727 = vld [vmem:[%s10 + $0x50] sm:$0xf]
        %v8728 = vld [vmem:[%s10 + $0x54] sm:$0xf]
        %v8729 = vld [vmem:[%s10 + $0x58] sm:$0xf]
        %v8730 = vld [vmem:[%s10 + $0x5c] sm:$0xf]
        %v8731 = vld [vmem:[%s11] sm:$0x1]
        %v8756 = vunpack.c.l.b16 %v8707
        %v8757 = vunpack.c.l.b16 %v8708
        %v8758 = vunpack.c.l.b16 %v8709
        %v8759 = vunpack.c.l.b16 %v8710
        %v8760 = vunpack.c.l.b16 %v8711
        %v8761 = vunpack.c.l.b16 %v8712
        %v8762 = vunpack.c.l.b16 %v8713
        %v8763 = vunpack.c.l.b16 %v8714
        %v8764 = vunpack.c.l.b16 %v8715
        %v8765 = vunpack.c.l.b16 %v8716
        %v8766 = vunpack.c.l.b16 %v8717
        %v8767 = vunpack.c.l.b16 %v8718
        %v8768 = vunpack.c.l.b16 %v8719
        %v8769 = vunpack.c.l.b16 %v8720
        %v8770 = vunpack.c.l.b16 %v8721
        %v8771 = vunpack.c.l.b16 %v8722
        %v8772 = vunpack.c.l.b16 %v8723
        %v8773 = vunpack.c.l.b16 %v8724
        %v8774 = vunpack.c.l.b16 %v8725
        %v8775 = vunpack.c.l.b16 %v8726
        %v8776 = vunpack.c.l.b16 %v8727
        %v8777 = vunpack.c.l.b16 %v8728
        %v8778 = vunpack.c.l.b16 %v8729
        %v8779 = vunpack.c.l.b16 %v8730
        %v8780 = vpack.c.b16 %v8757, %v8756
        %v8781 = vpack.c.b16 %v8759, %v8758
        %v8782 = vpack.c.b16 %v8761, %v8760
        %v8783 = vpack.c.b16 %v8763, %v8762
        %v8784 = vpack.c.b16 %v8765, %v8764
        %v8785 = vpack.c.b16 %v8767, %v8766
        %v8786 = vpack.c.b16 %v8769, %v8768
        %v8787 = vpack.c.b16 %v8771, %v8770
        %v8788 = vpack.c.b16 %v8773, %v8772
        %v8789 = vpack.c.b16 %v8775, %v8774
        %v8790 = vpack.c.b16 %v8777, %v8776
        %v8791 = vpack.c.b16 %v8779, %v8778
        %v8805 = vsel %vm1430, %v8706, 0
        %8807 = vmatpush.bf16.msra.mxu0 %v8787
        %8808 = vmatpush.bf16.msra.mxu0 %v8786
        %8809 = vmatpush.bf16.msra.mxu0 %v8785
        %8810 = vmatpush.bf16.msra.mxu0 %v8784
        %8811 = vmatpush.bf16.msra.mxu0 %v8783
        %8812 = vmatpush.bf16.msra.mxu0 %v8782
        %8813 = vmatpush.bf16.msra.mxu0 %v8781
        %8814 = vmatpush.bf16.msra.mxu0 %v8780
        %8815 = vmatmul.bf16.gmra.mxu0 %v8705
        %v8816 = vpop.f32.mrf.mxu0
        %v8817 = vadd.f32 %v8731, %v8816
        %v8818 = vpop.f32.mrf.mxu0
        %8819 = vdwg.mxu0
        %8820 = vmatpush.bf16.msra.mxu0 0
        %8821 = vmatpush.bf16.msra.mxu0 0
        %8822 = vmatpush.bf16.msra.mxu0 0
        %8823 = vmatpush.bf16.msra.mxu0 0
        %8824 = vmatpush.bf16.msra.mxu0 %v8791
        %8825 = vmatpush.bf16.msra.mxu0 %v8790
        %8826 = vmatpush.bf16.msra.mxu0 %v8789
        %8827 = vmatpush.bf16.msra.mxu0 %v8788
        %8828 = vmatmul.bf16.gmra.mxu0 %v8805
        %v8829 = vpop.f32.mrf.mxu0
        %v8830 = vadd.f32 %v8817, %v8829
        %v8831 = vpop.f32.mrf.mxu0
        %8832 = vdwg.mxu0
        %vm8833 = vcmask 73728
        %v8834 = vsel %vm8833, %v8830, -inf
        %8835 = vmax.xlane.f32.xlu0 %v8834
        %v8836 = vpop.xlane.xlu0 %8835
        %v8837 = vsub.f32 %v8830, %v8836
        %v8838 = vmul.f32 %v8837, 1.442695
        %v8839 = vpow.pop %v8838
        %v8840 = vsel %vm8833, %v8839, 0.0
        %8841 = vadd.xlane.f32.xlu0 %v8840
        %v8842 = vpop.xlane.xlu0 %8841
        %v8843 = vlog2.pop %v8842
        %v8844 = vmul.f32 %v8843, 0.6931472
        %v8845 = vsub.f32 %v8837, %v8844
        %8846 = vst.msk [vmem:[%s436] sm:$0x1] %vm8833, %v8845
        %8847 = vst.msk [vmem:[%s442] sm:$0x1] %vm8833, %v8830
        %s8848 = sand.u32 %s296, 1
        %s8849 = scalar_lea.sflag [#allocation3], %s8848
        %s8850 = sand.u32 %s296, 1
        %s8851 = scalar_lea.vmem [#allocation2], %s8850
        %s8852 = sand.u32 %s322, 1
        %s8853 = scalar_lea.sflag [#allocation5], %s8852
        %s8854 = sand.u32 %s322, 1
        %s8855 = scalar_lea.vmem [#allocation4], %s8854
        // Predicated region
        $region69: #{lenet_forward.1} parent=67 // pred_check
          %p8856 = pneg %p306
        $region70: #{lenet_forward.1} parent=67 // pred_check_branch
          %8858 = sbr.rel (%p8856) target = $region72
        $region71: #{lenet_forward.1} parent=67 // pred_region
          %8860 = vsyncadd %s8849, 0
          %s8861 = scalar_lea.hbm %s12, %s31
          %s8863 = sshll.u32 %s8851, 4
          %s8864 = int_to_ptr.vmem [resolvable:$true] %s8863
          %s8865 = sshll.u32 %s8861, 4
          %s8866 = int_to_ptr.hbm [resolvable:$true] %s8865
          %8868 = dma.vmem_to_hbm [thread:$0]  %s8864, 16, %s8866, %s8849
        $region72: #{lenet_forward.1} parent=67 // pred_fallthru
          _
        // Predicated region
        $region73: #{lenet_forward.1} parent=67 // pred_check
          %p8869 = pneg %p332
        $region74: #{lenet_forward.1} parent=67 // pred_check_branch
          %8871 = sbr.rel (%p8869) target = $region76
        $region75: #{lenet_forward.1} parent=67 // pred_region
          %8873 = vsyncadd %s8853, 0
          %s8874 = scalar_lea.hbm %s13, %s31
          %s8876 = sshll.u32 %s8855, 4
          %s8877 = int_to_ptr.vmem [resolvable:$true] %s8876
          %s8878 = sshll.u32 %s8874, 4
          %s8879 = int_to_ptr.hbm [resolvable:$true] %s8878
          %8881 = dma.vmem_to_hbm [thread:$0]  %s8877, 16, %s8879, %s8853
        $region76: #{lenet_forward.1} parent=67 // pred_fallthru
          _
      $region68: #{lenet_forward.1} parent=5 // pred_fallthru
        _
      %p8882 = scmp.le.s32.totalorder 2, %s26
      // Predicated region
      $region77: #{lenet_forward.1} parent=5 // pred_check
        %p8883 = pneg %p8882
      $region78: #{lenet_forward.1} parent=5 // pred_check_branch
        %8885 = sbr.rel (%p8883) target = $region80
      $region79: #{lenet_forward.1} parent=5 // pred_region
        %s8886 = ssub.s32 %s26, 2
        // Predicated region
        $region81: #{lenet_forward.1} parent=79 // pred_check
          %p8887 = pneg %p312
        $region82: #{lenet_forward.1} parent=79 // pred_check_branch
          %8889 = sbr.rel (%p8887) target = $region84
        $region83: #{lenet_forward.1} parent=79 // pred_region
          %s8890 = sand.u32 %s297, 1
          %s8891 = scalar_lea.sflag [#allocation3], %s8890
          %s8892 = sand.u32 %s297, 1
          %s8893 = scalar_lea.vmem [#allocation2], %s8892
          %8895 = dma.done %s8891, 16
        $region84: #{lenet_forward.1} parent=79 // pred_fallthru
          _
        // Predicated region
        $region85: #{lenet_forward.1} parent=79 // pred_check
          %p8896 = pneg %p338
        $region86: #{lenet_forward.1} parent=79 // pred_check_branch
          %8898 = sbr.rel (%p8896) target = $region88
        $region87: #{lenet_forward.1} parent=79 // pred_region
          %s8899 = sand.u32 %s323, 1
          %s8900 = scalar_lea.sflag [#allocation5], %s8899
          %s8901 = sand.u32 %s323, 1
          %s8902 = scalar_lea.vmem [#allocation4], %s8901
          %8904 = dma.done %s8900, 16
        $region88: #{lenet_forward.1} parent=79 // pred_fallthru
          _
      $region80: #{lenet_forward.1} parent=5 // pred_fallthru
        _
    $region6: #{lenet_forward.1} parent=1 // loop_footer
      %s30 = sadd.s32 1, %s26
    $region7: #{lenet_forward.1} parent=1 // loop_footer_branch
      %25 = sbr.rel target = $region3
    $region8: #{lenet_forward.1} parent=1 // loop_exit
      _
    %8905 = vsyncpa [#allocation3], 1
    %s8906 = scalar_lea.sflag [#allocation3], 1
    %8907 = vsyncpa %s8906, 1
    %8908 = vsyncpa [#allocation5], 1
    %s8909 = scalar_lea.sflag [#allocation5], 1
    %8910 = vsyncpa %s8909, 1

</llo_original>
